<compile_context>
chip_gen: v5e
topology: v5e:2x2
jax: 0.10.0
libtpu: 0.0.40
codegen_flags: <defaults>
</compile_context>

<pallas_src>
import functools

import jax
import jax.numpy as jnp
from jax import lax
from jax.experimental import pallas as pl
from jax.experimental.pallas import tpu as pltpu


def _round_up(x, m):
    return (x + m - 1) // m * m


# ---------------------------------------------------------------------------
# Fused kernel: [optional BN+ReLU on the input planes] -> 3x3x3 conv as one
# bf16 MXU matmul over K = 27*Cin_pad -> output plane + partial BN statistics.
# One grid step = one (batch element, output depth-plane).
# ---------------------------------------------------------------------------
def _conv_plane_kernel(xm1_ref, x0_ref, xp1_ref, w_ref, b_ref,
                       scale_ref, shift_ref, mask_ref,
                       y_ref, sum_ref, sq_ref,
                       *, H, W, D, apply_bn_relu):
    d = pl.program_id(1)
    Cpi = xm1_ref.shape[-1]
    Cpo = y_ref.shape[-1]

    if apply_bn_relu:
        interior = mask_ref[...]            # (H+2, W+2, Cpi) {0,1} float mask
        scale = scale_ref[...]              # (1, Cpi)
        shift = shift_ref[...]              # (1, Cpi)

    planes = []
    for kd, ref in enumerate((xm1_ref, x0_ref, xp1_ref)):
        p = ref[0, 0]                       # (H+2, W+2, Cpi) f32
        if apply_bn_relu:
            # BN + ReLU of the previous conv output, fused into this conv's input
            # path.  The zero spatial padding must stay zero afterwards, hence the
            # interior mask and the depth-validity factor.
            dp = d + kd                     # depth index in padded coordinates
            valid = jnp.logical_and(dp >= 1, dp <= D).astype(jnp.float32)
            p = jnp.maximum(p * scale + shift, 0.0) * interior * valid
        planes.append(p)

    # im2col: 27 shifted windows concatenated along lanes.  Each window keeps the
    # full 128-lane channel tile, so the concat is tile-aligned (no lane packing).
    cols = []
    for kd in range(3):
        for kh in range(3):
            for kw in range(3):
                win = planes[kd][kh:kh + H, kw:kw + W, :]      # (H, W, Cpi)
                cols.append(win.reshape(H * W, Cpi))
    patch = jnp.concatenate(cols, axis=-1).astype(jnp.bfloat16)  # (H*W, 27*Cpi)

    acc = jnp.dot(patch, w_ref[...], preferred_element_type=jnp.float32)  # (H*W, Cpo)
    acc = acc + b_ref[...]

    y_ref[...] = acc.reshape(1, 1, H, W, Cpo).astype(y_ref.dtype)
    # Per-plane partial BatchNorm statistics of *this* conv's output (fused — no
    # extra HBM pass over the activation).
    sum_ref[...] = jnp.sum(acc, axis=0, keepdims=True).reshape(1, 1, 1, Cpo)
    sq_ref[...] = jnp.sum(acc * acc, axis=0, keepdims=True).reshape(1, 1, 1, Cpo)


def _fused_conv_bn_stats(x_pad, w_mat, bias, scale_in, shift_in, interior_mask,
                         *, D, H, W, apply_bn_relu):
    """x_pad: (N, D+2, H+2, W+2, Cpi) f32.

    Returns conv output (N, D, H, W, Cpo) f32 and its per-channel (sum, sum_sq).
    When apply_bn_relu, relu(x * scale_in + shift_in) is applied to real input
    voxels (padding kept at zero) before the convolution.
    """
    N = x_pad.shape[0]
    Cpi = x_pad.shape[-1]
    Cpo = w_mat.shape[-1]

    kernel = functools.partial(_conv_plane_kernel, H=H, W=W, D=D,
                               apply_bn_relu=apply_bn_relu)
    plane_blk = (1, 1, H + 2, W + 2, Cpi)

    y, s, sq = pl.pallas_call(
        kernel,
        grid=(N, D),
        in_specs=[
            pl.BlockSpec(plane_blk, lambda n, d: (n, d, 0, 0, 0)),
            pl.BlockSpec(plane_blk, lambda n, d: (n, d + 1, 0, 0, 0)),
            pl.BlockSpec(plane_blk, lambda n, d: (n, d + 2, 0, 0, 0)),
            pl.BlockSpec((27 * Cpi, Cpo), lambda n, d: (0, 0)),
            pl.BlockSpec((1, Cpo), lambda n, d: (0, 0)),
            pl.BlockSpec((1, Cpi), lambda n, d: (0, 0)),
            pl.BlockSpec((1, Cpi), lambda n, d: (0, 0)),
            pl.BlockSpec((H + 2, W + 2, Cpi), lambda n, d: (0, 0, 0)),
        ],
        out_specs=(
            pl.BlockSpec((1, 1, H, W, Cpo), lambda n, d: (n, d, 0, 0, 0)),
            pl.BlockSpec((1, 1, 1, Cpo), lambda n, d: (n, d, 0, 0)),
            pl.BlockSpec((1, 1, 1, Cpo), lambda n, d: (n, d, 0, 0)),
        ),
        out_shape=(
            jax.ShapeDtypeStruct((N, D, H, W, Cpo), jnp.float32),
            jax.ShapeDtypeStruct((N, D, 1, Cpo), jnp.float32),
            jax.ShapeDtypeStruct((N, D, 1, Cpo), jnp.float32),
        ),
        compiler_params=pltpu.CompilerParams(
            dimension_semantics=("parallel", "parallel")),
    )(x_pad, x_pad, x_pad, w_mat, bias, scale_in, shift_in, interior_mask)

    return y, jnp.sum(s, axis=(0, 1, 2)), jnp.sum(sq, axis=(0, 1, 2))


# ---------------------------------------------------------------------------
# Final fused affine-BN + ReLU (lane-dense, tiled over (batch, depth) planes).
# ---------------------------------------------------------------------------
def _bn_relu_kernel(y_ref, scale_ref, shift_ref, o_ref):
    o_ref[...] = jnp.maximum(y_ref[...] * scale_ref[...] + shift_ref[...], 0.0)


def _bn_relu_apply(y, scale, shift):
    N, D, H, W, C = y.shape
    y2 = y.reshape(N * D, H * W, C)
    out = pl.pallas_call(
        _bn_relu_kernel,
        grid=(N * D,),
        in_specs=[
            pl.BlockSpec((1, H * W, C), lambda i: (i, 0, 0)),
            pl.BlockSpec((1, C), lambda i: (0, 0)),
            pl.BlockSpec((1, C), lambda i: (0, 0)),
        ],
        out_specs=pl.BlockSpec((1, H * W, C), lambda i: (i, 0, 0)),
        out_shape=jax.ShapeDtypeStruct((N * D, H * W, C), jnp.float32),
        compiler_params=pltpu.CompilerParams(dimension_semantics=("parallel",)),
    )(y2, scale[None, :], shift[None, :])
    return out.reshape(N, D, H, W, C)


# ---------------------------------------------------------------------------
# Parameter packing and BN scale/shift from batch statistics.
# ---------------------------------------------------------------------------
def _pad_channels_1d(v, c):
    return jnp.pad(v, (0, c - v.shape[0]))


def _pack_weight(w, cpi, cpo):
    kd, kh, kw, ci, co = w.shape
    wp = jnp.pad(w, ((0, 0), (0, 0), (0, 0), (0, cpi - ci), (0, cpo - co)))
    return wp.reshape(kd * kh * kw * cpi, cpo).astype(jnp.bfloat16)


def _bn_scale_shift(s, sq, gamma, beta, count, eps=1e-5):
    mean = s / count
    var = jnp.maximum(sq / count - mean * mean, 0.0)   # clamp: guards cancellation
    inv = lax.rsqrt(var + eps)
    scale = gamma * inv
    shift = beta - mean * scale
    return scale, shift


# ---------------------------------------------------------------------------
# double_conv forward: (conv => BN => ReLU) * 2
# ---------------------------------------------------------------------------
@jax.jit
def double_conv_forward(x, params):
    """x: (N, D, H, W, Cin) f32 -> (N, D, H, W, Cout) f32 (NDHWC layout)."""
    N, D, H, W, Cin = x.shape
    Cout = params["b1"].shape[0]
    Cpi = _round_up(Cin, 128)
    Cpo = _round_up(Cout, 128)
    count = N * D * H * W
    eps = 1e-5

    mask1 = jnp.pad(jnp.ones((H, W, Cpi), jnp.float32), ((1, 1), (1, 1), (0, 0)))
    mask2 = jnp.pad(jnp.ones((H, W, Cpo), jnp.float32), ((1, 1), (1, 1), (0, 0)))

    # ---- conv1 (raw input, no fused BN) + BN1 batch statistics ----------------
    xp = jnp.pad(x, ((0, 0), (1, 1), (1, 1), (1, 1), (0, Cpi - Cin)))
    w1 = _pack_weight(params["w1"], Cpi, Cpo)
    b1 = _pad_channels_1d(params["b1"], Cpo)[None, :]
    one = jnp.ones((1, Cpi), jnp.float32)
    zero = jnp.zeros((1, Cpi), jnp.float32)
    y1, s1, q1 = _fused_conv_bn_stats(xp, w1, b1, one, zero, mask1,
                                      D=D, H=H, W=W, apply_bn_relu=False)

    scale1, shift1 = _bn_scale_shift(
        s1, q1, _pad_channels_1d(params["g1"], Cpo),
        _pad_channels_1d(params["be1"], Cpo), count, eps)

    # ---- conv2 with BN1 + ReLU fused into its input path + BN2 statistics -----
    y1p = jnp.pad(y1, ((0, 0), (1, 1), (1, 1), (1, 1), (0, 0)))
    w2 = _pack_weight(params["w2"], Cpo, Cpo)
    b2 = _pad_channels_1d(params["b2"], Cpo)[None, :]
    y2, s2, q2 = _fused_conv_bn_stats(y1p, w2, b2, scale1[None, :], shift1[None, :],
                                      mask2, D=D, H=H, W=W, apply_bn_relu=True)

    scale2, shift2 = _bn_scale_shift(
        s2, q2, _pad_channels_1d(params["g2"], Cpo),
        _pad_channels_1d(params["be2"], Cpo), count, eps)

    # ---- final BN2 + ReLU: one tiled, lane-dense elementwise pass --------------
    out = _bn_relu_apply(y2, scale2, shift2)
    return out[..., :Cout]


def init_params(key, in_ch, out_ch):
    ks = jax.random.split(key, 8)
    return {
        "w1": jax.random.normal(ks[0], (3, 3, 3, in_ch, out_ch), jnp.float32) * 0.1,
        "b1": jax.random.normal(ks[1], (out_ch,), jnp.float32) * 0.05,
        "g1": 1.0 + 0.1 * jax.random.normal(ks[2], (out_ch,), jnp.float32),
        "be1": 0.05 * jax.random.normal(ks[3], (out_ch,), jnp.float32),
        "w2": jax.random.normal(ks[4], (3, 3, 3, out_ch, out_ch), jnp.float32) * 0.1,
        "b2": jax.random.normal(ks[5], (out_ch,), jnp.float32) * 0.05,
        "g2": 1.0 + 0.1 * jax.random.normal(ks[6], (out_ch,), jnp.float32),
        "be2": 0.05 * jax.random.normal(ks[7], (out_ch,), jnp.float32),
    }


# Pure-JAX f32 reference (same training-mode BN semantics) used as a sanity check.
def _reference_double_conv(x, params, eps=1e-5):
    dn = lax.conv_dimension_numbers(x.shape, params["w1"].shape,
                                    ("NDHWC", "DHWIO", "NDHWC"))

    def conv(v, w, b):
        return lax.conv_general_dilated(v, w, (1, 1, 1), "SAME",
                                        dimension_numbers=dn) + b

    def bn_relu(v, g, b):
        mean = v.mean(axis=(0, 1, 2, 3))
        var = ((v - mean) ** 2).mean(axis=(0, 1, 2, 3))
        return jnp.maximum((v - mean) * lax.rsqrt(var + eps) * g + b, 0.0)

    v = bn_relu(conv(x, params["w1"], params["b1"]), params["g1"], params["be1"])
    v = bn_relu(conv(v, params["w2"], params["b2"]), params["g2"], params["be2"])
    return v


if __name__ == "__main__":
    key = jax.random.PRNGKey(0)
    k_x, k_p = jax.random.split(key)

    N, in_ch, out_ch, D, H, W = 2, 4, 8, 8, 8, 8
    # PyTorch-style NCDHW input, converted to the kernels' NDHWC layout.
    x_ncdhw = jax.random.normal(k_x, (N, in_ch, D, H, W), jnp.float32)
    x = jnp.transpose(x_ncdhw, (0, 2, 3, 4, 1))      # (N, D, H, W, C)

    params = init_params(k_p, in_ch, out_ch)

    out = jax.block_until_ready(double_conv_forward(x, params))
    assert out.shape == (N, D, H, W, out_ch)
    assert bool(jnp.all(jnp.isfinite(out)))

    # Loose check against a pure-JAX f32 reference (kernel matmuls run in bf16).
    ref = _reference_double_conv(x, params)
    err = float(jnp.max(jnp.abs(out - ref)))
    assert err < 0.25, f"max abs err vs reference: {err}"

    print("KERNEL_OK")
</pallas_src>

<mosaic_0001>
module attributes {stable_mosaic.version = 11 : i64} {
  func.func @_conv_plane_kernel(%arg0: i32, %arg1: i32, %arg2: memref<1x1x10x10x128xf32, #tpu.memory_space<vmem>>, %arg3: memref<1x1x10x10x128xf32, #tpu.memory_space<vmem>>, %arg4: memref<1x1x10x10x128xf32, #tpu.memory_space<vmem>>, %arg5: memref<3456x128xbf16, #tpu.memory_space<vmem>>, %arg6: memref<1x128xf32, #tpu.memory_space<vmem>>, %arg7: memref<1x128xf32, #tpu.memory_space<vmem>>, %arg8: memref<1x128xf32, #tpu.memory_space<vmem>>, %arg9: memref<10x10x128xf32, #tpu.memory_space<vmem>>, %arg10: memref<1x1x8x8x128xf32, #tpu.memory_space<vmem>>, %arg11: memref<1x1x1x128xf32, #tpu.memory_space<vmem>>, %arg12: memref<1x1x1x128xf32, #tpu.memory_space<vmem>>) attributes {dimension_semantics = [#tpu.dimension_semantics<parallel>, #tpu.dimension_semantics<parallel>], iteration_bounds = array<i64: 2, 8>, scalar_prefetch = 0 : i64, scratch_operands = 0 : i64, tpu.core_type = #tpu.core_type<tc>, window_params = [{transform_indices = @transform_0, window_bounds = array<i64: 1, 1, 10, 10, 128>}, {transform_indices = @transform_1, window_bounds = array<i64: 1, 1, 10, 10, 128>}, {transform_indices = @transform_2, window_bounds = array<i64: 1, 1, 10, 10, 128>}, {pipeline_mode = #tpu.pipeline_mode<synchronous>, transform_indices = @transform_3, window_bounds = array<i64: 3456, 128>}, {pipeline_mode = #tpu.pipeline_mode<synchronous>, transform_indices = @transform_4, window_bounds = array<i64: 1, 128>}, {pipeline_mode = #tpu.pipeline_mode<synchronous>, transform_indices = @transform_5, window_bounds = array<i64: 1, 128>}, {pipeline_mode = #tpu.pipeline_mode<synchronous>, transform_indices = @transform_6, window_bounds = array<i64: 1, 128>}, {pipeline_mode = #tpu.pipeline_mode<synchronous>, transform_indices = @transform_7, window_bounds = array<i64: 10, 10, 128>}, {transform_indices = @transform_8, window_bounds = array<i64: 1, 1, 8, 8, 128>}, {transform_indices = @transform_9, window_bounds = array<i64: 1, 1, 1, 128>}, {transform_indices = @transform_10, window_bounds = array<i64: 1, 1, 1, 128>}]} {
    %c0 = arith.constant 0 : index
    %c0_0 = arith.constant 0 : index
    %c0_1 = arith.constant 0 : index
    %c0_2 = arith.constant 0 : index
    %c0_3 = arith.constant 0 : index
    %0 = vector.load %arg2[%c0, %c0_0, %c0_1, %c0_2, %c0_3] : memref<1x1x10x10x128xf32, #tpu.memory_space<vmem>>, vector<1x1x10x10x128xf32>
    %1 = vector.shape_cast %0 : vector<1x1x10x10x128xf32> to vector<10x10x128xf32>
    %c0_4 = arith.constant 0 : index
    %c0_5 = arith.constant 0 : index
    %c0_6 = arith.constant 0 : index
    %c0_7 = arith.constant 0 : index
    %c0_8 = arith.constant 0 : index
    %2 = vector.load %arg3[%c0_4, %c0_5, %c0_6, %c0_7, %c0_8] : memref<1x1x10x10x128xf32, #tpu.memory_space<vmem>>, vector<1x1x10x10x128xf32>
    %3 = vector.shape_cast %2 : vector<1x1x10x10x128xf32> to vector<10x10x128xf32>
    %c0_9 = arith.constant 0 : index
    %c0_10 = arith.constant 0 : index
    %c0_11 = arith.constant 0 : index
    %c0_12 = arith.constant 0 : index
    %c0_13 = arith.constant 0 : index
    %4 = vector.load %arg4[%c0_9, %c0_10, %c0_11, %c0_12, %c0_13] : memref<1x1x10x10x128xf32, #tpu.memory_space<vmem>>, vector<1x1x10x10x128xf32>
    %5 = vector.shape_cast %4 : vector<1x1x10x10x128xf32> to vector<10x10x128xf32>
    %6 = vector.extract_strided_slice %1 {offsets = [0, 0, 0], sizes = [8, 8, 128], strides = [1, 1, 1]} : vector<10x10x128xf32> to vector<8x8x128xf32>
    %7 = vector.shape_cast %6 : vector<8x8x128xf32> to vector<64x128xf32>
    %8 = vector.extract_strided_slice %1 {offsets = [0, 1, 0], sizes = [8, 8, 128], strides = [1, 1, 1]} : vector<10x10x128xf32> to vector<8x8x128xf32>
    %9 = vector.shape_cast %8 : vector<8x8x128xf32> to vector<64x128xf32>
    %10 = vector.extract_strided_slice %1 {offsets = [0, 2, 0], sizes = [8, 8, 128], strides = [1, 1, 1]} : vector<10x10x128xf32> to vector<8x8x128xf32>
    %11 = vector.shape_cast %10 : vector<8x8x128xf32> to vector<64x128xf32>
    %12 = vector.extract_strided_slice %1 {offsets = [1, 0, 0], sizes = [8, 8, 128], strides = [1, 1, 1]} : vector<10x10x128xf32> to vector<8x8x128xf32>
    %13 = vector.shape_cast %12 : vector<8x8x128xf32> to vector<64x128xf32>
    %14 = vector.extract_strided_slice %1 {offsets = [1, 1, 0], sizes = [8, 8, 128], strides = [1, 1, 1]} : vector<10x10x128xf32> to vector<8x8x128xf32>
    %15 = vector.shape_cast %14 : vector<8x8x128xf32> to vector<64x128xf32>
    %16 = vector.extract_strided_slice %1 {offsets = [1, 2, 0], sizes = [8, 8, 128], strides = [1, 1, 1]} : vector<10x10x128xf32> to vector<8x8x128xf32>
    %17 = vector.shape_cast %16 : vector<8x8x128xf32> to vector<64x128xf32>
    %18 = vector.extract_strided_slice %1 {offsets = [2, 0, 0], sizes = [8, 8, 128], strides = [1, 1, 1]} : vector<10x10x128xf32> to vector<8x8x128xf32>
    %19 = vector.shape_cast %18 : vector<8x8x128xf32> to vector<64x128xf32>
    %20 = vector.extract_strided_slice %1 {offsets = [2, 1, 0], sizes = [8, 8, 128], strides = [1, 1, 1]} : vector<10x10x128xf32> to vector<8x8x128xf32>
    %21 = vector.shape_cast %20 : vector<8x8x128xf32> to vector<64x128xf32>
    %22 = vector.extract_strided_slice %1 {offsets = [2, 2, 0], sizes = [8, 8, 128], strides = [1, 1, 1]} : vector<10x10x128xf32> to vector<8x8x128xf32>
    %23 = vector.shape_cast %22 : vector<8x8x128xf32> to vector<64x128xf32>
    %24 = vector.extract_strided_slice %3 {offsets = [0, 0, 0], sizes = [8, 8, 128], strides = [1, 1, 1]} : vector<10x10x128xf32> to vector<8x8x128xf32>
    %25 = vector.shape_cast %24 : vector<8x8x128xf32> to vector<64x128xf32>
    %26 = vector.extract_strided_slice %3 {offsets = [0, 1, 0], sizes = [8, 8, 128], strides = [1, 1, 1]} : vector<10x10x128xf32> to vector<8x8x128xf32>
    %27 = vector.shape_cast %26 : vector<8x8x128xf32> to vector<64x128xf32>
    %28 = vector.extract_strided_slice %3 {offsets = [0, 2, 0], sizes = [8, 8, 128], strides = [1, 1, 1]} : vector<10x10x128xf32> to vector<8x8x128xf32>
    %29 = vector.shape_cast %28 : vector<8x8x128xf32> to vector<64x128xf32>
    %30 = vector.extract_strided_slice %3 {offsets = [1, 0, 0], sizes = [8, 8, 128], strides = [1, 1, 1]} : vector<10x10x128xf32> to vector<8x8x128xf32>
    %31 = vector.shape_cast %30 : vector<8x8x128xf32> to vector<64x128xf32>
    %32 = vector.extract_strided_slice %3 {offsets = [1, 1, 0], sizes = [8, 8, 128], strides = [1, 1, 1]} : vector<10x10x128xf32> to vector<8x8x128xf32>
    %33 = vector.shape_cast %32 : vector<8x8x128xf32> to vector<64x128xf32>
    %34 = vector.extract_strided_slice %3 {offsets = [1, 2, 0], sizes = [8, 8, 128], strides = [1, 1, 1]} : vector<10x10x128xf32> to vector<8x8x128xf32>
    %35 = vector.shape_cast %34 : vector<8x8x128xf32> to vector<64x128xf32>
    %36 = vector.extract_strided_slice %3 {offsets = [2, 0, 0], sizes = [8, 8, 128], strides = [1, 1, 1]} : vector<10x10x128xf32> to vector<8x8x128xf32>
    %37 = vector.shape_cast %36 : vector<8x8x128xf32> to vector<64x128xf32>
    %38 = vector.extract_strided_slice %3 {offsets = [2, 1, 0], sizes = [8, 8, 128], strides = [1, 1, 1]} : vector<10x10x128xf32> to vector<8x8x128xf32>
    %39 = vector.shape_cast %38 : vector<8x8x128xf32> to vector<64x128xf32>
    %40 = vector.extract_strided_slice %3 {offsets = [2, 2, 0], sizes = [8, 8, 128], strides = [1, 1, 1]} : vector<10x10x128xf32> to vector<8x8x128xf32>
    %41 = vector.shape_cast %40 : vector<8x8x128xf32> to vector<64x128xf32>
    %42 = vector.extract_strided_slice %5 {offsets = [0, 0, 0], sizes = [8, 8, 128], strides = [1, 1, 1]} : vector<10x10x128xf32> to vector<8x8x128xf32>
    %43 = vector.shape_cast %42 : vector<8x8x128xf32> to vector<64x128xf32>
    %44 = vector.extract_strided_slice %5 {offsets = [0, 1, 0], sizes = [8, 8, 128], strides = [1, 1, 1]} : vector<10x10x128xf32> to vector<8x8x128xf32>
    %45 = vector.shape_cast %44 : vector<8x8x128xf32> to vector<64x128xf32>
    %46 = vector.extract_strided_slice %5 {offsets = [0, 2, 0], sizes = [8, 8, 128], strides = [1, 1, 1]} : vector<10x10x128xf32> to vector<8x8x128xf32>
    %47 = vector.shape_cast %46 : vector<8x8x128xf32> to vector<64x128xf32>
    %48 = vector.extract_strided_slice %5 {offsets = [1, 0, 0], sizes = [8, 8, 128], strides = [1, 1, 1]} : vector<10x10x128xf32> to vector<8x8x128xf32>
    %49 = vector.shape_cast %48 : vector<8x8x128xf32> to vector<64x128xf32>
    %50 = vector.extract_strided_slice %5 {offsets = [1, 1, 0], sizes = [8, 8, 128], strides = [1, 1, 1]} : vector<10x10x128xf32> to vector<8x8x128xf32>
    %51 = vector.shape_cast %50 : vector<8x8x128xf32> to vector<64x128xf32>
    %52 = vector.extract_strided_slice %5 {offsets = [1, 2, 0], sizes = [8, 8, 128], strides = [1, 1, 1]} : vector<10x10x128xf32> to vector<8x8x128xf32>
    %53 = vector.shape_cast %52 : vector<8x8x128xf32> to vector<64x128xf32>
    %54 = vector.extract_strided_slice %5 {offsets = [2, 0, 0], sizes = [8, 8, 128], strides = [1, 1, 1]} : vector<10x10x128xf32> to vector<8x8x128xf32>
    %55 = vector.shape_cast %54 : vector<8x8x128xf32> to vector<64x128xf32>
    %56 = vector.extract_strided_slice %5 {offsets = [2, 1, 0], sizes = [8, 8, 128], strides = [1, 1, 1]} : vector<10x10x128xf32> to vector<8x8x128xf32>
    %57 = vector.shape_cast %56 : vector<8x8x128xf32> to vector<64x128xf32>
    %58 = vector.extract_strided_slice %5 {offsets = [2, 2, 0], sizes = [8, 8, 128], strides = [1, 1, 1]} : vector<10x10x128xf32> to vector<8x8x128xf32>
    %59 = vector.shape_cast %58 : vector<8x8x128xf32> to vector<64x128xf32>
    %60 = tpu.concatenate %7, %9, %11, %13, %15, %17, %19, %21, %23, %25, %27, %29, %31, %33, %35, %37 in 1 : vector<64x128xf32>, vector<64x128xf32>, vector<64x128xf32>, vector<64x128xf32>, vector<64x128xf32>, vector<64x128xf32>, vector<64x128xf32>, vector<64x128xf32>, vector<64x128xf32>, vector<64x128xf32>, vector<64x128xf32>, vector<64x128xf32>, vector<64x128xf32>, vector<64x128xf32>, vector<64x128xf32>, vector<64x128xf32> -> vector<64x2048xf32>
    %61 = tpu.concatenate %39, %41, %43, %45, %47, %49, %51, %53, %55, %57, %59 in 1 : vector<64x128xf32>, vector<64x128xf32>, vector<64x128xf32>, vector<64x128xf32>, vector<64x128xf32>, vector<64x128xf32>, vector<64x128xf32>, vector<64x128xf32>, vector<64x128xf32>, vector<64x128xf32>, vector<64x128xf32> -> vector<64x1408xf32>
    %62 = tpu.concatenate %60, %61 in 1 : vector<64x2048xf32>, vector<64x1408xf32> -> vector<64x3456xf32>
    %63 = arith.truncf %62 : vector<64x3456xf32> to vector<64x3456xbf16>
    %c0_14 = arith.constant 0 : index
    %c0_15 = arith.constant 0 : index
    %64 = vector.load %arg5[%c0_14, %c0_15] : memref<3456x128xbf16, #tpu.memory_space<vmem>>, vector<3456x128xbf16>
    %cst = arith.constant dense<0.000000e+00> : vector<64x128xf32>
    %65 = tpu.matmul %63, %64, %cst {dimension_numbers = #tpu.dot_dimension_numbers<[1], [0], [0], [1], [0, 0, 1, 1], [], []>} : vector<64x3456xbf16>, vector<3456x128xbf16>, vector<64x128xf32> -> vector<64x128xf32>
    %c0_16 = arith.constant 0 : index
    %c0_17 = arith.constant 0 : index
    %66 = vector.load %arg6[%c0_16, %c0_17] : memref<1x128xf32, #tpu.memory_space<vmem>>, vector<1x128xf32>
    %67 = vector.broadcast %66 : vector<1x128xf32> to vector<64x128xf32>
    %68 = arith.addf %65, %67 : vector<64x128xf32>
    %69 = vector.shape_cast %68 : vector<64x128xf32> to vector<1x1x8x8x128xf32>
    %c0_18 = arith.constant 0 : index
    %c0_19 = arith.constant 0 : index
    %c0_20 = arith.constant 0 : index
    %c0_21 = arith.constant 0 : index
    %c0_22 = arith.constant 0 : index
    %70 = vector.load %arg10[%c0_18, %c0_19, %c0_20, %c0_21, %c0_22] : memref<1x1x8x8x128xf32, #tpu.memory_space<vmem>>, vector<1x1x8x8x128xf32>
    tpu.vector_store %arg10[%c0_18, %c0_19, %c0_20, %c0_21, %c0_22], %69 {strides = array<i32>} : memref<1x1x8x8x128xf32, #tpu.memory_space<vmem>>, vector<1x1x8x8x128xf32>,
    %cst_23 = arith.constant dense<0.000000e+00> : vector<128xf32>
    %71 = vector.multi_reduction <add>, %68, %cst_23 [0] : vector<64x128xf32> to vector<128xf32>
    %72 = vector.shape_cast %71 : vector<128xf32> to vector<1x128xf32>
    %73 = vector.shape_cast %72 : vector<1x128xf32> to vector<1x1x1x128xf32>
    %c0_24 = arith.constant 0 : index
    %c0_25 = arith.constant 0 : index
    %c0_26 = arith.constant 0 : index
    %c0_27 = arith.constant 0 : index
    %74 = vector.load %arg11[%c0_24, %c0_25, %c0_26, %c0_27] : memref<1x1x1x128xf32, #tpu.memory_space<vmem>>, vector<1x1x1x128xf32>
    tpu.vector_store %arg11[%c0_24, %c0_25, %c0_26, %c0_27], %73 {strides = array<i32>} : memref<1x1x1x128xf32, #tpu.memory_space<vmem>>, vector<1x1x1x128xf32>,
    %75 = arith.mulf %68, %68 : vector<64x128xf32>
    %cst_28 = arith.constant dense<0.000000e+00> : vector<128xf32>
    %76 = vector.multi_reduction <add>, %75, %cst_28 [0] : vector<64x128xf32> to vector<128xf32>
    %77 = vector.shape_cast %76 : vector<128xf32> to vector<1x128xf32>
    %78 = vector.shape_cast %77 : vector<1x128xf32> to vector<1x1x1x128xf32>
    %c0_29 = arith.constant 0 : index
    %c0_30 = arith.constant 0 : index
    %c0_31 = arith.constant 0 : index
    %c0_32 = arith.constant 0 : index
    %79 = vector.load %arg12[%c0_29, %c0_30, %c0_31, %c0_32] : memref<1x1x1x128xf32, #tpu.memory_space<vmem>>, vector<1x1x1x128xf32>
    tpu.vector_store %arg12[%c0_29, %c0_30, %c0_31, %c0_32], %78 {strides = array<i32>} : memref<1x1x1x128xf32, #tpu.memory_space<vmem>>, vector<1x1x1x128xf32>,
    return
  }
  func.func @transform_0(%arg0: i32, %arg1: i32) -> (i32, i32, i32, i32, i32) {
    %c0_i32 = arith.constant 0 : i32
    %c0_i32_0 = arith.constant 0 : i32
    %c0_i32_1 = arith.constant 0 : i32
    %c0_i32_2 = arith.constant 0 : i32
    return %arg0, %arg1, %c0_i32, %c0_i32_0, %c0_i32_1 : i32, i32, i32, i32, i32
  }
  func.func @transform_1(%arg0: i32, %arg1: i32) -> (i32, i32, i32, i32, i32) {
    %c1_i32 = arith.constant 1 : i32
    %0 = arith.addi %arg1, %c1_i32 : i32
    %c0_i32 = arith.constant 0 : i32
    %c0_i32_0 = arith.constant 0 : i32
    %c0_i32_1 = arith.constant 0 : i32
    %c0_i32_2 = arith.constant 0 : i32
    return %arg0, %0, %c0_i32, %c0_i32_0, %c0_i32_1 : i32, i32, i32, i32, i32
  }
  func.func @transform_2(%arg0: i32, %arg1: i32) -> (i32, i32, i32, i32, i32) {
    %c2_i32 = arith.constant 2 : i32
    %0 = arith.addi %arg1, %c2_i32 : i32
    %c0_i32 = arith.constant 0 : i32
    %c0_i32_0 = arith.constant 0 : i32
    %c0_i32_1 = arith.constant 0 : i32
    %c0_i32_2 = arith.constant 0 : i32
    return %arg0, %0, %c0_i32, %c0_i32_0, %c0_i32_1 : i32, i32, i32, i32, i32
  }
  func.func @transform_3(%arg0: i32, %arg1: i32) -> (i32, i32) {
    %c0_i32 = arith.constant 0 : i32
    %c0_i32_0 = arith.constant 0 : i32
    %c0_i32_1 = arith.constant 0 : i32
    return %c0_i32, %c0_i32_0 : i32, i32
  }
  func.func @transform_4(%arg0: i32, %arg1: i32) -> (i32, i32) {
    %c0_i32 = arith.constant 0 : i32
    %c0_i32_0 = arith.constant 0 : i32
    %c0_i32_1 = arith.constant 0 : i32
    return %c0_i32, %c0_i32_0 : i32, i32
  }
  func.func @transform_5(%arg0: i32, %arg1: i32) -> (i32, i32) {
    %c0_i32 = arith.constant 0 : i32
    %c0_i32_0 = arith.constant 0 : i32
    %c0_i32_1 = arith.constant 0 : i32
    return %c0_i32, %c0_i32_0 : i32, i32
  }
  func.func @transform_6(%arg0: i32, %arg1: i32) -> (i32, i32) {
    %c0_i32 = arith.constant 0 : i32
    %c0_i32_0 = arith.constant 0 : i32
    %c0_i32_1 = arith.constant 0 : i32
    return %c0_i32, %c0_i32_0 : i32, i32
  }
  func.func @transform_7(%arg0: i32, %arg1: i32) -> (i32, i32, i32) {
    %c0_i32 = arith.constant 0 : i32
    %c0_i32_0 = arith.constant 0 : i32
    %c0_i32_1 = arith.constant 0 : i32
    %c0_i32_2 = arith.constant 0 : i32
    return %c0_i32, %c0_i32_0, %c0_i32_1 : i32, i32, i32
  }
  func.func @transform_8(%arg0: i32, %arg1: i32) -> (i32, i32, i32, i32, i32) {
    %c0_i32 = arith.constant 0 : i32
    %c0_i32_0 = arith.constant 0 : i32
    %c0_i32_1 = arith.constant 0 : i32
    %c0_i32_2 = arith.constant 0 : i32
    return %arg0, %arg1, %c0_i32, %c0_i32_0, %c0_i32_1 : i32, i32, i32, i32, i32
  }
  func.func @transform_9(%arg0: i32, %arg1: i32) -> (i32, i32, i32, i32) {
    %c0_i32 = arith.constant 0 : i32
    %c0_i32_0 = arith.constant 0 : i32
    %c0_i32_1 = arith.constant 0 : i32
    return %arg0, %arg1, %c0_i32, %c0_i32_0 : i32, i32, i32, i32
  }
  func.func @transform_10(%arg0: i32, %arg1: i32) -> (i32, i32, i32, i32) {
    %c0_i32 = arith.constant 0 : i32
    %c0_i32_0 = arith.constant 0 : i32
    %c0_i32_1 = arith.constant 0 : i32
    return %arg0, %arg1, %c0_i32, %c0_i32_0 : i32, i32, i32, i32
  }
}

module attributes {stable_mosaic.version = 11 : i64} {
  func.func @_bn_relu_kernel(%arg0: i32, %arg1: memref<1x64x128xf32, #tpu.memory_space<vmem>>, %arg2: memref<1x128xf32, #tpu.memory_space<vmem>>, %arg3: memref<1x128xf32, #tpu.memory_space<vmem>>, %arg4: memref<1x64x128xf32, #tpu.memory_space<vmem>>) attributes {dimension_semantics = [#tpu.dimension_semantics<parallel>], iteration_bounds = array<i64: 16>, scalar_prefetch = 0 : i64, scratch_operands = 0 : i64, tpu.core_type = #tpu.core_type<tc>, window_params = [{transform_indices = @transform_0, window_bounds = array<i64: 1, 64, 128>}, {pipeline_mode = #tpu.pipeline_mode<synchronous>, transform_indices = @transform_1, window_bounds = array<i64: 1, 128>}, {pipeline_mode = #tpu.pipeline_mode<synchronous>, transform_indices = @transform_2, window_bounds = array<i64: 1, 128>}, {transform_indices = @transform_3, window_bounds = array<i64: 1, 64, 128>}]} {
    %c0 = arith.constant 0 : index
    %c0_0 = arith.constant 0 : index
    %c0_1 = arith.constant 0 : index
    %0 = vector.load %arg1[%c0, %c0_0, %c0_1] : memref<1x64x128xf32, #tpu.memory_space<vmem>>, vector<1x64x128xf32>
    %c0_2 = arith.constant 0 : index
    %c0_3 = arith.constant 0 : index
    %1 = vector.load %arg2[%c0_2, %c0_3] : memref<1x128xf32, #tpu.memory_space<vmem>>, vector<1x128xf32>
    %2 = vector.shape_cast %1 : vector<1x128xf32> to vector<1x1x128xf32>
    %3 = vector.broadcast %2 : vector<1x1x128xf32> to vector<1x64x128xf32>
    %4 = arith.mulf %0, %3 : vector<1x64x128xf32>
    %c0_4 = arith.constant 0 : index
    %c0_5 = arith.constant 0 : index
    %5 = vector.load %arg3[%c0_4, %c0_5] : memref<1x128xf32, #tpu.memory_space<vmem>>, vector<1x128xf32>
    %6 = vector.shape_cast %5 : vector<1x128xf32> to vector<1x1x128xf32>
    %7 = vector.broadcast %6 : vector<1x1x128xf32> to vector<1x64x128xf32>
    %8 = arith.addf %4, %7 : vector<1x64x128xf32>
    %cst = arith.constant 0.000000e+00 : f32
    %9 = vector.broadcast %cst : f32 to vector<1x64x128xf32>
    %10 = arith.maximumf %8, %9 : vector<1x64x128xf32>
    %c0_6 = arith.constant 0 : index
    %c0_7 = arith.constant 0 : index
    %c0_8 = arith.constant 0 : index
    %11 = vector.load %arg4[%c0_6, %c0_7, %c0_8] : memref<1x64x128xf32, #tpu.memory_space<vmem>>, vector<1x64x128xf32>
    tpu.vector_store %arg4[%c0_6, %c0_7, %c0_8], %10 {strides = array<i32>} : memref<1x64x128xf32, #tpu.memory_space<vmem>>, vector<1x64x128xf32>,
    return
  }
  func.func @transform_0(%arg0: i32) -> (i32, i32, i32) {
    %c0_i32 = arith.constant 0 : i32
    %c0_i32_0 = arith.constant 0 : i32
    %c0_i32_1 = arith.constant 0 : i32
    return %arg0, %c0_i32, %c0_i32_0 : i32, i32, i32
  }
  func.func @transform_1(%arg0: i32) -> (i32, i32) {
    %c0_i32 = arith.constant 0 : i32
    %c0_i32_0 = arith.constant 0 : i32
    %c0_i32_1 = arith.constant 0 : i32
    return %c0_i32, %c0_i32_0 : i32, i32
  }
  func.func @transform_2(%arg0: i32) -> (i32, i32) {
    %c0_i32 = arith.constant 0 : i32
    %c0_i32_0 = arith.constant 0 : i32
    %c0_i32_1 = arith.constant 0 : i32
    return %c0_i32, %c0_i32_0 : i32, i32
  }
  func.func @transform_3(%arg0: i32) -> (i32, i32, i32) {
    %c0_i32 = arith.constant 0 : i32
    %c0_i32_0 = arith.constant 0 : i32
    %c0_i32_1 = arith.constant 0 : i32
    return %arg0, %c0_i32, %c0_i32_0 : i32, i32, i32
  }
}

module attributes {stable_mosaic.version = 11 : i64} {
  func.func @_conv_plane_kernel(%arg0: i32, %arg1: i32, %arg2: memref<1x1x10x10x128xf32, #tpu.memory_space<vmem>>, %arg3: memref<1x1x10x10x128xf32, #tpu.memory_space<vmem>>, %arg4: memref<1x1x10x10x128xf32, #tpu.memory_space<vmem>>, %arg5: memref<3456x128xbf16, #tpu.memory_space<vmem>>, %arg6: memref<1x128xf32, #tpu.memory_space<vmem>>, %arg7: memref<1x128xf32, #tpu.memory_space<vmem>>, %arg8: memref<1x128xf32, #tpu.memory_space<vmem>>, %arg9: memref<10x10x128xf32, #tpu.memory_space<vmem>>, %arg10: memref<1x1x8x8x128xf32, #tpu.memory_space<vmem>>, %arg11: memref<1x1x1x128xf32, #tpu.memory_space<vmem>>, %arg12: memref<1x1x1x128xf32, #tpu.memory_space<vmem>>) attributes {dimension_semantics = [#tpu.dimension_semantics<parallel>, #tpu.dimension_semantics<parallel>], iteration_bounds = array<i64: 2, 8>, scalar_prefetch = 0 : i64, scratch_operands = 0 : i64, tpu.core_type = #tpu.core_type<tc>, window_params = [{transform_indices = @transform_0, window_bounds = array<i64: 1, 1, 10, 10, 128>}, {transform_indices = @transform_1, window_bounds = array<i64: 1, 1, 10, 10, 128>}, {transform_indices = @transform_2, window_bounds = array<i64: 1, 1, 10, 10, 128>}, {pipeline_mode = #tpu.pipeline_mode<synchronous>, transform_indices = @transform_3, window_bounds = array<i64: 3456, 128>}, {pipeline_mode = #tpu.pipeline_mode<synchronous>, transform_indices = @transform_4, window_bounds = array<i64: 1, 128>}, {pipeline_mode = #tpu.pipeline_mode<synchronous>, transform_indices = @transform_5, window_bounds = array<i64: 1, 128>}, {pipeline_mode = #tpu.pipeline_mode<synchronous>, transform_indices = @transform_6, window_bounds = array<i64: 1, 128>}, {pipeline_mode = #tpu.pipeline_mode<synchronous>, transform_indices = @transform_7, window_bounds = array<i64: 10, 10, 128>}, {transform_indices = @transform_8, window_bounds = array<i64: 1, 1, 8, 8, 128>}, {transform_indices = @transform_9, window_bounds = array<i64: 1, 1, 1, 128>}, {transform_indices = @transform_10, window_bounds = array<i64: 1, 1, 1, 128>}]} {
    %c0 = arith.constant 0 : index
    %c0_0 = arith.constant 0 : index
    %c0_1 = arith.constant 0 : index
    %0 = vector.load %arg9[%c0, %c0_0, %c0_1] : memref<10x10x128xf32, #tpu.memory_space<vmem>>, vector<10x10x128xf32>
    %c0_2 = arith.constant 0 : index
    %c0_3 = arith.constant 0 : index
    %1 = vector.load %arg7[%c0_2, %c0_3] : memref<1x128xf32, #tpu.memory_space<vmem>>, vector<1x128xf32>
    %c0_4 = arith.constant 0 : index
    %c0_5 = arith.constant 0 : index
    %2 = vector.load %arg8[%c0_4, %c0_5] : memref<1x128xf32, #tpu.memory_space<vmem>>, vector<1x128xf32>
    %c0_6 = arith.constant 0 : index
    %c0_7 = arith.constant 0 : index
    %c0_8 = arith.constant 0 : index
    %c0_9 = arith.constant 0 : index
    %c0_10 = arith.constant 0 : index
    %3 = vector.load %arg2[%c0_6, %c0_7, %c0_8, %c0_9, %c0_10] : memref<1x1x10x10x128xf32, #tpu.memory_space<vmem>>, vector<1x1x10x10x128xf32>
    %4 = vector.shape_cast %3 : vector<1x1x10x10x128xf32> to vector<10x10x128xf32>
    %c0_i32 = arith.constant 0 : i32
    %5 = arith.addi %arg1, %c0_i32 : i32
    %c1_i32 = arith.constant 1 : i32
    %6 = arith.cmpi sge, %5, %c1_i32 : i32
    %c8_i32 = arith.constant 8 : i32
    %7 = arith.cmpi sle, %5, %c8_i32 : i32
    %8 = arith.andi %6, %7 : i1
    %9 = arith.extui %8 : i1 to i32
    %10 = arith.sitofp %9 : i32 to f32
    %11 = vector.shape_cast %1 : vector<1x128xf32> to vector<1x1x128xf32>
    %12 = vector.broadcast %11 : vector<1x1x128xf32> to vector<10x10x128xf32>
    %13 = arith.mulf %4, %12 : vector<10x10x128xf32>
    %14 = vector.shape_cast %2 : vector<1x128xf32> to vector<1x1x128xf32>
    %15 = vector.broadcast %14 : vector<1x1x128xf32> to vector<10x10x128xf32>
    %16 = arith.addf %13, %15 : vector<10x10x128xf32>
    %cst = arith.constant 0.000000e+00 : f32
    %17 = vector.broadcast %cst : f32 to vector<10x10x128xf32>
    %18 = arith.maximumf %16, %17 : vector<10x10x128xf32>
    %19 = arith.mulf %18, %0 : vector<10x10x128xf32>
    %20 = vector.broadcast %10 : f32 to vector<10x10x128xf32>
    %21 = arith.mulf %19, %20 : vector<10x10x128xf32>
    %c0_11 = arith.constant 0 : index
    %c0_12 = arith.constant 0 : index
    %c0_13 = arith.constant 0 : index
    %c0_14 = arith.constant 0 : index
    %c0_15 = arith.constant 0 : index
    %22 = vector.load %arg3[%c0_11, %c0_12, %c0_13, %c0_14, %c0_15] : memref<1x1x10x10x128xf32, #tpu.memory_space<vmem>>, vector<1x1x10x10x128xf32>
    %23 = vector.shape_cast %22 : vector<1x1x10x10x128xf32> to vector<10x10x128xf32>
    %c1_i32_16 = arith.constant 1 : i32
    %24 = arith.addi %arg1, %c1_i32_16 : i32
    %c1_i32_17 = arith.constant 1 : i32
    %25 = arith.cmpi sge, %24, %c1_i32_17 : i32
    %c8_i32_18 = arith.constant 8 : i32
    %26 = arith.cmpi sle, %24, %c8_i32_18 : i32
    %27 = arith.andi %25, %26 : i1
    %28 = arith.extui %27 : i1 to i32
    %29 = arith.sitofp %28 : i32 to f32
    %30 = vector.shape_cast %1 : vector<1x128xf32> to vector<1x1x128xf32>
    %31 = vector.broadcast %30 : vector<1x1x128xf32> to vector<10x10x128xf32>
    %32 = arith.mulf %23, %31 : vector<10x10x128xf32>
    %33 = vector.shape_cast %2 : vector<1x128xf32> to vector<1x1x128xf32>
    %34 = vector.broadcast %33 : vector<1x1x128xf32> to vector<10x10x128xf32>
    %35 = arith.addf %32, %34 : vector<10x10x128xf32>
    %cst_19 = arith.constant 0.000000e+00 : f32
    %36 = vector.broadcast %cst_19 : f32 to vector<10x10x128xf32>
    %37 = arith.maximumf %35, %36 : vector<10x10x128xf32>
    %38 = arith.mulf %37, %0 : vector<10x10x128xf32>
    %39 = vector.broadcast %29 : f32 to vector<10x10x128xf32>
    %40 = arith.mulf %38, %39 : vector<10x10x128xf32>
    %c0_20 = arith.constant 0 : index
    %c0_21 = arith.constant 0 : index
    %c0_22 = arith.constant 0 : index
    %c0_23 = arith.constant 0 : index
    %c0_24 = arith.constant 0 : index
    %41 = vector.load %arg4[%c0_20, %c0_21, %c0_22, %c0_23, %c0_24] : memref<1x1x10x10x128xf32, #tpu.memory_space<vmem>>, vector<1x1x10x10x128xf32>
    %42 = vector.shape_cast %41 : vector<1x1x10x10x128xf32> to vector<10x10x128xf32>
    %c2_i32 = arith.constant 2 : i32
    %43 = arith.addi %arg1, %c2_i32 : i32
    %c1_i32_25 = arith.constant 1 : i32
    %44 = arith.cmpi sge, %43, %c1_i32_25 : i32
    %c8_i32_26 = arith.constant 8 : i32
    %45 = arith.cmpi sle, %43, %c8_i32_26 : i32
    %46 = arith.andi %44, %45 : i1
    %47 = arith.extui %46 : i1 to i32
    %48 = arith.sitofp %47 : i32 to f32
    %49 = vector.shape_cast %1 : vector<1x128xf32> to vector<1x1x128xf32>
    %50 = vector.broadcast %49 : vector<1x1x128xf32> to vector<10x10x128xf32>
    %51 = arith.mulf %42, %50 : vector<10x10x128xf32>
    %52 = vector.shape_cast %2 : vector<1x128xf32> to vector<1x1x128xf32>
    %53 = vector.broadcast %52 : vector<1x1x128xf32> to vector<10x10x128xf32>
    %54 = arith.addf %51, %53 : vector<10x10x128xf32>
    %cst_27 = arith.constant 0.000000e+00 : f32
    %55 = vector.broadcast %cst_27 : f32 to vector<10x10x128xf32>
    %56 = arith.maximumf %54, %55 : vector<10x10x128xf32>
    %57 = arith.mulf %56, %0 : vector<10x10x128xf32>
    %58 = vector.broadcast %48 : f32 to vector<10x10x128xf32>
    %59 = arith.mulf %57, %58 : vector<10x10x128xf32>
    %60 = vector.extract_strided_slice %21 {offsets = [0, 0, 0], sizes = [8, 8, 128], strides = [1, 1, 1]} : vector<10x10x128xf32> to vector<8x8x128xf32>
    %61 = vector.shape_cast %60 : vector<8x8x128xf32> to vector<64x128xf32>
    %62 = vector.extract_strided_slice %21 {offsets = [0, 1, 0], sizes = [8, 8, 128], strides = [1, 1, 1]} : vector<10x10x128xf32> to vector<8x8x128xf32>
    %63 = vector.shape_cast %62 : vector<8x8x128xf32> to vector<64x128xf32>
    %64 = vector.extract_strided_slice %21 {offsets = [0, 2, 0], sizes = [8, 8, 128], strides = [1, 1, 1]} : vector<10x10x128xf32> to vector<8x8x128xf32>
    %65 = vector.shape_cast %64 : vector<8x8x128xf32> to vector<64x128xf32>
    %66 = vector.extract_strided_slice %21 {offsets = [1, 0, 0], sizes = [8, 8, 128], strides = [1, 1, 1]} : vector<10x10x128xf32> to vector<8x8x128xf32>
    %67 = vector.shape_cast %66 : vector<8x8x128xf32> to vector<64x128xf32>
    %68 = vector.extract_strided_slice %21 {offsets = [1, 1, 0], sizes = [8, 8, 128], strides = [1, 1, 1]} : vector<10x10x128xf32> to vector<8x8x128xf32>
    %69 = vector.shape_cast %68 : vector<8x8x128xf32> to vector<64x128xf32>
    %70 = vector.extract_strided_slice %21 {offsets = [1, 2, 0], sizes = [8, 8, 128], strides = [1, 1, 1]} : vector<10x10x128xf32> to vector<8x8x128xf32>
    %71 = vector.shape_cast %70 : vector<8x8x128xf32> to vector<64x128xf32>
    %72 = vector.extract_strided_slice %21 {offsets = [2, 0, 0], sizes = [8, 8, 128], strides = [1, 1, 1]} : vector<10x10x128xf32> to vector<8x8x128xf32>
    %73 = vector.shape_cast %72 : vector<8x8x128xf32> to vector<64x128xf32>
    %74 = vector.extract_strided_slice %21 {offsets = [2, 1, 0], sizes = [8, 8, 128], strides = [1, 1, 1]} : vector<10x10x128xf32> to vector<8x8x128xf32>
    %75 = vector.shape_cast %74 : vector<8x8x128xf32> to vector<64x128xf32>
    %76 = vector.extract_strided_slice %21 {offsets = [2, 2, 0], sizes = [8, 8, 128], strides = [1, 1, 1]} : vector<10x10x128xf32> to vector<8x8x128xf32>
    %77 = vector.shape_cast %76 : vector<8x8x128xf32> to vector<64x128xf32>
    %78 = vector.extract_strided_slice %40 {offsets = [0, 0, 0], sizes = [8, 8, 128], strides = [1, 1, 1]} : vector<10x10x128xf32> to vector<8x8x128xf32>
    %79 = vector.shape_cast %78 : vector<8x8x128xf32> to vector<64x128xf32>
    %80 = vector.extract_strided_slice %40 {offsets = [0, 1, 0], sizes = [8, 8, 128], strides = [1, 1, 1]} : vector<10x10x128xf32> to vector<8x8x128xf32>
    %81 = vector.shape_cast %80 : vector<8x8x128xf32> to vector<64x128xf32>
    %82 = vector.extract_strided_slice %40 {offsets = [0, 2, 0], sizes = [8, 8, 128], strides = [1, 1, 1]} : vector<10x10x128xf32> to vector<8x8x128xf32>
    %83 = vector.shape_cast %82 : vector<8x8x128xf32> to vector<64x128xf32>
    %84 = vector.extract_strided_slice %40 {offsets = [1, 0, 0], sizes = [8, 8, 128], strides = [1, 1, 1]} : vector<10x10x128xf32> to vector<8x8x128xf32>
    %85 = vector.shape_cast %84 : vector<8x8x128xf32> to vector<64x128xf32>
    %86 = vector.extract_strided_slice %40 {offsets = [1, 1, 0], sizes = [8, 8, 128], strides = [1, 1, 1]} : vector<10x10x128xf32> to vector<8x8x128xf32>
    %87 = vector.shape_cast %86 : vector<8x8x128xf32> to vector<64x128xf32>
    %88 = vector.extract_strided_slice %40 {offsets = [1, 2, 0], sizes = [8, 8, 128], strides = [1, 1, 1]} : vector<10x10x128xf32> to vector<8x8x128xf32>
    %89 = vector.shape_cast %88 : vector<8x8x128xf32> to vector<64x128xf32>
    %90 = vector.extract_strided_slice %40 {offsets = [2, 0, 0], sizes = [8, 8, 128], strides = [1, 1, 1]} : vector<10x10x128xf32> to vector<8x8x128xf32>
    %91 = vector.shape_cast %90 : vector<8x8x128xf32> to vector<64x128xf32>
    %92 = vector.extract_strided_slice %40 {offsets = [2, 1, 0], sizes = [8, 8, 128], strides = [1, 1, 1]} : vector<10x10x128xf32> to vector<8x8x128xf32>
    %93 = vector.shape_cast %92 : vector<8x8x128xf32> to vector<64x128xf32>
    %94 = vector.extract_strided_slice %40 {offsets = [2, 2, 0], sizes = [8, 8, 128], strides = [1, 1, 1]} : vector<10x10x128xf32> to vector<8x8x128xf32>
    %95 = vector.shape_cast %94 : vector<8x8x128xf32> to vector<64x128xf32>
    %96 = vector.extract_strided_slice %59 {offsets = [0, 0, 0], sizes = [8, 8, 128], strides = [1, 1, 1]} : vector<10x10x128xf32> to vector<8x8x128xf32>
    %97 = vector.shape_cast %96 : vector<8x8x128xf32> to vector<64x128xf32>
    %98 = vector.extract_strided_slice %59 {offsets = [0, 1, 0], sizes = [8, 8, 128], strides = [1, 1, 1]} : vector<10x10x128xf32> to vector<8x8x128xf32>
    %99 = vector.shape_cast %98 : vector<8x8x128xf32> to vector<64x128xf32>
    %100 = vector.extract_strided_slice %59 {offsets = [0, 2, 0], sizes = [8, 8, 128], strides = [1, 1, 1]} : vector<10x10x128xf32> to vector<8x8x128xf32>
    %101 = vector.shape_cast %100 : vector<8x8x128xf32> to vector<64x128xf32>
    %102 = vector.extract_strided_slice %59 {offsets = [1, 0, 0], sizes = [8, 8, 128], strides = [1, 1, 1]} : vector<10x10x128xf32> to vector<8x8x128xf32>
    %103 = vector.shape_cast %102 : vector<8x8x128xf32> to vector<64x128xf32>
    %104 = vector.extract_strided_slice %59 {offsets = [1, 1, 0], sizes = [8, 8, 128], strides = [1, 1, 1]} : vector<10x10x128xf32> to vector<8x8x128xf32>
    %105 = vector.shape_cast %104 : vector<8x8x128xf32> to vector<64x128xf32>
    %106 = vector.extract_strided_slice %59 {offsets = [1, 2, 0], sizes = [8, 8, 128], strides = [1, 1, 1]} : vector<10x10x128xf32> to vector<8x8x128xf32>
    %107 = vector.shape_cast %106 : vector<8x8x128xf32> to vector<64x128xf32>
    %108 = vector.extract_strided_slice %59 {offsets = [2, 0, 0], sizes = [8, 8, 128], strides = [1, 1, 1]} : vector<10x10x128xf32> to vector<8x8x128xf32>
    %109 = vector.shape_cast %108 : vector<8x8x128xf32> to vector<64x128xf32>
    %110 = vector.extract_strided_slice %59 {offsets = [2, 1, 0], sizes = [8, 8, 128], strides = [1, 1, 1]} : vector<10x10x128xf32> to vector<8x8x128xf32>
    %111 = vector.shape_cast %110 : vector<8x8x128xf32> to vector<64x128xf32>
    %112 = vector.extract_strided_slice %59 {offsets = [2, 2, 0], sizes = [8, 8, 128], strides = [1, 1, 1]} : vector<10x10x128xf32> to vector<8x8x128xf32>
    %113 = vector.shape_cast %112 : vector<8x8x128xf32> to vector<64x128xf32>
    %114 = tpu.concatenate %61, %63, %65, %67, %69, %71, %73, %75, %77, %79, %81, %83, %85, %87, %89, %91 in 1 : vector<64x128xf32>, vector<64x128xf32>, vector<64x128xf32>, vector<64x128xf32>, vector<64x128xf32>, vector<64x128xf32>, vector<64x128xf32>, vector<64x128xf32>, vector<64x128xf32>, vector<64x128xf32>, vector<64x128xf32>, vector<64x128xf32>, vector<64x128xf32>, vector<64x128xf32>, vector<64x128xf32>, vector<64x128xf32> -> vector<64x2048xf32>
    %115 = tpu.concatenate %93, %95, %97, %99, %101, %103, %105, %107, %109, %111, %113 in 1 : vector<64x128xf32>, vector<64x128xf32>, vector<64x128xf32>, vector<64x128xf32>, vector<64x128xf32>, vector<64x128xf32>, vector<64x128xf32>, vector<64x128xf32>, vector<64x128xf32>, vector<64x128xf32>, vector<64x128xf32> -> vector<64x1408xf32>
    %116 = tpu.concatenate %114, %115 in 1 : vector<64x2048xf32>, vector<64x1408xf32> -> vector<64x3456xf32>
    %117 = arith.truncf %116 : vector<64x3456xf32> to vector<64x3456xbf16>
    %c0_28 = arith.constant 0 : index
    %c0_29 = arith.constant 0 : index
    %118 = vector.load %arg5[%c0_28, %c0_29] : memref<3456x128xbf16, #tpu.memory_space<vmem>>, vector<3456x128xbf16>
    %cst_30 = arith.constant dense<0.000000e+00> : vector<64x128xf32>
    %119 = tpu.matmul %117, %118, %cst_30 {dimension_numbers = #tpu.dot_dimension_numbers<[1], [0], [0], [1], [0, 0, 1, 1], [], []>} : vector<64x3456xbf16>, vector<3456x128xbf16>, vector<64x128xf32> -> vector<64x128xf32>
    %c0_31 = arith.constant 0 : index
    %c0_32 = arith.constant 0 : index
    %120 = vector.load %arg6[%c0_31, %c0_32] : memref<1x128xf32, #tpu.memory_space<vmem>>, vector<1x128xf32>
    %121 = vector.broadcast %120 : vector<1x128xf32> to vector<64x128xf32>
    %122 = arith.addf %119, %121 : vector<64x128xf32>
    %123 = vector.shape_cast %122 : vector<64x128xf32> to vector<1x1x8x8x128xf32>
    %c0_33 = arith.constant 0 : index
    %c0_34 = arith.constant 0 : index
    %c0_35 = arith.constant 0 : index
    %c0_36 = arith.constant 0 : index
    %c0_37 = arith.constant 0 : index
    %124 = vector.load %arg10[%c0_33, %c0_34, %c0_35, %c0_36, %c0_37] : memref<1x1x8x8x128xf32, #tpu.memory_space<vmem>>, vector<1x1x8x8x128xf32>
    tpu.vector_store %arg10[%c0_33, %c0_34, %c0_35, %c0_36, %c0_37], %123 {strides = array<i32>} : memref<1x1x8x8x128xf32, #tpu.memory_space<vmem>>, vector<1x1x8x8x128xf32>,
    %cst_38 = arith.constant dense<0.000000e+00> : vector<128xf32>
    %125 = vector.multi_reduction <add>, %122, %cst_38 [0] : vector<64x128xf32> to vector<128xf32>
    %126 = vector.shape_cast %125 : vector<128xf32> to vector<1x128xf32>
    %127 = vector.shape_cast %126 : vector<1x128xf32> to vector<1x1x1x128xf32>
    %c0_39 = arith.constant 0 : index
    %c0_40 = arith.constant 0 : index
    %c0_41 = arith.constant 0 : index
    %c0_42 = arith.constant 0 : index
    %128 = vector.load %arg11[%c0_39, %c0_40, %c0_41, %c0_42] : memref<1x1x1x128xf32, #tpu.memory_space<vmem>>, vector<1x1x1x128xf32>
    tpu.vector_store %arg11[%c0_39, %c0_40, %c0_41, %c0_42], %127 {strides = array<i32>} : memref<1x1x1x128xf32, #tpu.memory_space<vmem>>, vector<1x1x1x128xf32>,
    %129 = arith.mulf %122, %122 : vector<64x128xf32>
    %cst_43 = arith.constant dense<0.000000e+00> : vector<128xf32>
    %130 = vector.multi_reduction <add>, %129, %cst_43 [0] : vector<64x128xf32> to vector<128xf32>
    %131 = vector.shape_cast %130 : vector<128xf32> to vector<1x128xf32>
    %132 = vector.shape_cast %131 : vector<1x128xf32> to vector<1x1x1x128xf32>
    %c0_44 = arith.constant 0 : index
    %c0_45 = arith.constant 0 : index
    %c0_46 = arith.constant 0 : index
    %c0_47 = arith.constant 0 : index
    %133 = vector.load %arg12[%c0_44, %c0_45, %c0_46, %c0_47] : memref<1x1x1x128xf32, #tpu.memory_space<vmem>>, vector<1x1x1x128xf32>
    tpu.vector_store %arg12[%c0_44, %c0_45, %c0_46, %c0_47], %132 {strides = array<i32>} : memref<1x1x1x128xf32, #tpu.memory_space<vmem>>, vector<1x1x1x128xf32>,
    return
  }
  func.func @transform_0(%arg0: i32, %arg1: i32) -> (i32, i32, i32, i32, i32) {
    %c0_i32 = arith.constant 0 : i32
    %c0_i32_0 = arith.constant 0 : i32
    %c0_i32_1 = arith.constant 0 : i32
    %c0_i32_2 = arith.constant 0 : i32
    return %arg0, %arg1, %c0_i32, %c0_i32_0, %c0_i32_1 : i32, i32, i32, i32, i32
  }
  func.func @transform_1(%arg0: i32, %arg1: i32) -> (i32, i32, i32, i32, i32) {
    %c1_i32 = arith.constant 1 : i32
    %0 = arith.addi %arg1, %c1_i32 : i32
    %c0_i32 = arith.constant 0 : i32
    %c0_i32_0 = arith.constant 0 : i32
    %c0_i32_1 = arith.constant 0 : i32
    %c0_i32_2 = arith.constant 0 : i32
    return %arg0, %0, %c0_i32, %c0_i32_0, %c0_i32_1 : i32, i32, i32, i32, i32
  }
  func.func @transform_2(%arg0: i32, %arg1: i32) -> (i32, i32, i32, i32, i32) {
    %c2_i32 = arith.constant 2 : i32
    %0 = arith.addi %arg1, %c2_i32 : i32
    %c0_i32 = arith.constant 0 : i32
    %c0_i32_0 = arith.constant 0 : i32
    %c0_i32_1 = arith.constant 0 : i32
    %c0_i32_2 = arith.constant 0 : i32
    return %arg0, %0, %c0_i32, %c0_i32_0, %c0_i32_1 : i32, i32, i32, i32, i32
  }
  func.func @transform_3(%arg0: i32, %arg1: i32) -> (i32, i32) {
    %c0_i32 = arith.constant 0 : i32
    %c0_i32_0 = arith.constant 0 : i32
    %c0_i32_1 = arith.constant 0 : i32
    return %c0_i32, %c0_i32_0 : i32, i32
  }
  func.func @transform_4(%arg0: i32, %arg1: i32) -> (i32, i32) {
    %c0_i32 = arith.constant 0 : i32
    %c0_i32_0 = arith.constant 0 : i32
    %c0_i32_1 = arith.constant 0 : i32
    return %c0_i32, %c0_i32_0 : i32, i32
  }
  func.func @transform_5(%arg0: i32, %arg1: i32) -> (i32, i32) {
    %c0_i32 = arith.constant 0 : i32
    %c0_i32_0 = arith.constant 0 : i32
    %c0_i32_1 = arith.constant 0 : i32
    return %c0_i32, %c0_i32_0 : i32, i32
  }
  func.func @transform_6(%arg0: i32, %arg1: i32) -> (i32, i32) {
    %c0_i32 = arith.constant 0 : i32
    %c0_i32_0 = arith.constant 0 : i32
    %c0_i32_1 = arith.constant 0 : i32
    return %c0_i32, %c0_i32_0 : i32, i32
  }
  func.func @transform_7(%arg0: i32, %arg1: i32) -> (i32, i32, i32) {
    %c0_i32 = arith.constant 0 : i32
    %c0_i32_0 = arith.constant 0 : i32
    %c0_i32_1 = arith.constant 0 : i32
    %c0_i32_2 = arith.constant 0 : i32
    return %c0_i32, %c0_i32_0, %c0_i32_1 : i32, i32, i32
  }
  func.func @transform_8(%arg0: i32, %arg1: i32) -> (i32, i32, i32, i32, i32) {
    %c0_i32 = arith.constant 0 : i32
    %c0_i32_0 = arith.constant 0 : i32
    %c0_i32_1 = arith.constant 0 : i32
    %c0_i32_2 = arith.constant 0 : i32
    return %arg0, %arg1, %c0_i32, %c0_i32_0, %c0_i32_1 : i32, i32, i32, i32, i32
  }
  func.func @transform_9(%arg0: i32, %arg1: i32) -> (i32, i32, i32, i32) {
    %c0_i32 = arith.constant 0 : i32
    %c0_i32_0 = arith.constant 0 : i32
    %c0_i32_1 = arith.constant 0 : i32
    return %arg0, %arg1, %c0_i32, %c0_i32_0 : i32, i32, i32, i32
  }
  func.func @transform_10(%arg0: i32, %arg1: i32) -> (i32, i32, i32, i32) {
    %c0_i32 = arith.constant 0 : i32
    %c0_i32_0 = arith.constant 0 : i32
    %c0_i32_1 = arith.constant 0 : i32
    return %arg0, %arg1, %c0_i32, %c0_i32_0 : i32, i32, i32, i32
  }
}

</mosaic_0001>

<llo_original>
// kernel: double_conv_forward.5
$region0: #{double_conv_forward.5}
  #allocation0 [shape = 'u32[]', space=smem, size = 0x4, offset = 0x4, fixed_abs, tag = 'smem constant byte address 0x4 - core index']
  #allocation1 [shape = 'u32[72,128]{1,0:T(1,128)}', space=vmem, size = 0x9000, scoped, tag = 'internal scratch']
  %s0 = inlined_call_operand.vmem [shape: f32[16,64,128], index: 0, kind: input, shape index: {}]
  %s1 = inlined_call_operand.vmem [shape: f32[1,128], index: 1, kind: input, shape index: {}]
  %s2 = inlined_call_operand.vmem [shape: f32[1,128], index: 2, kind: input, shape index: {}]
  %s3 = inlined_call_operand.hbm [shape: f32[16,64,128], index: 3, kind: output, shape index: {}]
  %s4 = sld [smem:[#allocation0]]
  $region45: #{double_conv_forward.5} parent=0
    _
  %s6 = ssub.s32 1, %s4
  %s7 = scalar_select 0, %s6, %s4
  $region1: #{double_conv_forward.5} parent=0
    #allocation2 [shape = 'u8[65536]{0}', space=vmem, size = 0x10000, scoped, tag = 'output window, operand 0']
    #allocation3 [shape = 's32[2]{0}', space=sflag, size = 0x8, scoped, tag = 'scoped memory for double_conv_forward.5']
    %8 = vsyncpa [#allocation3], 0
    %s9 = scalar_lea.sflag [#allocation3], 1
    %10 = vsyncpa %s9, 0
    loop: start=0, step=1, limit=18
    $region2: #{double_conv_forward.5} parent=1 // loop_pre_header
      _
    $region3: #{double_conv_forward.5} parent=1 // loop_header
      %s12 = sphi 0, %s16
      %p13 = scmp.ge.s32.totalorder %s12, 18
      %s22 = sphi 0, %s24
      %s25 = sphi 0, %s22
      %s26 = sphi 0, %s25
      %s42 = sphi 0, %s26
      %s46 = sphi 0, %s46
      %s48 = sphi 0, %s46
      %s49 = sphi 0, %s48
      %s63 = sphi 0, %s49
      %s67 = sphi 0, %s67
      %s69 = sphi 0, %s67
      %s70 = sphi 0, %s69
      %s84 = sphi 0, %s70
      %s90 = sphi 0, %s92
      %s93 = sphi 0, %s90
      %s94 = sphi 0, %s93
      %s110 = sphi 0, %s94
    $region4: #{double_conv_forward.5} parent=1 // loop_header_branch
      %15 = sbr.rel (%p13) target = $region8
    $region5: #{double_conv_forward.5} parent=1 // loop_body
      %s17 = ssub.s32 %s12, 1
      %s18 = ssub.s32 %s12, 2
      %s19 = sadd.s32 %s12, 1
      %s20 = ssub.s32 %s12, %s19
      %p21 = scmp.eq.s32.totalorder %s20, 0
      %s23 = sadd.s32 %s22, 1
      %s24 = scalar_select %p21, %s22, %s23
      %p27 = pneg %p21
      %p28 = scmp.eq.s32.totalorder %s12, 15
      %p29 = por %p27, %p28
      %p30 = scmp.ne.s32.totalorder %s22, %s25
      %p31 = scmp.eq.s32.totalorder %s12, 0
      %p32 = por %p30, %p31
      %p33 = scmp.ne.s32.totalorder %s22, %s25
      %p34 = scmp.eq.s32.totalorder %s17, 15
      %p35 = por %p33, %p34
      %p36 = scmp.ne.s32.totalorder %s25, %s26
      %p37 = scmp.eq.s32.totalorder %s17, 0
      %p38 = por %p36, %p37
      %p39 = scmp.ne.s32.totalorder %s25, %s26
      %p40 = scmp.eq.s32.totalorder %s18, 15
      %p41 = por %p39, %p40
      %p43 = scmp.ne.s32.totalorder %s26, %s42
      %p44 = scmp.eq.s32.totalorder %s18, 0
      %p45 = por %p43, %p44
      %s47 = sadd.s32 %s46, 1
      %p50 = scmp.eq.s32.totalorder %s12, 15
      %p51 = scmp.ne.s32.totalorder %s46, %s48
      %p52 = scmp.eq.s32.totalorder %s12, 0
      %p53 = por %p51, %p52
      %p54 = scmp.ne.s32.totalorder %s46, %s48
      %p55 = scmp.eq.s32.totalorder %s17, 15
      %p56 = por %p54, %p55
      %p57 = scmp.ne.s32.totalorder %s48, %s49
      %p58 = scmp.eq.s32.totalorder %s17, 0
      %p59 = por %p57, %p58
      %p60 = scmp.ne.s32.totalorder %s48, %s49
      %p61 = scmp.eq.s32.totalorder %s18, 15
      %p62 = por %p60, %p61
      %p64 = scmp.ne.s32.totalorder %s49, %s63
      %p65 = scmp.eq.s32.totalorder %s18, 0
      %p66 = por %p64, %p65
      %s68 = sadd.s32 %s67, 1
      %p71 = scmp.eq.s32.totalorder %s12, 15
      %p72 = scmp.ne.s32.totalorder %s67, %s69
      %p73 = scmp.eq.s32.totalorder %s12, 0
      %p74 = por %p72, %p73
      %p75 = scmp.ne.s32.totalorder %s67, %s69
      %p76 = scmp.eq.s32.totalorder %s17, 15
      %p77 = por %p75, %p76
      %p78 = scmp.ne.s32.totalorder %s69, %s70
      %p79 = scmp.eq.s32.totalorder %s17, 0
      %p80 = por %p78, %p79
      %p81 = scmp.ne.s32.totalorder %s69, %s70
      %p82 = scmp.eq.s32.totalorder %s18, 15
      %p83 = por %p81, %p82
      %p85 = scmp.ne.s32.totalorder %s70, %s84
      %p86 = scmp.eq.s32.totalorder %s18, 0
      %p87 = por %p85, %p86
      %s88 = ssub.s32 %s12, %s19
      %p89 = scmp.eq.s32.totalorder %s88, 0
      %s91 = sadd.s32 %s90, 1
      %s92 = scalar_select %p89, %s90, %s91
      %p95 = pneg %p89
      %p96 = scmp.eq.s32.totalorder %s12, 15
      %p97 = por %p95, %p96
      %p98 = scmp.ne.s32.totalorder %s90, %s93
      %p99 = scmp.eq.s32.totalorder %s12, 0
      %p100 = por %p98, %p99
      %p101 = scmp.ne.s32.totalorder %s90, %s93
      %p102 = scmp.eq.s32.totalorder %s17, 15
      %p103 = por %p101, %p102
      %p104 = scmp.ne.s32.totalorder %s93, %s94
      %p105 = scmp.eq.s32.totalorder %s17, 0
      %p106 = por %p104, %p105
      %p107 = scmp.ne.s32.totalorder %s93, %s94
      %p108 = scmp.eq.s32.totalorder %s18, 15
      %p109 = por %p107, %p108
      %p111 = scmp.ne.s32.totalorder %s94, %s110
      %p112 = scmp.eq.s32.totalorder %s18, 0
      %p113 = por %p111, %p112
      %p114 = scmp.le.s32.totalorder 1, %s12
      %p115 = scmp.lt.s32.totalorder %s12, 17
      %p116 = pnand %p114, %p115
      %p117 = pneg %p116
      // Predicated region
      $region9: #{double_conv_forward.5} parent=5 // pred_check
        _
      $region10: #{double_conv_forward.5} parent=5 // pred_check_branch
        %119 = sbr.rel (%p116) target = $region12
      $region11: #{double_conv_forward.5} parent=5 // pred_region
        %s120 = ssub.s32 %s12, 1
        // Predicated region
        $region13: #{double_conv_forward.5} parent=11 // pred_check
          %p121 = pneg %p59
        $region14: #{double_conv_forward.5} parent=11 // pred_check_branch
          %123 = sbr.rel (%p121) target = $region16
        $region15: #{double_conv_forward.5} parent=11 // pred_region
          _
        $region16: #{double_conv_forward.5} parent=11 // pred_fallthru
          _
        // Predicated region
        $region17: #{double_conv_forward.5} parent=11 // pred_check
          %p124 = pneg %p80
        $region18: #{double_conv_forward.5} parent=11 // pred_check_branch
          %126 = sbr.rel (%p124) target = $region20
        $region19: #{double_conv_forward.5} parent=11 // pred_region
          _
        $region20: #{double_conv_forward.5} parent=11 // pred_fallthru
          _
      $region12: #{double_conv_forward.5} parent=5 // pred_fallthru
        _
      %p127 = scmp.lt.s32.totalorder %s12, 16
      // Predicated region
      $region21: #{double_conv_forward.5} parent=5 // pred_check
        %p128 = pneg %p127
      $region22: #{double_conv_forward.5} parent=5 // pred_check_branch
        %130 = sbr.rel (%p128) target = $region24
      $region23: #{double_conv_forward.5} parent=5 // pred_region
        // Predicated region
        $region25: #{double_conv_forward.5} parent=23 // pred_check
          %p131 = pneg %p32
        $region26: #{double_conv_forward.5} parent=23 // pred_check_branch
          %133 = sbr.rel (%p131) target = $region28
        $region27: #{double_conv_forward.5} parent=23 // pred_region
          %p134 = scmp.lt.s32.totalorder %s12, 15
          %s135 = scalar_select %p134, %s12, 15
          %s136 = smul.addr %s135, 8
          %s137 = smul.addr %s136, 8
          %s138 = scalar_lea.vmem %s0, %s137
        $region28: #{double_conv_forward.5} parent=23 // pred_fallthru
          _
      $region24: #{double_conv_forward.5} parent=5 // pred_fallthru
        _
      %p139 = scmp.le.s32.totalorder 1, %s12
      %p140 = scmp.lt.s32.totalorder %s12, 17
      %p141 = pnand %p139, %p140
      %p142 = pneg %p141
      // Predicated region
      $region29: #{double_conv_forward.5} parent=5 // pred_check
        _
      $region30: #{double_conv_forward.5} parent=5 // pred_check_branch
        %144 = sbr.rel (%p141) target = $region32
      $region31: #{double_conv_forward.5} parent=5 // pred_region
        %s145 = ssub.s32 %s12, 1
        %p146 = scmp.lt.s32.totalorder %s17, 15
        %s147 = scalar_select %p146, %s17, 15
        %s148 = smul.addr %s147, 8
        %s149 = smul.addr %s148, 8
        %s150 = scalar_lea.vmem %s0, %s149
        %p151 = pneg %p38
        %p152 = pneg %p35
        %p153 = pneg %p59
        %p154 = pneg %p56
        %p155 = pneg %p80
        %p156 = pneg %p77
        %p157 = pneg %p106
        %p158 = pneg %p103
        %s159 = sand.u32 %s93, 1
        %s160 = scalar_lea.sflag [#allocation3], %s159
        %s161 = sand.u32 %s93, 1
        %s162 = smul.addr %s161, 64
        %s163 = scalar_lea.vmem [#allocation2], %s162
        %p164 = scmp.lt.s32.totalorder %s17, 15
        %s165 = scalar_select %p164, %s17, 15
        %s166 = smul.addr %s165, 8
        %s167 = smul.addr %s166, 8
        %s168 = scalar_lea.vmem %s0, %s167
        %v169 = vld [vmem:[%s168] sm:$0xff]
        %v170 = vld [vmem:[%s168 + $0x8] sm:$0xff]
        %v171 = vld [vmem:[%s168 + $0x10] sm:$0xff]
        %v172 = vld [vmem:[%s168 + $0x18] sm:$0xff]
        %v173 = vld [vmem:[%s168 + $0x20] sm:$0xff]
        %v174 = vld [vmem:[%s168 + $0x28] sm:$0xff]
        %v175 = vld [vmem:[%s168 + $0x30] sm:$0xff]
        %v176 = vld [vmem:[%s168 + $0x38] sm:$0xff]
        %v177 = vld [vmem:[%s1] sm:$0x1]
        %v179 = vperm.slane %v177, 0
        %v181 = vmul.f32 %v169, %v179
        %v182 = vmul.f32 %v170, %v179
        %v183 = vmul.f32 %v171, %v179
        %v184 = vmul.f32 %v172, %v179
        %v185 = vmul.f32 %v173, %v179
        %v186 = vmul.f32 %v174, %v179
        %v187 = vmul.f32 %v175, %v179
        %v188 = vmul.f32 %v176, %v179
        %v189 = vld [vmem:[%s2] sm:$0x1]
        %v191 = vperm.slane %v189, 0
        %v193 = vadd.f32 %v181, %v191
        %v194 = vadd.f32 %v182, %v191
        %v195 = vadd.f32 %v183, %v191
        %v196 = vadd.f32 %v184, %v191
        %v197 = vadd.f32 %v185, %v191
        %v198 = vadd.f32 %v186, %v191
        %v199 = vadd.f32 %v187, %v191
        %v200 = vadd.f32 %v188, %v191
        %v201 = vmax.f32 %v193, 0.0
        %v202 = vmax.f32 %v194, 0.0
        %v203 = vmax.f32 %v195, 0.0
        %v204 = vmax.f32 %v196, 0.0
        %v205 = vmax.f32 %v197, 0.0
        %v206 = vmax.f32 %v198, 0.0
        %v207 = vmax.f32 %v199, 0.0
        %v208 = vmax.f32 %v200, 0.0
        %209 = vst [vmem:[%s163] sm:$0xff] %v201
        %210 = vst [vmem:[%s163 + $0x8] sm:$0xff] %v202
        %211 = vst [vmem:[%s163 + $0x10] sm:$0xff] %v203
        %212 = vst [vmem:[%s163 + $0x18] sm:$0xff] %v204
        %213 = vst [vmem:[%s163 + $0x20] sm:$0xff] %v205
        %214 = vst [vmem:[%s163 + $0x28] sm:$0xff] %v206
        %215 = vst [vmem:[%s163 + $0x30] sm:$0xff] %v207
        %216 = vst [vmem:[%s163 + $0x38] sm:$0xff] %v208
        %s217 = sand.u32 %s93, 1
        %s218 = scalar_lea.sflag [#allocation3], %s217
        %s219 = sand.u32 %s93, 1
        %s220 = smul.addr %s219, 64
        %s221 = scalar_lea.vmem [#allocation2], %s220
        // Predicated region
        $region33: #{double_conv_forward.5} parent=31 // pred_check
          %p222 = pneg %p103
        $region34: #{double_conv_forward.5} parent=31 // pred_check_branch
          %224 = sbr.rel (%p222) target = $region36
        $region35: #{double_conv_forward.5} parent=31 // pred_region
          %226 = vsyncadd %s218, 0
          %s227 = smul.addr %s17, 8
          %s228 = smul.addr %s227, 8
          %s229 = scalar_lea.hbm %s3, %s228
          %s230 = sshll.u32 %s221, 4
          %s231 = int_to_ptr.vmem [resolvable:$true] %s230
          %s232 = sshll.u32 %s229, 4
          %s233 = int_to_ptr.hbm [resolvable:$true] %s232
          %238 = dma.vmem_to_hbm [thread:$0]  %s231, 1024, %s233, %s218, 128, 128, 8
        $region36: #{double_conv_forward.5} parent=31 // pred_fallthru
          _
      $region32: #{double_conv_forward.5} parent=5 // pred_fallthru
        _
      %p239 = scmp.le.s32.totalorder 2, %s12
      // Predicated region
      $region37: #{double_conv_forward.5} parent=5 // pred_check
        %p240 = pneg %p239
      $region38: #{double_conv_forward.5} parent=5 // pred_check_branch
        %242 = sbr.rel (%p240) target = $region40
      $region39: #{double_conv_forward.5} parent=5 // pred_region
        %s243 = ssub.s32 %s12, 2
        // Predicated region
        $region41: #{double_conv_forward.5} parent=39 // pred_check
          %p244 = pneg %p109
        $region42: #{double_conv_forward.5} parent=39 // pred_check_branch
          %246 = sbr.rel (%p244) target = $region44
        $region43: #{double_conv_forward.5} parent=39 // pred_region
          %s247 = sand.u32 %s94, 1
          %s248 = scalar_lea.sflag [#allocation3], %s247
          %s249 = sand.u32 %s94, 1
          %s250 = smul.addr %s249, 64
          %s251 = scalar_lea.vmem [#allocation2], %s250
          %253 = dma.done %s248, 1024
        $region44: #{double_conv_forward.5} parent=39 // pred_fallthru
          _
      $region40: #{double_conv_forward.5} parent=5 // pred_fallthru
        _
    $region6: #{double_conv_forward.5} parent=1 // loop_footer
      %s16 = sadd.s32 1, %s12
    $region7: #{double_conv_forward.5} parent=1 // loop_footer_branch
      %11 = sbr.rel target = $region3
    $region8: #{double_conv_forward.5} parent=1 // loop_exit
      _
    %254 = vsyncpa [#allocation3], 1
    %s255 = scalar_lea.sflag [#allocation3], 1
    %256 = vsyncpa %s255, 1

// kernel: double_conv_forward.3
$region0: #{double_conv_forward.3}
  #allocation0 [shape = 'u32[]', space=smem, size = 0x4, offset = 0x4, fixed_abs, tag = 'smem constant byte address 0x4 - core index']
  #allocation1 [shape = 'u32[72,128]{1,0:T(1,128)}', space=vmem, size = 0x9000, scoped, tag = 'internal scratch']
  %s0 = inlined_call_operand.vmem [shape: f32[2,10,10,10,128], index: 0, kind: input, shape index: {}, may-alias: {0,1,2}]
  %s1 = inlined_call_operand.vmem [shape: f32[2,10,10,10,128], index: 1, kind: input, shape index: {}, may-alias: {0,1,2}]
  %s2 = inlined_call_operand.vmem [shape: f32[2,10,10,10,128], index: 2, kind: input, shape index: {}, may-alias: {0,1,2}]
  %s3 = inlined_call_operand.vmem [shape: bf16[3456,128], index: 3, kind: input, shape index: {}]
  %s4 = inlined_call_operand.vmem [shape: f32[1,128], index: 4, kind: input, shape index: {}]
  %s5 = inlined_call_operand.vmem [shape: f32[1,128], index: 5, kind: input, shape index: {}]
  %s6 = inlined_call_operand.vmem [shape: f32[1,128], index: 6, kind: input, shape index: {}]
  %s7 = inlined_call_operand.vmem [shape: f32[10,10,128], index: 7, kind: input, shape index: {}]
  %s8 = inlined_call_operand.vmem [shape: f32[2,8,8,8,128], index: 8, kind: output, shape index: {0}]
  %s9 = inlined_call_operand.vmem [shape: f32[2,8,1,128], index: 9, kind: output, shape index: {1}]
  %s10 = inlined_call_operand.vmem [shape: f32[2,8,1,128], index: 10, kind: output, shape index: {2}]
  %11 = xla_tuple %s8, %s9, %s10
  %s12 = sld [smem:[#allocation0]]
  $region81: #{double_conv_forward.3} parent=0
    _
  %s14 = ssub.s32 1, %s12
  %s15 = scalar_select 0, %s14, %s12
  loop: start=0, step=1, limit=18
  $region2: #{double_conv_forward.3} parent=0 // loop_pre_header
    _
  $region3: #{double_conv_forward.3} parent=0 // loop_header
    %s17 = sphi 0, %s21
    %p18 = scmp.ge.s32.totalorder %s17, 18
    %s24 = sphi 0, %s36
    %s25 = sphi 0, %s32
    %s26 = sphi 0, %s24
    %s27 = sphi 0, %s25
    %s28 = sphi 0, %s26
    %s29 = sphi 0, %s27
    %s41 = sphi 0, %s43
    %s44 = sphi 0, %s41
    %s45 = sphi 0, %s44
    %s61 = sphi 0, %s45
    %s71 = sphi 0, %s73
    %s74 = sphi 0, %s71
    %s75 = sphi 0, %s74
    %s91 = sphi 0, %s75
    %s101 = sphi 0, %s103
    %s104 = sphi 0, %s101
    %s105 = sphi 0, %s104
    %s121 = sphi 0, %s105
    %s125 = sphi 0, %s125
    %s127 = sphi 0, %s125
    %s128 = sphi 0, %s127
    %s142 = sphi 0, %s128
    %s146 = sphi 0, %s146
    %s148 = sphi 0, %s146
    %s149 = sphi 0, %s148
    %s163 = sphi 0, %s149
    %s167 = sphi 0, %s167
    %s169 = sphi 0, %s167
    %s170 = sphi 0, %s169
    %s184 = sphi 0, %s170
    %s188 = sphi 0, %s188
    %s190 = sphi 0, %s188
    %s191 = sphi 0, %s190
    %s205 = sphi 0, %s191
    %s209 = sphi 0, %s209
    %s211 = sphi 0, %s209
    %s212 = sphi 0, %s211
    %s226 = sphi 0, %s212
    %s234 = sphi 0, %s236
    %s237 = sphi 0, %s234
    %s238 = sphi 0, %s237
    %s254 = sphi 0, %s238
    %s262 = sphi 0, %s264
    %s265 = sphi 0, %s262
    %s266 = sphi 0, %s265
    %s282 = sphi 0, %s266
    %s290 = sphi 0, %s292
    %s293 = sphi 0, %s290
    %s294 = sphi 0, %s293
    %s310 = sphi 0, %s294
  $region4: #{double_conv_forward.3} parent=0 // loop_header_branch
    %20 = sbr.rel (%p18) target = $region8
  $region5: #{double_conv_forward.3} parent=0 // loop_body
    %s22 = ssub.s32 %s17, 1
    %s23 = ssub.s32 %s17, 2
    %s30 = sadd.s32 1, %s25
    %p31 = scmp.ge.s32.totalorder %s30, 8
    %s32 = scalar_select %p31, 0, %s30
    %s33 = sadd.s32 1, %s24
    %s34 = scalar_select %p31, %s33, %s24
    %p35 = scmp.ge.s32.totalorder %s34, 2
    %s36 = scalar_select %p35, 0, %s34
    %s37 = ssub.s32 %s24, %s36
    %s38 = ssub.s32 %s25, %s32
    %s39 = sor.u32 %s37, %s38
    %p40 = scmp.eq.s32.totalorder %s39, 0
    %s42 = sadd.s32 %s41, 1
    %s43 = scalar_select %p40, %s41, %s42
    %p46 = pneg %p40
    %p47 = scmp.eq.s32.totalorder %s17, 15
    %p48 = por %p46, %p47
    %p49 = scmp.ne.s32.totalorder %s41, %s44
    %p50 = scmp.eq.s32.totalorder %s17, 0
    %p51 = por %p49, %p50
    %p52 = scmp.ne.s32.totalorder %s41, %s44
    %p53 = scmp.eq.s32.totalorder %s22, 15
    %p54 = por %p52, %p53
    %p55 = scmp.ne.s32.totalorder %s44, %s45
    %p56 = scmp.eq.s32.totalorder %s22, 0
    %p57 = por %p55, %p56
    %p58 = scmp.ne.s32.totalorder %s44, %s45
    %p59 = scmp.eq.s32.totalorder %s23, 15
    %p60 = por %p58, %p59
    %p62 = scmp.ne.s32.totalorder %s45, %s61
    %p63 = scmp.eq.s32.totalorder %s23, 0
    %p64 = por %p62, %p63
    %s65 = sadd.s32 %s25, 1
    %s66 = sadd.s32 %s32, 1
    %s67 = ssub.s32 %s24, %s36
    %s68 = ssub.s32 %s65, %s66
    %s69 = sor.u32 %s67, %s68
    %p70 = scmp.eq.s32.totalorder %s69, 0
    %s72 = sadd.s32 %s71, 1
    %s73 = scalar_select %p70, %s71, %s72
    %p76 = pneg %p70
    %p77 = scmp.eq.s32.totalorder %s17, 15
    %p78 = por %p76, %p77
    %p79 = scmp.ne.s32.totalorder %s71, %s74
    %p80 = scmp.eq.s32.totalorder %s17, 0
    %p81 = por %p79, %p80
    %p82 = scmp.ne.s32.totalorder %s71, %s74
    %p83 = scmp.eq.s32.totalorder %s22, 15
    %p84 = por %p82, %p83
    %p85 = scmp.ne.s32.totalorder %s74, %s75
    %p86 = scmp.eq.s32.totalorder %s22, 0
    %p87 = por %p85, %p86
    %p88 = scmp.ne.s32.totalorder %s74, %s75
    %p89 = scmp.eq.s32.totalorder %s23, 15
    %p90 = por %p88, %p89
    %p92 = scmp.ne.s32.totalorder %s75, %s91
    %p93 = scmp.eq.s32.totalorder %s23, 0
    %p94 = por %p92, %p93
    %s95 = sadd.s32 %s25, 2
    %s96 = sadd.s32 %s32, 2
    %s97 = ssub.s32 %s24, %s36
    %s98 = ssub.s32 %s95, %s96
    %s99 = sor.u32 %s97, %s98
    %p100 = scmp.eq.s32.totalorder %s99, 0
    %s102 = sadd.s32 %s101, 1
    %s103 = scalar_select %p100, %s101, %s102
    %p106 = pneg %p100
    %p107 = scmp.eq.s32.totalorder %s17, 15
    %p108 = por %p106, %p107
    %p109 = scmp.ne.s32.totalorder %s101, %s104
    %p110 = scmp.eq.s32.totalorder %s17, 0
    %p111 = por %p109, %p110
    %p112 = scmp.ne.s32.totalorder %s101, %s104
    %p113 = scmp.eq.s32.totalorder %s22, 15
    %p114 = por %p112, %p113
    %p115 = scmp.ne.s32.totalorder %s104, %s105
    %p116 = scmp.eq.s32.totalorder %s22, 0
    %p117 = por %p115, %p116
    %p118 = scmp.ne.s32.totalorder %s104, %s105
    %p119 = scmp.eq.s32.totalorder %s23, 15
    %p120 = por %p118, %p119
    %p122 = scmp.ne.s32.totalorder %s105, %s121
    %p123 = scmp.eq.s32.totalorder %s23, 0
    %p124 = por %p122, %p123
    %s126 = sadd.s32 %s125, 1
    %p129 = scmp.eq.s32.totalorder %s17, 15
    %p130 = scmp.ne.s32.totalorder %s125, %s127
    %p131 = scmp.eq.s32.totalorder %s17, 0
    %p132 = por %p130, %p131
    %p133 = scmp.ne.s32.totalorder %s125, %s127
    %p134 = scmp.eq.s32.totalorder %s22, 15
    %p135 = por %p133, %p134
    %p136 = scmp.ne.s32.totalorder %s127, %s128
    %p137 = scmp.eq.s32.totalorder %s22, 0
    %p138 = por %p136, %p137
    %p139 = scmp.ne.s32.totalorder %s127, %s128
    %p140 = scmp.eq.s32.totalorder %s23, 15
    %p141 = por %p139, %p140
    %p143 = scmp.ne.s32.totalorder %s128, %s142
    %p144 = scmp.eq.s32.totalorder %s23, 0
    %p145 = por %p143, %p144
    %s147 = sadd.s32 %s146, 1
    %p150 = scmp.eq.s32.totalorder %s17, 15
    %p151 = scmp.ne.s32.totalorder %s146, %s148
    %p152 = scmp.eq.s32.totalorder %s17, 0
    %p153 = por %p151, %p152
    %p154 = scmp.ne.s32.totalorder %s146, %s148
    %p155 = scmp.eq.s32.totalorder %s22, 15
    %p156 = por %p154, %p155
    %p157 = scmp.ne.s32.totalorder %s148, %s149
    %p158 = scmp.eq.s32.totalorder %s22, 0
    %p159 = por %p157, %p158
    %p160 = scmp.ne.s32.totalorder %s148, %s149
    %p161 = scmp.eq.s32.totalorder %s23, 15
    %p162 = por %p160, %p161
    %p164 = scmp.ne.s32.totalorder %s149, %s163
    %p165 = scmp.eq.s32.totalorder %s23, 0
    %p166 = por %p164, %p165
    %s168 = sadd.s32 %s167, 1
    %p171 = scmp.eq.s32.totalorder %s17, 15
    %p172 = scmp.ne.s32.totalorder %s167, %s169
    %p173 = scmp.eq.s32.totalorder %s17, 0
    %p174 = por %p172, %p173
    %p175 = scmp.ne.s32.totalorder %s167, %s169
    %p176 = scmp.eq.s32.totalorder %s22, 15
    %p177 = por %p175, %p176
    %p178 = scmp.ne.s32.totalorder %s169, %s170
    %p179 = scmp.eq.s32.totalorder %s22, 0
    %p180 = por %p178, %p179
    %p181 = scmp.ne.s32.totalorder %s169, %s170
    %p182 = scmp.eq.s32.totalorder %s23, 15
    %p183 = por %p181, %p182
    %p185 = scmp.ne.s32.totalorder %s170, %s184
    %p186 = scmp.eq.s32.totalorder %s23, 0
    %p187 = por %p185, %p186
    %s189 = sadd.s32 %s188, 1
    %p192 = scmp.eq.s32.totalorder %s17, 15
    %p193 = scmp.ne.s32.totalorder %s188, %s190
    %p194 = scmp.eq.s32.totalorder %s17, 0
    %p195 = por %p193, %p194
    %p196 = scmp.ne.s32.totalorder %s188, %s190
    %p197 = scmp.eq.s32.totalorder %s22, 15
    %p198 = por %p196, %p197
    %p199 = scmp.ne.s32.totalorder %s190, %s191
    %p200 = scmp.eq.s32.totalorder %s22, 0
    %p201 = por %p199, %p200
    %p202 = scmp.ne.s32.totalorder %s190, %s191
    %p203 = scmp.eq.s32.totalorder %s23, 15
    %p204 = por %p202, %p203
    %p206 = scmp.ne.s32.totalorder %s191, %s205
    %p207 = scmp.eq.s32.totalorder %s23, 0
    %p208 = por %p206, %p207
    %s210 = sadd.s32 %s209, 1
    %p213 = scmp.eq.s32.totalorder %s17, 15
    %p214 = scmp.ne.s32.totalorder %s209, %s211
    %p215 = scmp.eq.s32.totalorder %s17, 0
    %p216 = por %p214, %p215
    %p217 = scmp.ne.s32.totalorder %s209, %s211
    %p218 = scmp.eq.s32.totalorder %s22, 15
    %p219 = por %p217, %p218
    %p220 = scmp.ne.s32.totalorder %s211, %s212
    %p221 = scmp.eq.s32.totalorder %s22, 0
    %p222 = por %p220, %p221
    %p223 = scmp.ne.s32.totalorder %s211, %s212
    %p224 = scmp.eq.s32.totalorder %s23, 15
    %p225 = por %p223, %p224
    %p227 = scmp.ne.s32.totalorder %s212, %s226
    %p228 = scmp.eq.s32.totalorder %s23, 0
    %p229 = por %p227, %p228
    %s230 = ssub.s32 %s24, %s36
    %s231 = ssub.s32 %s25, %s32
    %s232 = sor.u32 %s230, %s231
    %p233 = scmp.eq.s32.totalorder %s232, 0
    %s235 = sadd.s32 %s234, 1
    %s236 = scalar_select %p233, %s234, %s235
    %p239 = pneg %p233
    %p240 = scmp.eq.s32.totalorder %s17, 15
    %p241 = por %p239, %p240
    %p242 = scmp.ne.s32.totalorder %s234, %s237
    %p243 = scmp.eq.s32.totalorder %s17, 0
    %p244 = por %p242, %p243
    %p245 = scmp.ne.s32.totalorder %s234, %s237
    %p246 = scmp.eq.s32.totalorder %s22, 15
    %p247 = por %p245, %p246
    %p248 = scmp.ne.s32.totalorder %s237, %s238
    %p249 = scmp.eq.s32.totalorder %s22, 0
    %p250 = por %p248, %p249
    %p251 = scmp.ne.s32.totalorder %s237, %s238
    %p252 = scmp.eq.s32.totalorder %s23, 15
    %p253 = por %p251, %p252
    %p255 = scmp.ne.s32.totalorder %s238, %s254
    %p256 = scmp.eq.s32.totalorder %s23, 0
    %p257 = por %p255, %p256
    %s258 = ssub.s32 %s24, %s36
    %s259 = ssub.s32 %s25, %s32
    %s260 = sor.u32 %s258, %s259
    %p261 = scmp.eq.s32.totalorder %s260, 0
    %s263 = sadd.s32 %s262, 1
    %s264 = scalar_select %p261, %s262, %s263
    %p267 = pneg %p261
    %p268 = scmp.eq.s32.totalorder %s17, 15
    %p269 = por %p267, %p268
    %p270 = scmp.ne.s32.totalorder %s262, %s265
    %p271 = scmp.eq.s32.totalorder %s17, 0
    %p272 = por %p270, %p271
    %p273 = scmp.ne.s32.totalorder %s262, %s265
    %p274 = scmp.eq.s32.totalorder %s22, 15
    %p275 = por %p273, %p274
    %p276 = scmp.ne.s32.totalorder %s265, %s266
    %p277 = scmp.eq.s32.totalorder %s22, 0
    %p278 = por %p276, %p277
    %p279 = scmp.ne.s32.totalorder %s265, %s266
    %p280 = scmp.eq.s32.totalorder %s23, 15
    %p281 = por %p279, %p280
    %p283 = scmp.ne.s32.totalorder %s266, %s282
    %p284 = scmp.eq.s32.totalorder %s23, 0
    %p285 = por %p283, %p284
    %s286 = ssub.s32 %s24, %s36
    %s287 = ssub.s32 %s25, %s32
    %s288 = sor.u32 %s286, %s287
    %p289 = scmp.eq.s32.totalorder %s288, 0
    %s291 = sadd.s32 %s290, 1
    %s292 = scalar_select %p289, %s290, %s291
    %p295 = pneg %p289
    %p296 = scmp.eq.s32.totalorder %s17, 15
    %p297 = por %p295, %p296
    %p298 = scmp.ne.s32.totalorder %s290, %s293
    %p299 = scmp.eq.s32.totalorder %s17, 0
    %p300 = por %p298, %p299
    %p301 = scmp.ne.s32.totalorder %s290, %s293
    %p302 = scmp.eq.s32.totalorder %s22, 15
    %p303 = por %p301, %p302
    %p304 = scmp.ne.s32.totalorder %s293, %s294
    %p305 = scmp.eq.s32.totalorder %s22, 0
    %p306 = por %p304, %p305
    %p307 = scmp.ne.s32.totalorder %s293, %s294
    %p308 = scmp.eq.s32.totalorder %s23, 15
    %p309 = por %p307, %p308
    %p311 = scmp.ne.s32.totalorder %s294, %s310
    %p312 = scmp.eq.s32.totalorder %s23, 0
    %p313 = por %p311, %p312
    %p314 = scmp.le.s32.totalorder 1, %s17
    %p315 = scmp.lt.s32.totalorder %s17, 17
    %p316 = pnand %p314, %p315
    %p317 = pneg %p316
    // Predicated region
    $region9: #{double_conv_forward.3} parent=5 // pred_check
      _
    $region10: #{double_conv_forward.3} parent=5 // pred_check_branch
      %319 = sbr.rel (%p316) target = $region12
    $region11: #{double_conv_forward.3} parent=5 // pred_region
      %s320 = ssub.s32 %s17, 1
      // Predicated region
      $region13: #{double_conv_forward.3} parent=11 // pred_check
        %p321 = pneg %p138
      $region14: #{double_conv_forward.3} parent=11 // pred_check_branch
        %323 = sbr.rel (%p321) target = $region16
      $region15: #{double_conv_forward.3} parent=11 // pred_region
        _
      $region16: #{double_conv_forward.3} parent=11 // pred_fallthru
        _
      // Predicated region
      $region17: #{double_conv_forward.3} parent=11 // pred_check
        %p324 = pneg %p159
      $region18: #{double_conv_forward.3} parent=11 // pred_check_branch
        %326 = sbr.rel (%p324) target = $region20
      $region19: #{double_conv_forward.3} parent=11 // pred_region
        _
      $region20: #{double_conv_forward.3} parent=11 // pred_fallthru
        _
      // Predicated region
      $region21: #{double_conv_forward.3} parent=11 // pred_check
        %p327 = pneg %p180
      $region22: #{double_conv_forward.3} parent=11 // pred_check_branch
        %329 = sbr.rel (%p327) target = $region24
      $region23: #{double_conv_forward.3} parent=11 // pred_region
        _
      $region24: #{double_conv_forward.3} parent=11 // pred_fallthru
        _
      // Predicated region
      $region25: #{double_conv_forward.3} parent=11 // pred_check
        %p330 = pneg %p201
      $region26: #{double_conv_forward.3} parent=11 // pred_check_branch
        %332 = sbr.rel (%p330) target = $region28
      $region27: #{double_conv_forward.3} parent=11 // pred_region
        _
      $region28: #{double_conv_forward.3} parent=11 // pred_fallthru
        _
      // Predicated region
      $region29: #{double_conv_forward.3} parent=11 // pred_check
        %p333 = pneg %p222
      $region30: #{double_conv_forward.3} parent=11 // pred_check_branch
        %335 = sbr.rel (%p333) target = $region32
      $region31: #{double_conv_forward.3} parent=11 // pred_region
        _
      $region32: #{double_conv_forward.3} parent=11 // pred_fallthru
        _
    $region12: #{double_conv_forward.3} parent=5 // pred_fallthru
      _
    %p336 = scmp.lt.s32.totalorder %s17, 16
    // Predicated region
    $region33: #{double_conv_forward.3} parent=5 // pred_check
      %p337 = pneg %p336
    $region34: #{double_conv_forward.3} parent=5 // pred_check_branch
      %339 = sbr.rel (%p337) target = $region36
    $region35: #{double_conv_forward.3} parent=5 // pred_region
      // Predicated region
      $region37: #{double_conv_forward.3} parent=35 // pred_check
        %p340 = pneg %p51
      $region38: #{double_conv_forward.3} parent=35 // pred_check_branch
        %342 = sbr.rel (%p340) target = $region40
      $region39: #{double_conv_forward.3} parent=35 // pred_region
        %p343 = scmp.lt.s32.totalorder %s24, 1
        %s344 = scalar_select %p343, %s24, 1
        %p345 = scmp.lt.s32.totalorder %s25, 9
        %s346 = scalar_select %p345, %s25, 9
        %s347 = smul.addr %s346, 20
        %s348 = smul.addr %s344, 200
        %s349 = sadd.s32 %s347, %s348
        %s350 = smul.addr %s349, 8
        %s351 = scalar_lea.vmem %s0, %s350
      $region40: #{double_conv_forward.3} parent=35 // pred_fallthru
        _
      // Predicated region
      $region41: #{double_conv_forward.3} parent=35 // pred_check
        %p352 = pneg %p81
      $region42: #{double_conv_forward.3} parent=35 // pred_check_branch
        %354 = sbr.rel (%p352) target = $region44
      $region43: #{double_conv_forward.3} parent=35 // pred_region
        %s355 = sadd.s32 %s25, 1
        %p356 = scmp.lt.s32.totalorder %s24, 1
        %s357 = scalar_select %p356, %s24, 1
        %p358 = scmp.lt.s32.totalorder %s355, 9
        %s359 = scalar_select %p358, %s355, 9
        %s360 = smul.addr %s359, 20
        %s361 = smul.addr %s357, 200
        %s362 = sadd.s32 %s360, %s361
        %s363 = smul.addr %s362, 8
        %s364 = scalar_lea.vmem %s1, %s363
        %s365 = sadd.s32 %s25, 1
      $region44: #{double_conv_forward.3} parent=35 // pred_fallthru
        _
      // Predicated region
      $region45: #{double_conv_forward.3} parent=35 // pred_check
        %p366 = pneg %p111
      $region46: #{double_conv_forward.3} parent=35 // pred_check_branch
        %368 = sbr.rel (%p366) target = $region48
      $region47: #{double_conv_forward.3} parent=35 // pred_region
        %s369 = sadd.s32 %s25, 2
        %p370 = scmp.lt.s32.totalorder %s24, 1
        %s371 = scalar_select %p370, %s24, 1
        %p372 = scmp.lt.s32.totalorder %s369, 9
        %s373 = scalar_select %p372, %s369, 9
        %s374 = smul.addr %s373, 20
        %s375 = smul.addr %s371, 200
        %s376 = sadd.s32 %s374, %s375
        %s377 = smul.addr %s376, 8
        %s378 = scalar_lea.vmem %s2, %s377
        %s379 = sadd.s32 %s25, 2
      $region48: #{double_conv_forward.3} parent=35 // pred_fallthru
        _
    $region36: #{double_conv_forward.3} parent=5 // pred_fallthru
      _
    %p380 = scmp.le.s32.totalorder 1, %s17
    %p381 = scmp.lt.s32.totalorder %s17, 17
    %p382 = pnand %p380, %p381
    %p383 = pneg %p382
    // Predicated region
    $region49: #{double_conv_forward.3} parent=5 // pred_check
      _
    $region50: #{double_conv_forward.3} parent=5 // pred_check_branch
      %385 = sbr.rel (%p382) target = $region52
    $region51: #{double_conv_forward.3} parent=5 // pred_region
      %s386 = ssub.s32 %s17, 1
      %p387 = scmp.lt.s32.totalorder %s26, 1
      %s388 = scalar_select %p387, %s26, 1
      %p389 = scmp.lt.s32.totalorder %s27, 9
      %s390 = scalar_select %p389, %s27, 9
      %s391 = smul.addr %s390, 20
      %s392 = smul.addr %s388, 200
      %s393 = sadd.s32 %s391, %s392
      %s394 = smul.addr %s393, 8
      %s395 = scalar_lea.vmem %s0, %s394
      %p396 = pneg %p57
      %p397 = pneg %p54
      %s398 = sadd.s32 %s27, 1
      %p399 = scmp.lt.s32.totalorder %s26, 1
      %s400 = scalar_select %p399, %s26, 1
      %p401 = scmp.lt.s32.totalorder %s398, 9
      %s402 = scalar_select %p401, %s398, 9
      %s403 = smul.addr %s402, 20
      %s404 = smul.addr %s400, 200
      %s405 = sadd.s32 %s403, %s404
      %s406 = smul.addr %s405, 8
      %s407 = scalar_lea.vmem %s1, %s406
      %p408 = pneg %p87
      %p409 = pneg %p84
      %s410 = sadd.s32 %s27, 2
      %p411 = scmp.lt.s32.totalorder %s26, 1
      %s412 = scalar_select %p411, %s26, 1
      %p413 = scmp.lt.s32.totalorder %s410, 9
      %s414 = scalar_select %p413, %s410, 9
      %s415 = smul.addr %s414, 20
      %s416 = smul.addr %s412, 200
      %s417 = sadd.s32 %s415, %s416
      %s418 = smul.addr %s417, 8
      %s419 = scalar_lea.vmem %s2, %s418
      %p420 = pneg %p117
      %p421 = pneg %p114
      %p422 = pneg %p138
      %p423 = pneg %p135
      %p424 = pneg %p159
      %p425 = pneg %p156
      %p426 = pneg %p180
      %p427 = pneg %p177
      %p428 = pneg %p201
      %p429 = pneg %p198
      %p430 = pneg %p222
      %p431 = pneg %p219
      %p432 = pneg %p250
      %p433 = pneg %p247
      %p434 = scmp.lt.s32.totalorder %s26, 1
      %s435 = scalar_select %p434, %s26, 1
      %p436 = scmp.lt.s32.totalorder %s27, 7
      %s437 = scalar_select %p436, %s27, 7
      %s438 = smul.addr %s437, 8
      %s439 = smul.addr %s435, 64
      %s440 = sadd.s32 %s438, %s439
      %s441 = smul.addr %s440, 8
      %s442 = scalar_lea.vmem %s8, %s441
      %p443 = pneg %p278
      %p444 = pneg %p275
      %p445 = scmp.lt.s32.totalorder %s26, 1
      %s446 = scalar_select %p445, %s26, 1
      %p447 = scmp.lt.s32.totalorder %s27, 7
      %s448 = scalar_select %p447, %s27, 7
      %s449 = smul.addr %s446, 8
      %s450 = sadd.s32 %s448, %s449
      %s451 = scalar_lea.vmem %s9, %s450
      %p452 = pneg %p306
      %p453 = pneg %p303
      %p454 = scmp.lt.s32.totalorder %s26, 1
      %s455 = scalar_select %p454, %s26, 1
      %p456 = scmp.lt.s32.totalorder %s27, 7
      %s457 = scalar_select %p456, %s27, 7
      %s458 = smul.addr %s455, 8
      %s459 = sadd.s32 %s457, %s458
      %s460 = scalar_lea.vmem %s10, %s459
      %p461 = scmp.lt.s32.totalorder %s26, 1
      %s462 = scalar_select %p461, %s26, 1
      %p463 = scmp.lt.s32.totalorder %s27, 9
      %s464 = scalar_select %p463, %s27, 9
      %s465 = smul.addr %s464, 20
      %s466 = smul.addr %s462, 200
      %s467 = sadd.s32 %s465, %s466
      %s468 = smul.addr %s467, 8
      %s469 = scalar_lea.vmem %s0, %s468
      %s470 = sadd.s32 %s27, 1
      %p471 = scmp.lt.s32.totalorder %s26, 1
      %s472 = scalar_select %p471, %s26, 1
      %p473 = scmp.lt.s32.totalorder %s470, 9
      %s474 = scalar_select %p473, %s470, 9
      %s475 = smul.addr %s474, 20
      %s476 = smul.addr %s472, 200
      %s477 = sadd.s32 %s475, %s476
      %s478 = smul.addr %s477, 8
      %s479 = scalar_lea.vmem %s1, %s478
      %s480 = sadd.s32 %s27, 1
      %s481 = sadd.s32 %s27, 2
      %p482 = scmp.lt.s32.totalorder %s26, 1
      %s483 = scalar_select %p482, %s26, 1
      %p484 = scmp.lt.s32.totalorder %s481, 9
      %s485 = scalar_select %p484, %s481, 9
      %s486 = smul.addr %s485, 20
      %s487 = smul.addr %s483, 200
      %s488 = sadd.s32 %s486, %s487
      %s489 = smul.addr %s488, 8
      %s490 = scalar_lea.vmem %s2, %s489
      %s491 = sadd.s32 %s27, 2
      %p492 = scmp.lt.s32.totalorder %s26, 1
      %s493 = scalar_select %p492, %s26, 1
      %p494 = scmp.lt.s32.totalorder %s27, 7
      %s495 = scalar_select %p494, %s27, 7
      %s496 = smul.addr %s495, 8
      %s497 = smul.addr %s493, 64
      %s498 = sadd.s32 %s496, %s497
      %s499 = smul.addr %s498, 8
      %s500 = scalar_lea.vmem %s8, %s499
      %p501 = scmp.lt.s32.totalorder %s26, 1
      %s502 = scalar_select %p501, %s26, 1
      %p503 = scmp.lt.s32.totalorder %s27, 7
      %s504 = scalar_select %p503, %s27, 7
      %s505 = smul.addr %s502, 8
      %s506 = sadd.s32 %s504, %s505
      %s507 = scalar_lea.vmem %s9, %s506
      %p508 = scmp.lt.s32.totalorder %s26, 1
      %s509 = scalar_select %p508, %s26, 1
      %p510 = scmp.lt.s32.totalorder %s27, 7
      %s511 = scalar_select %p510, %s27, 7
      %s512 = smul.addr %s509, 8
      %s513 = sadd.s32 %s511, %s512
      %s514 = scalar_lea.vmem %s10, %s513
      %v515 = vld [vmem:[%s469] sm:$0xff]
      %v516 = vld [vmem:[%s469 + $0x8] sm:$0x3]
      %v517 = vld [vmem:[%s469 + $0x10] sm:$0xff]
      %v518 = vld [vmem:[%s469 + $0x18] sm:$0x3]
      %v519 = vld [vmem:[%s469 + $0x20] sm:$0xff]
      %v520 = vld [vmem:[%s469 + $0x28] sm:$0x3]
      %v521 = vld [vmem:[%s469 + $0x30] sm:$0xff]
      %v522 = vld [vmem:[%s469 + $0x38] sm:$0x3]
      %v523 = vld [vmem:[%s469 + $0x40] sm:$0xff]
      %v524 = vld [vmem:[%s469 + $0x48] sm:$0x3]
      %v525 = vld [vmem:[%s469 + $0x50] sm:$0xff]
      %v526 = vld [vmem:[%s469 + $0x58] sm:$0x3]
      %v527 = vld [vmem:[%s469 + $0x60] sm:$0xff]
      %v528 = vld [vmem:[%s469 + $0x68] sm:$0x3]
      %v529 = vld [vmem:[%s469 + $0x70] sm:$0xff]
      %v530 = vld [vmem:[%s469 + $0x78] sm:$0x3]
      %v531 = vld [vmem:[%s469 + $0x80] sm:$0xff]
      %v532 = vld [vmem:[%s469 + $0x88] sm:$0x3]
      %v533 = vld [vmem:[%s469 + $0x90] sm:$0xff]
      %v534 = vld [vmem:[%s469 + $0x98] sm:$0x3]
      %v535 = vld [vmem:[%s479] sm:$0xff]
      %v536 = vld [vmem:[%s479 + $0x8] sm:$0x3]
      %v537 = vld [vmem:[%s479 + $0x10] sm:$0xff]
      %v538 = vld [vmem:[%s479 + $0x18] sm:$0x3]
      %v539 = vld [vmem:[%s479 + $0x20] sm:$0xff]
      %v540 = vld [vmem:[%s479 + $0x28] sm:$0x3]
      %v541 = vld [vmem:[%s479 + $0x30] sm:$0xff]
      %v542 = vld [vmem:[%s479 + $0x38] sm:$0x3]
      %v543 = vld [vmem:[%s479 + $0x40] sm:$0xff]
      %v544 = vld [vmem:[%s479 + $0x48] sm:$0x3]
      %v545 = vld [vmem:[%s479 + $0x50] sm:$0xff]
      %v546 = vld [vmem:[%s479 + $0x58] sm:$0x3]
      %v547 = vld [vmem:[%s479 + $0x60] sm:$0xff]
      %v548 = vld [vmem:[%s479 + $0x68] sm:$0x3]
      %v549 = vld [vmem:[%s479 + $0x70] sm:$0xff]
      %v550 = vld [vmem:[%s479 + $0x78] sm:$0x3]
      %v551 = vld [vmem:[%s479 + $0x80] sm:$0xff]
      %v552 = vld [vmem:[%s479 + $0x88] sm:$0x3]
      %v553 = vld [vmem:[%s479 + $0x90] sm:$0xff]
      %v554 = vld [vmem:[%s479 + $0x98] sm:$0x3]
      %v555 = vld [vmem:[%s490] sm:$0xff]
      %v556 = vld [vmem:[%s490 + $0x8] sm:$0x3]
      %v557 = vld [vmem:[%s490 + $0x10] sm:$0xff]
      %v558 = vld [vmem:[%s490 + $0x18] sm:$0x3]
      %v559 = vld [vmem:[%s490 + $0x20] sm:$0xff]
      %v560 = vld [vmem:[%s490 + $0x28] sm:$0x3]
      %v561 = vld [vmem:[%s490 + $0x30] sm:$0xff]
      %v562 = vld [vmem:[%s490 + $0x38] sm:$0x3]
      %v563 = vld [vmem:[%s490 + $0x40] sm:$0xff]
      %v564 = vld [vmem:[%s490 + $0x48] sm:$0x3]
      %v565 = vld [vmem:[%s490 + $0x50] sm:$0xff]
      %v566 = vld [vmem:[%s490 + $0x58] sm:$0x3]
      %v567 = vld [vmem:[%s490 + $0x60] sm:$0xff]
      %v568 = vld [vmem:[%s490 + $0x68] sm:$0x3]
      %v569 = vld [vmem:[%s490 + $0x70] sm:$0xff]
      %v570 = vld [vmem:[%s490 + $0x78] sm:$0x3]
      %v571 = vld [vmem:[%s490 + $0x80] sm:$0xff]
      %v572 = vld [vmem:[%s490 + $0x88] sm:$0x3]
      %v573 = vld [vmem:[%s490 + $0x90] sm:$0xff]
      %v574 = vld [vmem:[%s490 + $0x98] sm:$0x3]
      %vm591 = vcmask 1046528
      %v592 = vrot.slane %v515, 1
      %v593 = vrot.slane %v516, 1
      %v594 = vsel %vm591, %v592, %v593
      %v595 = vrot.slane %v517, 1
      %v596 = vrot.slane %v518, 1
      %v597 = vsel %vm591, %v595, %v596
      %v598 = vrot.slane %v519, 1
      %v599 = vrot.slane %v520, 1
      %v600 = vsel %vm591, %v598, %v599
      %v601 = vrot.slane %v521, 1
      %v602 = vrot.slane %v522, 1
      %v603 = vsel %vm591, %v601, %v602
      %v604 = vrot.slane %v523, 1
      %v605 = vrot.slane %v524, 1
      %v606 = vsel %vm591, %v604, %v605
      %v607 = vrot.slane %v525, 1
      %v608 = vrot.slane %v526, 1
      %v609 = vsel %vm591, %v607, %v608
      %v610 = vrot.slane %v527, 1
      %v611 = vrot.slane %v528, 1
      %v612 = vsel %vm591, %v610, %v611
      %v613 = vrot.slane %v529, 1
      %v614 = vrot.slane %v530, 1
      %v615 = vsel %vm591, %v613, %v614
      %vm624 = vcmask 1045504
      %v625 = vrot.slane %v515, 2
      %v626 = vrot.slane %v516, 2
      %v627 = vsel %vm624, %v625, %v626
      %v628 = vrot.slane %v517, 2
      %v629 = vrot.slane %v518, 2
      %v630 = vsel %vm624, %v628, %v629
      %v631 = vrot.slane %v519, 2
      %v632 = vrot.slane %v520, 2
      %v633 = vsel %vm624, %v631, %v632
      %v634 = vrot.slane %v521, 2
      %v635 = vrot.slane %v522, 2
      %v636 = vsel %vm624, %v634, %v635
      %v637 = vrot.slane %v523, 2
      %v638 = vrot.slane %v524, 2
      %v639 = vsel %vm624, %v637, %v638
      %v640 = vrot.slane %v525, 2
      %v641 = vrot.slane %v526, 2
      %v642 = vsel %vm624, %v640, %v641
      %v643 = vrot.slane %v527, 2
      %v644 = vrot.slane %v528, 2
      %v645 = vsel %vm624, %v643, %v644
      %v646 = vrot.slane %v529, 2
      %v647 = vrot.slane %v530, 2
      %v648 = vsel %vm624, %v646, %v647
      %v659 = vrot.slane %v531, 1
      %v660 = vrot.slane %v532, 1
      %v661 = vsel %vm591, %v659, %v660
      %v663 = vrot.slane %v531, 2
      %v664 = vrot.slane %v532, 2
      %v665 = vsel %vm624, %v663, %v664
      %v669 = vrot.slane %v533, 1
      %v670 = vrot.slane %v534, 1
      %v671 = vsel %vm591, %v669, %v670
      %v673 = vrot.slane %v533, 2
      %v674 = vrot.slane %v534, 2
      %v675 = vsel %vm624, %v673, %v674
      %v693 = vrot.slane %v535, 1
      %v694 = vrot.slane %v536, 1
      %v695 = vsel %vm591, %v693, %v694
      %v696 = vrot.slane %v537, 1
      %v697 = vrot.slane %v538, 1
      %v698 = vsel %vm591, %v696, %v697
      %v699 = vrot.slane %v539, 1
      %v700 = vrot.slane %v540, 1
      %v701 = vsel %vm591, %v699, %v700
      %v702 = vrot.slane %v541, 1
      %v703 = vrot.slane %v542, 1
      %v704 = vsel %vm591, %v702, %v703
      %v705 = vrot.slane %v543, 1
      %v706 = vrot.slane %v544, 1
      %v707 = vsel %vm591, %v705, %v706
      %v708 = vrot.slane %v545, 1
      %v709 = vrot.slane %v546, 1
      %v710 = vsel %vm591, %v708, %v709
      %v711 = vrot.slane %v547, 1
      %v712 = vrot.slane %v548, 1
      %v713 = vsel %vm591, %v711, %v712
      %v714 = vrot.slane %v549, 1
      %v715 = vrot.slane %v550, 1
      %v716 = vsel %vm591, %v714, %v715
      %v725 = vrot.slane %v535, 2
      %v726 = vrot.slane %v536, 2
      %v727 = vsel %vm624, %v725, %v726
      %v728 = vrot.slane %v537, 2
      %v729 = vrot.slane %v538, 2
      %v730 = vsel %vm624, %v728, %v729
      %v731 = vrot.slane %v539, 2
      %v732 = vrot.slane %v540, 2
      %v733 = vsel %vm624, %v731, %v732
      %v734 = vrot.slane %v541, 2
      %v735 = vrot.slane %v542, 2
      %v736 = vsel %vm624, %v734, %v735
      %v737 = vrot.slane %v543, 2
      %v738 = vrot.slane %v544, 2
      %v739 = vsel %vm624, %v737, %v738
      %v740 = vrot.slane %v545, 2
      %v741 = vrot.slane %v546, 2
      %v742 = vsel %vm624, %v740, %v741
      %v743 = vrot.slane %v547, 2
      %v744 = vrot.slane %v548, 2
      %v745 = vsel %vm624, %v743, %v744
      %v746 = vrot.slane %v549, 2
      %v747 = vrot.slane %v550, 2
      %v748 = vsel %vm624, %v746, %v747
      %v759 = vrot.slane %v551, 1
      %v760 = vrot.slane %v552, 1
      %v761 = vsel %vm591, %v759, %v760
      %v763 = vrot.slane %v551, 2
      %v764 = vrot.slane %v552, 2
      %v765 = vsel %vm624, %v763, %v764
      %v769 = vrot.slane %v553, 1
      %v770 = vrot.slane %v554, 1
      %v771 = vsel %vm591, %v769, %v770
      %v773 = vrot.slane %v553, 2
      %v774 = vrot.slane %v554, 2
      %v775 = vsel %vm624, %v773, %v774
      %v793 = vrot.slane %v555, 1
      %v794 = vrot.slane %v556, 1
      %v795 = vsel %vm591, %v793, %v794
      %v796 = vrot.slane %v557, 1
      %v797 = vrot.slane %v558, 1
      %v798 = vsel %vm591, %v796, %v797
      %v799 = vrot.slane %v559, 1
      %v800 = vrot.slane %v560, 1
      %v801 = vsel %vm591, %v799, %v800
      %v802 = vrot.slane %v561, 1
      %v803 = vrot.slane %v562, 1
      %v804 = vsel %vm591, %v802, %v803
      %v805 = vrot.slane %v563, 1
      %v806 = vrot.slane %v564, 1
      %v807 = vsel %vm591, %v805, %v806
      %v808 = vrot.slane %v565, 1
      %v809 = vrot.slane %v566, 1
      %v810 = vsel %vm591, %v808, %v809
      %v811 = vrot.slane %v567, 1
      %v812 = vrot.slane %v568, 1
      %v813 = vsel %vm591, %v811, %v812
      %v814 = vrot.slane %v569, 1
      %v815 = vrot.slane %v570, 1
      %v816 = vsel %vm591, %v814, %v815
      %v825 = vrot.slane %v555, 2
      %v826 = vrot.slane %v556, 2
      %v827 = vsel %vm624, %v825, %v826
      %v828 = vrot.slane %v557, 2
      %v829 = vrot.slane %v558, 2
      %v830 = vsel %vm624, %v828, %v829
      %v831 = vrot.slane %v559, 2
      %v832 = vrot.slane %v560, 2
      %v833 = vsel %vm624, %v831, %v832
      %v834 = vrot.slane %v561, 2
      %v835 = vrot.slane %v562, 2
      %v836 = vsel %vm624, %v834, %v835
      %v837 = vrot.slane %v563, 2
      %v838 = vrot.slane %v564, 2
      %v839 = vsel %vm624, %v837, %v838
      %v840 = vrot.slane %v565, 2
      %v841 = vrot.slane %v566, 2
      %v842 = vsel %vm624, %v840, %v841
      %v843 = vrot.slane %v567, 2
      %v844 = vrot.slane %v568, 2
      %v845 = vsel %vm624, %v843, %v844
      %v846 = vrot.slane %v569, 2
      %v847 = vrot.slane %v570, 2
      %v848 = vsel %vm624, %v846, %v847
      %v859 = vrot.slane %v571, 1
      %v860 = vrot.slane %v572, 1
      %v861 = vsel %vm591, %v859, %v860
      %v863 = vrot.slane %v571, 2
      %v864 = vrot.slane %v572, 2
      %v865 = vsel %vm624, %v863, %v864
      %v869 = vrot.slane %v573, 1
      %v870 = vrot.slane %v574, 1
      %v871 = vsel %vm591, %v869, %v870
      %v873 = vrot.slane %v573, 2
      %v874 = vrot.slane %v574, 2
      %v875 = vsel %vm624, %v873, %v874
      %v877 = vpack.c.bf16 %v517, %v515
      %v878 = vpack.c.bf16 %v597, %v594
      %v879 = vpack.c.bf16 %v630, %v627
      %v880 = vpack.c.bf16 %v519, %v517
      %v881 = vpack.c.bf16 %v600, %v597
      %v882 = vpack.c.bf16 %v633, %v630
      %v883 = vpack.c.bf16 %v521, %v519
      %v884 = vpack.c.bf16 %v603, %v600
      %v885 = vpack.c.bf16 %v636, %v633
      %v886 = vpack.c.bf16 %v537, %v535
      %v887 = vpack.c.bf16 %v698, %v695
      %v888 = vpack.c.bf16 %v730, %v727
      %v889 = vpack.c.bf16 %v539, %v537
      %v890 = vpack.c.bf16 %v701, %v698
      %v891 = vpack.c.bf16 %v733, %v730
      %v892 = vpack.c.bf16 %v541, %v539
      %v893 = vpack.c.bf16 %v704, %v701
      %v894 = vpack.c.bf16 %v736, %v733
      %v895 = vpack.c.bf16 %v557, %v555
      %v896 = vpack.c.bf16 %v798, %v795
      %v897 = vpack.c.bf16 %v830, %v827
      %v898 = vpack.c.bf16 %v559, %v557
      %v899 = vpack.c.bf16 %v801, %v798
      %v900 = vpack.c.bf16 %v833, %v830
      %v901 = vpack.c.bf16 %v561, %v559
      %v902 = vpack.c.bf16 %v804, %v801
      %v903 = vpack.c.bf16 %v836, %v833
      %v904 = vpack.c.bf16 %v523, %v521
      %v905 = vpack.c.bf16 %v606, %v603
      %v906 = vpack.c.bf16 %v639, %v636
      %v907 = vpack.c.bf16 %v525, %v523
      %v908 = vpack.c.bf16 %v609, %v606
      %v909 = vpack.c.bf16 %v642, %v639
      %v910 = vpack.c.bf16 %v543, %v541
      %v911 = vpack.c.bf16 %v707, %v704
      %v912 = vpack.c.bf16 %v739, %v736
      %v913 = vpack.c.bf16 %v545, %v543
      %v914 = vpack.c.bf16 %v710, %v707
      %v915 = vpack.c.bf16 %v742, %v739
      %v916 = vpack.c.bf16 %v563, %v561
      %v917 = vpack.c.bf16 %v807, %v804
      %v918 = vpack.c.bf16 %v839, %v836
      %v919 = vpack.c.bf16 %v565, %v563
      %v920 = vpack.c.bf16 %v810, %v807
      %v921 = vpack.c.bf16 %v842, %v839
      %v922 = vpack.c.bf16 %v527, %v525
      %v923 = vpack.c.bf16 %v612, %v609
      %v924 = vpack.c.bf16 %v645, %v642
      %v925 = vpack.c.bf16 %v529, %v527
      %v926 = vpack.c.bf16 %v615, %v612
      %v927 = vpack.c.bf16 %v648, %v645
      %v928 = vpack.c.bf16 %v547, %v545
      %v929 = vpack.c.bf16 %v713, %v710
      %v930 = vpack.c.bf16 %v745, %v742
      %v931 = vpack.c.bf16 %v549, %v547
      %v932 = vpack.c.bf16 %v716, %v713
      %v933 = vpack.c.bf16 %v748, %v745
      %v934 = vpack.c.bf16 %v567, %v565
      %v935 = vpack.c.bf16 %v813, %v810
      %v936 = vpack.c.bf16 %v845, %v842
      %v937 = vpack.c.bf16 %v569, %v567
      %v938 = vpack.c.bf16 %v816, %v813
      %v939 = vpack.c.bf16 %v848, %v845
      %v940 = vpack.c.bf16 %v531, %v529
      %v941 = vpack.c.bf16 %v661, %v615
      %v942 = vpack.c.bf16 %v665, %v648
      %v943 = vpack.c.bf16 %v533, %v531
      %v944 = vpack.c.bf16 %v671, %v661
      %v945 = vpack.c.bf16 %v675, %v665
      %v946 = vpack.c.bf16 %v551, %v549
      %v947 = vpack.c.bf16 %v761, %v716
      %v948 = vpack.c.bf16 %v765, %v748
      %v949 = vpack.c.bf16 %v553, %v551
      %v950 = vpack.c.bf16 %v771, %v761
      %v951 = vpack.c.bf16 %v775, %v765
      %v952 = vpack.c.bf16 %v571, %v569
      %v953 = vpack.c.bf16 %v861, %v816
      %v954 = vpack.c.bf16 %v865, %v848
      %v955 = vpack.c.bf16 %v573, %v571
      %v956 = vpack.c.bf16 %v871, %v861
      %v957 = vpack.c.bf16 %v875, %v865
      %v958 = vld [vmem:[%s3] sm:$0xf]
      %v959 = vld [vmem:[%s3 + $0x4] sm:$0xf]
      %v960 = vld [vmem:[%s3 + $0x8] sm:$0xf]
      %v961 = vld [vmem:[%s3 + $0xc] sm:$0xf]
      %v962 = vld [vmem:[%s3 + $0x10] sm:$0xf]
      %v963 = vld [vmem:[%s3 + $0x14] sm:$0xf]
      %v964 = vld [vmem:[%s3 + $0x18] sm:$0xf]
      %v965 = vld [vmem:[%s3 + $0x1c] sm:$0xf]
      %v966 = vld [vmem:[%s3 + $0x20] sm:$0xf]
      %v967 = vld [vmem:[%s3 + $0x24] sm:$0xf]
      %v968 = vld [vmem:[%s3 + $0x28] sm:$0xf]
      %v969 = vld [vmem:[%s3 + $0x2c] sm:$0xf]
      %v970 = vld [vmem:[%s3 + $0x30] sm:$0xf]
      %v971 = vld [vmem:[%s3 + $0x34] sm:$0xf]
      %v972 = vld [vmem:[%s3 + $0x38] sm:$0xf]
      %v973 = vld [vmem:[%s3 + $0x3c] sm:$0xf]
      %v974 = vld [vmem:[%s3 + $0x40] sm:$0xf]
      %v975 = vld [vmem:[%s3 + $0x44] sm:$0xf]
      %v976 = vld [vmem:[%s3 + $0x48] sm:$0xf]
      %v977 = vld [vmem:[%s3 + $0x4c] sm:$0xf]
      %v978 = vld [vmem:[%s3 + $0x50] sm:$0xf]
      %v979 = vld [vmem:[%s3 + $0x54] sm:$0xf]
      %v980 = vld [vmem:[%s3 + $0x58] sm:$0xf]
      %v981 = vld [vmem:[%s3 + $0x5c] sm:$0xf]
      %v982 = vld [vmem:[%s3 + $0x60] sm:$0xf]
      %v983 = vld [vmem:[%s3 + $0x64] sm:$0xf]
      %v984 = vld [vmem:[%s3 + $0x68] sm:$0xf]
      %v985 = vld [vmem:[%s3 + $0x6c] sm:$0xf]
      %v986 = vld [vmem:[%s3 + $0x70] sm:$0xf]
      %v987 = vld [vmem:[%s3 + $0x74] sm:$0xf]
      %v988 = vld [vmem:[%s3 + $0x78] sm:$0xf]
      %v989 = vld [vmem:[%s3 + $0x7c] sm:$0xf]
      %v990 = vld [vmem:[%s3 + $0x80] sm:$0xf]
      %v991 = vld [vmem:[%s3 + $0x84] sm:$0xf]
      %v992 = vld [vmem:[%s3 + $0x88] sm:$0xf]
      %v993 = vld [vmem:[%s3 + $0x8c] sm:$0xf]
      %v994 = vld [vmem:[%s3 + $0x90] sm:$0xf]
      %v995 = vld [vmem:[%s3 + $0x94] sm:$0xf]
      %v996 = vld [vmem:[%s3 + $0x98] sm:$0xf]
      %v997 = vld [vmem:[%s3 + $0x9c] sm:$0xf]
      %v998 = vld [vmem:[%s3 + $0xa0] sm:$0xf]
      %v999 = vld [vmem:[%s3 + $0xa4] sm:$0xf]
      %v1000 = vld [vmem:[%s3 + $0xa8] sm:$0xf]
      %v1001 = vld [vmem:[%s3 + $0xac] sm:$0xf]
      %v1002 = vld [vmem:[%s3 + $0xb0] sm:$0xf]
      %v1003 = vld [vmem:[%s3 + $0xb4] sm:$0xf]
      %v1004 = vld [vmem:[%s3 + $0xb8] sm:$0xf]
      %v1005 = vld [vmem:[%s3 + $0xbc] sm:$0xf]
      %v1006 = vld [vmem:[%s3 + $0xc0] sm:$0xf]
      %v1007 = vld [vmem:[%s3 + $0xc4] sm:$0xf]
      %v1008 = vld [vmem:[%s3 + $0xc8] sm:$0xf]
      %v1009 = vld [vmem:[%s3 + $0xcc] sm:$0xf]
      %v1010 = vld [vmem:[%s3 + $0xd0] sm:$0xf]
      %v1011 = vld [vmem:[%s3 + $0xd4] sm:$0xf]
      %v1012 = vld [vmem:[%s3 + $0xd8] sm:$0xf]
      %v1013 = vld [vmem:[%s3 + $0xdc] sm:$0xf]
      %v1014 = vld [vmem:[%s3 + $0xe0] sm:$0xf]
      %v1015 = vld [vmem:[%s3 + $0xe4] sm:$0xf]
      %v1016 = vld [vmem:[%s3 + $0xe8] sm:$0xf]
      %v1017 = vld [vmem:[%s3 + $0xec] sm:$0xf]
      %v1018 = vld [vmem:[%s3 + $0xf0] sm:$0xf]
      %v1019 = vld [vmem:[%s3 + $0xf4] sm:$0xf]
      %v1020 = vld [vmem:[%s3 + $0xf8] sm:$0xf]
      %v1021 = vld [vmem:[%s3 + $0xfc] sm:$0xf]
      %v1022 = vld [vmem:[%s3 + $0x100] sm:$0xf]
      %v1023 = vld [vmem:[%s3 + $0x104] sm:$0xf]
      %v1024 = vld [vmem:[%s3 + $0x108] sm:$0xf]
      %v1025 = vld [vmem:[%s3 + $0x10c] sm:$0xf]
      %v1026 = vld [vmem:[%s3 + $0x110] sm:$0xf]
      %v1027 = vld [vmem:[%s3 + $0x114] sm:$0xf]
      %v1028 = vld [vmem:[%s3 + $0x118] sm:$0xf]
      %v1029 = vld [vmem:[%s3 + $0x11c] sm:$0xf]
      %v1030 = vld [vmem:[%s3 + $0x120] sm:$0xf]
      %v1031 = vld [vmem:[%s3 + $0x124] sm:$0xf]
      %v1032 = vld [vmem:[%s3 + $0x128] sm:$0xf]
      %v1033 = vld [vmem:[%s3 + $0x12c] sm:$0xf]
      %v1034 = vld [vmem:[%s3 + $0x130] sm:$0xf]
      %v1035 = vld [vmem:[%s3 + $0x134] sm:$0xf]
      %v1036 = vld [vmem:[%s3 + $0x138] sm:$0xf]
      %v1037 = vld [vmem:[%s3 + $0x13c] sm:$0xf]
      %v1038 = vld [vmem:[%s3 + $0x140] sm:$0xf]
      %v1039 = vld [vmem:[%s3 + $0x144] sm:$0xf]
      %v1040 = vld [vmem:[%s3 + $0x148] sm:$0xf]
      %v1041 = vld [vmem:[%s3 + $0x14c] sm:$0xf]
      %v1042 = vld [vmem:[%s3 + $0x150] sm:$0xf]
      %v1043 = vld [vmem:[%s3 + $0x154] sm:$0xf]
      %v1044 = vld [vmem:[%s3 + $0x158] sm:$0xf]
      %v1045 = vld [vmem:[%s3 + $0x15c] sm:$0xf]
      %v1046 = vld [vmem:[%s3 + $0x160] sm:$0xf]
      %v1047 = vld [vmem:[%s3 + $0x164] sm:$0xf]
      %v1048 = vld [vmem:[%s3 + $0x168] sm:$0xf]
      %v1049 = vld [vmem:[%s3 + $0x16c] sm:$0xf]
      %v1050 = vld [vmem:[%s3 + $0x170] sm:$0xf]
      %v1051 = vld [vmem:[%s3 + $0x174] sm:$0xf]
      %v1052 = vld [vmem:[%s3 + $0x178] sm:$0xf]
      %v1053 = vld [vmem:[%s3 + $0x17c] sm:$0xf]
      %v1054 = vld [vmem:[%s3 + $0x180] sm:$0xf]
      %v1055 = vld [vmem:[%s3 + $0x184] sm:$0xf]
      %v1056 = vld [vmem:[%s3 + $0x188] sm:$0xf]
      %v1057 = vld [vmem:[%s3 + $0x18c] sm:$0xf]
      %v1058 = vld [vmem:[%s3 + $0x190] sm:$0xf]
      %v1059 = vld [vmem:[%s3 + $0x194] sm:$0xf]
      %v1060 = vld [vmem:[%s3 + $0x198] sm:$0xf]
      %v1061 = vld [vmem:[%s3 + $0x19c] sm:$0xf]
      %v1062 = vld [vmem:[%s3 + $0x1a0] sm:$0xf]
      %v1063 = vld [vmem:[%s3 + $0x1a4] sm:$0xf]
      %v1064 = vld [vmem:[%s3 + $0x1a8] sm:$0xf]
      %v1065 = vld [vmem:[%s3 + $0x1ac] sm:$0xf]
      %v1066 = vld [vmem:[%s3 + $0x1b0] sm:$0xf]
      %v1067 = vld [vmem:[%s3 + $0x1b4] sm:$0xf]
      %v1068 = vld [vmem:[%s3 + $0x1b8] sm:$0xf]
      %v1069 = vld [vmem:[%s3 + $0x1bc] sm:$0xf]
      %v1070 = vld [vmem:[%s3 + $0x1c0] sm:$0xf]
      %v1071 = vld [vmem:[%s3 + $0x1c4] sm:$0xf]
      %v1072 = vld [vmem:[%s3 + $0x1c8] sm:$0xf]
      %v1073 = vld [vmem:[%s3 + $0x1cc] sm:$0xf]
      %v1074 = vld [vmem:[%s3 + $0x1d0] sm:$0xf]
      %v1075 = vld [vmem:[%s3 + $0x1d4] sm:$0xf]
      %v1076 = vld [vmem:[%s3 + $0x1d8] sm:$0xf]
      %v1077 = vld [vmem:[%s3 + $0x1dc] sm:$0xf]
      %v1078 = vld [vmem:[%s3 + $0x1e0] sm:$0xf]
      %v1079 = vld [vmem:[%s3 + $0x1e4] sm:$0xf]
      %v1080 = vld [vmem:[%s3 + $0x1e8] sm:$0xf]
      %v1081 = vld [vmem:[%s3 + $0x1ec] sm:$0xf]
      %v1082 = vld [vmem:[%s3 + $0x1f0] sm:$0xf]
      %v1083 = vld [vmem:[%s3 + $0x1f4] sm:$0xf]
      %v1084 = vld [vmem:[%s3 + $0x1f8] sm:$0xf]
      %v1085 = vld [vmem:[%s3 + $0x1fc] sm:$0xf]
      %v1086 = vld [vmem:[%s3 + $0x200] sm:$0xf]
      %v1087 = vld [vmem:[%s3 + $0x204] sm:$0xf]
      %v1088 = vld [vmem:[%s3 + $0x208] sm:$0xf]
      %v1089 = vld [vmem:[%s3 + $0x20c] sm:$0xf]
      %v1090 = vld [vmem:[%s3 + $0x210] sm:$0xf]
      %v1091 = vld [vmem:[%s3 + $0x214] sm:$0xf]
      %v1092 = vld [vmem:[%s3 + $0x218] sm:$0xf]
      %v1093 = vld [vmem:[%s3 + $0x21c] sm:$0xf]
      %v1094 = vld [vmem:[%s3 + $0x220] sm:$0xf]
      %v1095 = vld [vmem:[%s3 + $0x224] sm:$0xf]
      %v1096 = vld [vmem:[%s3 + $0x228] sm:$0xf]
      %v1097 = vld [vmem:[%s3 + $0x22c] sm:$0xf]
      %v1098 = vld [vmem:[%s3 + $0x230] sm:$0xf]
      %v1099 = vld [vmem:[%s3 + $0x234] sm:$0xf]
      %v1100 = vld [vmem:[%s3 + $0x238] sm:$0xf]
      %v1101 = vld [vmem:[%s3 + $0x23c] sm:$0xf]
      %v1102 = vld [vmem:[%s3 + $0x240] sm:$0xf]
      %v1103 = vld [vmem:[%s3 + $0x244] sm:$0xf]
      %v1104 = vld [vmem:[%s3 + $0x248] sm:$0xf]
      %v1105 = vld [vmem:[%s3 + $0x24c] sm:$0xf]
      %v1106 = vld [vmem:[%s3 + $0x250] sm:$0xf]
      %v1107 = vld [vmem:[%s3 + $0x254] sm:$0xf]
      %v1108 = vld [vmem:[%s3 + $0x258] sm:$0xf]
      %v1109 = vld [vmem:[%s3 + $0x25c] sm:$0xf]
      %v1110 = vld [vmem:[%s3 + $0x260] sm:$0xf]
      %v1111 = vld [vmem:[%s3 + $0x264] sm:$0xf]
      %v1112 = vld [vmem:[%s3 + $0x268] sm:$0xf]
      %v1113 = vld [vmem:[%s3 + $0x26c] sm:$0xf]
      %v1114 = vld [vmem:[%s3 + $0x270] sm:$0xf]
      %v1115 = vld [vmem:[%s3 + $0x274] sm:$0xf]
      %v1116 = vld [vmem:[%s3 + $0x278] sm:$0xf]
      %v1117 = vld [vmem:[%s3 + $0x27c] sm:$0xf]
      %v1118 = vld [vmem:[%s3 + $0x280] sm:$0xf]
      %v1119 = vld [vmem:[%s3 + $0x284] sm:$0xf]
      %v1120 = vld [vmem:[%s3 + $0x288] sm:$0xf]
      %v1121 = vld [vmem:[%s3 + $0x28c] sm:$0xf]
      %v1122 = vld [vmem:[%s3 + $0x290] sm:$0xf]
      %v1123 = vld [vmem:[%s3 + $0x294] sm:$0xf]
      %v1124 = vld [vmem:[%s3 + $0x298] sm:$0xf]
      %v1125 = vld [vmem:[%s3 + $0x29c] sm:$0xf]
      %v1126 = vld [vmem:[%s3 + $0x2a0] sm:$0xf]
      %v1127 = vld [vmem:[%s3 + $0x2a4] sm:$0xf]
      %v1128 = vld [vmem:[%s3 + $0x2a8] sm:$0xf]
      %v1129 = vld [vmem:[%s3 + $0x2ac] sm:$0xf]
      %v1130 = vld [vmem:[%s3 + $0x2b0] sm:$0xf]
      %v1131 = vld [vmem:[%s3 + $0x2b4] sm:$0xf]
      %v1132 = vld [vmem:[%s3 + $0x2b8] sm:$0xf]
      %v1133 = vld [vmem:[%s3 + $0x2bc] sm:$0xf]
      %v1134 = vld [vmem:[%s3 + $0x2c0] sm:$0xf]
      %v1135 = vld [vmem:[%s3 + $0x2c4] sm:$0xf]
      %v1136 = vld [vmem:[%s3 + $0x2c8] sm:$0xf]
      %v1137 = vld [vmem:[%s3 + $0x2cc] sm:$0xf]
      %v1138 = vld [vmem:[%s3 + $0x2d0] sm:$0xf]
      %v1139 = vld [vmem:[%s3 + $0x2d4] sm:$0xf]
      %v1140 = vld [vmem:[%s3 + $0x2d8] sm:$0xf]
      %v1141 = vld [vmem:[%s3 + $0x2dc] sm:$0xf]
      %v1142 = vld [vmem:[%s3 + $0x2e0] sm:$0xf]
      %v1143 = vld [vmem:[%s3 + $0x2e4] sm:$0xf]
      %v1144 = vld [vmem:[%s3 + $0x2e8] sm:$0xf]
      %v1145 = vld [vmem:[%s3 + $0x2ec] sm:$0xf]
      %v1146 = vld [vmem:[%s3 + $0x2f0] sm:$0xf]
      %v1147 = vld [vmem:[%s3 + $0x2f4] sm:$0xf]
      %v1148 = vld [vmem:[%s3 + $0x2f8] sm:$0xf]
      %v1149 = vld [vmem:[%s3 + $0x2fc] sm:$0xf]
      %v1150 = vld [vmem:[%s3 + $0x300] sm:$0xf]
      %v1151 = vld [vmem:[%s3 + $0x304] sm:$0xf]
      %v1152 = vld [vmem:[%s3 + $0x308] sm:$0xf]
      %v1153 = vld [vmem:[%s3 + $0x30c] sm:$0xf]
      %v1154 = vld [vmem:[%s3 + $0x310] sm:$0xf]
      %v1155 = vld [vmem:[%s3 + $0x314] sm:$0xf]
      %v1156 = vld [vmem:[%s3 + $0x318] sm:$0xf]
      %v1157 = vld [vmem:[%s3 + $0x31c] sm:$0xf]
      %v1158 = vld [vmem:[%s3 + $0x320] sm:$0xf]
      %v1159 = vld [vmem:[%s3 + $0x324] sm:$0xf]
      %v1160 = vld [vmem:[%s3 + $0x328] sm:$0xf]
      %v1161 = vld [vmem:[%s3 + $0x32c] sm:$0xf]
      %v1162 = vld [vmem:[%s3 + $0x330] sm:$0xf]
      %v1163 = vld [vmem:[%s3 + $0x334] sm:$0xf]
      %v1164 = vld [vmem:[%s3 + $0x338] sm:$0xf]
      %v1165 = vld [vmem:[%s3 + $0x33c] sm:$0xf]
      %v1166 = vld [vmem:[%s3 + $0x340] sm:$0xf]
      %v1167 = vld [vmem:[%s3 + $0x344] sm:$0xf]
      %v1168 = vld [vmem:[%s3 + $0x348] sm:$0xf]
      %v1169 = vld [vmem:[%s3 + $0x34c] sm:$0xf]
      %v1170 = vld [vmem:[%s3 + $0x350] sm:$0xf]
      %v1171 = vld [vmem:[%s3 + $0x354] sm:$0xf]
      %v1172 = vld [vmem:[%s3 + $0x358] sm:$0xf]
      %v1173 = vld [vmem:[%s3 + $0x35c] sm:$0xf]
      %v1174 = vld [vmem:[%s3 + $0x360] sm:$0xf]
      %v1175 = vld [vmem:[%s3 + $0x364] sm:$0xf]
      %v1176 = vld [vmem:[%s3 + $0x368] sm:$0xf]
      %v1177 = vld [vmem:[%s3 + $0x36c] sm:$0xf]
      %v1178 = vld [vmem:[%s3 + $0x370] sm:$0xf]
      %v1179 = vld [vmem:[%s3 + $0x374] sm:$0xf]
      %v1180 = vld [vmem:[%s3 + $0x378] sm:$0xf]
      %v1181 = vld [vmem:[%s3 + $0x37c] sm:$0xf]
      %v1182 = vld [vmem:[%s3 + $0x380] sm:$0xf]
      %v1183 = vld [vmem:[%s3 + $0x384] sm:$0xf]
      %v1184 = vld [vmem:[%s3 + $0x388] sm:$0xf]
      %v1185 = vld [vmem:[%s3 + $0x38c] sm:$0xf]
      %v1186 = vld [vmem:[%s3 + $0x390] sm:$0xf]
      %v1187 = vld [vmem:[%s3 + $0x394] sm:$0xf]
      %v1188 = vld [vmem:[%s3 + $0x398] sm:$0xf]
      %v1189 = vld [vmem:[%s3 + $0x39c] sm:$0xf]
      %v1190 = vld [vmem:[%s3 + $0x3a0] sm:$0xf]
      %v1191 = vld [vmem:[%s3 + $0x3a4] sm:$0xf]
      %v1192 = vld [vmem:[%s3 + $0x3a8] sm:$0xf]
      %v1193 = vld [vmem:[%s3 + $0x3ac] sm:$0xf]
      %v1194 = vld [vmem:[%s3 + $0x3b0] sm:$0xf]
      %v1195 = vld [vmem:[%s3 + $0x3b4] sm:$0xf]
      %v1196 = vld [vmem:[%s3 + $0x3b8] sm:$0xf]
      %v1197 = vld [vmem:[%s3 + $0x3bc] sm:$0xf]
      %v1198 = vld [vmem:[%s3 + $0x3c0] sm:$0xf]
      %v1199 = vld [vmem:[%s3 + $0x3c4] sm:$0xf]
      %v1200 = vld [vmem:[%s3 + $0x3c8] sm:$0xf]
      %v1201 = vld [vmem:[%s3 + $0x3cc] sm:$0xf]
      %v1202 = vld [vmem:[%s3 + $0x3d0] sm:$0xf]
      %v1203 = vld [vmem:[%s3 + $0x3d4] sm:$0xf]
      %v1204 = vld [vmem:[%s3 + $0x3d8] sm:$0xf]
      %v1205 = vld [vmem:[%s3 + $0x3dc] sm:$0xf]
      %v1206 = vld [vmem:[%s3 + $0x3e0] sm:$0xf]
      %v1207 = vld [vmem:[%s3 + $0x3e4] sm:$0xf]
      %v1208 = vld [vmem:[%s3 + $0x3e8] sm:$0xf]
      %v1209 = vld [vmem:[%s3 + $0x3ec] sm:$0xf]
      %v1210 = vld [vmem:[%s3 + $0x3f0] sm:$0xf]
      %v1211 = vld [vmem:[%s3 + $0x3f4] sm:$0xf]
      %v1212 = vld [vmem:[%s3 + $0x3f8] sm:$0xf]
      %v1213 = vld [vmem:[%s3 + $0x3fc] sm:$0xf]
      %v1214 = vld [vmem:[%s3 + $0x400] sm:$0xf]
      %v1215 = vld [vmem:[%s3 + $0x404] sm:$0xf]
      %v1216 = vld [vmem:[%s3 + $0x408] sm:$0xf]
      %v1217 = vld [vmem:[%s3 + $0x40c] sm:$0xf]
      %v1218 = vld [vmem:[%s3 + $0x410] sm:$0xf]
      %v1219 = vld [vmem:[%s3 + $0x414] sm:$0xf]
      %v1220 = vld [vmem:[%s3 + $0x418] sm:$0xf]
      %v1221 = vld [vmem:[%s3 + $0x41c] sm:$0xf]
      %v1222 = vld [vmem:[%s3 + $0x420] sm:$0xf]
      %v1223 = vld [vmem:[%s3 + $0x424] sm:$0xf]
      %v1224 = vld [vmem:[%s3 + $0x428] sm:$0xf]
      %v1225 = vld [vmem:[%s3 + $0x42c] sm:$0xf]
      %v1226 = vld [vmem:[%s3 + $0x430] sm:$0xf]
      %v1227 = vld [vmem:[%s3 + $0x434] sm:$0xf]
      %v1228 = vld [vmem:[%s3 + $0x438] sm:$0xf]
      %v1229 = vld [vmem:[%s3 + $0x43c] sm:$0xf]
      %v1230 = vld [vmem:[%s3 + $0x440] sm:$0xf]
      %v1231 = vld [vmem:[%s3 + $0x444] sm:$0xf]
      %v1232 = vld [vmem:[%s3 + $0x448] sm:$0xf]
      %v1233 = vld [vmem:[%s3 + $0x44c] sm:$0xf]
      %v1234 = vld [vmem:[%s3 + $0x450] sm:$0xf]
      %v1235 = vld [vmem:[%s3 + $0x454] sm:$0xf]
      %v1236 = vld [vmem:[%s3 + $0x458] sm:$0xf]
      %v1237 = vld [vmem:[%s3 + $0x45c] sm:$0xf]
      %v1238 = vld [vmem:[%s3 + $0x460] sm:$0xf]
      %v1239 = vld [vmem:[%s3 + $0x464] sm:$0xf]
      %v1240 = vld [vmem:[%s3 + $0x468] sm:$0xf]
      %v1241 = vld [vmem:[%s3 + $0x46c] sm:$0xf]
      %v1242 = vld [vmem:[%s3 + $0x470] sm:$0xf]
      %v1243 = vld [vmem:[%s3 + $0x474] sm:$0xf]
      %v1244 = vld [vmem:[%s3 + $0x478] sm:$0xf]
      %v1245 = vld [vmem:[%s3 + $0x47c] sm:$0xf]
      %v1246 = vld [vmem:[%s3 + $0x480] sm:$0xf]
      %v1247 = vld [vmem:[%s3 + $0x484] sm:$0xf]
      %v1248 = vld [vmem:[%s3 + $0x488] sm:$0xf]
      %v1249 = vld [vmem:[%s3 + $0x48c] sm:$0xf]
      %v1250 = vld [vmem:[%s3 + $0x490] sm:$0xf]
      %v1251 = vld [vmem:[%s3 + $0x494] sm:$0xf]
      %v1252 = vld [vmem:[%s3 + $0x498] sm:$0xf]
      %v1253 = vld [vmem:[%s3 + $0x49c] sm:$0xf]
      %v1254 = vld [vmem:[%s3 + $0x4a0] sm:$0xf]
      %v1255 = vld [vmem:[%s3 + $0x4a4] sm:$0xf]
      %v1256 = vld [vmem:[%s3 + $0x4a8] sm:$0xf]
      %v1257 = vld [vmem:[%s3 + $0x4ac] sm:$0xf]
      %v1258 = vld [vmem:[%s3 + $0x4b0] sm:$0xf]
      %v1259 = vld [vmem:[%s3 + $0x4b4] sm:$0xf]
      %v1260 = vld [vmem:[%s3 + $0x4b8] sm:$0xf]
      %v1261 = vld [vmem:[%s3 + $0x4bc] sm:$0xf]
      %v1262 = vld [vmem:[%s3 + $0x4c0] sm:$0xf]
      %v1263 = vld [vmem:[%s3 + $0x4c4] sm:$0xf]
      %v1264 = vld [vmem:[%s3 + $0x4c8] sm:$0xf]
      %v1265 = vld [vmem:[%s3 + $0x4cc] sm:$0xf]
      %v1266 = vld [vmem:[%s3 + $0x4d0] sm:$0xf]
      %v1267 = vld [vmem:[%s3 + $0x4d4] sm:$0xf]
      %v1268 = vld [vmem:[%s3 + $0x4d8] sm:$0xf]
      %v1269 = vld [vmem:[%s3 + $0x4dc] sm:$0xf]
      %v1270 = vld [vmem:[%s3 + $0x4e0] sm:$0xf]
      %v1271 = vld [vmem:[%s3 + $0x4e4] sm:$0xf]
      %v1272 = vld [vmem:[%s3 + $0x4e8] sm:$0xf]
      %v1273 = vld [vmem:[%s3 + $0x4ec] sm:$0xf]
      %v1274 = vld [vmem:[%s3 + $0x4f0] sm:$0xf]
      %v1275 = vld [vmem:[%s3 + $0x4f4] sm:$0xf]
      %v1276 = vld [vmem:[%s3 + $0x4f8] sm:$0xf]
      %v1277 = vld [vmem:[%s3 + $0x4fc] sm:$0xf]
      %v1278 = vld [vmem:[%s3 + $0x500] sm:$0xf]
      %v1279 = vld [vmem:[%s3 + $0x504] sm:$0xf]
      %v1280 = vld [vmem:[%s3 + $0x508] sm:$0xf]
      %v1281 = vld [vmem:[%s3 + $0x50c] sm:$0xf]
      %v1282 = vld [vmem:[%s3 + $0x510] sm:$0xf]
      %v1283 = vld [vmem:[%s3 + $0x514] sm:$0xf]
      %v1284 = vld [vmem:[%s3 + $0x518] sm:$0xf]
      %v1285 = vld [vmem:[%s3 + $0x51c] sm:$0xf]
      %v1286 = vld [vmem:[%s3 + $0x520] sm:$0xf]
      %v1287 = vld [vmem:[%s3 + $0x524] sm:$0xf]
      %v1288 = vld [vmem:[%s3 + $0x528] sm:$0xf]
      %v1289 = vld [vmem:[%s3 + $0x52c] sm:$0xf]
      %v1290 = vld [vmem:[%s3 + $0x530] sm:$0xf]
      %v1291 = vld [vmem:[%s3 + $0x534] sm:$0xf]
      %v1292 = vld [vmem:[%s3 + $0x538] sm:$0xf]
      %v1293 = vld [vmem:[%s3 + $0x53c] sm:$0xf]
      %v1294 = vld [vmem:[%s3 + $0x540] sm:$0xf]
      %v1295 = vld [vmem:[%s3 + $0x544] sm:$0xf]
      %v1296 = vld [vmem:[%s3 + $0x548] sm:$0xf]
      %v1297 = vld [vmem:[%s3 + $0x54c] sm:$0xf]
      %v1298 = vld [vmem:[%s3 + $0x550] sm:$0xf]
      %v1299 = vld [vmem:[%s3 + $0x554] sm:$0xf]
      %v1300 = vld [vmem:[%s3 + $0x558] sm:$0xf]
      %v1301 = vld [vmem:[%s3 + $0x55c] sm:$0xf]
      %v1302 = vld [vmem:[%s3 + $0x560] sm:$0xf]
      %v1303 = vld [vmem:[%s3 + $0x564] sm:$0xf]
      %v1304 = vld [vmem:[%s3 + $0x568] sm:$0xf]
      %v1305 = vld [vmem:[%s3 + $0x56c] sm:$0xf]
      %v1306 = vld [vmem:[%s3 + $0x570] sm:$0xf]
      %v1307 = vld [vmem:[%s3 + $0x574] sm:$0xf]
      %v1308 = vld [vmem:[%s3 + $0x578] sm:$0xf]
      %v1309 = vld [vmem:[%s3 + $0x57c] sm:$0xf]
      %v1310 = vld [vmem:[%s3 + $0x580] sm:$0xf]
      %v1311 = vld [vmem:[%s3 + $0x584] sm:$0xf]
      %v1312 = vld [vmem:[%s3 + $0x588] sm:$0xf]
      %v1313 = vld [vmem:[%s3 + $0x58c] sm:$0xf]
      %v1314 = vld [vmem:[%s3 + $0x590] sm:$0xf]
      %v1315 = vld [vmem:[%s3 + $0x594] sm:$0xf]
      %v1316 = vld [vmem:[%s3 + $0x598] sm:$0xf]
      %v1317 = vld [vmem:[%s3 + $0x59c] sm:$0xf]
      %v1318 = vld [vmem:[%s3 + $0x5a0] sm:$0xf]
      %v1319 = vld [vmem:[%s3 + $0x5a4] sm:$0xf]
      %v1320 = vld [vmem:[%s3 + $0x5a8] sm:$0xf]
      %v1321 = vld [vmem:[%s3 + $0x5ac] sm:$0xf]
      %v1322 = vld [vmem:[%s3 + $0x5b0] sm:$0xf]
      %v1323 = vld [vmem:[%s3 + $0x5b4] sm:$0xf]
      %v1324 = vld [vmem:[%s3 + $0x5b8] sm:$0xf]
      %v1325 = vld [vmem:[%s3 + $0x5bc] sm:$0xf]
      %v1326 = vld [vmem:[%s3 + $0x5c0] sm:$0xf]
      %v1327 = vld [vmem:[%s3 + $0x5c4] sm:$0xf]
      %v1328 = vld [vmem:[%s3 + $0x5c8] sm:$0xf]
      %v1329 = vld [vmem:[%s3 + $0x5cc] sm:$0xf]
      %v1330 = vld [vmem:[%s3 + $0x5d0] sm:$0xf]
      %v1331 = vld [vmem:[%s3 + $0x5d4] sm:$0xf]
      %v1332 = vld [vmem:[%s3 + $0x5d8] sm:$0xf]
      %v1333 = vld [vmem:[%s3 + $0x5dc] sm:$0xf]
      %v1334 = vld [vmem:[%s3 + $0x5e0] sm:$0xf]
      %v1335 = vld [vmem:[%s3 + $0x5e4] sm:$0xf]
      %v1336 = vld [vmem:[%s3 + $0x5e8] sm:$0xf]
      %v1337 = vld [vmem:[%s3 + $0x5ec] sm:$0xf]
      %v1338 = vld [vmem:[%s3 + $0x5f0] sm:$0xf]
      %v1339 = vld [vmem:[%s3 + $0x5f4] sm:$0xf]
      %v1340 = vld [vmem:[%s3 + $0x5f8] sm:$0xf]
      %v1341 = vld [vmem:[%s3 + $0x5fc] sm:$0xf]
      %v1342 = vld [vmem:[%s3 + $0x600] sm:$0xf]
      %v1343 = vld [vmem:[%s3 + $0x604] sm:$0xf]
      %v1344 = vld [vmem:[%s3 + $0x608] sm:$0xf]
      %v1345 = vld [vmem:[%s3 + $0x60c] sm:$0xf]
      %v1346 = vld [vmem:[%s3 + $0x610] sm:$0xf]
      %v1347 = vld [vmem:[%s3 + $0x614] sm:$0xf]
      %v1348 = vld [vmem:[%s3 + $0x618] sm:$0xf]
      %v1349 = vld [vmem:[%s3 + $0x61c] sm:$0xf]
      %v1350 = vld [vmem:[%s3 + $0x620] sm:$0xf]
      %v1351 = vld [vmem:[%s3 + $0x624] sm:$0xf]
      %v1352 = vld [vmem:[%s3 + $0x628] sm:$0xf]
      %v1353 = vld [vmem:[%s3 + $0x62c] sm:$0xf]
      %v1354 = vld [vmem:[%s3 + $0x630] sm:$0xf]
      %v1355 = vld [vmem:[%s3 + $0x634] sm:$0xf]
      %v1356 = vld [vmem:[%s3 + $0x638] sm:$0xf]
      %v1357 = vld [vmem:[%s3 + $0x63c] sm:$0xf]
      %v1358 = vld [vmem:[%s3 + $0x640] sm:$0xf]
      %v1359 = vld [vmem:[%s3 + $0x644] sm:$0xf]
      %v1360 = vld [vmem:[%s3 + $0x648] sm:$0xf]
      %v1361 = vld [vmem:[%s3 + $0x64c] sm:$0xf]
      %v1362 = vld [vmem:[%s3 + $0x650] sm:$0xf]
      %v1363 = vld [vmem:[%s3 + $0x654] sm:$0xf]
      %v1364 = vld [vmem:[%s3 + $0x658] sm:$0xf]
      %v1365 = vld [vmem:[%s3 + $0x65c] sm:$0xf]
      %v1366 = vld [vmem:[%s3 + $0x660] sm:$0xf]
      %v1367 = vld [vmem:[%s3 + $0x664] sm:$0xf]
      %v1368 = vld [vmem:[%s3 + $0x668] sm:$0xf]
      %v1369 = vld [vmem:[%s3 + $0x66c] sm:$0xf]
      %v1370 = vld [vmem:[%s3 + $0x670] sm:$0xf]
      %v1371 = vld [vmem:[%s3 + $0x674] sm:$0xf]
      %v1372 = vld [vmem:[%s3 + $0x678] sm:$0xf]
      %v1373 = vld [vmem:[%s3 + $0x67c] sm:$0xf]
      %v1374 = vld [vmem:[%s3 + $0x680] sm:$0xf]
      %v1375 = vld [vmem:[%s3 + $0x684] sm:$0xf]
      %v1376 = vld [vmem:[%s3 + $0x688] sm:$0xf]
      %v1377 = vld [vmem:[%s3 + $0x68c] sm:$0xf]
      %v1378 = vld [vmem:[%s3 + $0x690] sm:$0xf]
      %v1379 = vld [vmem:[%s3 + $0x694] sm:$0xf]
      %v1380 = vld [vmem:[%s3 + $0x698] sm:$0xf]
      %v1381 = vld [vmem:[%s3 + $0x69c] sm:$0xf]
      %v1382 = vld [vmem:[%s3 + $0x6a0] sm:$0xf]
      %v1383 = vld [vmem:[%s3 + $0x6a4] sm:$0xf]
      %v1384 = vld [vmem:[%s3 + $0x6a8] sm:$0xf]
      %v1385 = vld [vmem:[%s3 + $0x6ac] sm:$0xf]
      %v1386 = vld [vmem:[%s3 + $0x6b0] sm:$0xf]
      %v1387 = vld [vmem:[%s3 + $0x6b4] sm:$0xf]
      %v1388 = vld [vmem:[%s3 + $0x6b8] sm:$0xf]
      %v1389 = vld [vmem:[%s3 + $0x6bc] sm:$0xf]
      %v1390 = vld [vmem:[%s4] sm:$0x1]
      %v1392 = vperm.slane %v1390, 0
      %v1826 = vunpack.c.l.b16 %v958
      %v1827 = vunpack.c.l.b16 %v959
      %v1828 = vunpack.c.l.b16 %v960
      %v1829 = vunpack.c.l.b16 %v961
      %v1830 = vunpack.c.l.b16 %v962
      %v1831 = vunpack.c.l.b16 %v963
      %v1832 = vunpack.c.l.b16 %v964
      %v1833 = vunpack.c.l.b16 %v965
      %v1834 = vunpack.c.l.b16 %v966
      %v1835 = vunpack.c.l.b16 %v967
      %v1836 = vunpack.c.l.b16 %v968
      %v1837 = vunpack.c.l.b16 %v969
      %v1838 = vunpack.c.l.b16 %v970
      %v1839 = vunpack.c.l.b16 %v971
      %v1840 = vunpack.c.l.b16 %v972
      %v1841 = vunpack.c.l.b16 %v973
      %v1842 = vunpack.c.l.b16 %v974
      %v1843 = vunpack.c.l.b16 %v975
      %v1844 = vunpack.c.l.b16 %v976
      %v1845 = vunpack.c.l.b16 %v977
      %v1846 = vunpack.c.l.b16 %v978
      %v1847 = vunpack.c.l.b16 %v979
      %v1848 = vunpack.c.l.b16 %v980
      %v1849 = vunpack.c.l.b16 %v981
      %v1850 = vunpack.c.l.b16 %v982
      %v1851 = vunpack.c.l.b16 %v983
      %v1852 = vunpack.c.l.b16 %v984
      %v1853 = vunpack.c.l.b16 %v985
      %v1854 = vunpack.c.l.b16 %v986
      %v1855 = vunpack.c.l.b16 %v987
      %v1856 = vunpack.c.l.b16 %v988
      %v1857 = vunpack.c.l.b16 %v989
      %v1858 = vunpack.c.l.b16 %v990
      %v1859 = vunpack.c.l.b16 %v991
      %v1860 = vunpack.c.l.b16 %v992
      %v1861 = vunpack.c.l.b16 %v993
      %v1862 = vunpack.c.l.b16 %v994
      %v1863 = vunpack.c.l.b16 %v995
      %v1864 = vunpack.c.l.b16 %v996
      %v1865 = vunpack.c.l.b16 %v997
      %v1866 = vunpack.c.l.b16 %v998
      %v1867 = vunpack.c.l.b16 %v999
      %v1868 = vunpack.c.l.b16 %v1000
      %v1869 = vunpack.c.l.b16 %v1001
      %v1870 = vunpack.c.l.b16 %v1002
      %v1871 = vunpack.c.l.b16 %v1003
      %v1872 = vunpack.c.l.b16 %v1004
      %v1873 = vunpack.c.l.b16 %v1005
      %v1874 = vunpack.c.l.b16 %v1006
      %v1875 = vunpack.c.l.b16 %v1007
      %v1876 = vunpack.c.l.b16 %v1008
      %v1877 = vunpack.c.l.b16 %v1009
      %v1878 = vunpack.c.l.b16 %v1010
      %v1879 = vunpack.c.l.b16 %v1011
      %v1880 = vunpack.c.l.b16 %v1012
      %v1881 = vunpack.c.l.b16 %v1013
      %v1882 = vunpack.c.l.b16 %v1014
      %v1883 = vunpack.c.l.b16 %v1015
      %v1884 = vunpack.c.l.b16 %v1016
      %v1885 = vunpack.c.l.b16 %v1017
      %v1886 = vunpack.c.l.b16 %v1018
      %v1887 = vunpack.c.l.b16 %v1019
      %v1888 = vunpack.c.l.b16 %v1020
      %v1889 = vunpack.c.l.b16 %v1021
      %v1890 = vunpack.c.l.b16 %v1022
      %v1891 = vunpack.c.l.b16 %v1023
      %v1892 = vunpack.c.l.b16 %v1024
      %v1893 = vunpack.c.l.b16 %v1025
      %v1894 = vunpack.c.l.b16 %v1026
      %v1895 = vunpack.c.l.b16 %v1027
      %v1896 = vunpack.c.l.b16 %v1028
      %v1897 = vunpack.c.l.b16 %v1029
      %v1898 = vunpack.c.l.b16 %v1030
      %v1899 = vunpack.c.l.b16 %v1031
      %v1900 = vunpack.c.l.b16 %v1032
      %v1901 = vunpack.c.l.b16 %v1033
      %v1902 = vunpack.c.l.b16 %v1034
      %v1903 = vunpack.c.l.b16 %v1035
      %v1904 = vunpack.c.l.b16 %v1036
      %v1905 = vunpack.c.l.b16 %v1037
      %v1906 = vunpack.c.l.b16 %v1038
      %v1907 = vunpack.c.l.b16 %v1039
      %v1908 = vunpack.c.l.b16 %v1040
      %v1909 = vunpack.c.l.b16 %v1041
      %v1910 = vunpack.c.l.b16 %v1042
      %v1911 = vunpack.c.l.b16 %v1043
      %v1912 = vunpack.c.l.b16 %v1044
      %v1913 = vunpack.c.l.b16 %v1045
      %v1914 = vunpack.c.l.b16 %v1046
      %v1915 = vunpack.c.l.b16 %v1047
      %v1916 = vunpack.c.l.b16 %v1048
      %v1917 = vunpack.c.l.b16 %v1049
      %v1918 = vunpack.c.l.b16 %v1050
      %v1919 = vunpack.c.l.b16 %v1051
      %v1920 = vunpack.c.l.b16 %v1052
      %v1921 = vunpack.c.l.b16 %v1053
      %v1922 = vunpack.c.l.b16 %v1054
      %v1923 = vunpack.c.l.b16 %v1055
      %v1924 = vunpack.c.l.b16 %v1056
      %v1925 = vunpack.c.l.b16 %v1057
      %v1926 = vunpack.c.l.b16 %v1058
      %v1927 = vunpack.c.l.b16 %v1059
      %v1928 = vunpack.c.l.b16 %v1060
      %v1929 = vunpack.c.l.b16 %v1061
      %v1930 = vunpack.c.l.b16 %v1062
      %v1931 = vunpack.c.l.b16 %v1063
      %v1932 = vunpack.c.l.b16 %v1064
      %v1933 = vunpack.c.l.b16 %v1065
      %v1934 = vunpack.c.l.b16 %v1066
      %v1935 = vunpack.c.l.b16 %v1067
      %v1936 = vunpack.c.l.b16 %v1068
      %v1937 = vunpack.c.l.b16 %v1069
      %v1938 = vunpack.c.l.b16 %v1070
      %v1939 = vunpack.c.l.b16 %v1071
      %v1940 = vunpack.c.l.b16 %v1072
      %v1941 = vunpack.c.l.b16 %v1073
      %v1942 = vunpack.c.l.b16 %v1074
      %v1943 = vunpack.c.l.b16 %v1075
      %v1944 = vunpack.c.l.b16 %v1076
      %v1945 = vunpack.c.l.b16 %v1077
      %v1946 = vunpack.c.l.b16 %v1078
      %v1947 = vunpack.c.l.b16 %v1079
      %v1948 = vunpack.c.l.b16 %v1080
      %v1949 = vunpack.c.l.b16 %v1081
      %v1950 = vunpack.c.l.b16 %v1082
      %v1951 = vunpack.c.l.b16 %v1083
      %v1952 = vunpack.c.l.b16 %v1084
      %v1953 = vunpack.c.l.b16 %v1085
      %v1954 = vunpack.c.l.b16 %v1086
      %v1955 = vunpack.c.l.b16 %v1087
      %v1956 = vunpack.c.l.b16 %v1088
      %v1957 = vunpack.c.l.b16 %v1089
      %v1958 = vunpack.c.l.b16 %v1090
      %v1959 = vunpack.c.l.b16 %v1091
      %v1960 = vunpack.c.l.b16 %v1092
      %v1961 = vunpack.c.l.b16 %v1093
      %v1962 = vunpack.c.l.b16 %v1094
      %v1963 = vunpack.c.l.b16 %v1095
      %v1964 = vunpack.c.l.b16 %v1096
      %v1965 = vunpack.c.l.b16 %v1097
      %v1966 = vunpack.c.l.b16 %v1098
      %v1967 = vunpack.c.l.b16 %v1099
      %v1968 = vunpack.c.l.b16 %v1100
      %v1969 = vunpack.c.l.b16 %v1101
      %v1970 = vunpack.c.l.b16 %v1102
      %v1971 = vunpack.c.l.b16 %v1103
      %v1972 = vunpack.c.l.b16 %v1104
      %v1973 = vunpack.c.l.b16 %v1105
      %v1974 = vunpack.c.l.b16 %v1106
      %v1975 = vunpack.c.l.b16 %v1107
      %v1976 = vunpack.c.l.b16 %v1108
      %v1977 = vunpack.c.l.b16 %v1109
      %v1978 = vunpack.c.l.b16 %v1110
      %v1979 = vunpack.c.l.b16 %v1111
      %v1980 = vunpack.c.l.b16 %v1112
      %v1981 = vunpack.c.l.b16 %v1113
      %v1982 = vunpack.c.l.b16 %v1114
      %v1983 = vunpack.c.l.b16 %v1115
      %v1984 = vunpack.c.l.b16 %v1116
      %v1985 = vunpack.c.l.b16 %v1117
      %v1986 = vunpack.c.l.b16 %v1118
      %v1987 = vunpack.c.l.b16 %v1119
      %v1988 = vunpack.c.l.b16 %v1120
      %v1989 = vunpack.c.l.b16 %v1121
      %v1990 = vunpack.c.l.b16 %v1122
      %v1991 = vunpack.c.l.b16 %v1123
      %v1992 = vunpack.c.l.b16 %v1124
      %v1993 = vunpack.c.l.b16 %v1125
      %v1994 = vunpack.c.l.b16 %v1126
      %v1995 = vunpack.c.l.b16 %v1127
      %v1996 = vunpack.c.l.b16 %v1128
      %v1997 = vunpack.c.l.b16 %v1129
      %v1998 = vunpack.c.l.b16 %v1130
      %v1999 = vunpack.c.l.b16 %v1131
      %v2000 = vunpack.c.l.b16 %v1132
      %v2001 = vunpack.c.l.b16 %v1133
      %v2002 = vunpack.c.l.b16 %v1134
      %v2003 = vunpack.c.l.b16 %v1135
      %v2004 = vunpack.c.l.b16 %v1136
      %v2005 = vunpack.c.l.b16 %v1137
      %v2006 = vunpack.c.l.b16 %v1138
      %v2007 = vunpack.c.l.b16 %v1139
      %v2008 = vunpack.c.l.b16 %v1140
      %v2009 = vunpack.c.l.b16 %v1141
      %v2010 = vunpack.c.l.b16 %v1142
      %v2011 = vunpack.c.l.b16 %v1143
      %v2012 = vunpack.c.l.b16 %v1144
      %v2013 = vunpack.c.l.b16 %v1145
      %v2014 = vunpack.c.l.b16 %v1146
      %v2015 = vunpack.c.l.b16 %v1147
      %v2016 = vunpack.c.l.b16 %v1148
      %v2017 = vunpack.c.l.b16 %v1149
      %v2018 = vunpack.c.l.b16 %v1150
      %v2019 = vunpack.c.l.b16 %v1151
      %v2020 = vunpack.c.l.b16 %v1152
      %v2021 = vunpack.c.l.b16 %v1153
      %v2022 = vunpack.c.l.b16 %v1154
      %v2023 = vunpack.c.l.b16 %v1155
      %v2024 = vunpack.c.l.b16 %v1156
      %v2025 = vunpack.c.l.b16 %v1157
      %v2026 = vunpack.c.l.b16 %v1158
      %v2027 = vunpack.c.l.b16 %v1159
      %v2028 = vunpack.c.l.b16 %v1160
      %v2029 = vunpack.c.l.b16 %v1161
      %v2030 = vunpack.c.l.b16 %v1162
      %v2031 = vunpack.c.l.b16 %v1163
      %v2032 = vunpack.c.l.b16 %v1164
      %v2033 = vunpack.c.l.b16 %v1165
      %v2034 = vunpack.c.l.b16 %v1166
      %v2035 = vunpack.c.l.b16 %v1167
      %v2036 = vunpack.c.l.b16 %v1168
      %v2037 = vunpack.c.l.b16 %v1169
      %v2038 = vunpack.c.l.b16 %v1170
      %v2039 = vunpack.c.l.b16 %v1171
      %v2040 = vunpack.c.l.b16 %v1172
      %v2041 = vunpack.c.l.b16 %v1173
      %v2042 = vunpack.c.l.b16 %v1174
      %v2043 = vunpack.c.l.b16 %v1175
      %v2044 = vunpack.c.l.b16 %v1176
      %v2045 = vunpack.c.l.b16 %v1177
      %v2046 = vunpack.c.l.b16 %v1178
      %v2047 = vunpack.c.l.b16 %v1179
      %v2048 = vunpack.c.l.b16 %v1180
      %v2049 = vunpack.c.l.b16 %v1181
      %v2050 = vunpack.c.l.b16 %v1182
      %v2051 = vunpack.c.l.b16 %v1183
      %v2052 = vunpack.c.l.b16 %v1184
      %v2053 = vunpack.c.l.b16 %v1185
      %v2054 = vunpack.c.l.b16 %v1186
      %v2055 = vunpack.c.l.b16 %v1187
      %v2056 = vunpack.c.l.b16 %v1188
      %v2057 = vunpack.c.l.b16 %v1189
      %v2058 = vunpack.c.l.b16 %v1190
      %v2059 = vunpack.c.l.b16 %v1191
      %v2060 = vunpack.c.l.b16 %v1192
      %v2061 = vunpack.c.l.b16 %v1193
      %v2062 = vunpack.c.l.b16 %v1194
      %v2063 = vunpack.c.l.b16 %v1195
      %v2064 = vunpack.c.l.b16 %v1196
      %v2065 = vunpack.c.l.b16 %v1197
      %v2066 = vunpack.c.l.b16 %v1198
      %v2067 = vunpack.c.l.b16 %v1199
      %v2068 = vunpack.c.l.b16 %v1200
      %v2069 = vunpack.c.l.b16 %v1201
      %v2070 = vunpack.c.l.b16 %v1202
      %v2071 = vunpack.c.l.b16 %v1203
      %v2072 = vunpack.c.l.b16 %v1204
      %v2073 = vunpack.c.l.b16 %v1205
      %v2074 = vunpack.c.l.b16 %v1206
      %v2075 = vunpack.c.l.b16 %v1207
      %v2076 = vunpack.c.l.b16 %v1208
      %v2077 = vunpack.c.l.b16 %v1209
      %v2078 = vunpack.c.l.b16 %v1210
      %v2079 = vunpack.c.l.b16 %v1211
      %v2080 = vunpack.c.l.b16 %v1212
      %v2081 = vunpack.c.l.b16 %v1213
      %v2082 = vunpack.c.l.b16 %v1214
      %v2083 = vunpack.c.l.b16 %v1215
      %v2084 = vunpack.c.l.b16 %v1216
      %v2085 = vunpack.c.l.b16 %v1217
      %v2086 = vunpack.c.l.b16 %v1218
      %v2087 = vunpack.c.l.b16 %v1219
      %v2088 = vunpack.c.l.b16 %v1220
      %v2089 = vunpack.c.l.b16 %v1221
      %v2090 = vunpack.c.l.b16 %v1222
      %v2091 = vunpack.c.l.b16 %v1223
      %v2092 = vunpack.c.l.b16 %v1224
      %v2093 = vunpack.c.l.b16 %v1225
      %v2094 = vunpack.c.l.b16 %v1226
      %v2095 = vunpack.c.l.b16 %v1227
      %v2096 = vunpack.c.l.b16 %v1228
      %v2097 = vunpack.c.l.b16 %v1229
      %v2098 = vunpack.c.l.b16 %v1230
      %v2099 = vunpack.c.l.b16 %v1231
      %v2100 = vunpack.c.l.b16 %v1232
      %v2101 = vunpack.c.l.b16 %v1233
      %v2102 = vunpack.c.l.b16 %v1234
      %v2103 = vunpack.c.l.b16 %v1235
      %v2104 = vunpack.c.l.b16 %v1236
      %v2105 = vunpack.c.l.b16 %v1237
      %v2106 = vunpack.c.l.b16 %v1238
      %v2107 = vunpack.c.l.b16 %v1239
      %v2108 = vunpack.c.l.b16 %v1240
      %v2109 = vunpack.c.l.b16 %v1241
      %v2110 = vunpack.c.l.b16 %v1242
      %v2111 = vunpack.c.l.b16 %v1243
      %v2112 = vunpack.c.l.b16 %v1244
      %v2113 = vunpack.c.l.b16 %v1245
      %v2114 = vunpack.c.l.b16 %v1246
      %v2115 = vunpack.c.l.b16 %v1247
      %v2116 = vunpack.c.l.b16 %v1248
      %v2117 = vunpack.c.l.b16 %v1249
      %v2118 = vunpack.c.l.b16 %v1250
      %v2119 = vunpack.c.l.b16 %v1251
      %v2120 = vunpack.c.l.b16 %v1252
      %v2121 = vunpack.c.l.b16 %v1253
      %v2122 = vunpack.c.l.b16 %v1254
      %v2123 = vunpack.c.l.b16 %v1255
      %v2124 = vunpack.c.l.b16 %v1256
      %v2125 = vunpack.c.l.b16 %v1257
      %v2126 = vunpack.c.l.b16 %v1258
      %v2127 = vunpack.c.l.b16 %v1259
      %v2128 = vunpack.c.l.b16 %v1260
      %v2129 = vunpack.c.l.b16 %v1261
      %v2130 = vunpack.c.l.b16 %v1262
      %v2131 = vunpack.c.l.b16 %v1263
      %v2132 = vunpack.c.l.b16 %v1264
      %v2133 = vunpack.c.l.b16 %v1265
      %v2134 = vunpack.c.l.b16 %v1266
      %v2135 = vunpack.c.l.b16 %v1267
      %v2136 = vunpack.c.l.b16 %v1268
      %v2137 = vunpack.c.l.b16 %v1269
      %v2138 = vunpack.c.l.b16 %v1270
      %v2139 = vunpack.c.l.b16 %v1271
      %v2140 = vunpack.c.l.b16 %v1272
      %v2141 = vunpack.c.l.b16 %v1273
      %v2142 = vunpack.c.l.b16 %v1274
      %v2143 = vunpack.c.l.b16 %v1275
      %v2144 = vunpack.c.l.b16 %v1276
      %v2145 = vunpack.c.l.b16 %v1277
      %v2146 = vunpack.c.l.b16 %v1278
      %v2147 = vunpack.c.l.b16 %v1279
      %v2148 = vunpack.c.l.b16 %v1280
      %v2149 = vunpack.c.l.b16 %v1281
      %v2150 = vunpack.c.l.b16 %v1282
      %v2151 = vunpack.c.l.b16 %v1283
      %v2152 = vunpack.c.l.b16 %v1284
      %v2153 = vunpack.c.l.b16 %v1285
      %v2154 = vunpack.c.l.b16 %v1286
      %v2155 = vunpack.c.l.b16 %v1287
      %v2156 = vunpack.c.l.b16 %v1288
      %v2157 = vunpack.c.l.b16 %v1289
      %v2158 = vunpack.c.l.b16 %v1290
      %v2159 = vunpack.c.l.b16 %v1291
      %v2160 = vunpack.c.l.b16 %v1292
      %v2161 = vunpack.c.l.b16 %v1293
      %v2162 = vunpack.c.l.b16 %v1294
      %v2163 = vunpack.c.l.b16 %v1295
      %v2164 = vunpack.c.l.b16 %v1296
      %v2165 = vunpack.c.l.b16 %v1297
      %v2166 = vunpack.c.l.b16 %v1298
      %v2167 = vunpack.c.l.b16 %v1299
      %v2168 = vunpack.c.l.b16 %v1300
      %v2169 = vunpack.c.l.b16 %v1301
      %v2170 = vunpack.c.l.b16 %v1302
      %v2171 = vunpack.c.l.b16 %v1303
      %v2172 = vunpack.c.l.b16 %v1304
      %v2173 = vunpack.c.l.b16 %v1305
      %v2174 = vunpack.c.l.b16 %v1306
      %v2175 = vunpack.c.l.b16 %v1307
      %v2176 = vunpack.c.l.b16 %v1308
      %v2177 = vunpack.c.l.b16 %v1309
      %v2178 = vunpack.c.l.b16 %v1310
      %v2179 = vunpack.c.l.b16 %v1311
      %v2180 = vunpack.c.l.b16 %v1312
      %v2181 = vunpack.c.l.b16 %v1313
      %v2182 = vunpack.c.l.b16 %v1314
      %v2183 = vunpack.c.l.b16 %v1315
      %v2184 = vunpack.c.l.b16 %v1316
      %v2185 = vunpack.c.l.b16 %v1317
      %v2186 = vunpack.c.l.b16 %v1318
      %v2187 = vunpack.c.l.b16 %v1319
      %v2188 = vunpack.c.l.b16 %v1320
      %v2189 = vunpack.c.l.b16 %v1321
      %v2190 = vunpack.c.l.b16 %v1322
      %v2191 = vunpack.c.l.b16 %v1323
      %v2192 = vunpack.c.l.b16 %v1324
      %v2193 = vunpack.c.l.b16 %v1325
      %v2194 = vunpack.c.l.b16 %v1326
      %v2195 = vunpack.c.l.b16 %v1327
      %v2196 = vunpack.c.l.b16 %v1328
      %v2197 = vunpack.c.l.b16 %v1329
      %v2198 = vunpack.c.l.b16 %v1330
      %v2199 = vunpack.c.l.b16 %v1331
      %v2200 = vunpack.c.l.b16 %v1332
      %v2201 = vunpack.c.l.b16 %v1333
      %v2202 = vunpack.c.l.b16 %v1334
      %v2203 = vunpack.c.l.b16 %v1335
      %v2204 = vunpack.c.l.b16 %v1336
      %v2205 = vunpack.c.l.b16 %v1337
      %v2206 = vunpack.c.l.b16 %v1338
      %v2207 = vunpack.c.l.b16 %v1339
      %v2208 = vunpack.c.l.b16 %v1340
      %v2209 = vunpack.c.l.b16 %v1341
      %v2210 = vunpack.c.l.b16 %v1342
      %v2211 = vunpack.c.l.b16 %v1343
      %v2212 = vunpack.c.l.b16 %v1344
      %v2213 = vunpack.c.l.b16 %v1345
      %v2214 = vunpack.c.l.b16 %v1346
      %v2215 = vunpack.c.l.b16 %v1347
      %v2216 = vunpack.c.l.b16 %v1348
      %v2217 = vunpack.c.l.b16 %v1349
      %v2218 = vunpack.c.l.b16 %v1350
      %v2219 = vunpack.c.l.b16 %v1351
      %v2220 = vunpack.c.l.b16 %v1352
      %v2221 = vunpack.c.l.b16 %v1353
      %v2222 = vunpack.c.l.b16 %v1354
      %v2223 = vunpack.c.l.b16 %v1355
      %v2224 = vunpack.c.l.b16 %v1356
      %v2225 = vunpack.c.l.b16 %v1357
      %v2226 = vunpack.c.l.b16 %v1358
      %v2227 = vunpack.c.l.b16 %v1359
      %v2228 = vunpack.c.l.b16 %v1360
      %v2229 = vunpack.c.l.b16 %v1361
      %v2230 = vunpack.c.l.b16 %v1362
      %v2231 = vunpack.c.l.b16 %v1363
      %v2232 = vunpack.c.l.b16 %v1364
      %v2233 = vunpack.c.l.b16 %v1365
      %v2234 = vunpack.c.l.b16 %v1366
      %v2235 = vunpack.c.l.b16 %v1367
      %v2236 = vunpack.c.l.b16 %v1368
      %v2237 = vunpack.c.l.b16 %v1369
      %v2238 = vunpack.c.l.b16 %v1370
      %v2239 = vunpack.c.l.b16 %v1371
      %v2240 = vunpack.c.l.b16 %v1372
      %v2241 = vunpack.c.l.b16 %v1373
      %v2242 = vunpack.c.l.b16 %v1374
      %v2243 = vunpack.c.l.b16 %v1375
      %v2244 = vunpack.c.l.b16 %v1376
      %v2245 = vunpack.c.l.b16 %v1377
      %v2246 = vunpack.c.l.b16 %v1378
      %v2247 = vunpack.c.l.b16 %v1379
      %v2248 = vunpack.c.l.b16 %v1380
      %v2249 = vunpack.c.l.b16 %v1381
      %v2250 = vunpack.c.l.b16 %v1382
      %v2251 = vunpack.c.l.b16 %v1383
      %v2252 = vunpack.c.l.b16 %v1384
      %v2253 = vunpack.c.l.b16 %v1385
      %v2254 = vunpack.c.l.b16 %v1386
      %v2255 = vunpack.c.l.b16 %v1387
      %v2256 = vunpack.c.l.b16 %v1388
      %v2257 = vunpack.c.l.b16 %v1389
      %v2258 = vpack.c.b16 %v1827, %v1826
      %v2259 = vpack.c.b16 %v1829, %v1828
      %v2260 = vpack.c.b16 %v1831, %v1830
      %v2261 = vpack.c.b16 %v1833, %v1832
      %v2262 = vpack.c.b16 %v1835, %v1834
      %v2263 = vpack.c.b16 %v1837, %v1836
      %v2264 = vpack.c.b16 %v1839, %v1838
      %v2265 = vpack.c.b16 %v1841, %v1840
      %v2266 = vpack.c.b16 %v1843, %v1842
      %v2267 = vpack.c.b16 %v1845, %v1844
      %v2268 = vpack.c.b16 %v1847, %v1846
      %v2269 = vpack.c.b16 %v1849, %v1848
      %v2270 = vpack.c.b16 %v1851, %v1850
      %v2271 = vpack.c.b16 %v1853, %v1852
      %v2272 = vpack.c.b16 %v1855, %v1854
      %v2273 = vpack.c.b16 %v1857, %v1856
      %v2274 = vpack.c.b16 %v1859, %v1858
      %v2275 = vpack.c.b16 %v1861, %v1860
      %v2276 = vpack.c.b16 %v1863, %v1862
      %v2277 = vpack.c.b16 %v1865, %v1864
      %v2278 = vpack.c.b16 %v1867, %v1866
      %v2279 = vpack.c.b16 %v1869, %v1868
      %v2280 = vpack.c.b16 %v1871, %v1870
      %v2281 = vpack.c.b16 %v1873, %v1872
      %v2282 = vpack.c.b16 %v1875, %v1874
      %v2283 = vpack.c.b16 %v1877, %v1876
      %v2284 = vpack.c.b16 %v1879, %v1878
      %v2285 = vpack.c.b16 %v1881, %v1880
      %v2286 = vpack.c.b16 %v1883, %v1882
      %v2287 = vpack.c.b16 %v1885, %v1884
      %v2288 = vpack.c.b16 %v1887, %v1886
      %v2289 = vpack.c.b16 %v1889, %v1888
      %v2290 = vpack.c.b16 %v1891, %v1890
      %v2291 = vpack.c.b16 %v1893, %v1892
      %v2292 = vpack.c.b16 %v1895, %v1894
      %v2293 = vpack.c.b16 %v1897, %v1896
      %v2294 = vpack.c.b16 %v1899, %v1898
      %v2295 = vpack.c.b16 %v1901, %v1900
      %v2296 = vpack.c.b16 %v1903, %v1902
      %v2297 = vpack.c.b16 %v1905, %v1904
      %v2298 = vpack.c.b16 %v1907, %v1906
      %v2299 = vpack.c.b16 %v1909, %v1908
      %v2300 = vpack.c.b16 %v1911, %v1910
      %v2301 = vpack.c.b16 %v1913, %v1912
      %v2302 = vpack.c.b16 %v1915, %v1914
      %v2303 = vpack.c.b16 %v1917, %v1916
      %v2304 = vpack.c.b16 %v1919, %v1918
      %v2305 = vpack.c.b16 %v1921, %v1920
      %v2306 = vpack.c.b16 %v1923, %v1922
      %v2307 = vpack.c.b16 %v1925, %v1924
      %v2308 = vpack.c.b16 %v1927, %v1926
      %v2309 = vpack.c.b16 %v1929, %v1928
      %v2310 = vpack.c.b16 %v1931, %v1930
      %v2311 = vpack.c.b16 %v1933, %v1932
      %v2312 = vpack.c.b16 %v1935, %v1934
      %v2313 = vpack.c.b16 %v1937, %v1936
      %v2314 = vpack.c.b16 %v1939, %v1938
      %v2315 = vpack.c.b16 %v1941, %v1940
      %v2316 = vpack.c.b16 %v1943, %v1942
      %v2317 = vpack.c.b16 %v1945, %v1944
      %v2318 = vpack.c.b16 %v1947, %v1946
      %v2319 = vpack.c.b16 %v1949, %v1948
      %v2320 = vpack.c.b16 %v1951, %v1950
      %v2321 = vpack.c.b16 %v1953, %v1952
      %v2322 = vpack.c.b16 %v1955, %v1954
      %v2323 = vpack.c.b16 %v1957, %v1956
      %v2324 = vpack.c.b16 %v1959, %v1958
      %v2325 = vpack.c.b16 %v1961, %v1960
      %v2326 = vpack.c.b16 %v1963, %v1962
      %v2327 = vpack.c.b16 %v1965, %v1964
      %v2328 = vpack.c.b16 %v1967, %v1966
      %v2329 = vpack.c.b16 %v1969, %v1968
      %v2330 = vpack.c.b16 %v1971, %v1970
      %v2331 = vpack.c.b16 %v1973, %v1972
      %v2332 = vpack.c.b16 %v1975, %v1974
      %v2333 = vpack.c.b16 %v1977, %v1976
      %v2334 = vpack.c.b16 %v1979, %v1978
      %v2335 = vpack.c.b16 %v1981, %v1980
      %v2336 = vpack.c.b16 %v1983, %v1982
      %v2337 = vpack.c.b16 %v1985, %v1984
      %v2338 = vpack.c.b16 %v1987, %v1986
      %v2339 = vpack.c.b16 %v1989, %v1988
      %v2340 = vpack.c.b16 %v1991, %v1990
      %v2341 = vpack.c.b16 %v1993, %v1992
      %v2342 = vpack.c.b16 %v1995, %v1994
      %v2343 = vpack.c.b16 %v1997, %v1996
      %v2344 = vpack.c.b16 %v1999, %v1998
      %v2345 = vpack.c.b16 %v2001, %v2000
      %v2346 = vpack.c.b16 %v2003, %v2002
      %v2347 = vpack.c.b16 %v2005, %v2004
      %v2348 = vpack.c.b16 %v2007, %v2006
      %v2349 = vpack.c.b16 %v2009, %v2008
      %v2350 = vpack.c.b16 %v2011, %v2010
      %v2351 = vpack.c.b16 %v2013, %v2012
      %v2352 = vpack.c.b16 %v2015, %v2014
      %v2353 = vpack.c.b16 %v2017, %v2016
      %v2354 = vpack.c.b16 %v2019, %v2018
      %v2355 = vpack.c.b16 %v2021, %v2020
      %v2356 = vpack.c.b16 %v2023, %v2022
      %v2357 = vpack.c.b16 %v2025, %v2024
      %v2358 = vpack.c.b16 %v2027, %v2026
      %v2359 = vpack.c.b16 %v2029, %v2028
      %v2360 = vpack.c.b16 %v2031, %v2030
      %v2361 = vpack.c.b16 %v2033, %v2032
      %v2362 = vpack.c.b16 %v2035, %v2034
      %v2363 = vpack.c.b16 %v2037, %v2036
      %v2364 = vpack.c.b16 %v2039, %v2038
      %v2365 = vpack.c.b16 %v2041, %v2040
      %v2366 = vpack.c.b16 %v2043, %v2042
      %v2367 = vpack.c.b16 %v2045, %v2044
      %v2368 = vpack.c.b16 %v2047, %v2046
      %v2369 = vpack.c.b16 %v2049, %v2048
      %v2370 = vpack.c.b16 %v2051, %v2050
      %v2371 = vpack.c.b16 %v2053, %v2052
      %v2372 = vpack.c.b16 %v2055, %v2054
      %v2373 = vpack.c.b16 %v2057, %v2056
      %v2374 = vpack.c.b16 %v2059, %v2058
      %v2375 = vpack.c.b16 %v2061, %v2060
      %v2376 = vpack.c.b16 %v2063, %v2062
      %v2377 = vpack.c.b16 %v2065, %v2064
      %v2378 = vpack.c.b16 %v2067, %v2066
      %v2379 = vpack.c.b16 %v2069, %v2068
      %v2380 = vpack.c.b16 %v2071, %v2070
      %v2381 = vpack.c.b16 %v2073, %v2072
      %v2382 = vpack.c.b16 %v2075, %v2074
      %v2383 = vpack.c.b16 %v2077, %v2076
      %v2384 = vpack.c.b16 %v2079, %v2078
      %v2385 = vpack.c.b16 %v2081, %v2080
      %v2386 = vpack.c.b16 %v2083, %v2082
      %v2387 = vpack.c.b16 %v2085, %v2084
      %v2388 = vpack.c.b16 %v2087, %v2086
      %v2389 = vpack.c.b16 %v2089, %v2088
      %v2390 = vpack.c.b16 %v2091, %v2090
      %v2391 = vpack.c.b16 %v2093, %v2092
      %v2392 = vpack.c.b16 %v2095, %v2094
      %v2393 = vpack.c.b16 %v2097, %v2096
      %v2394 = vpack.c.b16 %v2099, %v2098
      %v2395 = vpack.c.b16 %v2101, %v2100
      %v2396 = vpack.c.b16 %v2103, %v2102
      %v2397 = vpack.c.b16 %v2105, %v2104
      %v2398 = vpack.c.b16 %v2107, %v2106
      %v2399 = vpack.c.b16 %v2109, %v2108
      %v2400 = vpack.c.b16 %v2111, %v2110
      %v2401 = vpack.c.b16 %v2113, %v2112
      %v2402 = vpack.c.b16 %v2115, %v2114
      %v2403 = vpack.c.b16 %v2117, %v2116
      %v2404 = vpack.c.b16 %v2119, %v2118
      %v2405 = vpack.c.b16 %v2121, %v2120
      %v2406 = vpack.c.b16 %v2123, %v2122
      %v2407 = vpack.c.b16 %v2125, %v2124
      %v2408 = vpack.c.b16 %v2127, %v2126
      %v2409 = vpack.c.b16 %v2129, %v2128
      %v2410 = vpack.c.b16 %v2131, %v2130
      %v2411 = vpack.c.b16 %v2133, %v2132
      %v2412 = vpack.c.b16 %v2135, %v2134
      %v2413 = vpack.c.b16 %v2137, %v2136
      %v2414 = vpack.c.b16 %v2139, %v2138
      %v2415 = vpack.c.b16 %v2141, %v2140
      %v2416 = vpack.c.b16 %v2143, %v2142
      %v2417 = vpack.c.b16 %v2145, %v2144
      %v2418 = vpack.c.b16 %v2147, %v2146
      %v2419 = vpack.c.b16 %v2149, %v2148
      %v2420 = vpack.c.b16 %v2151, %v2150
      %v2421 = vpack.c.b16 %v2153, %v2152
      %v2422 = vpack.c.b16 %v2155, %v2154
      %v2423 = vpack.c.b16 %v2157, %v2156
      %v2424 = vpack.c.b16 %v2159, %v2158
      %v2425 = vpack.c.b16 %v2161, %v2160
      %v2426 = vpack.c.b16 %v2163, %v2162
      %v2427 = vpack.c.b16 %v2165, %v2164
      %v2428 = vpack.c.b16 %v2167, %v2166
      %v2429 = vpack.c.b16 %v2169, %v2168
      %v2430 = vpack.c.b16 %v2171, %v2170
      %v2431 = vpack.c.b16 %v2173, %v2172
      %v2432 = vpack.c.b16 %v2175, %v2174
      %v2433 = vpack.c.b16 %v2177, %v2176
      %v2434 = vpack.c.b16 %v2179, %v2178
      %v2435 = vpack.c.b16 %v2181, %v2180
      %v2436 = vpack.c.b16 %v2183, %v2182
      %v2437 = vpack.c.b16 %v2185, %v2184
      %v2438 = vpack.c.b16 %v2187, %v2186
      %v2439 = vpack.c.b16 %v2189, %v2188
      %v2440 = vpack.c.b16 %v2191, %v2190
      %v2441 = vpack.c.b16 %v2193, %v2192
      %v2442 = vpack.c.b16 %v2195, %v2194
      %v2443 = vpack.c.b16 %v2197, %v2196
      %v2444 = vpack.c.b16 %v2199, %v2198
      %v2445 = vpack.c.b16 %v2201, %v2200
      %v2446 = vpack.c.b16 %v2203, %v2202
      %v2447 = vpack.c.b16 %v2205, %v2204
      %v2448 = vpack.c.b16 %v2207, %v2206
      %v2449 = vpack.c.b16 %v2209, %v2208
      %v2450 = vpack.c.b16 %v2211, %v2210
      %v2451 = vpack.c.b16 %v2213, %v2212
      %v2452 = vpack.c.b16 %v2215, %v2214
      %v2453 = vpack.c.b16 %v2217, %v2216
      %v2454 = vpack.c.b16 %v2219, %v2218
      %v2455 = vpack.c.b16 %v2221, %v2220
      %v2456 = vpack.c.b16 %v2223, %v2222
      %v2457 = vpack.c.b16 %v2225, %v2224
      %v2458 = vpack.c.b16 %v2227, %v2226
      %v2459 = vpack.c.b16 %v2229, %v2228
      %v2460 = vpack.c.b16 %v2231, %v2230
      %v2461 = vpack.c.b16 %v2233, %v2232
      %v2462 = vpack.c.b16 %v2235, %v2234
      %v2463 = vpack.c.b16 %v2237, %v2236
      %v2464 = vpack.c.b16 %v2239, %v2238
      %v2465 = vpack.c.b16 %v2241, %v2240
      %v2466 = vpack.c.b16 %v2243, %v2242
      %v2467 = vpack.c.b16 %v2245, %v2244
      %v2468 = vpack.c.b16 %v2247, %v2246
      %v2469 = vpack.c.b16 %v2249, %v2248
      %v2470 = vpack.c.b16 %v2251, %v2250
      %v2471 = vpack.c.b16 %v2253, %v2252
      %v2472 = vpack.c.b16 %v2255, %v2254
      %v2473 = vpack.c.b16 %v2257, %v2256
      %2690 = vmatpush.bf16.msra.mxu0 %v2265
      %2691 = vmatpush.bf16.msra.mxu0 %v2264
      %2692 = vmatpush.bf16.msra.mxu0 %v2263
      %2693 = vmatpush.bf16.msra.mxu0 %v2262
      %2694 = vmatpush.bf16.msra.mxu0 %v2261
      %2695 = vmatpush.bf16.msra.mxu0 %v2260
      %2696 = vmatpush.bf16.msra.mxu0 %v2259
      %2697 = vmatpush.bf16.msra.mxu0 %v2258
      %2698 = vmatmul.bf16.gmra.mxu0 %v877
      %v2699 = vpop.f32.mrf.mxu0
      %v2700 = vadd.f32 %v1392, %v2699
      %v2701 = vpop.f32.mrf.mxu0
      %v2702 = vadd.f32 %v1392, %v2701
      %2703 = vmatmul.bf16.gmra.mxu0 %v883
      %v2704 = vpop.f32.mrf.mxu0
      %v2705 = vadd.f32 %v1392, %v2704
      %v2706 = vpop.f32.mrf.mxu0
      %v2707 = vadd.f32 %v1392, %v2706
      %2708 = vmatmul.bf16.gmra.mxu0 %v907
      %v2709 = vpop.f32.mrf.mxu0
      %v2710 = vadd.f32 %v1392, %v2709
      %v2711 = vpop.f32.mrf.mxu0
      %v2712 = vadd.f32 %v1392, %v2711
      %2713 = vmatmul.bf16.gmra.mxu0 %v925
      %v2714 = vpop.f32.mrf.mxu0
      %v2715 = vadd.f32 %v1392, %v2714
      %v2716 = vpop.f32.mrf.mxu0
      %v2717 = vadd.f32 %v1392, %v2716
      %2718 = vdwg.mxu0
      %2719 = vmatpush.bf16.msra.mxu0 %v2273
      %2720 = vmatpush.bf16.msra.mxu0 %v2272
      %2721 = vmatpush.bf16.msra.mxu0 %v2271
      %2722 = vmatpush.bf16.msra.mxu0 %v2270
      %2723 = vmatpush.bf16.msra.mxu0 %v2269
      %2724 = vmatpush.bf16.msra.mxu0 %v2268
      %2725 = vmatpush.bf16.msra.mxu0 %v2267
      %2726 = vmatpush.bf16.msra.mxu0 %v2266
      %2727 = vmatmul.bf16.gmra.mxu0 %v878
      %v2728 = vpop.f32.mrf.mxu0
      %v2729 = vadd.f32 %v2700, %v2728
      %v2730 = vpop.f32.mrf.mxu0
      %v2731 = vadd.f32 %v2702, %v2730
      %2732 = vmatmul.bf16.gmra.mxu0 %v884
      %v2733 = vpop.f32.mrf.mxu0
      %v2734 = vadd.f32 %v2705, %v2733
      %v2735 = vpop.f32.mrf.mxu0
      %v2736 = vadd.f32 %v2707, %v2735
      %2737 = vmatmul.bf16.gmra.mxu0 %v908
      %v2738 = vpop.f32.mrf.mxu0
      %v2739 = vadd.f32 %v2710, %v2738
      %v2740 = vpop.f32.mrf.mxu0
      %v2741 = vadd.f32 %v2712, %v2740
      %2742 = vmatmul.bf16.gmra.mxu0 %v926
      %v2743 = vpop.f32.mrf.mxu0
      %v2744 = vadd.f32 %v2715, %v2743
      %v2745 = vpop.f32.mrf.mxu0
      %v2746 = vadd.f32 %v2717, %v2745
      %2747 = vdwg.mxu0
      %2748 = vmatpush.bf16.msra.mxu0 %v2281
      %2749 = vmatpush.bf16.msra.mxu0 %v2280
      %2750 = vmatpush.bf16.msra.mxu0 %v2279
      %2751 = vmatpush.bf16.msra.mxu0 %v2278
      %2752 = vmatpush.bf16.msra.mxu0 %v2277
      %2753 = vmatpush.bf16.msra.mxu0 %v2276
      %2754 = vmatpush.bf16.msra.mxu0 %v2275
      %2755 = vmatpush.bf16.msra.mxu0 %v2274
      %2756 = vmatmul.bf16.gmra.mxu0 %v879
      %v2757 = vpop.f32.mrf.mxu0
      %v2758 = vadd.f32 %v2729, %v2757
      %v2759 = vpop.f32.mrf.mxu0
      %v2760 = vadd.f32 %v2731, %v2759
      %2761 = vmatmul.bf16.gmra.mxu0 %v885
      %v2762 = vpop.f32.mrf.mxu0
      %v2763 = vadd.f32 %v2734, %v2762
      %v2764 = vpop.f32.mrf.mxu0
      %v2765 = vadd.f32 %v2736, %v2764
      %2766 = vmatmul.bf16.gmra.mxu0 %v909
      %v2767 = vpop.f32.mrf.mxu0
      %v2768 = vadd.f32 %v2739, %v2767
      %v2769 = vpop.f32.mrf.mxu0
      %v2770 = vadd.f32 %v2741, %v2769
      %2771 = vmatmul.bf16.gmra.mxu0 %v927
      %v2772 = vpop.f32.mrf.mxu0
      %v2773 = vadd.f32 %v2744, %v2772
      %v2774 = vpop.f32.mrf.mxu0
      %v2775 = vadd.f32 %v2746, %v2774
      %2776 = vdwg.mxu0
      %2777 = vmatpush.bf16.msra.mxu0 %v2289
      %2778 = vmatpush.bf16.msra.mxu0 %v2288
      %2779 = vmatpush.bf16.msra.mxu0 %v2287
      %2780 = vmatpush.bf16.msra.mxu0 %v2286
      %2781 = vmatpush.bf16.msra.mxu0 %v2285
      %2782 = vmatpush.bf16.msra.mxu0 %v2284
      %2783 = vmatpush.bf16.msra.mxu0 %v2283
      %2784 = vmatpush.bf16.msra.mxu0 %v2282
      %2785 = vmatmul.bf16.gmra.mxu0 %v880
      %v2786 = vpop.f32.mrf.mxu0
      %v2787 = vadd.f32 %v2758, %v2786
      %v2788 = vpop.f32.mrf.mxu0
      %v2789 = vadd.f32 %v2760, %v2788
      %2790 = vmatmul.bf16.gmra.mxu0 %v904
      %v2791 = vpop.f32.mrf.mxu0
      %v2792 = vadd.f32 %v2763, %v2791
      %v2793 = vpop.f32.mrf.mxu0
      %v2794 = vadd.f32 %v2765, %v2793
      %2795 = vmatmul.bf16.gmra.mxu0 %v922
      %v2796 = vpop.f32.mrf.mxu0
      %v2797 = vadd.f32 %v2768, %v2796
      %v2798 = vpop.f32.mrf.mxu0
      %v2799 = vadd.f32 %v2770, %v2798
      %2800 = vmatmul.bf16.gmra.mxu0 %v940
      %v2801 = vpop.f32.mrf.mxu0
      %v2802 = vadd.f32 %v2773, %v2801
      %v2803 = vpop.f32.mrf.mxu0
      %v2804 = vadd.f32 %v2775, %v2803
      %2805 = vdwg.mxu0
      %2806 = vmatpush.bf16.msra.mxu0 %v2297
      %2807 = vmatpush.bf16.msra.mxu0 %v2296
      %2808 = vmatpush.bf16.msra.mxu0 %v2295
      %2809 = vmatpush.bf16.msra.mxu0 %v2294
      %2810 = vmatpush.bf16.msra.mxu0 %v2293
      %2811 = vmatpush.bf16.msra.mxu0 %v2292
      %2812 = vmatpush.bf16.msra.mxu0 %v2291
      %2813 = vmatpush.bf16.msra.mxu0 %v2290
      %2814 = vmatmul.bf16.gmra.mxu0 %v881
      %v2815 = vpop.f32.mrf.mxu0
      %v2816 = vadd.f32 %v2787, %v2815
      %v2817 = vpop.f32.mrf.mxu0
      %v2818 = vadd.f32 %v2789, %v2817
      %2819 = vmatmul.bf16.gmra.mxu0 %v905
      %v2820 = vpop.f32.mrf.mxu0
      %v2821 = vadd.f32 %v2792, %v2820
      %v2822 = vpop.f32.mrf.mxu0
      %v2823 = vadd.f32 %v2794, %v2822
      %2824 = vmatmul.bf16.gmra.mxu0 %v923
      %v2825 = vpop.f32.mrf.mxu0
      %v2826 = vadd.f32 %v2797, %v2825
      %v2827 = vpop.f32.mrf.mxu0
      %v2828 = vadd.f32 %v2799, %v2827
      %2829 = vmatmul.bf16.gmra.mxu0 %v941
      %v2830 = vpop.f32.mrf.mxu0
      %v2831 = vadd.f32 %v2802, %v2830
      %v2832 = vpop.f32.mrf.mxu0
      %v2833 = vadd.f32 %v2804, %v2832
      %2834 = vdwg.mxu0
      %2835 = vmatpush.bf16.msra.mxu0 %v2305
      %2836 = vmatpush.bf16.msra.mxu0 %v2304
      %2837 = vmatpush.bf16.msra.mxu0 %v2303
      %2838 = vmatpush.bf16.msra.mxu0 %v2302
      %2839 = vmatpush.bf16.msra.mxu0 %v2301
      %2840 = vmatpush.bf16.msra.mxu0 %v2300
      %2841 = vmatpush.bf16.msra.mxu0 %v2299
      %2842 = vmatpush.bf16.msra.mxu0 %v2298
      %2843 = vmatmul.bf16.gmra.mxu0 %v882
      %v2844 = vpop.f32.mrf.mxu0
      %v2845 = vadd.f32 %v2816, %v2844
      %v2846 = vpop.f32.mrf.mxu0
      %v2847 = vadd.f32 %v2818, %v2846
      %2848 = vmatmul.bf16.gmra.mxu0 %v906
      %v2849 = vpop.f32.mrf.mxu0
      %v2850 = vadd.f32 %v2821, %v2849
      %v2851 = vpop.f32.mrf.mxu0
      %v2852 = vadd.f32 %v2823, %v2851
      %2853 = vmatmul.bf16.gmra.mxu0 %v924
      %v2854 = vpop.f32.mrf.mxu0
      %v2855 = vadd.f32 %v2826, %v2854
      %v2856 = vpop.f32.mrf.mxu0
      %v2857 = vadd.f32 %v2828, %v2856
      %2858 = vmatmul.bf16.gmra.mxu0 %v942
      %v2859 = vpop.f32.mrf.mxu0
      %v2860 = vadd.f32 %v2831, %v2859
      %v2861 = vpop.f32.mrf.mxu0
      %v2862 = vadd.f32 %v2833, %v2861
      %2863 = vdwg.mxu0
      %2864 = vmatpush.bf16.msra.mxu0 %v2313
      %2865 = vmatpush.bf16.msra.mxu0 %v2312
      %2866 = vmatpush.bf16.msra.mxu0 %v2311
      %2867 = vmatpush.bf16.msra.mxu0 %v2310
      %2868 = vmatpush.bf16.msra.mxu0 %v2309
      %2869 = vmatpush.bf16.msra.mxu0 %v2308
      %2870 = vmatpush.bf16.msra.mxu0 %v2307
      %2871 = vmatpush.bf16.msra.mxu0 %v2306
      %2872 = vmatmul.bf16.gmra.mxu0 %v883
      %v2873 = vpop.f32.mrf.mxu0
      %v2874 = vadd.f32 %v2845, %v2873
      %v2875 = vpop.f32.mrf.mxu0
      %v2876 = vadd.f32 %v2847, %v2875
      %2877 = vmatmul.bf16.gmra.mxu0 %v907
      %v2878 = vpop.f32.mrf.mxu0
      %v2879 = vadd.f32 %v2850, %v2878
      %v2880 = vpop.f32.mrf.mxu0
      %v2881 = vadd.f32 %v2852, %v2880
      %2882 = vmatmul.bf16.gmra.mxu0 %v925
      %v2883 = vpop.f32.mrf.mxu0
      %v2884 = vadd.f32 %v2855, %v2883
      %v2885 = vpop.f32.mrf.mxu0
      %v2886 = vadd.f32 %v2857, %v2885
      %2887 = vmatmul.bf16.gmra.mxu0 %v943
      %v2888 = vpop.f32.mrf.mxu0
      %v2889 = vadd.f32 %v2860, %v2888
      %v2890 = vpop.f32.mrf.mxu0
      %v2891 = vadd.f32 %v2862, %v2890
      %2892 = vdwg.mxu0
      %2893 = vmatpush.bf16.msra.mxu0 %v2321
      %2894 = vmatpush.bf16.msra.mxu0 %v2320
      %2895 = vmatpush.bf16.msra.mxu0 %v2319
      %2896 = vmatpush.bf16.msra.mxu0 %v2318
      %2897 = vmatpush.bf16.msra.mxu0 %v2317
      %2898 = vmatpush.bf16.msra.mxu0 %v2316
      %2899 = vmatpush.bf16.msra.mxu0 %v2315
      %2900 = vmatpush.bf16.msra.mxu0 %v2314
      %2901 = vmatmul.bf16.gmra.mxu0 %v884
      %v2902 = vpop.f32.mrf.mxu0
      %v2903 = vadd.f32 %v2874, %v2902
      %v2904 = vpop.f32.mrf.mxu0
      %v2905 = vadd.f32 %v2876, %v2904
      %2906 = vmatmul.bf16.gmra.mxu0 %v908
      %v2907 = vpop.f32.mrf.mxu0
      %v2908 = vadd.f32 %v2879, %v2907
      %v2909 = vpop.f32.mrf.mxu0
      %v2910 = vadd.f32 %v2881, %v2909
      %2911 = vmatmul.bf16.gmra.mxu0 %v926
      %v2912 = vpop.f32.mrf.mxu0
      %v2913 = vadd.f32 %v2884, %v2912
      %v2914 = vpop.f32.mrf.mxu0
      %v2915 = vadd.f32 %v2886, %v2914
      %2916 = vmatmul.bf16.gmra.mxu0 %v944
      %v2917 = vpop.f32.mrf.mxu0
      %v2918 = vadd.f32 %v2889, %v2917
      %v2919 = vpop.f32.mrf.mxu0
      %v2920 = vadd.f32 %v2891, %v2919
      %2921 = vdwg.mxu0
      %2922 = vmatpush.bf16.msra.mxu0 %v2329
      %2923 = vmatpush.bf16.msra.mxu0 %v2328
      %2924 = vmatpush.bf16.msra.mxu0 %v2327
      %2925 = vmatpush.bf16.msra.mxu0 %v2326
      %2926 = vmatpush.bf16.msra.mxu0 %v2325
      %2927 = vmatpush.bf16.msra.mxu0 %v2324
      %2928 = vmatpush.bf16.msra.mxu0 %v2323
      %2929 = vmatpush.bf16.msra.mxu0 %v2322
      %2930 = vmatmul.bf16.gmra.mxu0 %v885
      %v2931 = vpop.f32.mrf.mxu0
      %v2932 = vadd.f32 %v2903, %v2931
      %v2933 = vpop.f32.mrf.mxu0
      %v2934 = vadd.f32 %v2905, %v2933
      %2935 = vmatmul.bf16.gmra.mxu0 %v909
      %v2936 = vpop.f32.mrf.mxu0
      %v2937 = vadd.f32 %v2908, %v2936
      %v2938 = vpop.f32.mrf.mxu0
      %v2939 = vadd.f32 %v2910, %v2938
      %2940 = vmatmul.bf16.gmra.mxu0 %v927
      %v2941 = vpop.f32.mrf.mxu0
      %v2942 = vadd.f32 %v2913, %v2941
      %v2943 = vpop.f32.mrf.mxu0
      %v2944 = vadd.f32 %v2915, %v2943
      %2945 = vmatmul.bf16.gmra.mxu0 %v945
      %v2946 = vpop.f32.mrf.mxu0
      %v2947 = vadd.f32 %v2918, %v2946
      %v2948 = vpop.f32.mrf.mxu0
      %v2949 = vadd.f32 %v2920, %v2948
      %2950 = vdwg.mxu0
      %2951 = vmatpush.bf16.msra.mxu0 %v2337
      %2952 = vmatpush.bf16.msra.mxu0 %v2336
      %2953 = vmatpush.bf16.msra.mxu0 %v2335
      %2954 = vmatpush.bf16.msra.mxu0 %v2334
      %2955 = vmatpush.bf16.msra.mxu0 %v2333
      %2956 = vmatpush.bf16.msra.mxu0 %v2332
      %2957 = vmatpush.bf16.msra.mxu0 %v2331
      %2958 = vmatpush.bf16.msra.mxu0 %v2330
      %2959 = vmatmul.bf16.gmra.mxu0 %v886
      %v2960 = vpop.f32.mrf.mxu0
      %v2961 = vadd.f32 %v2932, %v2960
      %v2962 = vpop.f32.mrf.mxu0
      %v2963 = vadd.f32 %v2934, %v2962
      %2964 = vmatmul.bf16.gmra.mxu0 %v892
      %v2965 = vpop.f32.mrf.mxu0
      %v2966 = vadd.f32 %v2937, %v2965
      %v2967 = vpop.f32.mrf.mxu0
      %v2968 = vadd.f32 %v2939, %v2967
      %2969 = vmatmul.bf16.gmra.mxu0 %v913
      %v2970 = vpop.f32.mrf.mxu0
      %v2971 = vadd.f32 %v2942, %v2970
      %v2972 = vpop.f32.mrf.mxu0
      %v2973 = vadd.f32 %v2944, %v2972
      %2974 = vmatmul.bf16.gmra.mxu0 %v931
      %v2975 = vpop.f32.mrf.mxu0
      %v2976 = vadd.f32 %v2947, %v2975
      %v2977 = vpop.f32.mrf.mxu0
      %v2978 = vadd.f32 %v2949, %v2977
      %2979 = vdwg.mxu0
      %2980 = vmatpush.bf16.msra.mxu0 %v2345
      %2981 = vmatpush.bf16.msra.mxu0 %v2344
      %2982 = vmatpush.bf16.msra.mxu0 %v2343
      %2983 = vmatpush.bf16.msra.mxu0 %v2342
      %2984 = vmatpush.bf16.msra.mxu0 %v2341
      %2985 = vmatpush.bf16.msra.mxu0 %v2340
      %2986 = vmatpush.bf16.msra.mxu0 %v2339
      %2987 = vmatpush.bf16.msra.mxu0 %v2338
      %2988 = vmatmul.bf16.gmra.mxu0 %v887
      %v2989 = vpop.f32.mrf.mxu0
      %v2990 = vadd.f32 %v2961, %v2989
      %v2991 = vpop.f32.mrf.mxu0
      %v2992 = vadd.f32 %v2963, %v2991
      %2993 = vmatmul.bf16.gmra.mxu0 %v893
      %v2994 = vpop.f32.mrf.mxu0
      %v2995 = vadd.f32 %v2966, %v2994
      %v2996 = vpop.f32.mrf.mxu0
      %v2997 = vadd.f32 %v2968, %v2996
      %2998 = vmatmul.bf16.gmra.mxu0 %v914
      %v2999 = vpop.f32.mrf.mxu0
      %v3000 = vadd.f32 %v2971, %v2999
      %v3001 = vpop.f32.mrf.mxu0
      %v3002 = vadd.f32 %v2973, %v3001
      %3003 = vmatmul.bf16.gmra.mxu0 %v932
      %v3004 = vpop.f32.mrf.mxu0
      %v3005 = vadd.f32 %v2976, %v3004
      %v3006 = vpop.f32.mrf.mxu0
      %v3007 = vadd.f32 %v2978, %v3006
      %3008 = vdwg.mxu0
      %3009 = vmatpush.bf16.msra.mxu0 %v2353
      %3010 = vmatpush.bf16.msra.mxu0 %v2352
      %3011 = vmatpush.bf16.msra.mxu0 %v2351
      %3012 = vmatpush.bf16.msra.mxu0 %v2350
      %3013 = vmatpush.bf16.msra.mxu0 %v2349
      %3014 = vmatpush.bf16.msra.mxu0 %v2348
      %3015 = vmatpush.bf16.msra.mxu0 %v2347
      %3016 = vmatpush.bf16.msra.mxu0 %v2346
      %3017 = vmatmul.bf16.gmra.mxu0 %v888
      %v3018 = vpop.f32.mrf.mxu0
      %v3019 = vadd.f32 %v2990, %v3018
      %v3020 = vpop.f32.mrf.mxu0
      %v3021 = vadd.f32 %v2992, %v3020
      %3022 = vmatmul.bf16.gmra.mxu0 %v894
      %v3023 = vpop.f32.mrf.mxu0
      %v3024 = vadd.f32 %v2995, %v3023
      %v3025 = vpop.f32.mrf.mxu0
      %v3026 = vadd.f32 %v2997, %v3025
      %3027 = vmatmul.bf16.gmra.mxu0 %v915
      %v3028 = vpop.f32.mrf.mxu0
      %v3029 = vadd.f32 %v3000, %v3028
      %v3030 = vpop.f32.mrf.mxu0
      %v3031 = vadd.f32 %v3002, %v3030
      %3032 = vmatmul.bf16.gmra.mxu0 %v933
      %v3033 = vpop.f32.mrf.mxu0
      %v3034 = vadd.f32 %v3005, %v3033
      %v3035 = vpop.f32.mrf.mxu0
      %v3036 = vadd.f32 %v3007, %v3035
      %3037 = vdwg.mxu0
      %3038 = vmatpush.bf16.msra.mxu0 %v2361
      %3039 = vmatpush.bf16.msra.mxu0 %v2360
      %3040 = vmatpush.bf16.msra.mxu0 %v2359
      %3041 = vmatpush.bf16.msra.mxu0 %v2358
      %3042 = vmatpush.bf16.msra.mxu0 %v2357
      %3043 = vmatpush.bf16.msra.mxu0 %v2356
      %3044 = vmatpush.bf16.msra.mxu0 %v2355
      %3045 = vmatpush.bf16.msra.mxu0 %v2354
      %3046 = vmatmul.bf16.gmra.mxu0 %v889
      %v3047 = vpop.f32.mrf.mxu0
      %v3048 = vadd.f32 %v3019, %v3047
      %v3049 = vpop.f32.mrf.mxu0
      %v3050 = vadd.f32 %v3021, %v3049
      %3051 = vmatmul.bf16.gmra.mxu0 %v910
      %v3052 = vpop.f32.mrf.mxu0
      %v3053 = vadd.f32 %v3024, %v3052
      %v3054 = vpop.f32.mrf.mxu0
      %v3055 = vadd.f32 %v3026, %v3054
      %3056 = vmatmul.bf16.gmra.mxu0 %v928
      %v3057 = vpop.f32.mrf.mxu0
      %v3058 = vadd.f32 %v3029, %v3057
      %v3059 = vpop.f32.mrf.mxu0
      %v3060 = vadd.f32 %v3031, %v3059
      %3061 = vmatmul.bf16.gmra.mxu0 %v946
      %v3062 = vpop.f32.mrf.mxu0
      %v3063 = vadd.f32 %v3034, %v3062
      %v3064 = vpop.f32.mrf.mxu0
      %v3065 = vadd.f32 %v3036, %v3064
      %3066 = vdwg.mxu0
      %3067 = vmatpush.bf16.msra.mxu0 %v2369
      %3068 = vmatpush.bf16.msra.mxu0 %v2368
      %3069 = vmatpush.bf16.msra.mxu0 %v2367
      %3070 = vmatpush.bf16.msra.mxu0 %v2366
      %3071 = vmatpush.bf16.msra.mxu0 %v2365
      %3072 = vmatpush.bf16.msra.mxu0 %v2364
      %3073 = vmatpush.bf16.msra.mxu0 %v2363
      %3074 = vmatpush.bf16.msra.mxu0 %v2362
      %3075 = vmatmul.bf16.gmra.mxu0 %v890
      %v3076 = vpop.f32.mrf.mxu0
      %v3077 = vadd.f32 %v3048, %v3076
      %v3078 = vpop.f32.mrf.mxu0
      %v3079 = vadd.f32 %v3050, %v3078
      %3080 = vmatmul.bf16.gmra.mxu0 %v911
      %v3081 = vpop.f32.mrf.mxu0
      %v3082 = vadd.f32 %v3053, %v3081
      %v3083 = vpop.f32.mrf.mxu0
      %v3084 = vadd.f32 %v3055, %v3083
      %3085 = vmatmul.bf16.gmra.mxu0 %v929
      %v3086 = vpop.f32.mrf.mxu0
      %v3087 = vadd.f32 %v3058, %v3086
      %v3088 = vpop.f32.mrf.mxu0
      %v3089 = vadd.f32 %v3060, %v3088
      %3090 = vmatmul.bf16.gmra.mxu0 %v947
      %v3091 = vpop.f32.mrf.mxu0
      %v3092 = vadd.f32 %v3063, %v3091
      %v3093 = vpop.f32.mrf.mxu0
      %v3094 = vadd.f32 %v3065, %v3093
      %3095 = vdwg.mxu0
      %3096 = vmatpush.bf16.msra.mxu0 %v2377
      %3097 = vmatpush.bf16.msra.mxu0 %v2376
      %3098 = vmatpush.bf16.msra.mxu0 %v2375
      %3099 = vmatpush.bf16.msra.mxu0 %v2374
      %3100 = vmatpush.bf16.msra.mxu0 %v2373
      %3101 = vmatpush.bf16.msra.mxu0 %v2372
      %3102 = vmatpush.bf16.msra.mxu0 %v2371
      %3103 = vmatpush.bf16.msra.mxu0 %v2370
      %3104 = vmatmul.bf16.gmra.mxu0 %v891
      %v3105 = vpop.f32.mrf.mxu0
      %v3106 = vadd.f32 %v3077, %v3105
      %v3107 = vpop.f32.mrf.mxu0
      %v3108 = vadd.f32 %v3079, %v3107
      %3109 = vmatmul.bf16.gmra.mxu0 %v912
      %v3110 = vpop.f32.mrf.mxu0
      %v3111 = vadd.f32 %v3082, %v3110
      %v3112 = vpop.f32.mrf.mxu0
      %v3113 = vadd.f32 %v3084, %v3112
      %3114 = vmatmul.bf16.gmra.mxu0 %v930
      %v3115 = vpop.f32.mrf.mxu0
      %v3116 = vadd.f32 %v3087, %v3115
      %v3117 = vpop.f32.mrf.mxu0
      %v3118 = vadd.f32 %v3089, %v3117
      %3119 = vmatmul.bf16.gmra.mxu0 %v948
      %v3120 = vpop.f32.mrf.mxu0
      %v3121 = vadd.f32 %v3092, %v3120
      %v3122 = vpop.f32.mrf.mxu0
      %v3123 = vadd.f32 %v3094, %v3122
      %3124 = vdwg.mxu0
      %3125 = vmatpush.bf16.msra.mxu0 %v2385
      %3126 = vmatpush.bf16.msra.mxu0 %v2384
      %3127 = vmatpush.bf16.msra.mxu0 %v2383
      %3128 = vmatpush.bf16.msra.mxu0 %v2382
      %3129 = vmatpush.bf16.msra.mxu0 %v2381
      %3130 = vmatpush.bf16.msra.mxu0 %v2380
      %3131 = vmatpush.bf16.msra.mxu0 %v2379
      %3132 = vmatpush.bf16.msra.mxu0 %v2378
      %3133 = vmatmul.bf16.gmra.mxu0 %v892
      %v3134 = vpop.f32.mrf.mxu0
      %v3135 = vadd.f32 %v3106, %v3134
      %v3136 = vpop.f32.mrf.mxu0
      %v3137 = vadd.f32 %v3108, %v3136
      %3138 = vmatmul.bf16.gmra.mxu0 %v913
      %v3139 = vpop.f32.mrf.mxu0
      %v3140 = vadd.f32 %v3111, %v3139
      %v3141 = vpop.f32.mrf.mxu0
      %v3142 = vadd.f32 %v3113, %v3141
      %3143 = vmatmul.bf16.gmra.mxu0 %v931
      %v3144 = vpop.f32.mrf.mxu0
      %v3145 = vadd.f32 %v3116, %v3144
      %v3146 = vpop.f32.mrf.mxu0
      %v3147 = vadd.f32 %v3118, %v3146
      %3148 = vmatmul.bf16.gmra.mxu0 %v949
      %v3149 = vpop.f32.mrf.mxu0
      %v3150 = vadd.f32 %v3121, %v3149
      %v3151 = vpop.f32.mrf.mxu0
      %v3152 = vadd.f32 %v3123, %v3151
      %3153 = vdwg.mxu0
      %3154 = vmatpush.bf16.msra.mxu0 %v2393
      %3155 = vmatpush.bf16.msra.mxu0 %v2392
      %3156 = vmatpush.bf16.msra.mxu0 %v2391
      %3157 = vmatpush.bf16.msra.mxu0 %v2390
      %3158 = vmatpush.bf16.msra.mxu0 %v2389
      %3159 = vmatpush.bf16.msra.mxu0 %v2388
      %3160 = vmatpush.bf16.msra.mxu0 %v2387
      %3161 = vmatpush.bf16.msra.mxu0 %v2386
      %3162 = vmatmul.bf16.gmra.mxu0 %v893
      %v3163 = vpop.f32.mrf.mxu0
      %v3164 = vadd.f32 %v3135, %v3163
      %v3165 = vpop.f32.mrf.mxu0
      %v3166 = vadd.f32 %v3137, %v3165
      %3167 = vmatmul.bf16.gmra.mxu0 %v914
      %v3168 = vpop.f32.mrf.mxu0
      %v3169 = vadd.f32 %v3140, %v3168
      %v3170 = vpop.f32.mrf.mxu0
      %v3171 = vadd.f32 %v3142, %v3170
      %3172 = vmatmul.bf16.gmra.mxu0 %v932
      %v3173 = vpop.f32.mrf.mxu0
      %v3174 = vadd.f32 %v3145, %v3173
      %v3175 = vpop.f32.mrf.mxu0
      %v3176 = vadd.f32 %v3147, %v3175
      %3177 = vmatmul.bf16.gmra.mxu0 %v950
      %v3178 = vpop.f32.mrf.mxu0
      %v3179 = vadd.f32 %v3150, %v3178
      %v3180 = vpop.f32.mrf.mxu0
      %v3181 = vadd.f32 %v3152, %v3180
      %3182 = vdwg.mxu0
      %3183 = vmatpush.bf16.msra.mxu0 %v2401
      %3184 = vmatpush.bf16.msra.mxu0 %v2400
      %3185 = vmatpush.bf16.msra.mxu0 %v2399
      %3186 = vmatpush.bf16.msra.mxu0 %v2398
      %3187 = vmatpush.bf16.msra.mxu0 %v2397
      %3188 = vmatpush.bf16.msra.mxu0 %v2396
      %3189 = vmatpush.bf16.msra.mxu0 %v2395
      %3190 = vmatpush.bf16.msra.mxu0 %v2394
      %3191 = vmatmul.bf16.gmra.mxu0 %v894
      %v3192 = vpop.f32.mrf.mxu0
      %v3193 = vadd.f32 %v3164, %v3192
      %v3194 = vpop.f32.mrf.mxu0
      %v3195 = vadd.f32 %v3166, %v3194
      %3196 = vmatmul.bf16.gmra.mxu0 %v915
      %v3197 = vpop.f32.mrf.mxu0
      %v3198 = vadd.f32 %v3169, %v3197
      %v3199 = vpop.f32.mrf.mxu0
      %v3200 = vadd.f32 %v3171, %v3199
      %3201 = vmatmul.bf16.gmra.mxu0 %v933
      %v3202 = vpop.f32.mrf.mxu0
      %v3203 = vadd.f32 %v3174, %v3202
      %v3204 = vpop.f32.mrf.mxu0
      %v3205 = vadd.f32 %v3176, %v3204
      %3206 = vmatmul.bf16.gmra.mxu0 %v951
      %v3207 = vpop.f32.mrf.mxu0
      %v3208 = vadd.f32 %v3179, %v3207
      %v3209 = vpop.f32.mrf.mxu0
      %v3210 = vadd.f32 %v3181, %v3209
      %3211 = vdwg.mxu0
      %3212 = vmatpush.bf16.msra.mxu0 %v2409
      %3213 = vmatpush.bf16.msra.mxu0 %v2408
      %3214 = vmatpush.bf16.msra.mxu0 %v2407
      %3215 = vmatpush.bf16.msra.mxu0 %v2406
      %3216 = vmatpush.bf16.msra.mxu0 %v2405
      %3217 = vmatpush.bf16.msra.mxu0 %v2404
      %3218 = vmatpush.bf16.msra.mxu0 %v2403
      %3219 = vmatpush.bf16.msra.mxu0 %v2402
      %3220 = vmatmul.bf16.gmra.mxu0 %v895
      %v3221 = vpop.f32.mrf.mxu0
      %v3222 = vadd.f32 %v3193, %v3221
      %v3223 = vpop.f32.mrf.mxu0
      %v3224 = vadd.f32 %v3195, %v3223
      %3225 = vmatmul.bf16.gmra.mxu0 %v901
      %v3226 = vpop.f32.mrf.mxu0
      %v3227 = vadd.f32 %v3198, %v3226
      %v3228 = vpop.f32.mrf.mxu0
      %v3229 = vadd.f32 %v3200, %v3228
      %3230 = vmatmul.bf16.gmra.mxu0 %v919
      %v3231 = vpop.f32.mrf.mxu0
      %v3232 = vadd.f32 %v3203, %v3231
      %v3233 = vpop.f32.mrf.mxu0
      %v3234 = vadd.f32 %v3205, %v3233
      %3235 = vmatmul.bf16.gmra.mxu0 %v937
      %v3236 = vpop.f32.mrf.mxu0
      %v3237 = vadd.f32 %v3208, %v3236
      %v3238 = vpop.f32.mrf.mxu0
      %v3239 = vadd.f32 %v3210, %v3238
      %3240 = vdwg.mxu0
      %3241 = vmatpush.bf16.msra.mxu0 %v2417
      %3242 = vmatpush.bf16.msra.mxu0 %v2416
      %3243 = vmatpush.bf16.msra.mxu0 %v2415
      %3244 = vmatpush.bf16.msra.mxu0 %v2414
      %3245 = vmatpush.bf16.msra.mxu0 %v2413
      %3246 = vmatpush.bf16.msra.mxu0 %v2412
      %3247 = vmatpush.bf16.msra.mxu0 %v2411
      %3248 = vmatpush.bf16.msra.mxu0 %v2410
      %3249 = vmatmul.bf16.gmra.mxu0 %v896
      %v3250 = vpop.f32.mrf.mxu0
      %v3251 = vadd.f32 %v3222, %v3250
      %v3252 = vpop.f32.mrf.mxu0
      %v3253 = vadd.f32 %v3224, %v3252
      %3254 = vmatmul.bf16.gmra.mxu0 %v902
      %v3255 = vpop.f32.mrf.mxu0
      %v3256 = vadd.f32 %v3227, %v3255
      %v3257 = vpop.f32.mrf.mxu0
      %v3258 = vadd.f32 %v3229, %v3257
      %3259 = vmatmul.bf16.gmra.mxu0 %v920
      %v3260 = vpop.f32.mrf.mxu0
      %v3261 = vadd.f32 %v3232, %v3260
      %v3262 = vpop.f32.mrf.mxu0
      %v3263 = vadd.f32 %v3234, %v3262
      %3264 = vmatmul.bf16.gmra.mxu0 %v938
      %v3265 = vpop.f32.mrf.mxu0
      %v3266 = vadd.f32 %v3237, %v3265
      %v3267 = vpop.f32.mrf.mxu0
      %v3268 = vadd.f32 %v3239, %v3267
      %3269 = vdwg.mxu0
      %3270 = vmatpush.bf16.msra.mxu0 %v2425
      %3271 = vmatpush.bf16.msra.mxu0 %v2424
      %3272 = vmatpush.bf16.msra.mxu0 %v2423
      %3273 = vmatpush.bf16.msra.mxu0 %v2422
      %3274 = vmatpush.bf16.msra.mxu0 %v2421
      %3275 = vmatpush.bf16.msra.mxu0 %v2420
      %3276 = vmatpush.bf16.msra.mxu0 %v2419
      %3277 = vmatpush.bf16.msra.mxu0 %v2418
      %3278 = vmatmul.bf16.gmra.mxu0 %v897
      %v3279 = vpop.f32.mrf.mxu0
      %v3280 = vadd.f32 %v3251, %v3279
      %v3281 = vpop.f32.mrf.mxu0
      %v3282 = vadd.f32 %v3253, %v3281
      %3283 = vmatmul.bf16.gmra.mxu0 %v903
      %v3284 = vpop.f32.mrf.mxu0
      %v3285 = vadd.f32 %v3256, %v3284
      %v3286 = vpop.f32.mrf.mxu0
      %v3287 = vadd.f32 %v3258, %v3286
      %3288 = vmatmul.bf16.gmra.mxu0 %v921
      %v3289 = vpop.f32.mrf.mxu0
      %v3290 = vadd.f32 %v3261, %v3289
      %v3291 = vpop.f32.mrf.mxu0
      %v3292 = vadd.f32 %v3263, %v3291
      %3293 = vmatmul.bf16.gmra.mxu0 %v939
      %v3294 = vpop.f32.mrf.mxu0
      %v3295 = vadd.f32 %v3266, %v3294
      %v3296 = vpop.f32.mrf.mxu0
      %v3297 = vadd.f32 %v3268, %v3296
      %3298 = vdwg.mxu0
      %3299 = vmatpush.bf16.msra.mxu0 %v2433
      %3300 = vmatpush.bf16.msra.mxu0 %v2432
      %3301 = vmatpush.bf16.msra.mxu0 %v2431
      %3302 = vmatpush.bf16.msra.mxu0 %v2430
      %3303 = vmatpush.bf16.msra.mxu0 %v2429
      %3304 = vmatpush.bf16.msra.mxu0 %v2428
      %3305 = vmatpush.bf16.msra.mxu0 %v2427
      %3306 = vmatpush.bf16.msra.mxu0 %v2426
      %3307 = vmatmul.bf16.gmra.mxu0 %v898
      %v3308 = vpop.f32.mrf.mxu0
      %v3309 = vadd.f32 %v3280, %v3308
      %v3310 = vpop.f32.mrf.mxu0
      %v3311 = vadd.f32 %v3282, %v3310
      %3312 = vmatmul.bf16.gmra.mxu0 %v916
      %v3313 = vpop.f32.mrf.mxu0
      %v3314 = vadd.f32 %v3285, %v3313
      %v3315 = vpop.f32.mrf.mxu0
      %v3316 = vadd.f32 %v3287, %v3315
      %3317 = vmatmul.bf16.gmra.mxu0 %v934
      %v3318 = vpop.f32.mrf.mxu0
      %v3319 = vadd.f32 %v3290, %v3318
      %v3320 = vpop.f32.mrf.mxu0
      %v3321 = vadd.f32 %v3292, %v3320
      %3322 = vmatmul.bf16.gmra.mxu0 %v952
      %v3323 = vpop.f32.mrf.mxu0
      %v3324 = vadd.f32 %v3295, %v3323
      %v3325 = vpop.f32.mrf.mxu0
      %v3326 = vadd.f32 %v3297, %v3325
      %3327 = vdwg.mxu0
      %3328 = vmatpush.bf16.msra.mxu0 %v2441
      %3329 = vmatpush.bf16.msra.mxu0 %v2440
      %3330 = vmatpush.bf16.msra.mxu0 %v2439
      %3331 = vmatpush.bf16.msra.mxu0 %v2438
      %3332 = vmatpush.bf16.msra.mxu0 %v2437
      %3333 = vmatpush.bf16.msra.mxu0 %v2436
      %3334 = vmatpush.bf16.msra.mxu0 %v2435
      %3335 = vmatpush.bf16.msra.mxu0 %v2434
      %3336 = vmatmul.bf16.gmra.mxu0 %v899
      %v3337 = vpop.f32.mrf.mxu0
      %v3338 = vadd.f32 %v3309, %v3337
      %v3339 = vpop.f32.mrf.mxu0
      %v3340 = vadd.f32 %v3311, %v3339
      %3341 = vmatmul.bf16.gmra.mxu0 %v917
      %v3342 = vpop.f32.mrf.mxu0
      %v3343 = vadd.f32 %v3314, %v3342
      %v3344 = vpop.f32.mrf.mxu0
      %v3345 = vadd.f32 %v3316, %v3344
      %3346 = vmatmul.bf16.gmra.mxu0 %v935
      %v3347 = vpop.f32.mrf.mxu0
      %v3348 = vadd.f32 %v3319, %v3347
      %v3349 = vpop.f32.mrf.mxu0
      %v3350 = vadd.f32 %v3321, %v3349
      %3351 = vmatmul.bf16.gmra.mxu0 %v953
      %v3352 = vpop.f32.mrf.mxu0
      %v3353 = vadd.f32 %v3324, %v3352
      %v3354 = vpop.f32.mrf.mxu0
      %v3355 = vadd.f32 %v3326, %v3354
      %3356 = vdwg.mxu0
      %3357 = vmatpush.bf16.msra.mxu0 %v2449
      %3358 = vmatpush.bf16.msra.mxu0 %v2448
      %3359 = vmatpush.bf16.msra.mxu0 %v2447
      %3360 = vmatpush.bf16.msra.mxu0 %v2446
      %3361 = vmatpush.bf16.msra.mxu0 %v2445
      %3362 = vmatpush.bf16.msra.mxu0 %v2444
      %3363 = vmatpush.bf16.msra.mxu0 %v2443
      %3364 = vmatpush.bf16.msra.mxu0 %v2442
      %3365 = vmatmul.bf16.gmra.mxu0 %v900
      %v3366 = vpop.f32.mrf.mxu0
      %v3367 = vadd.f32 %v3338, %v3366
      %v3368 = vpop.f32.mrf.mxu0
      %v3369 = vadd.f32 %v3340, %v3368
      %3370 = vmatmul.bf16.gmra.mxu0 %v918
      %v3371 = vpop.f32.mrf.mxu0
      %v3372 = vadd.f32 %v3343, %v3371
      %v3373 = vpop.f32.mrf.mxu0
      %v3374 = vadd.f32 %v3345, %v3373
      %3375 = vmatmul.bf16.gmra.mxu0 %v936
      %v3376 = vpop.f32.mrf.mxu0
      %v3377 = vadd.f32 %v3348, %v3376
      %v3378 = vpop.f32.mrf.mxu0
      %v3379 = vadd.f32 %v3350, %v3378
      %3380 = vmatmul.bf16.gmra.mxu0 %v954
      %v3381 = vpop.f32.mrf.mxu0
      %v3382 = vadd.f32 %v3353, %v3381
      %v3383 = vpop.f32.mrf.mxu0
      %v3384 = vadd.f32 %v3355, %v3383
      %3385 = vdwg.mxu0
      %3386 = vmatpush.bf16.msra.mxu0 %v2457
      %3387 = vmatpush.bf16.msra.mxu0 %v2456
      %3388 = vmatpush.bf16.msra.mxu0 %v2455
      %3389 = vmatpush.bf16.msra.mxu0 %v2454
      %3390 = vmatpush.bf16.msra.mxu0 %v2453
      %3391 = vmatpush.bf16.msra.mxu0 %v2452
      %3392 = vmatpush.bf16.msra.mxu0 %v2451
      %3393 = vmatpush.bf16.msra.mxu0 %v2450
      %3394 = vmatmul.bf16.gmra.mxu0 %v901
      %v3395 = vpop.f32.mrf.mxu0
      %v3396 = vadd.f32 %v3367, %v3395
      %v3397 = vpop.f32.mrf.mxu0
      %v3398 = vadd.f32 %v3369, %v3397
      %3399 = vmatmul.bf16.gmra.mxu0 %v919
      %v3400 = vpop.f32.mrf.mxu0
      %v3401 = vadd.f32 %v3372, %v3400
      %v3402 = vpop.f32.mrf.mxu0
      %v3403 = vadd.f32 %v3374, %v3402
      %3404 = vmatmul.bf16.gmra.mxu0 %v937
      %v3405 = vpop.f32.mrf.mxu0
      %v3406 = vadd.f32 %v3377, %v3405
      %v3407 = vpop.f32.mrf.mxu0
      %v3408 = vadd.f32 %v3379, %v3407
      %3409 = vmatmul.bf16.gmra.mxu0 %v955
      %v3410 = vpop.f32.mrf.mxu0
      %v3411 = vadd.f32 %v3382, %v3410
      %v3412 = vpop.f32.mrf.mxu0
      %v3413 = vadd.f32 %v3384, %v3412
      %3414 = vdwg.mxu0
      %3415 = vmatpush.bf16.msra.mxu0 %v2465
      %3416 = vmatpush.bf16.msra.mxu0 %v2464
      %3417 = vmatpush.bf16.msra.mxu0 %v2463
      %3418 = vmatpush.bf16.msra.mxu0 %v2462
      %3419 = vmatpush.bf16.msra.mxu0 %v2461
      %3420 = vmatpush.bf16.msra.mxu0 %v2460
      %3421 = vmatpush.bf16.msra.mxu0 %v2459
      %3422 = vmatpush.bf16.msra.mxu0 %v2458
      %3423 = vmatmul.bf16.gmra.mxu0 %v902
      %v3424 = vpop.f32.mrf.mxu0
      %v3425 = vadd.f32 %v3396, %v3424
      %v3426 = vpop.f32.mrf.mxu0
      %v3427 = vadd.f32 %v3398, %v3426
      %3428 = vmatmul.bf16.gmra.mxu0 %v920
      %v3429 = vpop.f32.mrf.mxu0
      %v3430 = vadd.f32 %v3401, %v3429
      %v3431 = vpop.f32.mrf.mxu0
      %v3432 = vadd.f32 %v3403, %v3431
      %3433 = vmatmul.bf16.gmra.mxu0 %v938
      %v3434 = vpop.f32.mrf.mxu0
      %v3435 = vadd.f32 %v3406, %v3434
      %v3436 = vpop.f32.mrf.mxu0
      %v3437 = vadd.f32 %v3408, %v3436
      %3438 = vmatmul.bf16.gmra.mxu0 %v956
      %v3439 = vpop.f32.mrf.mxu0
      %v3440 = vadd.f32 %v3411, %v3439
      %v3441 = vpop.f32.mrf.mxu0
      %v3442 = vadd.f32 %v3413, %v3441
      %3443 = vdwg.mxu0
      %3444 = vmatpush.bf16.msra.mxu0 %v2473
      %3445 = vmatpush.bf16.msra.mxu0 %v2472
      %3446 = vmatpush.bf16.msra.mxu0 %v2471
      %3447 = vmatpush.bf16.msra.mxu0 %v2470
      %3448 = vmatpush.bf16.msra.mxu0 %v2469
      %3449 = vmatpush.bf16.msra.mxu0 %v2468
      %3450 = vmatpush.bf16.msra.mxu0 %v2467
      %3451 = vmatpush.bf16.msra.mxu0 %v2466
      %3452 = vmatmul.bf16.gmra.mxu0 %v903
      %v3453 = vpop.f32.mrf.mxu0
      %v3454 = vadd.f32 %v3425, %v3453
      %v3455 = vpop.f32.mrf.mxu0
      %v3456 = vadd.f32 %v3427, %v3455
      %3457 = vmatmul.bf16.gmra.mxu0 %v921
      %v3458 = vpop.f32.mrf.mxu0
      %v3459 = vadd.f32 %v3430, %v3458
      %v3460 = vpop.f32.mrf.mxu0
      %v3461 = vadd.f32 %v3432, %v3460
      %3462 = vmatmul.bf16.gmra.mxu0 %v939
      %v3463 = vpop.f32.mrf.mxu0
      %v3464 = vadd.f32 %v3435, %v3463
      %v3465 = vpop.f32.mrf.mxu0
      %v3466 = vadd.f32 %v3437, %v3465
      %3467 = vmatmul.bf16.gmra.mxu0 %v957
      %v3468 = vpop.f32.mrf.mxu0
      %v3469 = vadd.f32 %v3440, %v3468
      %v3470 = vpop.f32.mrf.mxu0
      %v3471 = vadd.f32 %v3442, %v3470
      %3472 = vdwg.mxu0
      %3473 = vst [vmem:[%s500] sm:$0xff] %v3454
      %3474 = vst [vmem:[%s500 + $0x8] sm:$0xff] %v3456
      %3475 = vst [vmem:[%s500 + $0x10] sm:$0xff] %v3459
      %3476 = vst [vmem:[%s500 + $0x18] sm:$0xff] %v3461
      %3477 = vst [vmem:[%s500 + $0x20] sm:$0xff] %v3464
      %3478 = vst [vmem:[%s500 + $0x28] sm:$0xff] %v3466
      %3479 = vst [vmem:[%s500 + $0x30] sm:$0xff] %v3469
      %3480 = vst [vmem:[%s500 + $0x38] sm:$0xff] %v3471
      %v3481 = vadd.f32 %v3454, %v3456
      %v3482 = vadd.f32 %v3481, %v3459
      %v3483 = vadd.f32 %v3482, %v3461
      %v3484 = vadd.f32 %v3483, %v3464
      %v3485 = vadd.f32 %v3484, %v3466
      %v3486 = vadd.f32 %v3485, %v3469
      %v3487 = vadd.f32 %v3486, %v3471
      %v3488 = vrot.slane %v3487, 4
      %v3489 = vadd.f32 %v3487, %v3488
      %v3490 = vrot.slane %v3489, 2
      %v3491 = vadd.f32 %v3489, %v3490
      %v3492 = vrot.slane %v3491, 1
      %v3493 = vadd.f32 %v3491, %v3492
      %3494 = vst [vmem:[%s507] sm:$0x1] %v3493
      %v3495 = vmul.f32 %v3454, %v3454
      %v3496 = vmul.f32 %v3456, %v3456
      %v3497 = vmul.f32 %v3459, %v3459
      %v3498 = vmul.f32 %v3461, %v3461
      %v3499 = vmul.f32 %v3464, %v3464
      %v3500 = vmul.f32 %v3466, %v3466
      %v3501 = vmul.f32 %v3469, %v3469
      %v3502 = vmul.f32 %v3471, %v3471
      %v3503 = vadd.f32 %v3495, %v3496
      %v3504 = vadd.f32 %v3503, %v3497
      %v3505 = vadd.f32 %v3504, %v3498
      %v3506 = vadd.f32 %v3505, %v3499
      %v3507 = vadd.f32 %v3506, %v3500
      %v3508 = vadd.f32 %v3507, %v3501
      %v3509 = vadd.f32 %v3508, %v3502
      %v3510 = vrot.slane %v3509, 4
      %v3511 = vadd.f32 %v3509, %v3510
      %v3512 = vrot.slane %v3511, 2
      %v3513 = vadd.f32 %v3511, %v3512
      %v3514 = vrot.slane %v3513, 1
      %v3515 = vadd.f32 %v3513, %v3514
      %3516 = vst [vmem:[%s514] sm:$0x1] %v3515
      %p3517 = scmp.lt.s32.totalorder %s26, 1
      %s3518 = scalar_select %p3517, %s26, 1
      %p3519 = scmp.lt.s32.totalorder %s27, 7
      %s3520 = scalar_select %p3519, %s27, 7
      %s3521 = smul.addr %s3520, 8
      %s3522 = smul.addr %s3518, 64
      %s3523 = sadd.s32 %s3521, %s3522
      %s3524 = smul.addr %s3523, 8
      %s3525 = scalar_lea.vmem %s8, %s3524
      %p3526 = scmp.lt.s32.totalorder %s26, 1
      %s3527 = scalar_select %p3526, %s26, 1
      %p3528 = scmp.lt.s32.totalorder %s27, 7
      %s3529 = scalar_select %p3528, %s27, 7
      %s3530 = smul.addr %s3527, 8
      %s3531 = sadd.s32 %s3529, %s3530
      %s3532 = scalar_lea.vmem %s9, %s3531
      %p3533 = scmp.lt.s32.totalorder %s26, 1
      %s3534 = scalar_select %p3533, %s26, 1
      %p3535 = scmp.lt.s32.totalorder %s27, 7
      %s3536 = scalar_select %p3535, %s27, 7
      %s3537 = smul.addr %s3534, 8
      %s3538 = sadd.s32 %s3536, %s3537
      %s3539 = scalar_lea.vmem %s10, %s3538
      // Predicated region
      $region53: #{double_conv_forward.3} parent=51 // pred_check
        %p3540 = pneg %p247
      $region54: #{double_conv_forward.3} parent=51 // pred_check_branch
        %3542 = sbr.rel (%p3540) target = $region56
      $region55: #{double_conv_forward.3} parent=51 // pred_region
        _
      $region56: #{double_conv_forward.3} parent=51 // pred_fallthru
        _
      // Predicated region
      $region57: #{double_conv_forward.3} parent=51 // pred_check
        %p3543 = pneg %p275
      $region58: #{double_conv_forward.3} parent=51 // pred_check_branch
        %3545 = sbr.rel (%p3543) target = $region60
      $region59: #{double_conv_forward.3} parent=51 // pred_region
        _
      $region60: #{double_conv_forward.3} parent=51 // pred_fallthru
        _
      // Predicated region
      $region61: #{double_conv_forward.3} parent=51 // pred_check
        %p3546 = pneg %p303
      $region62: #{double_conv_forward.3} parent=51 // pred_check_branch
        %3548 = sbr.rel (%p3546) target = $region64
      $region63: #{double_conv_forward.3} parent=51 // pred_region
        _
      $region64: #{double_conv_forward.3} parent=51 // pred_fallthru
        _
    $region52: #{double_conv_forward.3} parent=5 // pred_fallthru
      _
    %p3549 = scmp.le.s32.totalorder 2, %s17
    // Predicated region
    $region65: #{double_conv_forward.3} parent=5 // pred_check
      %p3550 = pneg %p3549
    $region66: #{double_conv_forward.3} parent=5 // pred_check_branch
      %3552 = sbr.rel (%p3550) target = $region68
    $region67: #{double_conv_forward.3} parent=5 // pred_region
      %s3553 = ssub.s32 %s17, 2
      // Predicated region
      $region69: #{double_conv_forward.3} parent=67 // pred_check
        %p3554 = pneg %p253
      $region70: #{double_conv_forward.3} parent=67 // pred_check_branch
        %3556 = sbr.rel (%p3554) target = $region72
      $region71: #{double_conv_forward.3} parent=67 // pred_region
        %p3557 = scmp.lt.s32.totalorder %s28, 1
        %s3558 = scalar_select %p3557, %s28, 1
        %p3559 = scmp.lt.s32.totalorder %s29, 7
        %s3560 = scalar_select %p3559, %s29, 7
        %s3561 = smul.addr %s3560, 8
        %s3562 = smul.addr %s3558, 64
        %s3563 = sadd.s32 %s3561, %s3562
        %s3564 = smul.addr %s3563, 8
        %s3565 = scalar_lea.vmem %s8, %s3564
      $region72: #{double_conv_forward.3} parent=67 // pred_fallthru
        _
      // Predicated region
      $region73: #{double_conv_forward.3} parent=67 // pred_check
        %p3566 = pneg %p281
      $region74: #{double_conv_forward.3} parent=67 // pred_check_branch
        %3568 = sbr.rel (%p3566) target = $region76
      $region75: #{double_conv_forward.3} parent=67 // pred_region
        %p3569 = scmp.lt.s32.totalorder %s28, 1
        %s3570 = scalar_select %p3569, %s28, 1
        %p3571 = scmp.lt.s32.totalorder %s29, 7
        %s3572 = scalar_select %p3571, %s29, 7
        %s3573 = smul.addr %s3570, 8
        %s3574 = sadd.s32 %s3572, %s3573
        %s3575 = scalar_lea.vmem %s9, %s3574
      $region76: #{double_conv_forward.3} parent=67 // pred_fallthru
        _
      // Predicated region
      $region77: #{double_conv_forward.3} parent=67 // pred_check
        %p3576 = pneg %p309
      $region78: #{double_conv_forward.3} parent=67 // pred_check_branch
        %3578 = sbr.rel (%p3576) target = $region80
      $region79: #{double_conv_forward.3} parent=67 // pred_region
        %p3579 = scmp.lt.s32.totalorder %s28, 1
        %s3580 = scalar_select %p3579, %s28, 1
        %p3581 = scmp.lt.s32.totalorder %s29, 7
        %s3582 = scalar_select %p3581, %s29, 7
        %s3583 = smul.addr %s3580, 8
        %s3584 = sadd.s32 %s3582, %s3583
        %s3585 = scalar_lea.vmem %s10, %s3584
      $region80: #{double_conv_forward.3} parent=67 // pred_fallthru
        _
    $region68: #{double_conv_forward.3} parent=5 // pred_fallthru
      _
  $region6: #{double_conv_forward.3} parent=0 // loop_footer
    %s21 = sadd.s32 1, %s17
  $region7: #{double_conv_forward.3} parent=0 // loop_footer_branch
    %16 = sbr.rel target = $region3
  $region8: #{double_conv_forward.3} parent=0 // loop_exit
    _

// kernel: double_conv_forward.4
$region0: #{double_conv_forward.4}
  #allocation0 [shape = 'u32[]', space=smem, size = 0x4, offset = 0x4, fixed_abs, tag = 'smem constant byte address 0x4 - core index']
  #allocation1 [shape = 'u32[72,128]{1,0:T(1,128)}', space=vmem, size = 0x9000, scoped, tag = 'internal scratch']
  %s0 = inlined_call_operand.vmem [shape: f32[2,10,10,10,128], index: 0, kind: input, shape index: {}, may-alias: {0,1,2}]
  %s1 = inlined_call_operand.vmem [shape: f32[2,10,10,10,128], index: 1, kind: input, shape index: {}, may-alias: {0,1,2}]
  %s2 = inlined_call_operand.vmem [shape: f32[2,10,10,10,128], index: 2, kind: input, shape index: {}, may-alias: {0,1,2}]
  %s3 = inlined_call_operand.vmem [shape: bf16[3456,128], index: 3, kind: input, shape index: {}]
  %s4 = inlined_call_operand.vmem [shape: f32[1,128], index: 4, kind: input, shape index: {}]
  %s5 = inlined_call_operand.vmem [shape: f32[1,128], index: 5, kind: input, shape index: {}]
  %s6 = inlined_call_operand.vmem [shape: f32[1,128], index: 6, kind: input, shape index: {}]
  %s7 = inlined_call_operand.vmem [shape: f32[10,10,128], index: 7, kind: input, shape index: {}]
  %s8 = inlined_call_operand.vmem [shape: f32[2,8,8,8,128], index: 8, kind: output, shape index: {0}]
  %s9 = inlined_call_operand.vmem [shape: f32[2,8,1,128], index: 9, kind: output, shape index: {1}]
  %s10 = inlined_call_operand.vmem [shape: f32[2,8,1,128], index: 10, kind: output, shape index: {2}]
  %11 = xla_tuple %s8, %s9, %s10
  %s12 = sld [smem:[#allocation0]]
  $region81: #{double_conv_forward.4} parent=0
    _
  %s14 = ssub.s32 1, %s12
  %s15 = scalar_select 0, %s14, %s12
  loop: start=0, step=1, limit=18
  $region2: #{double_conv_forward.4} parent=0 // loop_pre_header
    _
  $region3: #{double_conv_forward.4} parent=0 // loop_header
    %s17 = sphi 0, %s21
    %p18 = scmp.ge.s32.totalorder %s17, 18
    %s24 = sphi 0, %s36
    %s25 = sphi 0, %s32
    %s26 = sphi 0, %s24
    %s27 = sphi 0, %s25
    %s28 = sphi 0, %s26
    %s29 = sphi 0, %s27
    %s41 = sphi 0, %s43
    %s44 = sphi 0, %s41
    %s45 = sphi 0, %s44
    %s61 = sphi 0, %s45
    %s71 = sphi 0, %s73
    %s74 = sphi 0, %s71
    %s75 = sphi 0, %s74
    %s91 = sphi 0, %s75
    %s101 = sphi 0, %s103
    %s104 = sphi 0, %s101
    %s105 = sphi 0, %s104
    %s121 = sphi 0, %s105
    %s125 = sphi 0, %s125
    %s127 = sphi 0, %s125
    %s128 = sphi 0, %s127
    %s142 = sphi 0, %s128
    %s146 = sphi 0, %s146
    %s148 = sphi 0, %s146
    %s149 = sphi 0, %s148
    %s163 = sphi 0, %s149
    %s167 = sphi 0, %s167
    %s169 = sphi 0, %s167
    %s170 = sphi 0, %s169
    %s184 = sphi 0, %s170
    %s188 = sphi 0, %s188
    %s190 = sphi 0, %s188
    %s191 = sphi 0, %s190
    %s205 = sphi 0, %s191
    %s209 = sphi 0, %s209
    %s211 = sphi 0, %s209
    %s212 = sphi 0, %s211
    %s226 = sphi 0, %s212
    %s234 = sphi 0, %s236
    %s237 = sphi 0, %s234
    %s238 = sphi 0, %s237
    %s254 = sphi 0, %s238
    %s262 = sphi 0, %s264
    %s265 = sphi 0, %s262
    %s266 = sphi 0, %s265
    %s282 = sphi 0, %s266
    %s290 = sphi 0, %s292
    %s293 = sphi 0, %s290
    %s294 = sphi 0, %s293
    %s310 = sphi 0, %s294
  $region4: #{double_conv_forward.4} parent=0 // loop_header_branch
    %20 = sbr.rel (%p18) target = $region8
  $region5: #{double_conv_forward.4} parent=0 // loop_body
    %s22 = ssub.s32 %s17, 1
    %s23 = ssub.s32 %s17, 2
    %s30 = sadd.s32 1, %s25
    %p31 = scmp.ge.s32.totalorder %s30, 8
    %s32 = scalar_select %p31, 0, %s30
    %s33 = sadd.s32 1, %s24
    %s34 = scalar_select %p31, %s33, %s24
    %p35 = scmp.ge.s32.totalorder %s34, 2
    %s36 = scalar_select %p35, 0, %s34
    %s37 = ssub.s32 %s24, %s36
    %s38 = ssub.s32 %s25, %s32
    %s39 = sor.u32 %s37, %s38
    %p40 = scmp.eq.s32.totalorder %s39, 0
    %s42 = sadd.s32 %s41, 1
    %s43 = scalar_select %p40, %s41, %s42
    %p46 = pneg %p40
    %p47 = scmp.eq.s32.totalorder %s17, 15
    %p48 = por %p46, %p47
    %p49 = scmp.ne.s32.totalorder %s41, %s44
    %p50 = scmp.eq.s32.totalorder %s17, 0
    %p51 = por %p49, %p50
    %p52 = scmp.ne.s32.totalorder %s41, %s44
    %p53 = scmp.eq.s32.totalorder %s22, 15
    %p54 = por %p52, %p53
    %p55 = scmp.ne.s32.totalorder %s44, %s45
    %p56 = scmp.eq.s32.totalorder %s22, 0
    %p57 = por %p55, %p56
    %p58 = scmp.ne.s32.totalorder %s44, %s45
    %p59 = scmp.eq.s32.totalorder %s23, 15
    %p60 = por %p58, %p59
    %p62 = scmp.ne.s32.totalorder %s45, %s61
    %p63 = scmp.eq.s32.totalorder %s23, 0
    %p64 = por %p62, %p63
    %s65 = sadd.s32 %s25, 1
    %s66 = sadd.s32 %s32, 1
    %s67 = ssub.s32 %s24, %s36
    %s68 = ssub.s32 %s65, %s66
    %s69 = sor.u32 %s67, %s68
    %p70 = scmp.eq.s32.totalorder %s69, 0
    %s72 = sadd.s32 %s71, 1
    %s73 = scalar_select %p70, %s71, %s72
    %p76 = pneg %p70
    %p77 = scmp.eq.s32.totalorder %s17, 15
    %p78 = por %p76, %p77
    %p79 = scmp.ne.s32.totalorder %s71, %s74
    %p80 = scmp.eq.s32.totalorder %s17, 0
    %p81 = por %p79, %p80
    %p82 = scmp.ne.s32.totalorder %s71, %s74
    %p83 = scmp.eq.s32.totalorder %s22, 15
    %p84 = por %p82, %p83
    %p85 = scmp.ne.s32.totalorder %s74, %s75
    %p86 = scmp.eq.s32.totalorder %s22, 0
    %p87 = por %p85, %p86
    %p88 = scmp.ne.s32.totalorder %s74, %s75
    %p89 = scmp.eq.s32.totalorder %s23, 15
    %p90 = por %p88, %p89
    %p92 = scmp.ne.s32.totalorder %s75, %s91
    %p93 = scmp.eq.s32.totalorder %s23, 0
    %p94 = por %p92, %p93
    %s95 = sadd.s32 %s25, 2
    %s96 = sadd.s32 %s32, 2
    %s97 = ssub.s32 %s24, %s36
    %s98 = ssub.s32 %s95, %s96
    %s99 = sor.u32 %s97, %s98
    %p100 = scmp.eq.s32.totalorder %s99, 0
    %s102 = sadd.s32 %s101, 1
    %s103 = scalar_select %p100, %s101, %s102
    %p106 = pneg %p100
    %p107 = scmp.eq.s32.totalorder %s17, 15
    %p108 = por %p106, %p107
    %p109 = scmp.ne.s32.totalorder %s101, %s104
    %p110 = scmp.eq.s32.totalorder %s17, 0
    %p111 = por %p109, %p110
    %p112 = scmp.ne.s32.totalorder %s101, %s104
    %p113 = scmp.eq.s32.totalorder %s22, 15
    %p114 = por %p112, %p113
    %p115 = scmp.ne.s32.totalorder %s104, %s105
    %p116 = scmp.eq.s32.totalorder %s22, 0
    %p117 = por %p115, %p116
    %p118 = scmp.ne.s32.totalorder %s104, %s105
    %p119 = scmp.eq.s32.totalorder %s23, 15
    %p120 = por %p118, %p119
    %p122 = scmp.ne.s32.totalorder %s105, %s121
    %p123 = scmp.eq.s32.totalorder %s23, 0
    %p124 = por %p122, %p123
    %s126 = sadd.s32 %s125, 1
    %p129 = scmp.eq.s32.totalorder %s17, 15
    %p130 = scmp.ne.s32.totalorder %s125, %s127
    %p131 = scmp.eq.s32.totalorder %s17, 0
    %p132 = por %p130, %p131
    %p133 = scmp.ne.s32.totalorder %s125, %s127
    %p134 = scmp.eq.s32.totalorder %s22, 15
    %p135 = por %p133, %p134
    %p136 = scmp.ne.s32.totalorder %s127, %s128
    %p137 = scmp.eq.s32.totalorder %s22, 0
    %p138 = por %p136, %p137
    %p139 = scmp.ne.s32.totalorder %s127, %s128
    %p140 = scmp.eq.s32.totalorder %s23, 15
    %p141 = por %p139, %p140
    %p143 = scmp.ne.s32.totalorder %s128, %s142
    %p144 = scmp.eq.s32.totalorder %s23, 0
    %p145 = por %p143, %p144
    %s147 = sadd.s32 %s146, 1
    %p150 = scmp.eq.s32.totalorder %s17, 15
    %p151 = scmp.ne.s32.totalorder %s146, %s148
    %p152 = scmp.eq.s32.totalorder %s17, 0
    %p153 = por %p151, %p152
    %p154 = scmp.ne.s32.totalorder %s146, %s148
    %p155 = scmp.eq.s32.totalorder %s22, 15
    %p156 = por %p154, %p155
    %p157 = scmp.ne.s32.totalorder %s148, %s149
    %p158 = scmp.eq.s32.totalorder %s22, 0
    %p159 = por %p157, %p158
    %p160 = scmp.ne.s32.totalorder %s148, %s149
    %p161 = scmp.eq.s32.totalorder %s23, 15
    %p162 = por %p160, %p161
    %p164 = scmp.ne.s32.totalorder %s149, %s163
    %p165 = scmp.eq.s32.totalorder %s23, 0
    %p166 = por %p164, %p165
    %s168 = sadd.s32 %s167, 1
    %p171 = scmp.eq.s32.totalorder %s17, 15
    %p172 = scmp.ne.s32.totalorder %s167, %s169
    %p173 = scmp.eq.s32.totalorder %s17, 0
    %p174 = por %p172, %p173
    %p175 = scmp.ne.s32.totalorder %s167, %s169
    %p176 = scmp.eq.s32.totalorder %s22, 15
    %p177 = por %p175, %p176
    %p178 = scmp.ne.s32.totalorder %s169, %s170
    %p179 = scmp.eq.s32.totalorder %s22, 0
    %p180 = por %p178, %p179
    %p181 = scmp.ne.s32.totalorder %s169, %s170
    %p182 = scmp.eq.s32.totalorder %s23, 15
    %p183 = por %p181, %p182
    %p185 = scmp.ne.s32.totalorder %s170, %s184
    %p186 = scmp.eq.s32.totalorder %s23, 0
    %p187 = por %p185, %p186
    %s189 = sadd.s32 %s188, 1
    %p192 = scmp.eq.s32.totalorder %s17, 15
    %p193 = scmp.ne.s32.totalorder %s188, %s190
    %p194 = scmp.eq.s32.totalorder %s17, 0
    %p195 = por %p193, %p194
    %p196 = scmp.ne.s32.totalorder %s188, %s190
    %p197 = scmp.eq.s32.totalorder %s22, 15
    %p198 = por %p196, %p197
    %p199 = scmp.ne.s32.totalorder %s190, %s191
    %p200 = scmp.eq.s32.totalorder %s22, 0
    %p201 = por %p199, %p200
    %p202 = scmp.ne.s32.totalorder %s190, %s191
    %p203 = scmp.eq.s32.totalorder %s23, 15
    %p204 = por %p202, %p203
    %p206 = scmp.ne.s32.totalorder %s191, %s205
    %p207 = scmp.eq.s32.totalorder %s23, 0
    %p208 = por %p206, %p207
    %s210 = sadd.s32 %s209, 1
    %p213 = scmp.eq.s32.totalorder %s17, 15
    %p214 = scmp.ne.s32.totalorder %s209, %s211
    %p215 = scmp.eq.s32.totalorder %s17, 0
    %p216 = por %p214, %p215
    %p217 = scmp.ne.s32.totalorder %s209, %s211
    %p218 = scmp.eq.s32.totalorder %s22, 15
    %p219 = por %p217, %p218
    %p220 = scmp.ne.s32.totalorder %s211, %s212
    %p221 = scmp.eq.s32.totalorder %s22, 0
    %p222 = por %p220, %p221
    %p223 = scmp.ne.s32.totalorder %s211, %s212
    %p224 = scmp.eq.s32.totalorder %s23, 15
    %p225 = por %p223, %p224
    %p227 = scmp.ne.s32.totalorder %s212, %s226
    %p228 = scmp.eq.s32.totalorder %s23, 0
    %p229 = por %p227, %p228
    %s230 = ssub.s32 %s24, %s36
    %s231 = ssub.s32 %s25, %s32
    %s232 = sor.u32 %s230, %s231
    %p233 = scmp.eq.s32.totalorder %s232, 0
    %s235 = sadd.s32 %s234, 1
    %s236 = scalar_select %p233, %s234, %s235
    %p239 = pneg %p233
    %p240 = scmp.eq.s32.totalorder %s17, 15
    %p241 = por %p239, %p240
    %p242 = scmp.ne.s32.totalorder %s234, %s237
    %p243 = scmp.eq.s32.totalorder %s17, 0
    %p244 = por %p242, %p243
    %p245 = scmp.ne.s32.totalorder %s234, %s237
    %p246 = scmp.eq.s32.totalorder %s22, 15
    %p247 = por %p245, %p246
    %p248 = scmp.ne.s32.totalorder %s237, %s238
    %p249 = scmp.eq.s32.totalorder %s22, 0
    %p250 = por %p248, %p249
    %p251 = scmp.ne.s32.totalorder %s237, %s238
    %p252 = scmp.eq.s32.totalorder %s23, 15
    %p253 = por %p251, %p252
    %p255 = scmp.ne.s32.totalorder %s238, %s254
    %p256 = scmp.eq.s32.totalorder %s23, 0
    %p257 = por %p255, %p256
    %s258 = ssub.s32 %s24, %s36
    %s259 = ssub.s32 %s25, %s32
    %s260 = sor.u32 %s258, %s259
    %p261 = scmp.eq.s32.totalorder %s260, 0
    %s263 = sadd.s32 %s262, 1
    %s264 = scalar_select %p261, %s262, %s263
    %p267 = pneg %p261
    %p268 = scmp.eq.s32.totalorder %s17, 15
    %p269 = por %p267, %p268
    %p270 = scmp.ne.s32.totalorder %s262, %s265
    %p271 = scmp.eq.s32.totalorder %s17, 0
    %p272 = por %p270, %p271
    %p273 = scmp.ne.s32.totalorder %s262, %s265
    %p274 = scmp.eq.s32.totalorder %s22, 15
    %p275 = por %p273, %p274
    %p276 = scmp.ne.s32.totalorder %s265, %s266
    %p277 = scmp.eq.s32.totalorder %s22, 0
    %p278 = por %p276, %p277
    %p279 = scmp.ne.s32.totalorder %s265, %s266
    %p280 = scmp.eq.s32.totalorder %s23, 15
    %p281 = por %p279, %p280
    %p283 = scmp.ne.s32.totalorder %s266, %s282
    %p284 = scmp.eq.s32.totalorder %s23, 0
    %p285 = por %p283, %p284
    %s286 = ssub.s32 %s24, %s36
    %s287 = ssub.s32 %s25, %s32
    %s288 = sor.u32 %s286, %s287
    %p289 = scmp.eq.s32.totalorder %s288, 0
    %s291 = sadd.s32 %s290, 1
    %s292 = scalar_select %p289, %s290, %s291
    %p295 = pneg %p289
    %p296 = scmp.eq.s32.totalorder %s17, 15
    %p297 = por %p295, %p296
    %p298 = scmp.ne.s32.totalorder %s290, %s293
    %p299 = scmp.eq.s32.totalorder %s17, 0
    %p300 = por %p298, %p299
    %p301 = scmp.ne.s32.totalorder %s290, %s293
    %p302 = scmp.eq.s32.totalorder %s22, 15
    %p303 = por %p301, %p302
    %p304 = scmp.ne.s32.totalorder %s293, %s294
    %p305 = scmp.eq.s32.totalorder %s22, 0
    %p306 = por %p304, %p305
    %p307 = scmp.ne.s32.totalorder %s293, %s294
    %p308 = scmp.eq.s32.totalorder %s23, 15
    %p309 = por %p307, %p308
    %p311 = scmp.ne.s32.totalorder %s294, %s310
    %p312 = scmp.eq.s32.totalorder %s23, 0
    %p313 = por %p311, %p312
    %p314 = scmp.le.s32.totalorder 1, %s17
    %p315 = scmp.lt.s32.totalorder %s17, 17
    %p316 = pnand %p314, %p315
    %p317 = pneg %p316
    // Predicated region
    $region9: #{double_conv_forward.4} parent=5 // pred_check
      _
    $region10: #{double_conv_forward.4} parent=5 // pred_check_branch
      %319 = sbr.rel (%p316) target = $region12
    $region11: #{double_conv_forward.4} parent=5 // pred_region
      %s320 = ssub.s32 %s17, 1
      // Predicated region
      $region13: #{double_conv_forward.4} parent=11 // pred_check
        %p321 = pneg %p138
      $region14: #{double_conv_forward.4} parent=11 // pred_check_branch
        %323 = sbr.rel (%p321) target = $region16
      $region15: #{double_conv_forward.4} parent=11 // pred_region
        _
      $region16: #{double_conv_forward.4} parent=11 // pred_fallthru
        _
      // Predicated region
      $region17: #{double_conv_forward.4} parent=11 // pred_check
        %p324 = pneg %p159
      $region18: #{double_conv_forward.4} parent=11 // pred_check_branch
        %326 = sbr.rel (%p324) target = $region20
      $region19: #{double_conv_forward.4} parent=11 // pred_region
        _
      $region20: #{double_conv_forward.4} parent=11 // pred_fallthru
        _
      // Predicated region
      $region21: #{double_conv_forward.4} parent=11 // pred_check
        %p327 = pneg %p180
      $region22: #{double_conv_forward.4} parent=11 // pred_check_branch
        %329 = sbr.rel (%p327) target = $region24
      $region23: #{double_conv_forward.4} parent=11 // pred_region
        _
      $region24: #{double_conv_forward.4} parent=11 // pred_fallthru
        _
      // Predicated region
      $region25: #{double_conv_forward.4} parent=11 // pred_check
        %p330 = pneg %p201
      $region26: #{double_conv_forward.4} parent=11 // pred_check_branch
        %332 = sbr.rel (%p330) target = $region28
      $region27: #{double_conv_forward.4} parent=11 // pred_region
        _
      $region28: #{double_conv_forward.4} parent=11 // pred_fallthru
        _
      // Predicated region
      $region29: #{double_conv_forward.4} parent=11 // pred_check
        %p333 = pneg %p222
      $region30: #{double_conv_forward.4} parent=11 // pred_check_branch
        %335 = sbr.rel (%p333) target = $region32
      $region31: #{double_conv_forward.4} parent=11 // pred_region
        _
      $region32: #{double_conv_forward.4} parent=11 // pred_fallthru
        _
    $region12: #{double_conv_forward.4} parent=5 // pred_fallthru
      _
    %p336 = scmp.lt.s32.totalorder %s17, 16
    // Predicated region
    $region33: #{double_conv_forward.4} parent=5 // pred_check
      %p337 = pneg %p336
    $region34: #{double_conv_forward.4} parent=5 // pred_check_branch
      %339 = sbr.rel (%p337) target = $region36
    $region35: #{double_conv_forward.4} parent=5 // pred_region
      // Predicated region
      $region37: #{double_conv_forward.4} parent=35 // pred_check
        %p340 = pneg %p51
      $region38: #{double_conv_forward.4} parent=35 // pred_check_branch
        %342 = sbr.rel (%p340) target = $region40
      $region39: #{double_conv_forward.4} parent=35 // pred_region
        %p343 = scmp.lt.s32.totalorder %s24, 1
        %s344 = scalar_select %p343, %s24, 1
        %p345 = scmp.lt.s32.totalorder %s25, 9
        %s346 = scalar_select %p345, %s25, 9
        %s347 = smul.addr %s346, 20
        %s348 = smul.addr %s344, 200
        %s349 = sadd.s32 %s347, %s348
        %s350 = smul.addr %s349, 8
        %s351 = scalar_lea.vmem %s0, %s350
      $region40: #{double_conv_forward.4} parent=35 // pred_fallthru
        _
      // Predicated region
      $region41: #{double_conv_forward.4} parent=35 // pred_check
        %p352 = pneg %p81
      $region42: #{double_conv_forward.4} parent=35 // pred_check_branch
        %354 = sbr.rel (%p352) target = $region44
      $region43: #{double_conv_forward.4} parent=35 // pred_region
        %s355 = sadd.s32 %s25, 1
        %p356 = scmp.lt.s32.totalorder %s24, 1
        %s357 = scalar_select %p356, %s24, 1
        %p358 = scmp.lt.s32.totalorder %s355, 9
        %s359 = scalar_select %p358, %s355, 9
        %s360 = smul.addr %s359, 20
        %s361 = smul.addr %s357, 200
        %s362 = sadd.s32 %s360, %s361
        %s363 = smul.addr %s362, 8
        %s364 = scalar_lea.vmem %s1, %s363
        %s365 = sadd.s32 %s25, 1
      $region44: #{double_conv_forward.4} parent=35 // pred_fallthru
        _
      // Predicated region
      $region45: #{double_conv_forward.4} parent=35 // pred_check
        %p366 = pneg %p111
      $region46: #{double_conv_forward.4} parent=35 // pred_check_branch
        %368 = sbr.rel (%p366) target = $region48
      $region47: #{double_conv_forward.4} parent=35 // pred_region
        %s369 = sadd.s32 %s25, 2
        %p370 = scmp.lt.s32.totalorder %s24, 1
        %s371 = scalar_select %p370, %s24, 1
        %p372 = scmp.lt.s32.totalorder %s369, 9
        %s373 = scalar_select %p372, %s369, 9
        %s374 = smul.addr %s373, 20
        %s375 = smul.addr %s371, 200
        %s376 = sadd.s32 %s374, %s375
        %s377 = smul.addr %s376, 8
        %s378 = scalar_lea.vmem %s2, %s377
        %s379 = sadd.s32 %s25, 2
      $region48: #{double_conv_forward.4} parent=35 // pred_fallthru
        _
    $region36: #{double_conv_forward.4} parent=5 // pred_fallthru
      _
    %p380 = scmp.le.s32.totalorder 1, %s17
    %p381 = scmp.lt.s32.totalorder %s17, 17
    %p382 = pnand %p380, %p381
    %p383 = pneg %p382
    // Predicated region
    $region49: #{double_conv_forward.4} parent=5 // pred_check
      _
    $region50: #{double_conv_forward.4} parent=5 // pred_check_branch
      %385 = sbr.rel (%p382) target = $region52
    $region51: #{double_conv_forward.4} parent=5 // pred_region
      %s386 = ssub.s32 %s17, 1
      %p387 = scmp.lt.s32.totalorder %s26, 1
      %s388 = scalar_select %p387, %s26, 1
      %p389 = scmp.lt.s32.totalorder %s27, 9
      %s390 = scalar_select %p389, %s27, 9
      %s391 = smul.addr %s390, 20
      %s392 = smul.addr %s388, 200
      %s393 = sadd.s32 %s391, %s392
      %s394 = smul.addr %s393, 8
      %s395 = scalar_lea.vmem %s0, %s394
      %p396 = pneg %p57
      %p397 = pneg %p54
      %s398 = sadd.s32 %s27, 1
      %p399 = scmp.lt.s32.totalorder %s26, 1
      %s400 = scalar_select %p399, %s26, 1
      %p401 = scmp.lt.s32.totalorder %s398, 9
      %s402 = scalar_select %p401, %s398, 9
      %s403 = smul.addr %s402, 20
      %s404 = smul.addr %s400, 200
      %s405 = sadd.s32 %s403, %s404
      %s406 = smul.addr %s405, 8
      %s407 = scalar_lea.vmem %s1, %s406
      %p408 = pneg %p87
      %p409 = pneg %p84
      %s410 = sadd.s32 %s27, 2
      %p411 = scmp.lt.s32.totalorder %s26, 1
      %s412 = scalar_select %p411, %s26, 1
      %p413 = scmp.lt.s32.totalorder %s410, 9
      %s414 = scalar_select %p413, %s410, 9
      %s415 = smul.addr %s414, 20
      %s416 = smul.addr %s412, 200
      %s417 = sadd.s32 %s415, %s416
      %s418 = smul.addr %s417, 8
      %s419 = scalar_lea.vmem %s2, %s418
      %p420 = pneg %p117
      %p421 = pneg %p114
      %p422 = pneg %p138
      %p423 = pneg %p135
      %p424 = pneg %p159
      %p425 = pneg %p156
      %p426 = pneg %p180
      %p427 = pneg %p177
      %p428 = pneg %p201
      %p429 = pneg %p198
      %p430 = pneg %p222
      %p431 = pneg %p219
      %p432 = pneg %p250
      %p433 = pneg %p247
      %p434 = scmp.lt.s32.totalorder %s26, 1
      %s435 = scalar_select %p434, %s26, 1
      %p436 = scmp.lt.s32.totalorder %s27, 7
      %s437 = scalar_select %p436, %s27, 7
      %s438 = smul.addr %s437, 8
      %s439 = smul.addr %s435, 64
      %s440 = sadd.s32 %s438, %s439
      %s441 = smul.addr %s440, 8
      %s442 = scalar_lea.vmem %s8, %s441
      %p443 = pneg %p278
      %p444 = pneg %p275
      %p445 = scmp.lt.s32.totalorder %s26, 1
      %s446 = scalar_select %p445, %s26, 1
      %p447 = scmp.lt.s32.totalorder %s27, 7
      %s448 = scalar_select %p447, %s27, 7
      %s449 = smul.addr %s446, 8
      %s450 = sadd.s32 %s448, %s449
      %s451 = scalar_lea.vmem %s9, %s450
      %p452 = pneg %p306
      %p453 = pneg %p303
      %p454 = scmp.lt.s32.totalorder %s26, 1
      %s455 = scalar_select %p454, %s26, 1
      %p456 = scmp.lt.s32.totalorder %s27, 7
      %s457 = scalar_select %p456, %s27, 7
      %s458 = smul.addr %s455, 8
      %s459 = sadd.s32 %s457, %s458
      %s460 = scalar_lea.vmem %s10, %s459
      %p461 = scmp.lt.s32.totalorder %s26, 1
      %s462 = scalar_select %p461, %s26, 1
      %p463 = scmp.lt.s32.totalorder %s27, 9
      %s464 = scalar_select %p463, %s27, 9
      %s465 = smul.addr %s464, 20
      %s466 = smul.addr %s462, 200
      %s467 = sadd.s32 %s465, %s466
      %s468 = smul.addr %s467, 8
      %s469 = scalar_lea.vmem %s0, %s468
      %s470 = sadd.s32 %s27, 1
      %p471 = scmp.lt.s32.totalorder %s26, 1
      %s472 = scalar_select %p471, %s26, 1
      %p473 = scmp.lt.s32.totalorder %s470, 9
      %s474 = scalar_select %p473, %s470, 9
      %s475 = smul.addr %s474, 20
      %s476 = smul.addr %s472, 200
      %s477 = sadd.s32 %s475, %s476
      %s478 = smul.addr %s477, 8
      %s479 = scalar_lea.vmem %s1, %s478
      %s480 = sadd.s32 %s27, 1
      %s481 = sadd.s32 %s27, 2
      %p482 = scmp.lt.s32.totalorder %s26, 1
      %s483 = scalar_select %p482, %s26, 1
      %p484 = scmp.lt.s32.totalorder %s481, 9
      %s485 = scalar_select %p484, %s481, 9
      %s486 = smul.addr %s485, 20
      %s487 = smul.addr %s483, 200
      %s488 = sadd.s32 %s486, %s487
      %s489 = smul.addr %s488, 8
      %s490 = scalar_lea.vmem %s2, %s489
      %s491 = sadd.s32 %s27, 2
      %p492 = scmp.lt.s32.totalorder %s26, 1
      %s493 = scalar_select %p492, %s26, 1
      %p494 = scmp.lt.s32.totalorder %s27, 7
      %s495 = scalar_select %p494, %s27, 7
      %s496 = smul.addr %s495, 8
      %s497 = smul.addr %s493, 64
      %s498 = sadd.s32 %s496, %s497
      %s499 = smul.addr %s498, 8
      %s500 = scalar_lea.vmem %s8, %s499
      %p501 = scmp.lt.s32.totalorder %s26, 1
      %s502 = scalar_select %p501, %s26, 1
      %p503 = scmp.lt.s32.totalorder %s27, 7
      %s504 = scalar_select %p503, %s27, 7
      %s505 = smul.addr %s502, 8
      %s506 = sadd.s32 %s504, %s505
      %s507 = scalar_lea.vmem %s9, %s506
      %p508 = scmp.lt.s32.totalorder %s26, 1
      %s509 = scalar_select %p508, %s26, 1
      %p510 = scmp.lt.s32.totalorder %s27, 7
      %s511 = scalar_select %p510, %s27, 7
      %s512 = smul.addr %s509, 8
      %s513 = sadd.s32 %s511, %s512
      %s514 = scalar_lea.vmem %s10, %s513
      %v515 = vld [vmem:[%s7] sm:$0xff]
      %v516 = vld [vmem:[%s7 + $0x8] sm:$0x3]
      %v517 = vld [vmem:[%s7 + $0x10] sm:$0xff]
      %v518 = vld [vmem:[%s7 + $0x18] sm:$0x3]
      %v519 = vld [vmem:[%s7 + $0x20] sm:$0xff]
      %v520 = vld [vmem:[%s7 + $0x28] sm:$0x3]
      %v521 = vld [vmem:[%s7 + $0x30] sm:$0xff]
      %v522 = vld [vmem:[%s7 + $0x38] sm:$0x3]
      %v523 = vld [vmem:[%s7 + $0x40] sm:$0xff]
      %v524 = vld [vmem:[%s7 + $0x48] sm:$0x3]
      %v525 = vld [vmem:[%s7 + $0x50] sm:$0xff]
      %v526 = vld [vmem:[%s7 + $0x58] sm:$0x3]
      %v527 = vld [vmem:[%s7 + $0x60] sm:$0xff]
      %v528 = vld [vmem:[%s7 + $0x68] sm:$0x3]
      %v529 = vld [vmem:[%s7 + $0x70] sm:$0xff]
      %v530 = vld [vmem:[%s7 + $0x78] sm:$0x3]
      %v531 = vld [vmem:[%s7 + $0x80] sm:$0xff]
      %v532 = vld [vmem:[%s7 + $0x88] sm:$0x3]
      %v533 = vld [vmem:[%s7 + $0x90] sm:$0xff]
      %v534 = vld [vmem:[%s7 + $0x98] sm:$0x3]
      %v535 = vld [vmem:[%s5] sm:$0x1]
      %v536 = vld [vmem:[%s6] sm:$0x1]
      %v537 = vld [vmem:[%s469] sm:$0xff]
      %v538 = vld [vmem:[%s469 + $0x8] sm:$0x3]
      %v539 = vld [vmem:[%s469 + $0x10] sm:$0xff]
      %v540 = vld [vmem:[%s469 + $0x18] sm:$0x3]
      %v541 = vld [vmem:[%s469 + $0x20] sm:$0xff]
      %v542 = vld [vmem:[%s469 + $0x28] sm:$0x3]
      %v543 = vld [vmem:[%s469 + $0x30] sm:$0xff]
      %v544 = vld [vmem:[%s469 + $0x38] sm:$0x3]
      %v545 = vld [vmem:[%s469 + $0x40] sm:$0xff]
      %v546 = vld [vmem:[%s469 + $0x48] sm:$0x3]
      %v547 = vld [vmem:[%s469 + $0x50] sm:$0xff]
      %v548 = vld [vmem:[%s469 + $0x58] sm:$0x3]
      %v549 = vld [vmem:[%s469 + $0x60] sm:$0xff]
      %v550 = vld [vmem:[%s469 + $0x68] sm:$0x3]
      %v551 = vld [vmem:[%s469 + $0x70] sm:$0xff]
      %v552 = vld [vmem:[%s469 + $0x78] sm:$0x3]
      %v553 = vld [vmem:[%s469 + $0x80] sm:$0xff]
      %v554 = vld [vmem:[%s469 + $0x88] sm:$0x3]
      %v555 = vld [vmem:[%s469 + $0x90] sm:$0xff]
      %v556 = vld [vmem:[%s469 + $0x98] sm:$0x3]
      %p557 = scmp.ge.s32.totalorder %s27, 1
      %p558 = scmp.le.s32.totalorder %s27, 8
      %p559 = pnand %p557, %p558
      %p560 = pneg %p559
      %s561 = scalar_select %p560, 1, 0
      %s562 = scvt.s32.f32 %s561
      %v564 = vperm.slane %v535, 0
      %v566 = vmul.f32 %v537, %v564
      %v567 = vmul.f32 %v538, %v564
      %v568 = vmul.f32 %v539, %v564
      %v569 = vmul.f32 %v540, %v564
      %v570 = vmul.f32 %v541, %v564
      %v571 = vmul.f32 %v542, %v564
      %v572 = vmul.f32 %v543, %v564
      %v573 = vmul.f32 %v544, %v564
      %v574 = vmul.f32 %v545, %v564
      %v575 = vmul.f32 %v546, %v564
      %v576 = vmul.f32 %v547, %v564
      %v577 = vmul.f32 %v548, %v564
      %v578 = vmul.f32 %v549, %v564
      %v579 = vmul.f32 %v550, %v564
      %v580 = vmul.f32 %v551, %v564
      %v581 = vmul.f32 %v552, %v564
      %v582 = vmul.f32 %v553, %v564
      %v583 = vmul.f32 %v554, %v564
      %v584 = vmul.f32 %v555, %v564
      %v585 = vmul.f32 %v556, %v564
      %v587 = vperm.slane %v536, 0
      %v589 = vadd.f32 %v566, %v587
      %v590 = vadd.f32 %v567, %v587
      %v591 = vadd.f32 %v568, %v587
      %v592 = vadd.f32 %v569, %v587
      %v593 = vadd.f32 %v570, %v587
      %v594 = vadd.f32 %v571, %v587
      %v595 = vadd.f32 %v572, %v587
      %v596 = vadd.f32 %v573, %v587
      %v597 = vadd.f32 %v574, %v587
      %v598 = vadd.f32 %v575, %v587
      %v599 = vadd.f32 %v576, %v587
      %v600 = vadd.f32 %v577, %v587
      %v601 = vadd.f32 %v578, %v587
      %v602 = vadd.f32 %v579, %v587
      %v603 = vadd.f32 %v580, %v587
      %v604 = vadd.f32 %v581, %v587
      %v605 = vadd.f32 %v582, %v587
      %v606 = vadd.f32 %v583, %v587
      %v607 = vadd.f32 %v584, %v587
      %v608 = vadd.f32 %v585, %v587
      %v609 = vmax.f32 %v589, 0.0
      %v610 = vmax.f32 %v590, 0.0
      %v611 = vmax.f32 %v591, 0.0
      %v612 = vmax.f32 %v592, 0.0
      %v613 = vmax.f32 %v593, 0.0
      %v614 = vmax.f32 %v594, 0.0
      %v615 = vmax.f32 %v595, 0.0
      %v616 = vmax.f32 %v596, 0.0
      %v617 = vmax.f32 %v597, 0.0
      %v618 = vmax.f32 %v598, 0.0
      %v619 = vmax.f32 %v599, 0.0
      %v620 = vmax.f32 %v600, 0.0
      %v621 = vmax.f32 %v601, 0.0
      %v622 = vmax.f32 %v602, 0.0
      %v623 = vmax.f32 %v603, 0.0
      %v624 = vmax.f32 %v604, 0.0
      %v625 = vmax.f32 %v605, 0.0
      %v626 = vmax.f32 %v606, 0.0
      %v627 = vmax.f32 %v607, 0.0
      %v628 = vmax.f32 %v608, 0.0
      %v629 = vmul.f32 %v609, %v515
      %v630 = vmul.f32 %v610, %v516
      %v631 = vmul.f32 %v611, %v517
      %v632 = vmul.f32 %v612, %v518
      %v633 = vmul.f32 %v613, %v519
      %v634 = vmul.f32 %v614, %v520
      %v635 = vmul.f32 %v615, %v521
      %v636 = vmul.f32 %v616, %v522
      %v637 = vmul.f32 %v617, %v523
      %v638 = vmul.f32 %v618, %v524
      %v639 = vmul.f32 %v619, %v525
      %v640 = vmul.f32 %v620, %v526
      %v641 = vmul.f32 %v621, %v527
      %v642 = vmul.f32 %v622, %v528
      %v643 = vmul.f32 %v623, %v529
      %v644 = vmul.f32 %v624, %v530
      %v645 = vmul.f32 %v625, %v531
      %v646 = vmul.f32 %v626, %v532
      %v647 = vmul.f32 %v627, %v533
      %v648 = vmul.f32 %v628, %v534
      %v649 = vstv %s562
      %v650 = vmul.f32 %v629, %v649
      %v651 = vmul.f32 %v630, %v649
      %v652 = vmul.f32 %v631, %v649
      %v653 = vmul.f32 %v632, %v649
      %v654 = vmul.f32 %v633, %v649
      %v655 = vmul.f32 %v634, %v649
      %v656 = vmul.f32 %v635, %v649
      %v657 = vmul.f32 %v636, %v649
      %v658 = vmul.f32 %v637, %v649
      %v659 = vmul.f32 %v638, %v649
      %v660 = vmul.f32 %v639, %v649
      %v661 = vmul.f32 %v640, %v649
      %v662 = vmul.f32 %v641, %v649
      %v663 = vmul.f32 %v642, %v649
      %v664 = vmul.f32 %v643, %v649
      %v665 = vmul.f32 %v644, %v649
      %v666 = vmul.f32 %v645, %v649
      %v667 = vmul.f32 %v646, %v649
      %v668 = vmul.f32 %v647, %v649
      %v669 = vmul.f32 %v648, %v649
      %v670 = vld [vmem:[%s479] sm:$0xff]
      %v671 = vld [vmem:[%s479 + $0x8] sm:$0x3]
      %v672 = vld [vmem:[%s479 + $0x10] sm:$0xff]
      %v673 = vld [vmem:[%s479 + $0x18] sm:$0x3]
      %v674 = vld [vmem:[%s479 + $0x20] sm:$0xff]
      %v675 = vld [vmem:[%s479 + $0x28] sm:$0x3]
      %v676 = vld [vmem:[%s479 + $0x30] sm:$0xff]
      %v677 = vld [vmem:[%s479 + $0x38] sm:$0x3]
      %v678 = vld [vmem:[%s479 + $0x40] sm:$0xff]
      %v679 = vld [vmem:[%s479 + $0x48] sm:$0x3]
      %v680 = vld [vmem:[%s479 + $0x50] sm:$0xff]
      %v681 = vld [vmem:[%s479 + $0x58] sm:$0x3]
      %v682 = vld [vmem:[%s479 + $0x60] sm:$0xff]
      %v683 = vld [vmem:[%s479 + $0x68] sm:$0x3]
      %v684 = vld [vmem:[%s479 + $0x70] sm:$0xff]
      %v685 = vld [vmem:[%s479 + $0x78] sm:$0x3]
      %v686 = vld [vmem:[%s479 + $0x80] sm:$0xff]
      %v687 = vld [vmem:[%s479 + $0x88] sm:$0x3]
      %v688 = vld [vmem:[%s479 + $0x90] sm:$0xff]
      %v689 = vld [vmem:[%s479 + $0x98] sm:$0x3]
      %s690 = sadd.s32 %s27, 1
      %p691 = scmp.ge.s32.totalorder %s690, 1
      %p692 = scmp.le.s32.totalorder %s690, 8
      %p693 = pnand %p691, %p692
      %p694 = pneg %p693
      %s695 = scalar_select %p694, 1, 0
      %s696 = scvt.s32.f32 %s695
      %v697 = vmul.f32 %v670, %v564
      %v698 = vmul.f32 %v671, %v564
      %v699 = vmul.f32 %v672, %v564
      %v700 = vmul.f32 %v673, %v564
      %v701 = vmul.f32 %v674, %v564
      %v702 = vmul.f32 %v675, %v564
      %v703 = vmul.f32 %v676, %v564
      %v704 = vmul.f32 %v677, %v564
      %v705 = vmul.f32 %v678, %v564
      %v706 = vmul.f32 %v679, %v564
      %v707 = vmul.f32 %v680, %v564
      %v708 = vmul.f32 %v681, %v564
      %v709 = vmul.f32 %v682, %v564
      %v710 = vmul.f32 %v683, %v564
      %v711 = vmul.f32 %v684, %v564
      %v712 = vmul.f32 %v685, %v564
      %v713 = vmul.f32 %v686, %v564
      %v714 = vmul.f32 %v687, %v564
      %v715 = vmul.f32 %v688, %v564
      %v716 = vmul.f32 %v689, %v564
      %v717 = vadd.f32 %v697, %v587
      %v718 = vadd.f32 %v698, %v587
      %v719 = vadd.f32 %v699, %v587
      %v720 = vadd.f32 %v700, %v587
      %v721 = vadd.f32 %v701, %v587
      %v722 = vadd.f32 %v702, %v587
      %v723 = vadd.f32 %v703, %v587
      %v724 = vadd.f32 %v704, %v587
      %v725 = vadd.f32 %v705, %v587
      %v726 = vadd.f32 %v706, %v587
      %v727 = vadd.f32 %v707, %v587
      %v728 = vadd.f32 %v708, %v587
      %v729 = vadd.f32 %v709, %v587
      %v730 = vadd.f32 %v710, %v587
      %v731 = vadd.f32 %v711, %v587
      %v732 = vadd.f32 %v712, %v587
      %v733 = vadd.f32 %v713, %v587
      %v734 = vadd.f32 %v714, %v587
      %v735 = vadd.f32 %v715, %v587
      %v736 = vadd.f32 %v716, %v587
      %v737 = vmax.f32 %v717, 0.0
      %v738 = vmax.f32 %v718, 0.0
      %v739 = vmax.f32 %v719, 0.0
      %v740 = vmax.f32 %v720, 0.0
      %v741 = vmax.f32 %v721, 0.0
      %v742 = vmax.f32 %v722, 0.0
      %v743 = vmax.f32 %v723, 0.0
      %v744 = vmax.f32 %v724, 0.0
      %v745 = vmax.f32 %v725, 0.0
      %v746 = vmax.f32 %v726, 0.0
      %v747 = vmax.f32 %v727, 0.0
      %v748 = vmax.f32 %v728, 0.0
      %v749 = vmax.f32 %v729, 0.0
      %v750 = vmax.f32 %v730, 0.0
      %v751 = vmax.f32 %v731, 0.0
      %v752 = vmax.f32 %v732, 0.0
      %v753 = vmax.f32 %v733, 0.0
      %v754 = vmax.f32 %v734, 0.0
      %v755 = vmax.f32 %v735, 0.0
      %v756 = vmax.f32 %v736, 0.0
      %v757 = vmul.f32 %v737, %v515
      %v758 = vmul.f32 %v738, %v516
      %v759 = vmul.f32 %v739, %v517
      %v760 = vmul.f32 %v740, %v518
      %v761 = vmul.f32 %v741, %v519
      %v762 = vmul.f32 %v742, %v520
      %v763 = vmul.f32 %v743, %v521
      %v764 = vmul.f32 %v744, %v522
      %v765 = vmul.f32 %v745, %v523
      %v766 = vmul.f32 %v746, %v524
      %v767 = vmul.f32 %v747, %v525
      %v768 = vmul.f32 %v748, %v526
      %v769 = vmul.f32 %v749, %v527
      %v770 = vmul.f32 %v750, %v528
      %v771 = vmul.f32 %v751, %v529
      %v772 = vmul.f32 %v752, %v530
      %v773 = vmul.f32 %v753, %v531
      %v774 = vmul.f32 %v754, %v532
      %v775 = vmul.f32 %v755, %v533
      %v776 = vmul.f32 %v756, %v534
      %v777 = vstv %s696
      %v778 = vmul.f32 %v757, %v777
      %v779 = vmul.f32 %v758, %v777
      %v780 = vmul.f32 %v759, %v777
      %v781 = vmul.f32 %v760, %v777
      %v782 = vmul.f32 %v761, %v777
      %v783 = vmul.f32 %v762, %v777
      %v784 = vmul.f32 %v763, %v777
      %v785 = vmul.f32 %v764, %v777
      %v786 = vmul.f32 %v765, %v777
      %v787 = vmul.f32 %v766, %v777
      %v788 = vmul.f32 %v767, %v777
      %v789 = vmul.f32 %v768, %v777
      %v790 = vmul.f32 %v769, %v777
      %v791 = vmul.f32 %v770, %v777
      %v792 = vmul.f32 %v771, %v777
      %v793 = vmul.f32 %v772, %v777
      %v794 = vmul.f32 %v773, %v777
      %v795 = vmul.f32 %v774, %v777
      %v796 = vmul.f32 %v775, %v777
      %v797 = vmul.f32 %v776, %v777
      %v798 = vld [vmem:[%s490] sm:$0xff]
      %v799 = vld [vmem:[%s490 + $0x8] sm:$0x3]
      %v800 = vld [vmem:[%s490 + $0x10] sm:$0xff]
      %v801 = vld [vmem:[%s490 + $0x18] sm:$0x3]
      %v802 = vld [vmem:[%s490 + $0x20] sm:$0xff]
      %v803 = vld [vmem:[%s490 + $0x28] sm:$0x3]
      %v804 = vld [vmem:[%s490 + $0x30] sm:$0xff]
      %v805 = vld [vmem:[%s490 + $0x38] sm:$0x3]
      %v806 = vld [vmem:[%s490 + $0x40] sm:$0xff]
      %v807 = vld [vmem:[%s490 + $0x48] sm:$0x3]
      %v808 = vld [vmem:[%s490 + $0x50] sm:$0xff]
      %v809 = vld [vmem:[%s490 + $0x58] sm:$0x3]
      %v810 = vld [vmem:[%s490 + $0x60] sm:$0xff]
      %v811 = vld [vmem:[%s490 + $0x68] sm:$0x3]
      %v812 = vld [vmem:[%s490 + $0x70] sm:$0xff]
      %v813 = vld [vmem:[%s490 + $0x78] sm:$0x3]
      %v814 = vld [vmem:[%s490 + $0x80] sm:$0xff]
      %v815 = vld [vmem:[%s490 + $0x88] sm:$0x3]
      %v816 = vld [vmem:[%s490 + $0x90] sm:$0xff]
      %v817 = vld [vmem:[%s490 + $0x98] sm:$0x3]
      %s818 = sadd.s32 %s27, 2
      %p819 = scmp.ge.s32.totalorder %s818, 1
      %p820 = scmp.le.s32.totalorder %s818, 8
      %p821 = pnand %p819, %p820
      %p822 = pneg %p821
      %s823 = scalar_select %p822, 1, 0
      %s824 = scvt.s32.f32 %s823
      %v825 = vmul.f32 %v798, %v564
      %v826 = vmul.f32 %v799, %v564
      %v827 = vmul.f32 %v800, %v564
      %v828 = vmul.f32 %v801, %v564
      %v829 = vmul.f32 %v802, %v564
      %v830 = vmul.f32 %v803, %v564
      %v831 = vmul.f32 %v804, %v564
      %v832 = vmul.f32 %v805, %v564
      %v833 = vmul.f32 %v806, %v564
      %v834 = vmul.f32 %v807, %v564
      %v835 = vmul.f32 %v808, %v564
      %v836 = vmul.f32 %v809, %v564
      %v837 = vmul.f32 %v810, %v564
      %v838 = vmul.f32 %v811, %v564
      %v839 = vmul.f32 %v812, %v564
      %v840 = vmul.f32 %v813, %v564
      %v841 = vmul.f32 %v814, %v564
      %v842 = vmul.f32 %v815, %v564
      %v843 = vmul.f32 %v816, %v564
      %v844 = vmul.f32 %v817, %v564
      %v845 = vadd.f32 %v825, %v587
      %v846 = vadd.f32 %v826, %v587
      %v847 = vadd.f32 %v827, %v587
      %v848 = vadd.f32 %v828, %v587
      %v849 = vadd.f32 %v829, %v587
      %v850 = vadd.f32 %v830, %v587
      %v851 = vadd.f32 %v831, %v587
      %v852 = vadd.f32 %v832, %v587
      %v853 = vadd.f32 %v833, %v587
      %v854 = vadd.f32 %v834, %v587
      %v855 = vadd.f32 %v835, %v587
      %v856 = vadd.f32 %v836, %v587
      %v857 = vadd.f32 %v837, %v587
      %v858 = vadd.f32 %v838, %v587
      %v859 = vadd.f32 %v839, %v587
      %v860 = vadd.f32 %v840, %v587
      %v861 = vadd.f32 %v841, %v587
      %v862 = vadd.f32 %v842, %v587
      %v863 = vadd.f32 %v843, %v587
      %v864 = vadd.f32 %v844, %v587
      %v865 = vmax.f32 %v845, 0.0
      %v866 = vmax.f32 %v846, 0.0
      %v867 = vmax.f32 %v847, 0.0
      %v868 = vmax.f32 %v848, 0.0
      %v869 = vmax.f32 %v849, 0.0
      %v870 = vmax.f32 %v850, 0.0
      %v871 = vmax.f32 %v851, 0.0
      %v872 = vmax.f32 %v852, 0.0
      %v873 = vmax.f32 %v853, 0.0
      %v874 = vmax.f32 %v854, 0.0
      %v875 = vmax.f32 %v855, 0.0
      %v876 = vmax.f32 %v856, 0.0
      %v877 = vmax.f32 %v857, 0.0
      %v878 = vmax.f32 %v858, 0.0
      %v879 = vmax.f32 %v859, 0.0
      %v880 = vmax.f32 %v860, 0.0
      %v881 = vmax.f32 %v861, 0.0
      %v882 = vmax.f32 %v862, 0.0
      %v883 = vmax.f32 %v863, 0.0
      %v884 = vmax.f32 %v864, 0.0
      %v885 = vmul.f32 %v865, %v515
      %v886 = vmul.f32 %v866, %v516
      %v887 = vmul.f32 %v867, %v517
      %v888 = vmul.f32 %v868, %v518
      %v889 = vmul.f32 %v869, %v519
      %v890 = vmul.f32 %v870, %v520
      %v891 = vmul.f32 %v871, %v521
      %v892 = vmul.f32 %v872, %v522
      %v893 = vmul.f32 %v873, %v523
      %v894 = vmul.f32 %v874, %v524
      %v895 = vmul.f32 %v875, %v525
      %v896 = vmul.f32 %v876, %v526
      %v897 = vmul.f32 %v877, %v527
      %v898 = vmul.f32 %v878, %v528
      %v899 = vmul.f32 %v879, %v529
      %v900 = vmul.f32 %v880, %v530
      %v901 = vmul.f32 %v881, %v531
      %v902 = vmul.f32 %v882, %v532
      %v903 = vmul.f32 %v883, %v533
      %v904 = vmul.f32 %v884, %v534
      %v905 = vstv %s824
      %v906 = vmul.f32 %v885, %v905
      %v907 = vmul.f32 %v886, %v905
      %v908 = vmul.f32 %v887, %v905
      %v909 = vmul.f32 %v888, %v905
      %v910 = vmul.f32 %v889, %v905
      %v911 = vmul.f32 %v890, %v905
      %v912 = vmul.f32 %v891, %v905
      %v913 = vmul.f32 %v892, %v905
      %v914 = vmul.f32 %v893, %v905
      %v915 = vmul.f32 %v894, %v905
      %v916 = vmul.f32 %v895, %v905
      %v917 = vmul.f32 %v896, %v905
      %v918 = vmul.f32 %v897, %v905
      %v919 = vmul.f32 %v898, %v905
      %v920 = vmul.f32 %v899, %v905
      %v921 = vmul.f32 %v900, %v905
      %v922 = vmul.f32 %v901, %v905
      %v923 = vmul.f32 %v902, %v905
      %v924 = vmul.f32 %v903, %v905
      %v925 = vmul.f32 %v904, %v905
      %vm942 = vcmask 1046528
      %v943 = vrot.slane %v650, 1
      %v944 = vrot.slane %v651, 1
      %v945 = vsel %vm942, %v943, %v944
      %v946 = vrot.slane %v652, 1
      %v947 = vrot.slane %v653, 1
      %v948 = vsel %vm942, %v946, %v947
      %v949 = vrot.slane %v654, 1
      %v950 = vrot.slane %v655, 1
      %v951 = vsel %vm942, %v949, %v950
      %v952 = vrot.slane %v656, 1
      %v953 = vrot.slane %v657, 1
      %v954 = vsel %vm942, %v952, %v953
      %v955 = vrot.slane %v658, 1
      %v956 = vrot.slane %v659, 1
      %v957 = vsel %vm942, %v955, %v956
      %v958 = vrot.slane %v660, 1
      %v959 = vrot.slane %v661, 1
      %v960 = vsel %vm942, %v958, %v959
      %v961 = vrot.slane %v662, 1
      %v962 = vrot.slane %v663, 1
      %v963 = vsel %vm942, %v961, %v962
      %v964 = vrot.slane %v664, 1
      %v965 = vrot.slane %v665, 1
      %v966 = vsel %vm942, %v964, %v965
      %vm975 = vcmask 1045504
      %v976 = vrot.slane %v650, 2
      %v977 = vrot.slane %v651, 2
      %v978 = vsel %vm975, %v976, %v977
      %v979 = vrot.slane %v652, 2
      %v980 = vrot.slane %v653, 2
      %v981 = vsel %vm975, %v979, %v980
      %v982 = vrot.slane %v654, 2
      %v983 = vrot.slane %v655, 2
      %v984 = vsel %vm975, %v982, %v983
      %v985 = vrot.slane %v656, 2
      %v986 = vrot.slane %v657, 2
      %v987 = vsel %vm975, %v985, %v986
      %v988 = vrot.slane %v658, 2
      %v989 = vrot.slane %v659, 2
      %v990 = vsel %vm975, %v988, %v989
      %v991 = vrot.slane %v660, 2
      %v992 = vrot.slane %v661, 2
      %v993 = vsel %vm975, %v991, %v992
      %v994 = vrot.slane %v662, 2
      %v995 = vrot.slane %v663, 2
      %v996 = vsel %vm975, %v994, %v995
      %v997 = vrot.slane %v664, 2
      %v998 = vrot.slane %v665, 2
      %v999 = vsel %vm975, %v997, %v998
      %v1010 = vrot.slane %v666, 1
      %v1011 = vrot.slane %v667, 1
      %v1012 = vsel %vm942, %v1010, %v1011
      %v1014 = vrot.slane %v666, 2
      %v1015 = vrot.slane %v667, 2
      %v1016 = vsel %vm975, %v1014, %v1015
      %v1020 = vrot.slane %v668, 1
      %v1021 = vrot.slane %v669, 1
      %v1022 = vsel %vm942, %v1020, %v1021
      %v1024 = vrot.slane %v668, 2
      %v1025 = vrot.slane %v669, 2
      %v1026 = vsel %vm975, %v1024, %v1025
      %v1044 = vrot.slane %v778, 1
      %v1045 = vrot.slane %v779, 1
      %v1046 = vsel %vm942, %v1044, %v1045
      %v1047 = vrot.slane %v780, 1
      %v1048 = vrot.slane %v781, 1
      %v1049 = vsel %vm942, %v1047, %v1048
      %v1050 = vrot.slane %v782, 1
      %v1051 = vrot.slane %v783, 1
      %v1052 = vsel %vm942, %v1050, %v1051
      %v1053 = vrot.slane %v784, 1
      %v1054 = vrot.slane %v785, 1
      %v1055 = vsel %vm942, %v1053, %v1054
      %v1056 = vrot.slane %v786, 1
      %v1057 = vrot.slane %v787, 1
      %v1058 = vsel %vm942, %v1056, %v1057
      %v1059 = vrot.slane %v788, 1
      %v1060 = vrot.slane %v789, 1
      %v1061 = vsel %vm942, %v1059, %v1060
      %v1062 = vrot.slane %v790, 1
      %v1063 = vrot.slane %v791, 1
      %v1064 = vsel %vm942, %v1062, %v1063
      %v1065 = vrot.slane %v792, 1
      %v1066 = vrot.slane %v793, 1
      %v1067 = vsel %vm942, %v1065, %v1066
      %v1076 = vrot.slane %v778, 2
      %v1077 = vrot.slane %v779, 2
      %v1078 = vsel %vm975, %v1076, %v1077
      %v1079 = vrot.slane %v780, 2
      %v1080 = vrot.slane %v781, 2
      %v1081 = vsel %vm975, %v1079, %v1080
      %v1082 = vrot.slane %v782, 2
      %v1083 = vrot.slane %v783, 2
      %v1084 = vsel %vm975, %v1082, %v1083
      %v1085 = vrot.slane %v784, 2
      %v1086 = vrot.slane %v785, 2
      %v1087 = vsel %vm975, %v1085, %v1086
      %v1088 = vrot.slane %v786, 2
      %v1089 = vrot.slane %v787, 2
      %v1090 = vsel %vm975, %v1088, %v1089
      %v1091 = vrot.slane %v788, 2
      %v1092 = vrot.slane %v789, 2
      %v1093 = vsel %vm975, %v1091, %v1092
      %v1094 = vrot.slane %v790, 2
      %v1095 = vrot.slane %v791, 2
      %v1096 = vsel %vm975, %v1094, %v1095
      %v1097 = vrot.slane %v792, 2
      %v1098 = vrot.slane %v793, 2
      %v1099 = vsel %vm975, %v1097, %v1098
      %v1110 = vrot.slane %v794, 1
      %v1111 = vrot.slane %v795, 1
      %v1112 = vsel %vm942, %v1110, %v1111
      %v1114 = vrot.slane %v794, 2
      %v1115 = vrot.slane %v795, 2
      %v1116 = vsel %vm975, %v1114, %v1115
      %v1120 = vrot.slane %v796, 1
      %v1121 = vrot.slane %v797, 1
      %v1122 = vsel %vm942, %v1120, %v1121
      %v1124 = vrot.slane %v796, 2
      %v1125 = vrot.slane %v797, 2
      %v1126 = vsel %vm975, %v1124, %v1125
      %v1144 = vrot.slane %v906, 1
      %v1145 = vrot.slane %v907, 1
      %v1146 = vsel %vm942, %v1144, %v1145
      %v1147 = vrot.slane %v908, 1
      %v1148 = vrot.slane %v909, 1
      %v1149 = vsel %vm942, %v1147, %v1148
      %v1150 = vrot.slane %v910, 1
      %v1151 = vrot.slane %v911, 1
      %v1152 = vsel %vm942, %v1150, %v1151
      %v1153 = vrot.slane %v912, 1
      %v1154 = vrot.slane %v913, 1
      %v1155 = vsel %vm942, %v1153, %v1154
      %v1156 = vrot.slane %v914, 1
      %v1157 = vrot.slane %v915, 1
      %v1158 = vsel %vm942, %v1156, %v1157
      %v1159 = vrot.slane %v916, 1
      %v1160 = vrot.slane %v917, 1
      %v1161 = vsel %vm942, %v1159, %v1160
      %v1162 = vrot.slane %v918, 1
      %v1163 = vrot.slane %v919, 1
      %v1164 = vsel %vm942, %v1162, %v1163
      %v1165 = vrot.slane %v920, 1
      %v1166 = vrot.slane %v921, 1
      %v1167 = vsel %vm942, %v1165, %v1166
      %v1176 = vrot.slane %v906, 2
      %v1177 = vrot.slane %v907, 2
      %v1178 = vsel %vm975, %v1176, %v1177
      %v1179 = vrot.slane %v908, 2
      %v1180 = vrot.slane %v909, 2
      %v1181 = vsel %vm975, %v1179, %v1180
      %v1182 = vrot.slane %v910, 2
      %v1183 = vrot.slane %v911, 2
      %v1184 = vsel %vm975, %v1182, %v1183
      %v1185 = vrot.slane %v912, 2
      %v1186 = vrot.slane %v913, 2
      %v1187 = vsel %vm975, %v1185, %v1186
      %v1188 = vrot.slane %v914, 2
      %v1189 = vrot.slane %v915, 2
      %v1190 = vsel %vm975, %v1188, %v1189
      %v1191 = vrot.slane %v916, 2
      %v1192 = vrot.slane %v917, 2
      %v1193 = vsel %vm975, %v1191, %v1192
      %v1194 = vrot.slane %v918, 2
      %v1195 = vrot.slane %v919, 2
      %v1196 = vsel %vm975, %v1194, %v1195
      %v1197 = vrot.slane %v920, 2
      %v1198 = vrot.slane %v921, 2
      %v1199 = vsel %vm975, %v1197, %v1198
      %v1210 = vrot.slane %v922, 1
      %v1211 = vrot.slane %v923, 1
      %v1212 = vsel %vm942, %v1210, %v1211
      %v1214 = vrot.slane %v922, 2
      %v1215 = vrot.slane %v923, 2
      %v1216 = vsel %vm975, %v1214, %v1215
      %v1220 = vrot.slane %v924, 1
      %v1221 = vrot.slane %v925, 1
      %v1222 = vsel %vm942, %v1220, %v1221
      %v1224 = vrot.slane %v924, 2
      %v1225 = vrot.slane %v925, 2
      %v1226 = vsel %vm975, %v1224, %v1225
      %v1228 = vpack.c.bf16 %v652, %v650
      %v1229 = vpack.c.bf16 %v948, %v945
      %v1230 = vpack.c.bf16 %v981, %v978
      %v1231 = vpack.c.bf16 %v654, %v652
      %v1232 = vpack.c.bf16 %v951, %v948
      %v1233 = vpack.c.bf16 %v984, %v981
      %v1234 = vpack.c.bf16 %v656, %v654
      %v1235 = vpack.c.bf16 %v954, %v951
      %v1236 = vpack.c.bf16 %v987, %v984
      %v1237 = vpack.c.bf16 %v780, %v778
      %v1238 = vpack.c.bf16 %v1049, %v1046
      %v1239 = vpack.c.bf16 %v1081, %v1078
      %v1240 = vpack.c.bf16 %v782, %v780
      %v1241 = vpack.c.bf16 %v1052, %v1049
      %v1242 = vpack.c.bf16 %v1084, %v1081
      %v1243 = vpack.c.bf16 %v784, %v782
      %v1244 = vpack.c.bf16 %v1055, %v1052
      %v1245 = vpack.c.bf16 %v1087, %v1084
      %v1246 = vpack.c.bf16 %v908, %v906
      %v1247 = vpack.c.bf16 %v1149, %v1146
      %v1248 = vpack.c.bf16 %v1181, %v1178
      %v1249 = vpack.c.bf16 %v910, %v908
      %v1250 = vpack.c.bf16 %v1152, %v1149
      %v1251 = vpack.c.bf16 %v1184, %v1181
      %v1252 = vpack.c.bf16 %v912, %v910
      %v1253 = vpack.c.bf16 %v1155, %v1152
      %v1254 = vpack.c.bf16 %v1187, %v1184
      %v1255 = vpack.c.bf16 %v658, %v656
      %v1256 = vpack.c.bf16 %v957, %v954
      %v1257 = vpack.c.bf16 %v990, %v987
      %v1258 = vpack.c.bf16 %v660, %v658
      %v1259 = vpack.c.bf16 %v960, %v957
      %v1260 = vpack.c.bf16 %v993, %v990
      %v1261 = vpack.c.bf16 %v786, %v784
      %v1262 = vpack.c.bf16 %v1058, %v1055
      %v1263 = vpack.c.bf16 %v1090, %v1087
      %v1264 = vpack.c.bf16 %v788, %v786
      %v1265 = vpack.c.bf16 %v1061, %v1058
      %v1266 = vpack.c.bf16 %v1093, %v1090
      %v1267 = vpack.c.bf16 %v914, %v912
      %v1268 = vpack.c.bf16 %v1158, %v1155
      %v1269 = vpack.c.bf16 %v1190, %v1187
      %v1270 = vpack.c.bf16 %v916, %v914
      %v1271 = vpack.c.bf16 %v1161, %v1158
      %v1272 = vpack.c.bf16 %v1193, %v1190
      %v1273 = vpack.c.bf16 %v662, %v660
      %v1274 = vpack.c.bf16 %v963, %v960
      %v1275 = vpack.c.bf16 %v996, %v993
      %v1276 = vpack.c.bf16 %v664, %v662
      %v1277 = vpack.c.bf16 %v966, %v963
      %v1278 = vpack.c.bf16 %v999, %v996
      %v1279 = vpack.c.bf16 %v790, %v788
      %v1280 = vpack.c.bf16 %v1064, %v1061
      %v1281 = vpack.c.bf16 %v1096, %v1093
      %v1282 = vpack.c.bf16 %v792, %v790
      %v1283 = vpack.c.bf16 %v1067, %v1064
      %v1284 = vpack.c.bf16 %v1099, %v1096
      %v1285 = vpack.c.bf16 %v918, %v916
      %v1286 = vpack.c.bf16 %v1164, %v1161
      %v1287 = vpack.c.bf16 %v1196, %v1193
      %v1288 = vpack.c.bf16 %v920, %v918
      %v1289 = vpack.c.bf16 %v1167, %v1164
      %v1290 = vpack.c.bf16 %v1199, %v1196
      %v1291 = vpack.c.bf16 %v666, %v664
      %v1292 = vpack.c.bf16 %v1012, %v966
      %v1293 = vpack.c.bf16 %v1016, %v999
      %v1294 = vpack.c.bf16 %v668, %v666
      %v1295 = vpack.c.bf16 %v1022, %v1012
      %v1296 = vpack.c.bf16 %v1026, %v1016
      %v1297 = vpack.c.bf16 %v794, %v792
      %v1298 = vpack.c.bf16 %v1112, %v1067
      %v1299 = vpack.c.bf16 %v1116, %v1099
      %v1300 = vpack.c.bf16 %v796, %v794
      %v1301 = vpack.c.bf16 %v1122, %v1112
      %v1302 = vpack.c.bf16 %v1126, %v1116
      %v1303 = vpack.c.bf16 %v922, %v920
      %v1304 = vpack.c.bf16 %v1212, %v1167
      %v1305 = vpack.c.bf16 %v1216, %v1199
      %v1306 = vpack.c.bf16 %v924, %v922
      %v1307 = vpack.c.bf16 %v1222, %v1212
      %v1308 = vpack.c.bf16 %v1226, %v1216
      %v1309 = vld [vmem:[%s3] sm:$0xf]
      %v1310 = vld [vmem:[%s3 + $0x4] sm:$0xf]
      %v1311 = vld [vmem:[%s3 + $0x8] sm:$0xf]
      %v1312 = vld [vmem:[%s3 + $0xc] sm:$0xf]
      %v1313 = vld [vmem:[%s3 + $0x10] sm:$0xf]
      %v1314 = vld [vmem:[%s3 + $0x14] sm:$0xf]
      %v1315 = vld [vmem:[%s3 + $0x18] sm:$0xf]
      %v1316 = vld [vmem:[%s3 + $0x1c] sm:$0xf]
      %v1317 = vld [vmem:[%s3 + $0x20] sm:$0xf]
      %v1318 = vld [vmem:[%s3 + $0x24] sm:$0xf]
      %v1319 = vld [vmem:[%s3 + $0x28] sm:$0xf]
      %v1320 = vld [vmem:[%s3 + $0x2c] sm:$0xf]
      %v1321 = vld [vmem:[%s3 + $0x30] sm:$0xf]
      %v1322 = vld [vmem:[%s3 + $0x34] sm:$0xf]
      %v1323 = vld [vmem:[%s3 + $0x38] sm:$0xf]
      %v1324 = vld [vmem:[%s3 + $0x3c] sm:$0xf]
      %v1325 = vld [vmem:[%s3 + $0x40] sm:$0xf]
      %v1326 = vld [vmem:[%s3 + $0x44] sm:$0xf]
      %v1327 = vld [vmem:[%s3 + $0x48] sm:$0xf]
      %v1328 = vld [vmem:[%s3 + $0x4c] sm:$0xf]
      %v1329 = vld [vmem:[%s3 + $0x50] sm:$0xf]
      %v1330 = vld [vmem:[%s3 + $0x54] sm:$0xf]
      %v1331 = vld [vmem:[%s3 + $0x58] sm:$0xf]
      %v1332 = vld [vmem:[%s3 + $0x5c] sm:$0xf]
      %v1333 = vld [vmem:[%s3 + $0x60] sm:$0xf]
      %v1334 = vld [vmem:[%s3 + $0x64] sm:$0xf]
      %v1335 = vld [vmem:[%s3 + $0x68] sm:$0xf]
      %v1336 = vld [vmem:[%s3 + $0x6c] sm:$0xf]
      %v1337 = vld [vmem:[%s3 + $0x70] sm:$0xf]
      %v1338 = vld [vmem:[%s3 + $0x74] sm:$0xf]
      %v1339 = vld [vmem:[%s3 + $0x78] sm:$0xf]
      %v1340 = vld [vmem:[%s3 + $0x7c] sm:$0xf]
      %v1341 = vld [vmem:[%s3 + $0x80] sm:$0xf]
      %v1342 = vld [vmem:[%s3 + $0x84] sm:$0xf]
      %v1343 = vld [vmem:[%s3 + $0x88] sm:$0xf]
      %v1344 = vld [vmem:[%s3 + $0x8c] sm:$0xf]
      %v1345 = vld [vmem:[%s3 + $0x90] sm:$0xf]
      %v1346 = vld [vmem:[%s3 + $0x94] sm:$0xf]
      %v1347 = vld [vmem:[%s3 + $0x98] sm:$0xf]
      %v1348 = vld [vmem:[%s3 + $0x9c] sm:$0xf]
      %v1349 = vld [vmem:[%s3 + $0xa0] sm:$0xf]
      %v1350 = vld [vmem:[%s3 + $0xa4] sm:$0xf]
      %v1351 = vld [vmem:[%s3 + $0xa8] sm:$0xf]
      %v1352 = vld [vmem:[%s3 + $0xac] sm:$0xf]
      %v1353 = vld [vmem:[%s3 + $0xb0] sm:$0xf]
      %v1354 = vld [vmem:[%s3 + $0xb4] sm:$0xf]
      %v1355 = vld [vmem:[%s3 + $0xb8] sm:$0xf]
      %v1356 = vld [vmem:[%s3 + $0xbc] sm:$0xf]
      %v1357 = vld [vmem:[%s3 + $0xc0] sm:$0xf]
      %v1358 = vld [vmem:[%s3 + $0xc4] sm:$0xf]
      %v1359 = vld [vmem:[%s3 + $0xc8] sm:$0xf]
      %v1360 = vld [vmem:[%s3 + $0xcc] sm:$0xf]
      %v1361 = vld [vmem:[%s3 + $0xd0] sm:$0xf]
      %v1362 = vld [vmem:[%s3 + $0xd4] sm:$0xf]
      %v1363 = vld [vmem:[%s3 + $0xd8] sm:$0xf]
      %v1364 = vld [vmem:[%s3 + $0xdc] sm:$0xf]
      %v1365 = vld [vmem:[%s3 + $0xe0] sm:$0xf]
      %v1366 = vld [vmem:[%s3 + $0xe4] sm:$0xf]
      %v1367 = vld [vmem:[%s3 + $0xe8] sm:$0xf]
      %v1368 = vld [vmem:[%s3 + $0xec] sm:$0xf]
      %v1369 = vld [vmem:[%s3 + $0xf0] sm:$0xf]
      %v1370 = vld [vmem:[%s3 + $0xf4] sm:$0xf]
      %v1371 = vld [vmem:[%s3 + $0xf8] sm:$0xf]
      %v1372 = vld [vmem:[%s3 + $0xfc] sm:$0xf]
      %v1373 = vld [vmem:[%s3 + $0x100] sm:$0xf]
      %v1374 = vld [vmem:[%s3 + $0x104] sm:$0xf]
      %v1375 = vld [vmem:[%s3 + $0x108] sm:$0xf]
      %v1376 = vld [vmem:[%s3 + $0x10c] sm:$0xf]
      %v1377 = vld [vmem:[%s3 + $0x110] sm:$0xf]
      %v1378 = vld [vmem:[%s3 + $0x114] sm:$0xf]
      %v1379 = vld [vmem:[%s3 + $0x118] sm:$0xf]
      %v1380 = vld [vmem:[%s3 + $0x11c] sm:$0xf]
      %v1381 = vld [vmem:[%s3 + $0x120] sm:$0xf]
      %v1382 = vld [vmem:[%s3 + $0x124] sm:$0xf]
      %v1383 = vld [vmem:[%s3 + $0x128] sm:$0xf]
      %v1384 = vld [vmem:[%s3 + $0x12c] sm:$0xf]
      %v1385 = vld [vmem:[%s3 + $0x130] sm:$0xf]
      %v1386 = vld [vmem:[%s3 + $0x134] sm:$0xf]
      %v1387 = vld [vmem:[%s3 + $0x138] sm:$0xf]
      %v1388 = vld [vmem:[%s3 + $0x13c] sm:$0xf]
      %v1389 = vld [vmem:[%s3 + $0x140] sm:$0xf]
      %v1390 = vld [vmem:[%s3 + $0x144] sm:$0xf]
      %v1391 = vld [vmem:[%s3 + $0x148] sm:$0xf]
      %v1392 = vld [vmem:[%s3 + $0x14c] sm:$0xf]
      %v1393 = vld [vmem:[%s3 + $0x150] sm:$0xf]
      %v1394 = vld [vmem:[%s3 + $0x154] sm:$0xf]
      %v1395 = vld [vmem:[%s3 + $0x158] sm:$0xf]
      %v1396 = vld [vmem:[%s3 + $0x15c] sm:$0xf]
      %v1397 = vld [vmem:[%s3 + $0x160] sm:$0xf]
      %v1398 = vld [vmem:[%s3 + $0x164] sm:$0xf]
      %v1399 = vld [vmem:[%s3 + $0x168] sm:$0xf]
      %v1400 = vld [vmem:[%s3 + $0x16c] sm:$0xf]
      %v1401 = vld [vmem:[%s3 + $0x170] sm:$0xf]
      %v1402 = vld [vmem:[%s3 + $0x174] sm:$0xf]
      %v1403 = vld [vmem:[%s3 + $0x178] sm:$0xf]
      %v1404 = vld [vmem:[%s3 + $0x17c] sm:$0xf]
      %v1405 = vld [vmem:[%s3 + $0x180] sm:$0xf]
      %v1406 = vld [vmem:[%s3 + $0x184] sm:$0xf]
      %v1407 = vld [vmem:[%s3 + $0x188] sm:$0xf]
      %v1408 = vld [vmem:[%s3 + $0x18c] sm:$0xf]
      %v1409 = vld [vmem:[%s3 + $0x190] sm:$0xf]
      %v1410 = vld [vmem:[%s3 + $0x194] sm:$0xf]
      %v1411 = vld [vmem:[%s3 + $0x198] sm:$0xf]
      %v1412 = vld [vmem:[%s3 + $0x19c] sm:$0xf]
      %v1413 = vld [vmem:[%s3 + $0x1a0] sm:$0xf]
      %v1414 = vld [vmem:[%s3 + $0x1a4] sm:$0xf]
      %v1415 = vld [vmem:[%s3 + $0x1a8] sm:$0xf]
      %v1416 = vld [vmem:[%s3 + $0x1ac] sm:$0xf]
      %v1417 = vld [vmem:[%s3 + $0x1b0] sm:$0xf]
      %v1418 = vld [vmem:[%s3 + $0x1b4] sm:$0xf]
      %v1419 = vld [vmem:[%s3 + $0x1b8] sm:$0xf]
      %v1420 = vld [vmem:[%s3 + $0x1bc] sm:$0xf]
      %v1421 = vld [vmem:[%s3 + $0x1c0] sm:$0xf]
      %v1422 = vld [vmem:[%s3 + $0x1c4] sm:$0xf]
      %v1423 = vld [vmem:[%s3 + $0x1c8] sm:$0xf]
      %v1424 = vld [vmem:[%s3 + $0x1cc] sm:$0xf]
      %v1425 = vld [vmem:[%s3 + $0x1d0] sm:$0xf]
      %v1426 = vld [vmem:[%s3 + $0x1d4] sm:$0xf]
      %v1427 = vld [vmem:[%s3 + $0x1d8] sm:$0xf]
      %v1428 = vld [vmem:[%s3 + $0x1dc] sm:$0xf]
      %v1429 = vld [vmem:[%s3 + $0x1e0] sm:$0xf]
      %v1430 = vld [vmem:[%s3 + $0x1e4] sm:$0xf]
      %v1431 = vld [vmem:[%s3 + $0x1e8] sm:$0xf]
      %v1432 = vld [vmem:[%s3 + $0x1ec] sm:$0xf]
      %v1433 = vld [vmem:[%s3 + $0x1f0] sm:$0xf]
      %v1434 = vld [vmem:[%s3 + $0x1f4] sm:$0xf]
      %v1435 = vld [vmem:[%s3 + $0x1f8] sm:$0xf]
      %v1436 = vld [vmem:[%s3 + $0x1fc] sm:$0xf]
      %v1437 = vld [vmem:[%s3 + $0x200] sm:$0xf]
      %v1438 = vld [vmem:[%s3 + $0x204] sm:$0xf]
      %v1439 = vld [vmem:[%s3 + $0x208] sm:$0xf]
      %v1440 = vld [vmem:[%s3 + $0x20c] sm:$0xf]
      %v1441 = vld [vmem:[%s3 + $0x210] sm:$0xf]
      %v1442 = vld [vmem:[%s3 + $0x214] sm:$0xf]
      %v1443 = vld [vmem:[%s3 + $0x218] sm:$0xf]
      %v1444 = vld [vmem:[%s3 + $0x21c] sm:$0xf]
      %v1445 = vld [vmem:[%s3 + $0x220] sm:$0xf]
      %v1446 = vld [vmem:[%s3 + $0x224] sm:$0xf]
      %v1447 = vld [vmem:[%s3 + $0x228] sm:$0xf]
      %v1448 = vld [vmem:[%s3 + $0x22c] sm:$0xf]
      %v1449 = vld [vmem:[%s3 + $0x230] sm:$0xf]
      %v1450 = vld [vmem:[%s3 + $0x234] sm:$0xf]
      %v1451 = vld [vmem:[%s3 + $0x238] sm:$0xf]
      %v1452 = vld [vmem:[%s3 + $0x23c] sm:$0xf]
      %v1453 = vld [vmem:[%s3 + $0x240] sm:$0xf]
      %v1454 = vld [vmem:[%s3 + $0x244] sm:$0xf]
      %v1455 = vld [vmem:[%s3 + $0x248] sm:$0xf]
      %v1456 = vld [vmem:[%s3 + $0x24c] sm:$0xf]
      %v1457 = vld [vmem:[%s3 + $0x250] sm:$0xf]
      %v1458 = vld [vmem:[%s3 + $0x254] sm:$0xf]
      %v1459 = vld [vmem:[%s3 + $0x258] sm:$0xf]
      %v1460 = vld [vmem:[%s3 + $0x25c] sm:$0xf]
      %v1461 = vld [vmem:[%s3 + $0x260] sm:$0xf]
      %v1462 = vld [vmem:[%s3 + $0x264] sm:$0xf]
      %v1463 = vld [vmem:[%s3 + $0x268] sm:$0xf]
      %v1464 = vld [vmem:[%s3 + $0x26c] sm:$0xf]
      %v1465 = vld [vmem:[%s3 + $0x270] sm:$0xf]
      %v1466 = vld [vmem:[%s3 + $0x274] sm:$0xf]
      %v1467 = vld [vmem:[%s3 + $0x278] sm:$0xf]
      %v1468 = vld [vmem:[%s3 + $0x27c] sm:$0xf]
      %v1469 = vld [vmem:[%s3 + $0x280] sm:$0xf]
      %v1470 = vld [vmem:[%s3 + $0x284] sm:$0xf]
      %v1471 = vld [vmem:[%s3 + $0x288] sm:$0xf]
      %v1472 = vld [vmem:[%s3 + $0x28c] sm:$0xf]
      %v1473 = vld [vmem:[%s3 + $0x290] sm:$0xf]
      %v1474 = vld [vmem:[%s3 + $0x294] sm:$0xf]
      %v1475 = vld [vmem:[%s3 + $0x298] sm:$0xf]
      %v1476 = vld [vmem:[%s3 + $0x29c] sm:$0xf]
      %v1477 = vld [vmem:[%s3 + $0x2a0] sm:$0xf]
      %v1478 = vld [vmem:[%s3 + $0x2a4] sm:$0xf]
      %v1479 = vld [vmem:[%s3 + $0x2a8] sm:$0xf]
      %v1480 = vld [vmem:[%s3 + $0x2ac] sm:$0xf]
      %v1481 = vld [vmem:[%s3 + $0x2b0] sm:$0xf]
      %v1482 = vld [vmem:[%s3 + $0x2b4] sm:$0xf]
      %v1483 = vld [vmem:[%s3 + $0x2b8] sm:$0xf]
      %v1484 = vld [vmem:[%s3 + $0x2bc] sm:$0xf]
      %v1485 = vld [vmem:[%s3 + $0x2c0] sm:$0xf]
      %v1486 = vld [vmem:[%s3 + $0x2c4] sm:$0xf]
      %v1487 = vld [vmem:[%s3 + $0x2c8] sm:$0xf]
      %v1488 = vld [vmem:[%s3 + $0x2cc] sm:$0xf]
      %v1489 = vld [vmem:[%s3 + $0x2d0] sm:$0xf]
      %v1490 = vld [vmem:[%s3 + $0x2d4] sm:$0xf]
      %v1491 = vld [vmem:[%s3 + $0x2d8] sm:$0xf]
      %v1492 = vld [vmem:[%s3 + $0x2dc] sm:$0xf]
      %v1493 = vld [vmem:[%s3 + $0x2e0] sm:$0xf]
      %v1494 = vld [vmem:[%s3 + $0x2e4] sm:$0xf]
      %v1495 = vld [vmem:[%s3 + $0x2e8] sm:$0xf]
      %v1496 = vld [vmem:[%s3 + $0x2ec] sm:$0xf]
      %v1497 = vld [vmem:[%s3 + $0x2f0] sm:$0xf]
      %v1498 = vld [vmem:[%s3 + $0x2f4] sm:$0xf]
      %v1499 = vld [vmem:[%s3 + $0x2f8] sm:$0xf]
      %v1500 = vld [vmem:[%s3 + $0x2fc] sm:$0xf]
      %v1501 = vld [vmem:[%s3 + $0x300] sm:$0xf]
      %v1502 = vld [vmem:[%s3 + $0x304] sm:$0xf]
      %v1503 = vld [vmem:[%s3 + $0x308] sm:$0xf]
      %v1504 = vld [vmem:[%s3 + $0x30c] sm:$0xf]
      %v1505 = vld [vmem:[%s3 + $0x310] sm:$0xf]
      %v1506 = vld [vmem:[%s3 + $0x314] sm:$0xf]
      %v1507 = vld [vmem:[%s3 + $0x318] sm:$0xf]
      %v1508 = vld [vmem:[%s3 + $0x31c] sm:$0xf]
      %v1509 = vld [vmem:[%s3 + $0x320] sm:$0xf]
      %v1510 = vld [vmem:[%s3 + $0x324] sm:$0xf]
      %v1511 = vld [vmem:[%s3 + $0x328] sm:$0xf]
      %v1512 = vld [vmem:[%s3 + $0x32c] sm:$0xf]
      %v1513 = vld [vmem:[%s3 + $0x330] sm:$0xf]
      %v1514 = vld [vmem:[%s3 + $0x334] sm:$0xf]
      %v1515 = vld [vmem:[%s3 + $0x338] sm:$0xf]
      %v1516 = vld [vmem:[%s3 + $0x33c] sm:$0xf]
      %v1517 = vld [vmem:[%s3 + $0x340] sm:$0xf]
      %v1518 = vld [vmem:[%s3 + $0x344] sm:$0xf]
      %v1519 = vld [vmem:[%s3 + $0x348] sm:$0xf]
      %v1520 = vld [vmem:[%s3 + $0x34c] sm:$0xf]
      %v1521 = vld [vmem:[%s3 + $0x350] sm:$0xf]
      %v1522 = vld [vmem:[%s3 + $0x354] sm:$0xf]
      %v1523 = vld [vmem:[%s3 + $0x358] sm:$0xf]
      %v1524 = vld [vmem:[%s3 + $0x35c] sm:$0xf]
      %v1525 = vld [vmem:[%s3 + $0x360] sm:$0xf]
      %v1526 = vld [vmem:[%s3 + $0x364] sm:$0xf]
      %v1527 = vld [vmem:[%s3 + $0x368] sm:$0xf]
      %v1528 = vld [vmem:[%s3 + $0x36c] sm:$0xf]
      %v1529 = vld [vmem:[%s3 + $0x370] sm:$0xf]
      %v1530 = vld [vmem:[%s3 + $0x374] sm:$0xf]
      %v1531 = vld [vmem:[%s3 + $0x378] sm:$0xf]
      %v1532 = vld [vmem:[%s3 + $0x37c] sm:$0xf]
      %v1533 = vld [vmem:[%s3 + $0x380] sm:$0xf]
      %v1534 = vld [vmem:[%s3 + $0x384] sm:$0xf]
      %v1535 = vld [vmem:[%s3 + $0x388] sm:$0xf]
      %v1536 = vld [vmem:[%s3 + $0x38c] sm:$0xf]
      %v1537 = vld [vmem:[%s3 + $0x390] sm:$0xf]
      %v1538 = vld [vmem:[%s3 + $0x394] sm:$0xf]
      %v1539 = vld [vmem:[%s3 + $0x398] sm:$0xf]
      %v1540 = vld [vmem:[%s3 + $0x39c] sm:$0xf]
      %v1541 = vld [vmem:[%s3 + $0x3a0] sm:$0xf]
      %v1542 = vld [vmem:[%s3 + $0x3a4] sm:$0xf]
      %v1543 = vld [vmem:[%s3 + $0x3a8] sm:$0xf]
      %v1544 = vld [vmem:[%s3 + $0x3ac] sm:$0xf]
      %v1545 = vld [vmem:[%s3 + $0x3b0] sm:$0xf]
      %v1546 = vld [vmem:[%s3 + $0x3b4] sm:$0xf]
      %v1547 = vld [vmem:[%s3 + $0x3b8] sm:$0xf]
      %v1548 = vld [vmem:[%s3 + $0x3bc] sm:$0xf]
      %v1549 = vld [vmem:[%s3 + $0x3c0] sm:$0xf]
      %v1550 = vld [vmem:[%s3 + $0x3c4] sm:$0xf]
      %v1551 = vld [vmem:[%s3 + $0x3c8] sm:$0xf]
      %v1552 = vld [vmem:[%s3 + $0x3cc] sm:$0xf]
      %v1553 = vld [vmem:[%s3 + $0x3d0] sm:$0xf]
      %v1554 = vld [vmem:[%s3 + $0x3d4] sm:$0xf]
      %v1555 = vld [vmem:[%s3 + $0x3d8] sm:$0xf]
      %v1556 = vld [vmem:[%s3 + $0x3dc] sm:$0xf]
      %v1557 = vld [vmem:[%s3 + $0x3e0] sm:$0xf]
      %v1558 = vld [vmem:[%s3 + $0x3e4] sm:$0xf]
      %v1559 = vld [vmem:[%s3 + $0x3e8] sm:$0xf]
      %v1560 = vld [vmem:[%s3 + $0x3ec] sm:$0xf]
      %v1561 = vld [vmem:[%s3 + $0x3f0] sm:$0xf]
      %v1562 = vld [vmem:[%s3 + $0x3f4] sm:$0xf]
      %v1563 = vld [vmem:[%s3 + $0x3f8] sm:$0xf]
      %v1564 = vld [vmem:[%s3 + $0x3fc] sm:$0xf]
      %v1565 = vld [vmem:[%s3 + $0x400] sm:$0xf]
      %v1566 = vld [vmem:[%s3 + $0x404] sm:$0xf]
      %v1567 = vld [vmem:[%s3 + $0x408] sm:$0xf]
      %v1568 = vld [vmem:[%s3 + $0x40c] sm:$0xf]
      %v1569 = vld [vmem:[%s3 + $0x410] sm:$0xf]
      %v1570 = vld [vmem:[%s3 + $0x414] sm:$0xf]
      %v1571 = vld [vmem:[%s3 + $0x418] sm:$0xf]
      %v1572 = vld [vmem:[%s3 + $0x41c] sm:$0xf]
      %v1573 = vld [vmem:[%s3 + $0x420] sm:$0xf]
      %v1574 = vld [vmem:[%s3 + $0x424] sm:$0xf]
      %v1575 = vld [vmem:[%s3 + $0x428] sm:$0xf]
      %v1576 = vld [vmem:[%s3 + $0x42c] sm:$0xf]
      %v1577 = vld [vmem:[%s3 + $0x430] sm:$0xf]
      %v1578 = vld [vmem:[%s3 + $0x434] sm:$0xf]
      %v1579 = vld [vmem:[%s3 + $0x438] sm:$0xf]
      %v1580 = vld [vmem:[%s3 + $0x43c] sm:$0xf]
      %v1581 = vld [vmem:[%s3 + $0x440] sm:$0xf]
      %v1582 = vld [vmem:[%s3 + $0x444] sm:$0xf]
      %v1583 = vld [vmem:[%s3 + $0x448] sm:$0xf]
      %v1584 = vld [vmem:[%s3 + $0x44c] sm:$0xf]
      %v1585 = vld [vmem:[%s3 + $0x450] sm:$0xf]
      %v1586 = vld [vmem:[%s3 + $0x454] sm:$0xf]
      %v1587 = vld [vmem:[%s3 + $0x458] sm:$0xf]
      %v1588 = vld [vmem:[%s3 + $0x45c] sm:$0xf]
      %v1589 = vld [vmem:[%s3 + $0x460] sm:$0xf]
      %v1590 = vld [vmem:[%s3 + $0x464] sm:$0xf]
      %v1591 = vld [vmem:[%s3 + $0x468] sm:$0xf]
      %v1592 = vld [vmem:[%s3 + $0x46c] sm:$0xf]
      %v1593 = vld [vmem:[%s3 + $0x470] sm:$0xf]
      %v1594 = vld [vmem:[%s3 + $0x474] sm:$0xf]
      %v1595 = vld [vmem:[%s3 + $0x478] sm:$0xf]
      %v1596 = vld [vmem:[%s3 + $0x47c] sm:$0xf]
      %v1597 = vld [vmem:[%s3 + $0x480] sm:$0xf]
      %v1598 = vld [vmem:[%s3 + $0x484] sm:$0xf]
      %v1599 = vld [vmem:[%s3 + $0x488] sm:$0xf]
      %v1600 = vld [vmem:[%s3 + $0x48c] sm:$0xf]
      %v1601 = vld [vmem:[%s3 + $0x490] sm:$0xf]
      %v1602 = vld [vmem:[%s3 + $0x494] sm:$0xf]
      %v1603 = vld [vmem:[%s3 + $0x498] sm:$0xf]
      %v1604 = vld [vmem:[%s3 + $0x49c] sm:$0xf]
      %v1605 = vld [vmem:[%s3 + $0x4a0] sm:$0xf]
      %v1606 = vld [vmem:[%s3 + $0x4a4] sm:$0xf]
      %v1607 = vld [vmem:[%s3 + $0x4a8] sm:$0xf]
      %v1608 = vld [vmem:[%s3 + $0x4ac] sm:$0xf]
      %v1609 = vld [vmem:[%s3 + $0x4b0] sm:$0xf]
      %v1610 = vld [vmem:[%s3 + $0x4b4] sm:$0xf]
      %v1611 = vld [vmem:[%s3 + $0x4b8] sm:$0xf]
      %v1612 = vld [vmem:[%s3 + $0x4bc] sm:$0xf]
      %v1613 = vld [vmem:[%s3 + $0x4c0] sm:$0xf]
      %v1614 = vld [vmem:[%s3 + $0x4c4] sm:$0xf]
      %v1615 = vld [vmem:[%s3 + $0x4c8] sm:$0xf]
      %v1616 = vld [vmem:[%s3 + $0x4cc] sm:$0xf]
      %v1617 = vld [vmem:[%s3 + $0x4d0] sm:$0xf]
      %v1618 = vld [vmem:[%s3 + $0x4d4] sm:$0xf]
      %v1619 = vld [vmem:[%s3 + $0x4d8] sm:$0xf]
      %v1620 = vld [vmem:[%s3 + $0x4dc] sm:$0xf]
      %v1621 = vld [vmem:[%s3 + $0x4e0] sm:$0xf]
      %v1622 = vld [vmem:[%s3 + $0x4e4] sm:$0xf]
      %v1623 = vld [vmem:[%s3 + $0x4e8] sm:$0xf]
      %v1624 = vld [vmem:[%s3 + $0x4ec] sm:$0xf]
      %v1625 = vld [vmem:[%s3 + $0x4f0] sm:$0xf]
      %v1626 = vld [vmem:[%s3 + $0x4f4] sm:$0xf]
      %v1627 = vld [vmem:[%s3 + $0x4f8] sm:$0xf]
      %v1628 = vld [vmem:[%s3 + $0x4fc] sm:$0xf]
      %v1629 = vld [vmem:[%s3 + $0x500] sm:$0xf]
      %v1630 = vld [vmem:[%s3 + $0x504] sm:$0xf]
      %v1631 = vld [vmem:[%s3 + $0x508] sm:$0xf]
      %v1632 = vld [vmem:[%s3 + $0x50c] sm:$0xf]
      %v1633 = vld [vmem:[%s3 + $0x510] sm:$0xf]
      %v1634 = vld [vmem:[%s3 + $0x514] sm:$0xf]
      %v1635 = vld [vmem:[%s3 + $0x518] sm:$0xf]
      %v1636 = vld [vmem:[%s3 + $0x51c] sm:$0xf]
      %v1637 = vld [vmem:[%s3 + $0x520] sm:$0xf]
      %v1638 = vld [vmem:[%s3 + $0x524] sm:$0xf]
      %v1639 = vld [vmem:[%s3 + $0x528] sm:$0xf]
      %v1640 = vld [vmem:[%s3 + $0x52c] sm:$0xf]
      %v1641 = vld [vmem:[%s3 + $0x530] sm:$0xf]
      %v1642 = vld [vmem:[%s3 + $0x534] sm:$0xf]
      %v1643 = vld [vmem:[%s3 + $0x538] sm:$0xf]
      %v1644 = vld [vmem:[%s3 + $0x53c] sm:$0xf]
      %v1645 = vld [vmem:[%s3 + $0x540] sm:$0xf]
      %v1646 = vld [vmem:[%s3 + $0x544] sm:$0xf]
      %v1647 = vld [vmem:[%s3 + $0x548] sm:$0xf]
      %v1648 = vld [vmem:[%s3 + $0x54c] sm:$0xf]
      %v1649 = vld [vmem:[%s3 + $0x550] sm:$0xf]
      %v1650 = vld [vmem:[%s3 + $0x554] sm:$0xf]
      %v1651 = vld [vmem:[%s3 + $0x558] sm:$0xf]
      %v1652 = vld [vmem:[%s3 + $0x55c] sm:$0xf]
      %v1653 = vld [vmem:[%s3 + $0x560] sm:$0xf]
      %v1654 = vld [vmem:[%s3 + $0x564] sm:$0xf]
      %v1655 = vld [vmem:[%s3 + $0x568] sm:$0xf]
      %v1656 = vld [vmem:[%s3 + $0x56c] sm:$0xf]
      %v1657 = vld [vmem:[%s3 + $0x570] sm:$0xf]
      %v1658 = vld [vmem:[%s3 + $0x574] sm:$0xf]
      %v1659 = vld [vmem:[%s3 + $0x578] sm:$0xf]
      %v1660 = vld [vmem:[%s3 + $0x57c] sm:$0xf]
      %v1661 = vld [vmem:[%s3 + $0x580] sm:$0xf]
      %v1662 = vld [vmem:[%s3 + $0x584] sm:$0xf]
      %v1663 = vld [vmem:[%s3 + $0x588] sm:$0xf]
      %v1664 = vld [vmem:[%s3 + $0x58c] sm:$0xf]
      %v1665 = vld [vmem:[%s3 + $0x590] sm:$0xf]
      %v1666 = vld [vmem:[%s3 + $0x594] sm:$0xf]
      %v1667 = vld [vmem:[%s3 + $0x598] sm:$0xf]
      %v1668 = vld [vmem:[%s3 + $0x59c] sm:$0xf]
      %v1669 = vld [vmem:[%s3 + $0x5a0] sm:$0xf]
      %v1670 = vld [vmem:[%s3 + $0x5a4] sm:$0xf]
      %v1671 = vld [vmem:[%s3 + $0x5a8] sm:$0xf]
      %v1672 = vld [vmem:[%s3 + $0x5ac] sm:$0xf]
      %v1673 = vld [vmem:[%s3 + $0x5b0] sm:$0xf]
      %v1674 = vld [vmem:[%s3 + $0x5b4] sm:$0xf]
      %v1675 = vld [vmem:[%s3 + $0x5b8] sm:$0xf]
      %v1676 = vld [vmem:[%s3 + $0x5bc] sm:$0xf]
      %v1677 = vld [vmem:[%s3 + $0x5c0] sm:$0xf]
      %v1678 = vld [vmem:[%s3 + $0x5c4] sm:$0xf]
      %v1679 = vld [vmem:[%s3 + $0x5c8] sm:$0xf]
      %v1680 = vld [vmem:[%s3 + $0x5cc] sm:$0xf]
      %v1681 = vld [vmem:[%s3 + $0x5d0] sm:$0xf]
      %v1682 = vld [vmem:[%s3 + $0x5d4] sm:$0xf]
      %v1683 = vld [vmem:[%s3 + $0x5d8] sm:$0xf]
      %v1684 = vld [vmem:[%s3 + $0x5dc] sm:$0xf]
      %v1685 = vld [vmem:[%s3 + $0x5e0] sm:$0xf]
      %v1686 = vld [vmem:[%s3 + $0x5e4] sm:$0xf]
      %v1687 = vld [vmem:[%s3 + $0x5e8] sm:$0xf]
      %v1688 = vld [vmem:[%s3 + $0x5ec] sm:$0xf]
      %v1689 = vld [vmem:[%s3 + $0x5f0] sm:$0xf]
      %v1690 = vld [vmem:[%s3 + $0x5f4] sm:$0xf]
      %v1691 = vld [vmem:[%s3 + $0x5f8] sm:$0xf]
      %v1692 = vld [vmem:[%s3 + $0x5fc] sm:$0xf]
      %v1693 = vld [vmem:[%s3 + $0x600] sm:$0xf]
      %v1694 = vld [vmem:[%s3 + $0x604] sm:$0xf]
      %v1695 = vld [vmem:[%s3 + $0x608] sm:$0xf]
      %v1696 = vld [vmem:[%s3 + $0x60c] sm:$0xf]
      %v1697 = vld [vmem:[%s3 + $0x610] sm:$0xf]
      %v1698 = vld [vmem:[%s3 + $0x614] sm:$0xf]
      %v1699 = vld [vmem:[%s3 + $0x618] sm:$0xf]
      %v1700 = vld [vmem:[%s3 + $0x61c] sm:$0xf]
      %v1701 = vld [vmem:[%s3 + $0x620] sm:$0xf]
      %v1702 = vld [vmem:[%s3 + $0x624] sm:$0xf]
      %v1703 = vld [vmem:[%s3 + $0x628] sm:$0xf]
      %v1704 = vld [vmem:[%s3 + $0x62c] sm:$0xf]
      %v1705 = vld [vmem:[%s3 + $0x630] sm:$0xf]
      %v1706 = vld [vmem:[%s3 + $0x634] sm:$0xf]
      %v1707 = vld [vmem:[%s3 + $0x638] sm:$0xf]
      %v1708 = vld [vmem:[%s3 + $0x63c] sm:$0xf]
      %v1709 = vld [vmem:[%s3 + $0x640] sm:$0xf]
      %v1710 = vld [vmem:[%s3 + $0x644] sm:$0xf]
      %v1711 = vld [vmem:[%s3 + $0x648] sm:$0xf]
      %v1712 = vld [vmem:[%s3 + $0x64c] sm:$0xf]
      %v1713 = vld [vmem:[%s3 + $0x650] sm:$0xf]
      %v1714 = vld [vmem:[%s3 + $0x654] sm:$0xf]
      %v1715 = vld [vmem:[%s3 + $0x658] sm:$0xf]
      %v1716 = vld [vmem:[%s3 + $0x65c] sm:$0xf]
      %v1717 = vld [vmem:[%s3 + $0x660] sm:$0xf]
      %v1718 = vld [vmem:[%s3 + $0x664] sm:$0xf]
      %v1719 = vld [vmem:[%s3 + $0x668] sm:$0xf]
      %v1720 = vld [vmem:[%s3 + $0x66c] sm:$0xf]
      %v1721 = vld [vmem:[%s3 + $0x670] sm:$0xf]
      %v1722 = vld [vmem:[%s3 + $0x674] sm:$0xf]
      %v1723 = vld [vmem:[%s3 + $0x678] sm:$0xf]
      %v1724 = vld [vmem:[%s3 + $0x67c] sm:$0xf]
      %v1725 = vld [vmem:[%s3 + $0x680] sm:$0xf]
      %v1726 = vld [vmem:[%s3 + $0x684] sm:$0xf]
      %v1727 = vld [vmem:[%s3 + $0x688] sm:$0xf]
      %v1728 = vld [vmem:[%s3 + $0x68c] sm:$0xf]
      %v1729 = vld [vmem:[%s3 + $0x690] sm:$0xf]
      %v1730 = vld [vmem:[%s3 + $0x694] sm:$0xf]
      %v1731 = vld [vmem:[%s3 + $0x698] sm:$0xf]
      %v1732 = vld [vmem:[%s3 + $0x69c] sm:$0xf]
      %v1733 = vld [vmem:[%s3 + $0x6a0] sm:$0xf]
      %v1734 = vld [vmem:[%s3 + $0x6a4] sm:$0xf]
      %v1735 = vld [vmem:[%s3 + $0x6a8] sm:$0xf]
      %v1736 = vld [vmem:[%s3 + $0x6ac] sm:$0xf]
      %v1737 = vld [vmem:[%s3 + $0x6b0] sm:$0xf]
      %v1738 = vld [vmem:[%s3 + $0x6b4] sm:$0xf]
      %v1739 = vld [vmem:[%s3 + $0x6b8] sm:$0xf]
      %v1740 = vld [vmem:[%s3 + $0x6bc] sm:$0xf]
      %v1741 = vld [vmem:[%s4] sm:$0x1]
      %v1743 = vperm.slane %v1741, 0
      %v2177 = vunpack.c.l.b16 %v1309
      %v2178 = vunpack.c.l.b16 %v1310
      %v2179 = vunpack.c.l.b16 %v1311
      %v2180 = vunpack.c.l.b16 %v1312
      %v2181 = vunpack.c.l.b16 %v1313
      %v2182 = vunpack.c.l.b16 %v1314
      %v2183 = vunpack.c.l.b16 %v1315
      %v2184 = vunpack.c.l.b16 %v1316
      %v2185 = vunpack.c.l.b16 %v1317
      %v2186 = vunpack.c.l.b16 %v1318
      %v2187 = vunpack.c.l.b16 %v1319
      %v2188 = vunpack.c.l.b16 %v1320
      %v2189 = vunpack.c.l.b16 %v1321
      %v2190 = vunpack.c.l.b16 %v1322
      %v2191 = vunpack.c.l.b16 %v1323
      %v2192 = vunpack.c.l.b16 %v1324
      %v2193 = vunpack.c.l.b16 %v1325
      %v2194 = vunpack.c.l.b16 %v1326
      %v2195 = vunpack.c.l.b16 %v1327
      %v2196 = vunpack.c.l.b16 %v1328
      %v2197 = vunpack.c.l.b16 %v1329
      %v2198 = vunpack.c.l.b16 %v1330
      %v2199 = vunpack.c.l.b16 %v1331
      %v2200 = vunpack.c.l.b16 %v1332
      %v2201 = vunpack.c.l.b16 %v1333
      %v2202 = vunpack.c.l.b16 %v1334
      %v2203 = vunpack.c.l.b16 %v1335
      %v2204 = vunpack.c.l.b16 %v1336
      %v2205 = vunpack.c.l.b16 %v1337
      %v2206 = vunpack.c.l.b16 %v1338
      %v2207 = vunpack.c.l.b16 %v1339
      %v2208 = vunpack.c.l.b16 %v1340
      %v2209 = vunpack.c.l.b16 %v1341
      %v2210 = vunpack.c.l.b16 %v1342
      %v2211 = vunpack.c.l.b16 %v1343
      %v2212 = vunpack.c.l.b16 %v1344
      %v2213 = vunpack.c.l.b16 %v1345
      %v2214 = vunpack.c.l.b16 %v1346
      %v2215 = vunpack.c.l.b16 %v1347
      %v2216 = vunpack.c.l.b16 %v1348
      %v2217 = vunpack.c.l.b16 %v1349
      %v2218 = vunpack.c.l.b16 %v1350
      %v2219 = vunpack.c.l.b16 %v1351
      %v2220 = vunpack.c.l.b16 %v1352
      %v2221 = vunpack.c.l.b16 %v1353
      %v2222 = vunpack.c.l.b16 %v1354
      %v2223 = vunpack.c.l.b16 %v1355
      %v2224 = vunpack.c.l.b16 %v1356
      %v2225 = vunpack.c.l.b16 %v1357
      %v2226 = vunpack.c.l.b16 %v1358
      %v2227 = vunpack.c.l.b16 %v1359
      %v2228 = vunpack.c.l.b16 %v1360
      %v2229 = vunpack.c.l.b16 %v1361
      %v2230 = vunpack.c.l.b16 %v1362
      %v2231 = vunpack.c.l.b16 %v1363
      %v2232 = vunpack.c.l.b16 %v1364
      %v2233 = vunpack.c.l.b16 %v1365
      %v2234 = vunpack.c.l.b16 %v1366
      %v2235 = vunpack.c.l.b16 %v1367
      %v2236 = vunpack.c.l.b16 %v1368
      %v2237 = vunpack.c.l.b16 %v1369
      %v2238 = vunpack.c.l.b16 %v1370
      %v2239 = vunpack.c.l.b16 %v1371
      %v2240 = vunpack.c.l.b16 %v1372
      %v2241 = vunpack.c.l.b16 %v1373
      %v2242 = vunpack.c.l.b16 %v1374
      %v2243 = vunpack.c.l.b16 %v1375
      %v2244 = vunpack.c.l.b16 %v1376
      %v2245 = vunpack.c.l.b16 %v1377
      %v2246 = vunpack.c.l.b16 %v1378
      %v2247 = vunpack.c.l.b16 %v1379
      %v2248 = vunpack.c.l.b16 %v1380
      %v2249 = vunpack.c.l.b16 %v1381
      %v2250 = vunpack.c.l.b16 %v1382
      %v2251 = vunpack.c.l.b16 %v1383
      %v2252 = vunpack.c.l.b16 %v1384
      %v2253 = vunpack.c.l.b16 %v1385
      %v2254 = vunpack.c.l.b16 %v1386
      %v2255 = vunpack.c.l.b16 %v1387
      %v2256 = vunpack.c.l.b16 %v1388
      %v2257 = vunpack.c.l.b16 %v1389
      %v2258 = vunpack.c.l.b16 %v1390
      %v2259 = vunpack.c.l.b16 %v1391
      %v2260 = vunpack.c.l.b16 %v1392
      %v2261 = vunpack.c.l.b16 %v1393
      %v2262 = vunpack.c.l.b16 %v1394
      %v2263 = vunpack.c.l.b16 %v1395
      %v2264 = vunpack.c.l.b16 %v1396
      %v2265 = vunpack.c.l.b16 %v1397
      %v2266 = vunpack.c.l.b16 %v1398
      %v2267 = vunpack.c.l.b16 %v1399
      %v2268 = vunpack.c.l.b16 %v1400
      %v2269 = vunpack.c.l.b16 %v1401
      %v2270 = vunpack.c.l.b16 %v1402
      %v2271 = vunpack.c.l.b16 %v1403
      %v2272 = vunpack.c.l.b16 %v1404
      %v2273 = vunpack.c.l.b16 %v1405
      %v2274 = vunpack.c.l.b16 %v1406
      %v2275 = vunpack.c.l.b16 %v1407
      %v2276 = vunpack.c.l.b16 %v1408
      %v2277 = vunpack.c.l.b16 %v1409
      %v2278 = vunpack.c.l.b16 %v1410
      %v2279 = vunpack.c.l.b16 %v1411
      %v2280 = vunpack.c.l.b16 %v1412
      %v2281 = vunpack.c.l.b16 %v1413
      %v2282 = vunpack.c.l.b16 %v1414
      %v2283 = vunpack.c.l.b16 %v1415
      %v2284 = vunpack.c.l.b16 %v1416
      %v2285 = vunpack.c.l.b16 %v1417
      %v2286 = vunpack.c.l.b16 %v1418
      %v2287 = vunpack.c.l.b16 %v1419
      %v2288 = vunpack.c.l.b16 %v1420
      %v2289 = vunpack.c.l.b16 %v1421
      %v2290 = vunpack.c.l.b16 %v1422
      %v2291 = vunpack.c.l.b16 %v1423
      %v2292 = vunpack.c.l.b16 %v1424
      %v2293 = vunpack.c.l.b16 %v1425
      %v2294 = vunpack.c.l.b16 %v1426
      %v2295 = vunpack.c.l.b16 %v1427
      %v2296 = vunpack.c.l.b16 %v1428
      %v2297 = vunpack.c.l.b16 %v1429
      %v2298 = vunpack.c.l.b16 %v1430
      %v2299 = vunpack.c.l.b16 %v1431
      %v2300 = vunpack.c.l.b16 %v1432
      %v2301 = vunpack.c.l.b16 %v1433
      %v2302 = vunpack.c.l.b16 %v1434
      %v2303 = vunpack.c.l.b16 %v1435
      %v2304 = vunpack.c.l.b16 %v1436
      %v2305 = vunpack.c.l.b16 %v1437
      %v2306 = vunpack.c.l.b16 %v1438
      %v2307 = vunpack.c.l.b16 %v1439
      %v2308 = vunpack.c.l.b16 %v1440
      %v2309 = vunpack.c.l.b16 %v1441
      %v2310 = vunpack.c.l.b16 %v1442
      %v2311 = vunpack.c.l.b16 %v1443
      %v2312 = vunpack.c.l.b16 %v1444
      %v2313 = vunpack.c.l.b16 %v1445
      %v2314 = vunpack.c.l.b16 %v1446
      %v2315 = vunpack.c.l.b16 %v1447
      %v2316 = vunpack.c.l.b16 %v1448
      %v2317 = vunpack.c.l.b16 %v1449
      %v2318 = vunpack.c.l.b16 %v1450
      %v2319 = vunpack.c.l.b16 %v1451
      %v2320 = vunpack.c.l.b16 %v1452
      %v2321 = vunpack.c.l.b16 %v1453
      %v2322 = vunpack.c.l.b16 %v1454
      %v2323 = vunpack.c.l.b16 %v1455
      %v2324 = vunpack.c.l.b16 %v1456
      %v2325 = vunpack.c.l.b16 %v1457
      %v2326 = vunpack.c.l.b16 %v1458
      %v2327 = vunpack.c.l.b16 %v1459
      %v2328 = vunpack.c.l.b16 %v1460
      %v2329 = vunpack.c.l.b16 %v1461
      %v2330 = vunpack.c.l.b16 %v1462
      %v2331 = vunpack.c.l.b16 %v1463
      %v2332 = vunpack.c.l.b16 %v1464
      %v2333 = vunpack.c.l.b16 %v1465
      %v2334 = vunpack.c.l.b16 %v1466
      %v2335 = vunpack.c.l.b16 %v1467
      %v2336 = vunpack.c.l.b16 %v1468
      %v2337 = vunpack.c.l.b16 %v1469
      %v2338 = vunpack.c.l.b16 %v1470
      %v2339 = vunpack.c.l.b16 %v1471
      %v2340 = vunpack.c.l.b16 %v1472
      %v2341 = vunpack.c.l.b16 %v1473
      %v2342 = vunpack.c.l.b16 %v1474
      %v2343 = vunpack.c.l.b16 %v1475
      %v2344 = vunpack.c.l.b16 %v1476
      %v2345 = vunpack.c.l.b16 %v1477
      %v2346 = vunpack.c.l.b16 %v1478
      %v2347 = vunpack.c.l.b16 %v1479
      %v2348 = vunpack.c.l.b16 %v1480
      %v2349 = vunpack.c.l.b16 %v1481
      %v2350 = vunpack.c.l.b16 %v1482
      %v2351 = vunpack.c.l.b16 %v1483
      %v2352 = vunpack.c.l.b16 %v1484
      %v2353 = vunpack.c.l.b16 %v1485
      %v2354 = vunpack.c.l.b16 %v1486
      %v2355 = vunpack.c.l.b16 %v1487
      %v2356 = vunpack.c.l.b16 %v1488
      %v2357 = vunpack.c.l.b16 %v1489
      %v2358 = vunpack.c.l.b16 %v1490
      %v2359 = vunpack.c.l.b16 %v1491
      %v2360 = vunpack.c.l.b16 %v1492
      %v2361 = vunpack.c.l.b16 %v1493
      %v2362 = vunpack.c.l.b16 %v1494
      %v2363 = vunpack.c.l.b16 %v1495
      %v2364 = vunpack.c.l.b16 %v1496
      %v2365 = vunpack.c.l.b16 %v1497
      %v2366 = vunpack.c.l.b16 %v1498
      %v2367 = vunpack.c.l.b16 %v1499
      %v2368 = vunpack.c.l.b16 %v1500
      %v2369 = vunpack.c.l.b16 %v1501
      %v2370 = vunpack.c.l.b16 %v1502
      %v2371 = vunpack.c.l.b16 %v1503
      %v2372 = vunpack.c.l.b16 %v1504
      %v2373 = vunpack.c.l.b16 %v1505
      %v2374 = vunpack.c.l.b16 %v1506
      %v2375 = vunpack.c.l.b16 %v1507
      %v2376 = vunpack.c.l.b16 %v1508
      %v2377 = vunpack.c.l.b16 %v1509
      %v2378 = vunpack.c.l.b16 %v1510
      %v2379 = vunpack.c.l.b16 %v1511
      %v2380 = vunpack.c.l.b16 %v1512
      %v2381 = vunpack.c.l.b16 %v1513
      %v2382 = vunpack.c.l.b16 %v1514
      %v2383 = vunpack.c.l.b16 %v1515
      %v2384 = vunpack.c.l.b16 %v1516
      %v2385 = vunpack.c.l.b16 %v1517
      %v2386 = vunpack.c.l.b16 %v1518
      %v2387 = vunpack.c.l.b16 %v1519
      %v2388 = vunpack.c.l.b16 %v1520
      %v2389 = vunpack.c.l.b16 %v1521
      %v2390 = vunpack.c.l.b16 %v1522
      %v2391 = vunpack.c.l.b16 %v1523
      %v2392 = vunpack.c.l.b16 %v1524
      %v2393 = vunpack.c.l.b16 %v1525
      %v2394 = vunpack.c.l.b16 %v1526
      %v2395 = vunpack.c.l.b16 %v1527
      %v2396 = vunpack.c.l.b16 %v1528
      %v2397 = vunpack.c.l.b16 %v1529
      %v2398 = vunpack.c.l.b16 %v1530
      %v2399 = vunpack.c.l.b16 %v1531
      %v2400 = vunpack.c.l.b16 %v1532
      %v2401 = vunpack.c.l.b16 %v1533
      %v2402 = vunpack.c.l.b16 %v1534
      %v2403 = vunpack.c.l.b16 %v1535
      %v2404 = vunpack.c.l.b16 %v1536
      %v2405 = vunpack.c.l.b16 %v1537
      %v2406 = vunpack.c.l.b16 %v1538
      %v2407 = vunpack.c.l.b16 %v1539
      %v2408 = vunpack.c.l.b16 %v1540
      %v2409 = vunpack.c.l.b16 %v1541
      %v2410 = vunpack.c.l.b16 %v1542
      %v2411 = vunpack.c.l.b16 %v1543
      %v2412 = vunpack.c.l.b16 %v1544
      %v2413 = vunpack.c.l.b16 %v1545
      %v2414 = vunpack.c.l.b16 %v1546
      %v2415 = vunpack.c.l.b16 %v1547
      %v2416 = vunpack.c.l.b16 %v1548
      %v2417 = vunpack.c.l.b16 %v1549
      %v2418 = vunpack.c.l.b16 %v1550
      %v2419 = vunpack.c.l.b16 %v1551
      %v2420 = vunpack.c.l.b16 %v1552
      %v2421 = vunpack.c.l.b16 %v1553
      %v2422 = vunpack.c.l.b16 %v1554
      %v2423 = vunpack.c.l.b16 %v1555
      %v2424 = vunpack.c.l.b16 %v1556
      %v2425 = vunpack.c.l.b16 %v1557
      %v2426 = vunpack.c.l.b16 %v1558
      %v2427 = vunpack.c.l.b16 %v1559
      %v2428 = vunpack.c.l.b16 %v1560
      %v2429 = vunpack.c.l.b16 %v1561
      %v2430 = vunpack.c.l.b16 %v1562
      %v2431 = vunpack.c.l.b16 %v1563
      %v2432 = vunpack.c.l.b16 %v1564
      %v2433 = vunpack.c.l.b16 %v1565
      %v2434 = vunpack.c.l.b16 %v1566
      %v2435 = vunpack.c.l.b16 %v1567
      %v2436 = vunpack.c.l.b16 %v1568
      %v2437 = vunpack.c.l.b16 %v1569
      %v2438 = vunpack.c.l.b16 %v1570
      %v2439 = vunpack.c.l.b16 %v1571
      %v2440 = vunpack.c.l.b16 %v1572
      %v2441 = vunpack.c.l.b16 %v1573
      %v2442 = vunpack.c.l.b16 %v1574
      %v2443 = vunpack.c.l.b16 %v1575
      %v2444 = vunpack.c.l.b16 %v1576
      %v2445 = vunpack.c.l.b16 %v1577
      %v2446 = vunpack.c.l.b16 %v1578
      %v2447 = vunpack.c.l.b16 %v1579
      %v2448 = vunpack.c.l.b16 %v1580
      %v2449 = vunpack.c.l.b16 %v1581
      %v2450 = vunpack.c.l.b16 %v1582
      %v2451 = vunpack.c.l.b16 %v1583
      %v2452 = vunpack.c.l.b16 %v1584
      %v2453 = vunpack.c.l.b16 %v1585
      %v2454 = vunpack.c.l.b16 %v1586
      %v2455 = vunpack.c.l.b16 %v1587
      %v2456 = vunpack.c.l.b16 %v1588
      %v2457 = vunpack.c.l.b16 %v1589
      %v2458 = vunpack.c.l.b16 %v1590
      %v2459 = vunpack.c.l.b16 %v1591
      %v2460 = vunpack.c.l.b16 %v1592
      %v2461 = vunpack.c.l.b16 %v1593
      %v2462 = vunpack.c.l.b16 %v1594
      %v2463 = vunpack.c.l.b16 %v1595
      %v2464 = vunpack.c.l.b16 %v1596
      %v2465 = vunpack.c.l.b16 %v1597
      %v2466 = vunpack.c.l.b16 %v1598
      %v2467 = vunpack.c.l.b16 %v1599
      %v2468 = vunpack.c.l.b16 %v1600
      %v2469 = vunpack.c.l.b16 %v1601
      %v2470 = vunpack.c.l.b16 %v1602
      %v2471 = vunpack.c.l.b16 %v1603
      %v2472 = vunpack.c.l.b16 %v1604
      %v2473 = vunpack.c.l.b16 %v1605
      %v2474 = vunpack.c.l.b16 %v1606
      %v2475 = vunpack.c.l.b16 %v1607
      %v2476 = vunpack.c.l.b16 %v1608
      %v2477 = vunpack.c.l.b16 %v1609
      %v2478 = vunpack.c.l.b16 %v1610
      %v2479 = vunpack.c.l.b16 %v1611
      %v2480 = vunpack.c.l.b16 %v1612
      %v2481 = vunpack.c.l.b16 %v1613
      %v2482 = vunpack.c.l.b16 %v1614
      %v2483 = vunpack.c.l.b16 %v1615
      %v2484 = vunpack.c.l.b16 %v1616
      %v2485 = vunpack.c.l.b16 %v1617
      %v2486 = vunpack.c.l.b16 %v1618
      %v2487 = vunpack.c.l.b16 %v1619
      %v2488 = vunpack.c.l.b16 %v1620
      %v2489 = vunpack.c.l.b16 %v1621
      %v2490 = vunpack.c.l.b16 %v1622
      %v2491 = vunpack.c.l.b16 %v1623
      %v2492 = vunpack.c.l.b16 %v1624
      %v2493 = vunpack.c.l.b16 %v1625
      %v2494 = vunpack.c.l.b16 %v1626
      %v2495 = vunpack.c.l.b16 %v1627
      %v2496 = vunpack.c.l.b16 %v1628
      %v2497 = vunpack.c.l.b16 %v1629
      %v2498 = vunpack.c.l.b16 %v1630
      %v2499 = vunpack.c.l.b16 %v1631
      %v2500 = vunpack.c.l.b16 %v1632
      %v2501 = vunpack.c.l.b16 %v1633
      %v2502 = vunpack.c.l.b16 %v1634
      %v2503 = vunpack.c.l.b16 %v1635
      %v2504 = vunpack.c.l.b16 %v1636
      %v2505 = vunpack.c.l.b16 %v1637
      %v2506 = vunpack.c.l.b16 %v1638
      %v2507 = vunpack.c.l.b16 %v1639
      %v2508 = vunpack.c.l.b16 %v1640
      %v2509 = vunpack.c.l.b16 %v1641
      %v2510 = vunpack.c.l.b16 %v1642
      %v2511 = vunpack.c.l.b16 %v1643
      %v2512 = vunpack.c.l.b16 %v1644
      %v2513 = vunpack.c.l.b16 %v1645
      %v2514 = vunpack.c.l.b16 %v1646
      %v2515 = vunpack.c.l.b16 %v1647
      %v2516 = vunpack.c.l.b16 %v1648
      %v2517 = vunpack.c.l.b16 %v1649
      %v2518 = vunpack.c.l.b16 %v1650
      %v2519 = vunpack.c.l.b16 %v1651
      %v2520 = vunpack.c.l.b16 %v1652
      %v2521 = vunpack.c.l.b16 %v1653
      %v2522 = vunpack.c.l.b16 %v1654
      %v2523 = vunpack.c.l.b16 %v1655
      %v2524 = vunpack.c.l.b16 %v1656
      %v2525 = vunpack.c.l.b16 %v1657
      %v2526 = vunpack.c.l.b16 %v1658
      %v2527 = vunpack.c.l.b16 %v1659
      %v2528 = vunpack.c.l.b16 %v1660
      %v2529 = vunpack.c.l.b16 %v1661
      %v2530 = vunpack.c.l.b16 %v1662
      %v2531 = vunpack.c.l.b16 %v1663
      %v2532 = vunpack.c.l.b16 %v1664
      %v2533 = vunpack.c.l.b16 %v1665
      %v2534 = vunpack.c.l.b16 %v1666
      %v2535 = vunpack.c.l.b16 %v1667
      %v2536 = vunpack.c.l.b16 %v1668
      %v2537 = vunpack.c.l.b16 %v1669
      %v2538 = vunpack.c.l.b16 %v1670
      %v2539 = vunpack.c.l.b16 %v1671
      %v2540 = vunpack.c.l.b16 %v1672
      %v2541 = vunpack.c.l.b16 %v1673
      %v2542 = vunpack.c.l.b16 %v1674
      %v2543 = vunpack.c.l.b16 %v1675
      %v2544 = vunpack.c.l.b16 %v1676
      %v2545 = vunpack.c.l.b16 %v1677
      %v2546 = vunpack.c.l.b16 %v1678
      %v2547 = vunpack.c.l.b16 %v1679
      %v2548 = vunpack.c.l.b16 %v1680
      %v2549 = vunpack.c.l.b16 %v1681
      %v2550 = vunpack.c.l.b16 %v1682
      %v2551 = vunpack.c.l.b16 %v1683
      %v2552 = vunpack.c.l.b16 %v1684
      %v2553 = vunpack.c.l.b16 %v1685
      %v2554 = vunpack.c.l.b16 %v1686
      %v2555 = vunpack.c.l.b16 %v1687
      %v2556 = vunpack.c.l.b16 %v1688
      %v2557 = vunpack.c.l.b16 %v1689
      %v2558 = vunpack.c.l.b16 %v1690
      %v2559 = vunpack.c.l.b16 %v1691
      %v2560 = vunpack.c.l.b16 %v1692
      %v2561 = vunpack.c.l.b16 %v1693
      %v2562 = vunpack.c.l.b16 %v1694
      %v2563 = vunpack.c.l.b16 %v1695
      %v2564 = vunpack.c.l.b16 %v1696
      %v2565 = vunpack.c.l.b16 %v1697
      %v2566 = vunpack.c.l.b16 %v1698
      %v2567 = vunpack.c.l.b16 %v1699
      %v2568 = vunpack.c.l.b16 %v1700
      %v2569 = vunpack.c.l.b16 %v1701
      %v2570 = vunpack.c.l.b16 %v1702
      %v2571 = vunpack.c.l.b16 %v1703
      %v2572 = vunpack.c.l.b16 %v1704
      %v2573 = vunpack.c.l.b16 %v1705
      %v2574 = vunpack.c.l.b16 %v1706
      %v2575 = vunpack.c.l.b16 %v1707
      %v2576 = vunpack.c.l.b16 %v1708
      %v2577 = vunpack.c.l.b16 %v1709
      %v2578 = vunpack.c.l.b16 %v1710
      %v2579 = vunpack.c.l.b16 %v1711
      %v2580 = vunpack.c.l.b16 %v1712
      %v2581 = vunpack.c.l.b16 %v1713
      %v2582 = vunpack.c.l.b16 %v1714
      %v2583 = vunpack.c.l.b16 %v1715
      %v2584 = vunpack.c.l.b16 %v1716
      %v2585 = vunpack.c.l.b16 %v1717
      %v2586 = vunpack.c.l.b16 %v1718
      %v2587 = vunpack.c.l.b16 %v1719
      %v2588 = vunpack.c.l.b16 %v1720
      %v2589 = vunpack.c.l.b16 %v1721
      %v2590 = vunpack.c.l.b16 %v1722
      %v2591 = vunpack.c.l.b16 %v1723
      %v2592 = vunpack.c.l.b16 %v1724
      %v2593 = vunpack.c.l.b16 %v1725
      %v2594 = vunpack.c.l.b16 %v1726
      %v2595 = vunpack.c.l.b16 %v1727
      %v2596 = vunpack.c.l.b16 %v1728
      %v2597 = vunpack.c.l.b16 %v1729
      %v2598 = vunpack.c.l.b16 %v1730
      %v2599 = vunpack.c.l.b16 %v1731
      %v2600 = vunpack.c.l.b16 %v1732
      %v2601 = vunpack.c.l.b16 %v1733
      %v2602 = vunpack.c.l.b16 %v1734
      %v2603 = vunpack.c.l.b16 %v1735
      %v2604 = vunpack.c.l.b16 %v1736
      %v2605 = vunpack.c.l.b16 %v1737
      %v2606 = vunpack.c.l.b16 %v1738
      %v2607 = vunpack.c.l.b16 %v1739
      %v2608 = vunpack.c.l.b16 %v1740
      %v2609 = vpack.c.b16 %v2178, %v2177
      %v2610 = vpack.c.b16 %v2180, %v2179
      %v2611 = vpack.c.b16 %v2182, %v2181
      %v2612 = vpack.c.b16 %v2184, %v2183
      %v2613 = vpack.c.b16 %v2186, %v2185
      %v2614 = vpack.c.b16 %v2188, %v2187
      %v2615 = vpack.c.b16 %v2190, %v2189
      %v2616 = vpack.c.b16 %v2192, %v2191
      %v2617 = vpack.c.b16 %v2194, %v2193
      %v2618 = vpack.c.b16 %v2196, %v2195
      %v2619 = vpack.c.b16 %v2198, %v2197
      %v2620 = vpack.c.b16 %v2200, %v2199
      %v2621 = vpack.c.b16 %v2202, %v2201
      %v2622 = vpack.c.b16 %v2204, %v2203
      %v2623 = vpack.c.b16 %v2206, %v2205
      %v2624 = vpack.c.b16 %v2208, %v2207
      %v2625 = vpack.c.b16 %v2210, %v2209
      %v2626 = vpack.c.b16 %v2212, %v2211
      %v2627 = vpack.c.b16 %v2214, %v2213
      %v2628 = vpack.c.b16 %v2216, %v2215
      %v2629 = vpack.c.b16 %v2218, %v2217
      %v2630 = vpack.c.b16 %v2220, %v2219
      %v2631 = vpack.c.b16 %v2222, %v2221
      %v2632 = vpack.c.b16 %v2224, %v2223
      %v2633 = vpack.c.b16 %v2226, %v2225
      %v2634 = vpack.c.b16 %v2228, %v2227
      %v2635 = vpack.c.b16 %v2230, %v2229
      %v2636 = vpack.c.b16 %v2232, %v2231
      %v2637 = vpack.c.b16 %v2234, %v2233
      %v2638 = vpack.c.b16 %v2236, %v2235
      %v2639 = vpack.c.b16 %v2238, %v2237
      %v2640 = vpack.c.b16 %v2240, %v2239
      %v2641 = vpack.c.b16 %v2242, %v2241
      %v2642 = vpack.c.b16 %v2244, %v2243
      %v2643 = vpack.c.b16 %v2246, %v2245
      %v2644 = vpack.c.b16 %v2248, %v2247
      %v2645 = vpack.c.b16 %v2250, %v2249
      %v2646 = vpack.c.b16 %v2252, %v2251
      %v2647 = vpack.c.b16 %v2254, %v2253
      %v2648 = vpack.c.b16 %v2256, %v2255
      %v2649 = vpack.c.b16 %v2258, %v2257
      %v2650 = vpack.c.b16 %v2260, %v2259
      %v2651 = vpack.c.b16 %v2262, %v2261
      %v2652 = vpack.c.b16 %v2264, %v2263
      %v2653 = vpack.c.b16 %v2266, %v2265
      %v2654 = vpack.c.b16 %v2268, %v2267
      %v2655 = vpack.c.b16 %v2270, %v2269
      %v2656 = vpack.c.b16 %v2272, %v2271
      %v2657 = vpack.c.b16 %v2274, %v2273
      %v2658 = vpack.c.b16 %v2276, %v2275
      %v2659 = vpack.c.b16 %v2278, %v2277
      %v2660 = vpack.c.b16 %v2280, %v2279
      %v2661 = vpack.c.b16 %v2282, %v2281
      %v2662 = vpack.c.b16 %v2284, %v2283
      %v2663 = vpack.c.b16 %v2286, %v2285
      %v2664 = vpack.c.b16 %v2288, %v2287
      %v2665 = vpack.c.b16 %v2290, %v2289
      %v2666 = vpack.c.b16 %v2292, %v2291
      %v2667 = vpack.c.b16 %v2294, %v2293
      %v2668 = vpack.c.b16 %v2296, %v2295
      %v2669 = vpack.c.b16 %v2298, %v2297
      %v2670 = vpack.c.b16 %v2300, %v2299
      %v2671 = vpack.c.b16 %v2302, %v2301
      %v2672 = vpack.c.b16 %v2304, %v2303
      %v2673 = vpack.c.b16 %v2306, %v2305
      %v2674 = vpack.c.b16 %v2308, %v2307
      %v2675 = vpack.c.b16 %v2310, %v2309
      %v2676 = vpack.c.b16 %v2312, %v2311
      %v2677 = vpack.c.b16 %v2314, %v2313
      %v2678 = vpack.c.b16 %v2316, %v2315
      %v2679 = vpack.c.b16 %v2318, %v2317
      %v2680 = vpack.c.b16 %v2320, %v2319
      %v2681 = vpack.c.b16 %v2322, %v2321
      %v2682 = vpack.c.b16 %v2324, %v2323
      %v2683 = vpack.c.b16 %v2326, %v2325
      %v2684 = vpack.c.b16 %v2328, %v2327
      %v2685 = vpack.c.b16 %v2330, %v2329
      %v2686 = vpack.c.b16 %v2332, %v2331
      %v2687 = vpack.c.b16 %v2334, %v2333
      %v2688 = vpack.c.b16 %v2336, %v2335
      %v2689 = vpack.c.b16 %v2338, %v2337
      %v2690 = vpack.c.b16 %v2340, %v2339
      %v2691 = vpack.c.b16 %v2342, %v2341
      %v2692 = vpack.c.b16 %v2344, %v2343
      %v2693 = vpack.c.b16 %v2346, %v2345
      %v2694 = vpack.c.b16 %v2348, %v2347
      %v2695 = vpack.c.b16 %v2350, %v2349
      %v2696 = vpack.c.b16 %v2352, %v2351
      %v2697 = vpack.c.b16 %v2354, %v2353
      %v2698 = vpack.c.b16 %v2356, %v2355
      %v2699 = vpack.c.b16 %v2358, %v2357
      %v2700 = vpack.c.b16 %v2360, %v2359
      %v2701 = vpack.c.b16 %v2362, %v2361
      %v2702 = vpack.c.b16 %v2364, %v2363
      %v2703 = vpack.c.b16 %v2366, %v2365
      %v2704 = vpack.c.b16 %v2368, %v2367
      %v2705 = vpack.c.b16 %v2370, %v2369
      %v2706 = vpack.c.b16 %v2372, %v2371
      %v2707 = vpack.c.b16 %v2374, %v2373
      %v2708 = vpack.c.b16 %v2376, %v2375
      %v2709 = vpack.c.b16 %v2378, %v2377
      %v2710 = vpack.c.b16 %v2380, %v2379
      %v2711 = vpack.c.b16 %v2382, %v2381
      %v2712 = vpack.c.b16 %v2384, %v2383
      %v2713 = vpack.c.b16 %v2386, %v2385
      %v2714 = vpack.c.b16 %v2388, %v2387
      %v2715 = vpack.c.b16 %v2390, %v2389
      %v2716 = vpack.c.b16 %v2392, %v2391
      %v2717 = vpack.c.b16 %v2394, %v2393
      %v2718 = vpack.c.b16 %v2396, %v2395
      %v2719 = vpack.c.b16 %v2398, %v2397
      %v2720 = vpack.c.b16 %v2400, %v2399
      %v2721 = vpack.c.b16 %v2402, %v2401
      %v2722 = vpack.c.b16 %v2404, %v2403
      %v2723 = vpack.c.b16 %v2406, %v2405
      %v2724 = vpack.c.b16 %v2408, %v2407
      %v2725 = vpack.c.b16 %v2410, %v2409
      %v2726 = vpack.c.b16 %v2412, %v2411
      %v2727 = vpack.c.b16 %v2414, %v2413
      %v2728 = vpack.c.b16 %v2416, %v2415
      %v2729 = vpack.c.b16 %v2418, %v2417
      %v2730 = vpack.c.b16 %v2420, %v2419
      %v2731 = vpack.c.b16 %v2422, %v2421
      %v2732 = vpack.c.b16 %v2424, %v2423
      %v2733 = vpack.c.b16 %v2426, %v2425
      %v2734 = vpack.c.b16 %v2428, %v2427
      %v2735 = vpack.c.b16 %v2430, %v2429
      %v2736 = vpack.c.b16 %v2432, %v2431
      %v2737 = vpack.c.b16 %v2434, %v2433
      %v2738 = vpack.c.b16 %v2436, %v2435
      %v2739 = vpack.c.b16 %v2438, %v2437
      %v2740 = vpack.c.b16 %v2440, %v2439
      %v2741 = vpack.c.b16 %v2442, %v2441
      %v2742 = vpack.c.b16 %v2444, %v2443
      %v2743 = vpack.c.b16 %v2446, %v2445
      %v2744 = vpack.c.b16 %v2448, %v2447
      %v2745 = vpack.c.b16 %v2450, %v2449
      %v2746 = vpack.c.b16 %v2452, %v2451
      %v2747 = vpack.c.b16 %v2454, %v2453
      %v2748 = vpack.c.b16 %v2456, %v2455
      %v2749 = vpack.c.b16 %v2458, %v2457
      %v2750 = vpack.c.b16 %v2460, %v2459
      %v2751 = vpack.c.b16 %v2462, %v2461
      %v2752 = vpack.c.b16 %v2464, %v2463
      %v2753 = vpack.c.b16 %v2466, %v2465
      %v2754 = vpack.c.b16 %v2468, %v2467
      %v2755 = vpack.c.b16 %v2470, %v2469
      %v2756 = vpack.c.b16 %v2472, %v2471
      %v2757 = vpack.c.b16 %v2474, %v2473
      %v2758 = vpack.c.b16 %v2476, %v2475
      %v2759 = vpack.c.b16 %v2478, %v2477
      %v2760 = vpack.c.b16 %v2480, %v2479
      %v2761 = vpack.c.b16 %v2482, %v2481
      %v2762 = vpack.c.b16 %v2484, %v2483
      %v2763 = vpack.c.b16 %v2486, %v2485
      %v2764 = vpack.c.b16 %v2488, %v2487
      %v2765 = vpack.c.b16 %v2490, %v2489
      %v2766 = vpack.c.b16 %v2492, %v2491
      %v2767 = vpack.c.b16 %v2494, %v2493
      %v2768 = vpack.c.b16 %v2496, %v2495
      %v2769 = vpack.c.b16 %v2498, %v2497
      %v2770 = vpack.c.b16 %v2500, %v2499
      %v2771 = vpack.c.b16 %v2502, %v2501
      %v2772 = vpack.c.b16 %v2504, %v2503
      %v2773 = vpack.c.b16 %v2506, %v2505
      %v2774 = vpack.c.b16 %v2508, %v2507
      %v2775 = vpack.c.b16 %v2510, %v2509
      %v2776 = vpack.c.b16 %v2512, %v2511
      %v2777 = vpack.c.b16 %v2514, %v2513
      %v2778 = vpack.c.b16 %v2516, %v2515
      %v2779 = vpack.c.b16 %v2518, %v2517
      %v2780 = vpack.c.b16 %v2520, %v2519
      %v2781 = vpack.c.b16 %v2522, %v2521
      %v2782 = vpack.c.b16 %v2524, %v2523
      %v2783 = vpack.c.b16 %v2526, %v2525
      %v2784 = vpack.c.b16 %v2528, %v2527
      %v2785 = vpack.c.b16 %v2530, %v2529
      %v2786 = vpack.c.b16 %v2532, %v2531
      %v2787 = vpack.c.b16 %v2534, %v2533
      %v2788 = vpack.c.b16 %v2536, %v2535
      %v2789 = vpack.c.b16 %v2538, %v2537
      %v2790 = vpack.c.b16 %v2540, %v2539
      %v2791 = vpack.c.b16 %v2542, %v2541
      %v2792 = vpack.c.b16 %v2544, %v2543
      %v2793 = vpack.c.b16 %v2546, %v2545
      %v2794 = vpack.c.b16 %v2548, %v2547
      %v2795 = vpack.c.b16 %v2550, %v2549
      %v2796 = vpack.c.b16 %v2552, %v2551
      %v2797 = vpack.c.b16 %v2554, %v2553
      %v2798 = vpack.c.b16 %v2556, %v2555
      %v2799 = vpack.c.b16 %v2558, %v2557
      %v2800 = vpack.c.b16 %v2560, %v2559
      %v2801 = vpack.c.b16 %v2562, %v2561
      %v2802 = vpack.c.b16 %v2564, %v2563
      %v2803 = vpack.c.b16 %v2566, %v2565
      %v2804 = vpack.c.b16 %v2568, %v2567
      %v2805 = vpack.c.b16 %v2570, %v2569
      %v2806 = vpack.c.b16 %v2572, %v2571
      %v2807 = vpack.c.b16 %v2574, %v2573
      %v2808 = vpack.c.b16 %v2576, %v2575
      %v2809 = vpack.c.b16 %v2578, %v2577
      %v2810 = vpack.c.b16 %v2580, %v2579
      %v2811 = vpack.c.b16 %v2582, %v2581
      %v2812 = vpack.c.b16 %v2584, %v2583
      %v2813 = vpack.c.b16 %v2586, %v2585
      %v2814 = vpack.c.b16 %v2588, %v2587
      %v2815 = vpack.c.b16 %v2590, %v2589
      %v2816 = vpack.c.b16 %v2592, %v2591
      %v2817 = vpack.c.b16 %v2594, %v2593
      %v2818 = vpack.c.b16 %v2596, %v2595
      %v2819 = vpack.c.b16 %v2598, %v2597
      %v2820 = vpack.c.b16 %v2600, %v2599
      %v2821 = vpack.c.b16 %v2602, %v2601
      %v2822 = vpack.c.b16 %v2604, %v2603
      %v2823 = vpack.c.b16 %v2606, %v2605
      %v2824 = vpack.c.b16 %v2608, %v2607
      %3041 = vmatpush.bf16.msra.mxu0 %v2616
      %3042 = vmatpush.bf16.msra.mxu0 %v2615
      %3043 = vmatpush.bf16.msra.mxu0 %v2614
      %3044 = vmatpush.bf16.msra.mxu0 %v2613
      %3045 = vmatpush.bf16.msra.mxu0 %v2612
      %3046 = vmatpush.bf16.msra.mxu0 %v2611
      %3047 = vmatpush.bf16.msra.mxu0 %v2610
      %3048 = vmatpush.bf16.msra.mxu0 %v2609
      %3049 = vmatmul.bf16.gmra.mxu0 %v1228
      %v3050 = vpop.f32.mrf.mxu0
      %v3051 = vadd.f32 %v1743, %v3050
      %v3052 = vpop.f32.mrf.mxu0
      %v3053 = vadd.f32 %v1743, %v3052
      %3054 = vmatmul.bf16.gmra.mxu0 %v1234
      %v3055 = vpop.f32.mrf.mxu0
      %v3056 = vadd.f32 %v1743, %v3055
      %v3057 = vpop.f32.mrf.mxu0
      %v3058 = vadd.f32 %v1743, %v3057
      %3059 = vmatmul.bf16.gmra.mxu0 %v1258
      %v3060 = vpop.f32.mrf.mxu0
      %v3061 = vadd.f32 %v1743, %v3060
      %v3062 = vpop.f32.mrf.mxu0
      %v3063 = vadd.f32 %v1743, %v3062
      %3064 = vmatmul.bf16.gmra.mxu0 %v1276
      %v3065 = vpop.f32.mrf.mxu0
      %v3066 = vadd.f32 %v1743, %v3065
      %v3067 = vpop.f32.mrf.mxu0
      %v3068 = vadd.f32 %v1743, %v3067
      %3069 = vdwg.mxu0
      %3070 = vmatpush.bf16.msra.mxu0 %v2624
      %3071 = vmatpush.bf16.msra.mxu0 %v2623
      %3072 = vmatpush.bf16.msra.mxu0 %v2622
      %3073 = vmatpush.bf16.msra.mxu0 %v2621
      %3074 = vmatpush.bf16.msra.mxu0 %v2620
      %3075 = vmatpush.bf16.msra.mxu0 %v2619
      %3076 = vmatpush.bf16.msra.mxu0 %v2618
      %3077 = vmatpush.bf16.msra.mxu0 %v2617
      %3078 = vmatmul.bf16.gmra.mxu0 %v1229
      %v3079 = vpop.f32.mrf.mxu0
      %v3080 = vadd.f32 %v3051, %v3079
      %v3081 = vpop.f32.mrf.mxu0
      %v3082 = vadd.f32 %v3053, %v3081
      %3083 = vmatmul.bf16.gmra.mxu0 %v1235
      %v3084 = vpop.f32.mrf.mxu0
      %v3085 = vadd.f32 %v3056, %v3084
      %v3086 = vpop.f32.mrf.mxu0
      %v3087 = vadd.f32 %v3058, %v3086
      %3088 = vmatmul.bf16.gmra.mxu0 %v1259
      %v3089 = vpop.f32.mrf.mxu0
      %v3090 = vadd.f32 %v3061, %v3089
      %v3091 = vpop.f32.mrf.mxu0
      %v3092 = vadd.f32 %v3063, %v3091
      %3093 = vmatmul.bf16.gmra.mxu0 %v1277
      %v3094 = vpop.f32.mrf.mxu0
      %v3095 = vadd.f32 %v3066, %v3094
      %v3096 = vpop.f32.mrf.mxu0
      %v3097 = vadd.f32 %v3068, %v3096
      %3098 = vdwg.mxu0
      %3099 = vmatpush.bf16.msra.mxu0 %v2632
      %3100 = vmatpush.bf16.msra.mxu0 %v2631
      %3101 = vmatpush.bf16.msra.mxu0 %v2630
      %3102 = vmatpush.bf16.msra.mxu0 %v2629
      %3103 = vmatpush.bf16.msra.mxu0 %v2628
      %3104 = vmatpush.bf16.msra.mxu0 %v2627
      %3105 = vmatpush.bf16.msra.mxu0 %v2626
      %3106 = vmatpush.bf16.msra.mxu0 %v2625
      %3107 = vmatmul.bf16.gmra.mxu0 %v1230
      %v3108 = vpop.f32.mrf.mxu0
      %v3109 = vadd.f32 %v3080, %v3108
      %v3110 = vpop.f32.mrf.mxu0
      %v3111 = vadd.f32 %v3082, %v3110
      %3112 = vmatmul.bf16.gmra.mxu0 %v1236
      %v3113 = vpop.f32.mrf.mxu0
      %v3114 = vadd.f32 %v3085, %v3113
      %v3115 = vpop.f32.mrf.mxu0
      %v3116 = vadd.f32 %v3087, %v3115
      %3117 = vmatmul.bf16.gmra.mxu0 %v1260
      %v3118 = vpop.f32.mrf.mxu0
      %v3119 = vadd.f32 %v3090, %v3118
      %v3120 = vpop.f32.mrf.mxu0
      %v3121 = vadd.f32 %v3092, %v3120
      %3122 = vmatmul.bf16.gmra.mxu0 %v1278
      %v3123 = vpop.f32.mrf.mxu0
      %v3124 = vadd.f32 %v3095, %v3123
      %v3125 = vpop.f32.mrf.mxu0
      %v3126 = vadd.f32 %v3097, %v3125
      %3127 = vdwg.mxu0
      %3128 = vmatpush.bf16.msra.mxu0 %v2640
      %3129 = vmatpush.bf16.msra.mxu0 %v2639
      %3130 = vmatpush.bf16.msra.mxu0 %v2638
      %3131 = vmatpush.bf16.msra.mxu0 %v2637
      %3132 = vmatpush.bf16.msra.mxu0 %v2636
      %3133 = vmatpush.bf16.msra.mxu0 %v2635
      %3134 = vmatpush.bf16.msra.mxu0 %v2634
      %3135 = vmatpush.bf16.msra.mxu0 %v2633
      %3136 = vmatmul.bf16.gmra.mxu0 %v1231
      %v3137 = vpop.f32.mrf.mxu0
      %v3138 = vadd.f32 %v3109, %v3137
      %v3139 = vpop.f32.mrf.mxu0
      %v3140 = vadd.f32 %v3111, %v3139
      %3141 = vmatmul.bf16.gmra.mxu0 %v1255
      %v3142 = vpop.f32.mrf.mxu0
      %v3143 = vadd.f32 %v3114, %v3142
      %v3144 = vpop.f32.mrf.mxu0
      %v3145 = vadd.f32 %v3116, %v3144
      %3146 = vmatmul.bf16.gmra.mxu0 %v1273
      %v3147 = vpop.f32.mrf.mxu0
      %v3148 = vadd.f32 %v3119, %v3147
      %v3149 = vpop.f32.mrf.mxu0
      %v3150 = vadd.f32 %v3121, %v3149
      %3151 = vmatmul.bf16.gmra.mxu0 %v1291
      %v3152 = vpop.f32.mrf.mxu0
      %v3153 = vadd.f32 %v3124, %v3152
      %v3154 = vpop.f32.mrf.mxu0
      %v3155 = vadd.f32 %v3126, %v3154
      %3156 = vdwg.mxu0
      %3157 = vmatpush.bf16.msra.mxu0 %v2648
      %3158 = vmatpush.bf16.msra.mxu0 %v2647
      %3159 = vmatpush.bf16.msra.mxu0 %v2646
      %3160 = vmatpush.bf16.msra.mxu0 %v2645
      %3161 = vmatpush.bf16.msra.mxu0 %v2644
      %3162 = vmatpush.bf16.msra.mxu0 %v2643
      %3163 = vmatpush.bf16.msra.mxu0 %v2642
      %3164 = vmatpush.bf16.msra.mxu0 %v2641
      %3165 = vmatmul.bf16.gmra.mxu0 %v1232
      %v3166 = vpop.f32.mrf.mxu0
      %v3167 = vadd.f32 %v3138, %v3166
      %v3168 = vpop.f32.mrf.mxu0
      %v3169 = vadd.f32 %v3140, %v3168
      %3170 = vmatmul.bf16.gmra.mxu0 %v1256
      %v3171 = vpop.f32.mrf.mxu0
      %v3172 = vadd.f32 %v3143, %v3171
      %v3173 = vpop.f32.mrf.mxu0
      %v3174 = vadd.f32 %v3145, %v3173
      %3175 = vmatmul.bf16.gmra.mxu0 %v1274
      %v3176 = vpop.f32.mrf.mxu0
      %v3177 = vadd.f32 %v3148, %v3176
      %v3178 = vpop.f32.mrf.mxu0
      %v3179 = vadd.f32 %v3150, %v3178
      %3180 = vmatmul.bf16.gmra.mxu0 %v1292
      %v3181 = vpop.f32.mrf.mxu0
      %v3182 = vadd.f32 %v3153, %v3181
      %v3183 = vpop.f32.mrf.mxu0
      %v3184 = vadd.f32 %v3155, %v3183
      %3185 = vdwg.mxu0
      %3186 = vmatpush.bf16.msra.mxu0 %v2656
      %3187 = vmatpush.bf16.msra.mxu0 %v2655
      %3188 = vmatpush.bf16.msra.mxu0 %v2654
      %3189 = vmatpush.bf16.msra.mxu0 %v2653
      %3190 = vmatpush.bf16.msra.mxu0 %v2652
      %3191 = vmatpush.bf16.msra.mxu0 %v2651
      %3192 = vmatpush.bf16.msra.mxu0 %v2650
      %3193 = vmatpush.bf16.msra.mxu0 %v2649
      %3194 = vmatmul.bf16.gmra.mxu0 %v1233
      %v3195 = vpop.f32.mrf.mxu0
      %v3196 = vadd.f32 %v3167, %v3195
      %v3197 = vpop.f32.mrf.mxu0
      %v3198 = vadd.f32 %v3169, %v3197
      %3199 = vmatmul.bf16.gmra.mxu0 %v1257
      %v3200 = vpop.f32.mrf.mxu0
      %v3201 = vadd.f32 %v3172, %v3200
      %v3202 = vpop.f32.mrf.mxu0
      %v3203 = vadd.f32 %v3174, %v3202
      %3204 = vmatmul.bf16.gmra.mxu0 %v1275
      %v3205 = vpop.f32.mrf.mxu0
      %v3206 = vadd.f32 %v3177, %v3205
      %v3207 = vpop.f32.mrf.mxu0
      %v3208 = vadd.f32 %v3179, %v3207
      %3209 = vmatmul.bf16.gmra.mxu0 %v1293
      %v3210 = vpop.f32.mrf.mxu0
      %v3211 = vadd.f32 %v3182, %v3210
      %v3212 = vpop.f32.mrf.mxu0
      %v3213 = vadd.f32 %v3184, %v3212
      %3214 = vdwg.mxu0
      %3215 = vmatpush.bf16.msra.mxu0 %v2664
      %3216 = vmatpush.bf16.msra.mxu0 %v2663
      %3217 = vmatpush.bf16.msra.mxu0 %v2662
      %3218 = vmatpush.bf16.msra.mxu0 %v2661
      %3219 = vmatpush.bf16.msra.mxu0 %v2660
      %3220 = vmatpush.bf16.msra.mxu0 %v2659
      %3221 = vmatpush.bf16.msra.mxu0 %v2658
      %3222 = vmatpush.bf16.msra.mxu0 %v2657
      %3223 = vmatmul.bf16.gmra.mxu0 %v1234
      %v3224 = vpop.f32.mrf.mxu0
      %v3225 = vadd.f32 %v3196, %v3224
      %v3226 = vpop.f32.mrf.mxu0
      %v3227 = vadd.f32 %v3198, %v3226
      %3228 = vmatmul.bf16.gmra.mxu0 %v1258
      %v3229 = vpop.f32.mrf.mxu0
      %v3230 = vadd.f32 %v3201, %v3229
      %v3231 = vpop.f32.mrf.mxu0
      %v3232 = vadd.f32 %v3203, %v3231
      %3233 = vmatmul.bf16.gmra.mxu0 %v1276
      %v3234 = vpop.f32.mrf.mxu0
      %v3235 = vadd.f32 %v3206, %v3234
      %v3236 = vpop.f32.mrf.mxu0
      %v3237 = vadd.f32 %v3208, %v3236
      %3238 = vmatmul.bf16.gmra.mxu0 %v1294
      %v3239 = vpop.f32.mrf.mxu0
      %v3240 = vadd.f32 %v3211, %v3239
      %v3241 = vpop.f32.mrf.mxu0
      %v3242 = vadd.f32 %v3213, %v3241
      %3243 = vdwg.mxu0
      %3244 = vmatpush.bf16.msra.mxu0 %v2672
      %3245 = vmatpush.bf16.msra.mxu0 %v2671
      %3246 = vmatpush.bf16.msra.mxu0 %v2670
      %3247 = vmatpush.bf16.msra.mxu0 %v2669
      %3248 = vmatpush.bf16.msra.mxu0 %v2668
      %3249 = vmatpush.bf16.msra.mxu0 %v2667
      %3250 = vmatpush.bf16.msra.mxu0 %v2666
      %3251 = vmatpush.bf16.msra.mxu0 %v2665
      %3252 = vmatmul.bf16.gmra.mxu0 %v1235
      %v3253 = vpop.f32.mrf.mxu0
      %v3254 = vadd.f32 %v3225, %v3253
      %v3255 = vpop.f32.mrf.mxu0
      %v3256 = vadd.f32 %v3227, %v3255
      %3257 = vmatmul.bf16.gmra.mxu0 %v1259
      %v3258 = vpop.f32.mrf.mxu0
      %v3259 = vadd.f32 %v3230, %v3258
      %v3260 = vpop.f32.mrf.mxu0
      %v3261 = vadd.f32 %v3232, %v3260
      %3262 = vmatmul.bf16.gmra.mxu0 %v1277
      %v3263 = vpop.f32.mrf.mxu0
      %v3264 = vadd.f32 %v3235, %v3263
      %v3265 = vpop.f32.mrf.mxu0
      %v3266 = vadd.f32 %v3237, %v3265
      %3267 = vmatmul.bf16.gmra.mxu0 %v1295
      %v3268 = vpop.f32.mrf.mxu0
      %v3269 = vadd.f32 %v3240, %v3268
      %v3270 = vpop.f32.mrf.mxu0
      %v3271 = vadd.f32 %v3242, %v3270
      %3272 = vdwg.mxu0
      %3273 = vmatpush.bf16.msra.mxu0 %v2680
      %3274 = vmatpush.bf16.msra.mxu0 %v2679
      %3275 = vmatpush.bf16.msra.mxu0 %v2678
      %3276 = vmatpush.bf16.msra.mxu0 %v2677
      %3277 = vmatpush.bf16.msra.mxu0 %v2676
      %3278 = vmatpush.bf16.msra.mxu0 %v2675
      %3279 = vmatpush.bf16.msra.mxu0 %v2674
      %3280 = vmatpush.bf16.msra.mxu0 %v2673
      %3281 = vmatmul.bf16.gmra.mxu0 %v1236
      %v3282 = vpop.f32.mrf.mxu0
      %v3283 = vadd.f32 %v3254, %v3282
      %v3284 = vpop.f32.mrf.mxu0
      %v3285 = vadd.f32 %v3256, %v3284
      %3286 = vmatmul.bf16.gmra.mxu0 %v1260
      %v3287 = vpop.f32.mrf.mxu0
      %v3288 = vadd.f32 %v3259, %v3287
      %v3289 = vpop.f32.mrf.mxu0
      %v3290 = vadd.f32 %v3261, %v3289
      %3291 = vmatmul.bf16.gmra.mxu0 %v1278
      %v3292 = vpop.f32.mrf.mxu0
      %v3293 = vadd.f32 %v3264, %v3292
      %v3294 = vpop.f32.mrf.mxu0
      %v3295 = vadd.f32 %v3266, %v3294
      %3296 = vmatmul.bf16.gmra.mxu0 %v1296
      %v3297 = vpop.f32.mrf.mxu0
      %v3298 = vadd.f32 %v3269, %v3297
      %v3299 = vpop.f32.mrf.mxu0
      %v3300 = vadd.f32 %v3271, %v3299
      %3301 = vdwg.mxu0
      %3302 = vmatpush.bf16.msra.mxu0 %v2688
      %3303 = vmatpush.bf16.msra.mxu0 %v2687
      %3304 = vmatpush.bf16.msra.mxu0 %v2686
      %3305 = vmatpush.bf16.msra.mxu0 %v2685
      %3306 = vmatpush.bf16.msra.mxu0 %v2684
      %3307 = vmatpush.bf16.msra.mxu0 %v2683
      %3308 = vmatpush.bf16.msra.mxu0 %v2682
      %3309 = vmatpush.bf16.msra.mxu0 %v2681
      %3310 = vmatmul.bf16.gmra.mxu0 %v1237
      %v3311 = vpop.f32.mrf.mxu0
      %v3312 = vadd.f32 %v3283, %v3311
      %v3313 = vpop.f32.mrf.mxu0
      %v3314 = vadd.f32 %v3285, %v3313
      %3315 = vmatmul.bf16.gmra.mxu0 %v1243
      %v3316 = vpop.f32.mrf.mxu0
      %v3317 = vadd.f32 %v3288, %v3316
      %v3318 = vpop.f32.mrf.mxu0
      %v3319 = vadd.f32 %v3290, %v3318
      %3320 = vmatmul.bf16.gmra.mxu0 %v1264
      %v3321 = vpop.f32.mrf.mxu0
      %v3322 = vadd.f32 %v3293, %v3321
      %v3323 = vpop.f32.mrf.mxu0
      %v3324 = vadd.f32 %v3295, %v3323
      %3325 = vmatmul.bf16.gmra.mxu0 %v1282
      %v3326 = vpop.f32.mrf.mxu0
      %v3327 = vadd.f32 %v3298, %v3326
      %v3328 = vpop.f32.mrf.mxu0
      %v3329 = vadd.f32 %v3300, %v3328
      %3330 = vdwg.mxu0
      %3331 = vmatpush.bf16.msra.mxu0 %v2696
      %3332 = vmatpush.bf16.msra.mxu0 %v2695
      %3333 = vmatpush.bf16.msra.mxu0 %v2694
      %3334 = vmatpush.bf16.msra.mxu0 %v2693
      %3335 = vmatpush.bf16.msra.mxu0 %v2692
      %3336 = vmatpush.bf16.msra.mxu0 %v2691
      %3337 = vmatpush.bf16.msra.mxu0 %v2690
      %3338 = vmatpush.bf16.msra.mxu0 %v2689
      %3339 = vmatmul.bf16.gmra.mxu0 %v1238
      %v3340 = vpop.f32.mrf.mxu0
      %v3341 = vadd.f32 %v3312, %v3340
      %v3342 = vpop.f32.mrf.mxu0
      %v3343 = vadd.f32 %v3314, %v3342
      %3344 = vmatmul.bf16.gmra.mxu0 %v1244
      %v3345 = vpop.f32.mrf.mxu0
      %v3346 = vadd.f32 %v3317, %v3345
      %v3347 = vpop.f32.mrf.mxu0
      %v3348 = vadd.f32 %v3319, %v3347
      %3349 = vmatmul.bf16.gmra.mxu0 %v1265
      %v3350 = vpop.f32.mrf.mxu0
      %v3351 = vadd.f32 %v3322, %v3350
      %v3352 = vpop.f32.mrf.mxu0
      %v3353 = vadd.f32 %v3324, %v3352
      %3354 = vmatmul.bf16.gmra.mxu0 %v1283
      %v3355 = vpop.f32.mrf.mxu0
      %v3356 = vadd.f32 %v3327, %v3355
      %v3357 = vpop.f32.mrf.mxu0
      %v3358 = vadd.f32 %v3329, %v3357
      %3359 = vdwg.mxu0
      %3360 = vmatpush.bf16.msra.mxu0 %v2704
      %3361 = vmatpush.bf16.msra.mxu0 %v2703
      %3362 = vmatpush.bf16.msra.mxu0 %v2702
      %3363 = vmatpush.bf16.msra.mxu0 %v2701
      %3364 = vmatpush.bf16.msra.mxu0 %v2700
      %3365 = vmatpush.bf16.msra.mxu0 %v2699
      %3366 = vmatpush.bf16.msra.mxu0 %v2698
      %3367 = vmatpush.bf16.msra.mxu0 %v2697
      %3368 = vmatmul.bf16.gmra.mxu0 %v1239
      %v3369 = vpop.f32.mrf.mxu0
      %v3370 = vadd.f32 %v3341, %v3369
      %v3371 = vpop.f32.mrf.mxu0
      %v3372 = vadd.f32 %v3343, %v3371
      %3373 = vmatmul.bf16.gmra.mxu0 %v1245
      %v3374 = vpop.f32.mrf.mxu0
      %v3375 = vadd.f32 %v3346, %v3374
      %v3376 = vpop.f32.mrf.mxu0
      %v3377 = vadd.f32 %v3348, %v3376
      %3378 = vmatmul.bf16.gmra.mxu0 %v1266
      %v3379 = vpop.f32.mrf.mxu0
      %v3380 = vadd.f32 %v3351, %v3379
      %v3381 = vpop.f32.mrf.mxu0
      %v3382 = vadd.f32 %v3353, %v3381
      %3383 = vmatmul.bf16.gmra.mxu0 %v1284
      %v3384 = vpop.f32.mrf.mxu0
      %v3385 = vadd.f32 %v3356, %v3384
      %v3386 = vpop.f32.mrf.mxu0
      %v3387 = vadd.f32 %v3358, %v3386
      %3388 = vdwg.mxu0
      %3389 = vmatpush.bf16.msra.mxu0 %v2712
      %3390 = vmatpush.bf16.msra.mxu0 %v2711
      %3391 = vmatpush.bf16.msra.mxu0 %v2710
      %3392 = vmatpush.bf16.msra.mxu0 %v2709
      %3393 = vmatpush.bf16.msra.mxu0 %v2708
      %3394 = vmatpush.bf16.msra.mxu0 %v2707
      %3395 = vmatpush.bf16.msra.mxu0 %v2706
      %3396 = vmatpush.bf16.msra.mxu0 %v2705
      %3397 = vmatmul.bf16.gmra.mxu0 %v1240
      %v3398 = vpop.f32.mrf.mxu0
      %v3399 = vadd.f32 %v3370, %v3398
      %v3400 = vpop.f32.mrf.mxu0
      %v3401 = vadd.f32 %v3372, %v3400
      %3402 = vmatmul.bf16.gmra.mxu0 %v1261
      %v3403 = vpop.f32.mrf.mxu0
      %v3404 = vadd.f32 %v3375, %v3403
      %v3405 = vpop.f32.mrf.mxu0
      %v3406 = vadd.f32 %v3377, %v3405
      %3407 = vmatmul.bf16.gmra.mxu0 %v1279
      %v3408 = vpop.f32.mrf.mxu0
      %v3409 = vadd.f32 %v3380, %v3408
      %v3410 = vpop.f32.mrf.mxu0
      %v3411 = vadd.f32 %v3382, %v3410
      %3412 = vmatmul.bf16.gmra.mxu0 %v1297
      %v3413 = vpop.f32.mrf.mxu0
      %v3414 = vadd.f32 %v3385, %v3413
      %v3415 = vpop.f32.mrf.mxu0
      %v3416 = vadd.f32 %v3387, %v3415
      %3417 = vdwg.mxu0
      %3418 = vmatpush.bf16.msra.mxu0 %v2720
      %3419 = vmatpush.bf16.msra.mxu0 %v2719
      %3420 = vmatpush.bf16.msra.mxu0 %v2718
      %3421 = vmatpush.bf16.msra.mxu0 %v2717
      %3422 = vmatpush.bf16.msra.mxu0 %v2716
      %3423 = vmatpush.bf16.msra.mxu0 %v2715
      %3424 = vmatpush.bf16.msra.mxu0 %v2714
      %3425 = vmatpush.bf16.msra.mxu0 %v2713
      %3426 = vmatmul.bf16.gmra.mxu0 %v1241
      %v3427 = vpop.f32.mrf.mxu0
      %v3428 = vadd.f32 %v3399, %v3427
      %v3429 = vpop.f32.mrf.mxu0
      %v3430 = vadd.f32 %v3401, %v3429
      %3431 = vmatmul.bf16.gmra.mxu0 %v1262
      %v3432 = vpop.f32.mrf.mxu0
      %v3433 = vadd.f32 %v3404, %v3432
      %v3434 = vpop.f32.mrf.mxu0
      %v3435 = vadd.f32 %v3406, %v3434
      %3436 = vmatmul.bf16.gmra.mxu0 %v1280
      %v3437 = vpop.f32.mrf.mxu0
      %v3438 = vadd.f32 %v3409, %v3437
      %v3439 = vpop.f32.mrf.mxu0
      %v3440 = vadd.f32 %v3411, %v3439
      %3441 = vmatmul.bf16.gmra.mxu0 %v1298
      %v3442 = vpop.f32.mrf.mxu0
      %v3443 = vadd.f32 %v3414, %v3442
      %v3444 = vpop.f32.mrf.mxu0
      %v3445 = vadd.f32 %v3416, %v3444
      %3446 = vdwg.mxu0
      %3447 = vmatpush.bf16.msra.mxu0 %v2728
      %3448 = vmatpush.bf16.msra.mxu0 %v2727
      %3449 = vmatpush.bf16.msra.mxu0 %v2726
      %3450 = vmatpush.bf16.msra.mxu0 %v2725
      %3451 = vmatpush.bf16.msra.mxu0 %v2724
      %3452 = vmatpush.bf16.msra.mxu0 %v2723
      %3453 = vmatpush.bf16.msra.mxu0 %v2722
      %3454 = vmatpush.bf16.msra.mxu0 %v2721
      %3455 = vmatmul.bf16.gmra.mxu0 %v1242
      %v3456 = vpop.f32.mrf.mxu0
      %v3457 = vadd.f32 %v3428, %v3456
      %v3458 = vpop.f32.mrf.mxu0
      %v3459 = vadd.f32 %v3430, %v3458
      %3460 = vmatmul.bf16.gmra.mxu0 %v1263
      %v3461 = vpop.f32.mrf.mxu0
      %v3462 = vadd.f32 %v3433, %v3461
      %v3463 = vpop.f32.mrf.mxu0
      %v3464 = vadd.f32 %v3435, %v3463
      %3465 = vmatmul.bf16.gmra.mxu0 %v1281
      %v3466 = vpop.f32.mrf.mxu0
      %v3467 = vadd.f32 %v3438, %v3466
      %v3468 = vpop.f32.mrf.mxu0
      %v3469 = vadd.f32 %v3440, %v3468
      %3470 = vmatmul.bf16.gmra.mxu0 %v1299
      %v3471 = vpop.f32.mrf.mxu0
      %v3472 = vadd.f32 %v3443, %v3471
      %v3473 = vpop.f32.mrf.mxu0
      %v3474 = vadd.f32 %v3445, %v3473
      %3475 = vdwg.mxu0
      %3476 = vmatpush.bf16.msra.mxu0 %v2736
      %3477 = vmatpush.bf16.msra.mxu0 %v2735
      %3478 = vmatpush.bf16.msra.mxu0 %v2734
      %3479 = vmatpush.bf16.msra.mxu0 %v2733
      %3480 = vmatpush.bf16.msra.mxu0 %v2732
      %3481 = vmatpush.bf16.msra.mxu0 %v2731
      %3482 = vmatpush.bf16.msra.mxu0 %v2730
      %3483 = vmatpush.bf16.msra.mxu0 %v2729
      %3484 = vmatmul.bf16.gmra.mxu0 %v1243
      %v3485 = vpop.f32.mrf.mxu0
      %v3486 = vadd.f32 %v3457, %v3485
      %v3487 = vpop.f32.mrf.mxu0
      %v3488 = vadd.f32 %v3459, %v3487
      %3489 = vmatmul.bf16.gmra.mxu0 %v1264
      %v3490 = vpop.f32.mrf.mxu0
      %v3491 = vadd.f32 %v3462, %v3490
      %v3492 = vpop.f32.mrf.mxu0
      %v3493 = vadd.f32 %v3464, %v3492
      %3494 = vmatmul.bf16.gmra.mxu0 %v1282
      %v3495 = vpop.f32.mrf.mxu0
      %v3496 = vadd.f32 %v3467, %v3495
      %v3497 = vpop.f32.mrf.mxu0
      %v3498 = vadd.f32 %v3469, %v3497
      %3499 = vmatmul.bf16.gmra.mxu0 %v1300
      %v3500 = vpop.f32.mrf.mxu0
      %v3501 = vadd.f32 %v3472, %v3500
      %v3502 = vpop.f32.mrf.mxu0
      %v3503 = vadd.f32 %v3474, %v3502
      %3504 = vdwg.mxu0
      %3505 = vmatpush.bf16.msra.mxu0 %v2744
      %3506 = vmatpush.bf16.msra.mxu0 %v2743
      %3507 = vmatpush.bf16.msra.mxu0 %v2742
      %3508 = vmatpush.bf16.msra.mxu0 %v2741
      %3509 = vmatpush.bf16.msra.mxu0 %v2740
      %3510 = vmatpush.bf16.msra.mxu0 %v2739
      %3511 = vmatpush.bf16.msra.mxu0 %v2738
      %3512 = vmatpush.bf16.msra.mxu0 %v2737
      %3513 = vmatmul.bf16.gmra.mxu0 %v1244
      %v3514 = vpop.f32.mrf.mxu0
      %v3515 = vadd.f32 %v3486, %v3514
      %v3516 = vpop.f32.mrf.mxu0
      %v3517 = vadd.f32 %v3488, %v3516
      %3518 = vmatmul.bf16.gmra.mxu0 %v1265
      %v3519 = vpop.f32.mrf.mxu0
      %v3520 = vadd.f32 %v3491, %v3519
      %v3521 = vpop.f32.mrf.mxu0
      %v3522 = vadd.f32 %v3493, %v3521
      %3523 = vmatmul.bf16.gmra.mxu0 %v1283
      %v3524 = vpop.f32.mrf.mxu0
      %v3525 = vadd.f32 %v3496, %v3524
      %v3526 = vpop.f32.mrf.mxu0
      %v3527 = vadd.f32 %v3498, %v3526
      %3528 = vmatmul.bf16.gmra.mxu0 %v1301
      %v3529 = vpop.f32.mrf.mxu0
      %v3530 = vadd.f32 %v3501, %v3529
      %v3531 = vpop.f32.mrf.mxu0
      %v3532 = vadd.f32 %v3503, %v3531
      %3533 = vdwg.mxu0
      %3534 = vmatpush.bf16.msra.mxu0 %v2752
      %3535 = vmatpush.bf16.msra.mxu0 %v2751
      %3536 = vmatpush.bf16.msra.mxu0 %v2750
      %3537 = vmatpush.bf16.msra.mxu0 %v2749
      %3538 = vmatpush.bf16.msra.mxu0 %v2748
      %3539 = vmatpush.bf16.msra.mxu0 %v2747
      %3540 = vmatpush.bf16.msra.mxu0 %v2746
      %3541 = vmatpush.bf16.msra.mxu0 %v2745
      %3542 = vmatmul.bf16.gmra.mxu0 %v1245
      %v3543 = vpop.f32.mrf.mxu0
      %v3544 = vadd.f32 %v3515, %v3543
      %v3545 = vpop.f32.mrf.mxu0
      %v3546 = vadd.f32 %v3517, %v3545
      %3547 = vmatmul.bf16.gmra.mxu0 %v1266
      %v3548 = vpop.f32.mrf.mxu0
      %v3549 = vadd.f32 %v3520, %v3548
      %v3550 = vpop.f32.mrf.mxu0
      %v3551 = vadd.f32 %v3522, %v3550
      %3552 = vmatmul.bf16.gmra.mxu0 %v1284
      %v3553 = vpop.f32.mrf.mxu0
      %v3554 = vadd.f32 %v3525, %v3553
      %v3555 = vpop.f32.mrf.mxu0
      %v3556 = vadd.f32 %v3527, %v3555
      %3557 = vmatmul.bf16.gmra.mxu0 %v1302
      %v3558 = vpop.f32.mrf.mxu0
      %v3559 = vadd.f32 %v3530, %v3558
      %v3560 = vpop.f32.mrf.mxu0
      %v3561 = vadd.f32 %v3532, %v3560
      %3562 = vdwg.mxu0
      %3563 = vmatpush.bf16.msra.mxu0 %v2760
      %3564 = vmatpush.bf16.msra.mxu0 %v2759
      %3565 = vmatpush.bf16.msra.mxu0 %v2758
      %3566 = vmatpush.bf16.msra.mxu0 %v2757
      %3567 = vmatpush.bf16.msra.mxu0 %v2756
      %3568 = vmatpush.bf16.msra.mxu0 %v2755
      %3569 = vmatpush.bf16.msra.mxu0 %v2754
      %3570 = vmatpush.bf16.msra.mxu0 %v2753
      %3571 = vmatmul.bf16.gmra.mxu0 %v1246
      %v3572 = vpop.f32.mrf.mxu0
      %v3573 = vadd.f32 %v3544, %v3572
      %v3574 = vpop.f32.mrf.mxu0
      %v3575 = vadd.f32 %v3546, %v3574
      %3576 = vmatmul.bf16.gmra.mxu0 %v1252
      %v3577 = vpop.f32.mrf.mxu0
      %v3578 = vadd.f32 %v3549, %v3577
      %v3579 = vpop.f32.mrf.mxu0
      %v3580 = vadd.f32 %v3551, %v3579
      %3581 = vmatmul.bf16.gmra.mxu0 %v1270
      %v3582 = vpop.f32.mrf.mxu0
      %v3583 = vadd.f32 %v3554, %v3582
      %v3584 = vpop.f32.mrf.mxu0
      %v3585 = vadd.f32 %v3556, %v3584
      %3586 = vmatmul.bf16.gmra.mxu0 %v1288
      %v3587 = vpop.f32.mrf.mxu0
      %v3588 = vadd.f32 %v3559, %v3587
      %v3589 = vpop.f32.mrf.mxu0
      %v3590 = vadd.f32 %v3561, %v3589
      %3591 = vdwg.mxu0
      %3592 = vmatpush.bf16.msra.mxu0 %v2768
      %3593 = vmatpush.bf16.msra.mxu0 %v2767
      %3594 = vmatpush.bf16.msra.mxu0 %v2766
      %3595 = vmatpush.bf16.msra.mxu0 %v2765
      %3596 = vmatpush.bf16.msra.mxu0 %v2764
      %3597 = vmatpush.bf16.msra.mxu0 %v2763
      %3598 = vmatpush.bf16.msra.mxu0 %v2762
      %3599 = vmatpush.bf16.msra.mxu0 %v2761
      %3600 = vmatmul.bf16.gmra.mxu0 %v1247
      %v3601 = vpop.f32.mrf.mxu0
      %v3602 = vadd.f32 %v3573, %v3601
      %v3603 = vpop.f32.mrf.mxu0
      %v3604 = vadd.f32 %v3575, %v3603
      %3605 = vmatmul.bf16.gmra.mxu0 %v1253
      %v3606 = vpop.f32.mrf.mxu0
      %v3607 = vadd.f32 %v3578, %v3606
      %v3608 = vpop.f32.mrf.mxu0
      %v3609 = vadd.f32 %v3580, %v3608
      %3610 = vmatmul.bf16.gmra.mxu0 %v1271
      %v3611 = vpop.f32.mrf.mxu0
      %v3612 = vadd.f32 %v3583, %v3611
      %v3613 = vpop.f32.mrf.mxu0
      %v3614 = vadd.f32 %v3585, %v3613
      %3615 = vmatmul.bf16.gmra.mxu0 %v1289
      %v3616 = vpop.f32.mrf.mxu0
      %v3617 = vadd.f32 %v3588, %v3616
      %v3618 = vpop.f32.mrf.mxu0
      %v3619 = vadd.f32 %v3590, %v3618
      %3620 = vdwg.mxu0
      %3621 = vmatpush.bf16.msra.mxu0 %v2776
      %3622 = vmatpush.bf16.msra.mxu0 %v2775
      %3623 = vmatpush.bf16.msra.mxu0 %v2774
      %3624 = vmatpush.bf16.msra.mxu0 %v2773
      %3625 = vmatpush.bf16.msra.mxu0 %v2772
      %3626 = vmatpush.bf16.msra.mxu0 %v2771
      %3627 = vmatpush.bf16.msra.mxu0 %v2770
      %3628 = vmatpush.bf16.msra.mxu0 %v2769
      %3629 = vmatmul.bf16.gmra.mxu0 %v1248
      %v3630 = vpop.f32.mrf.mxu0
      %v3631 = vadd.f32 %v3602, %v3630
      %v3632 = vpop.f32.mrf.mxu0
      %v3633 = vadd.f32 %v3604, %v3632
      %3634 = vmatmul.bf16.gmra.mxu0 %v1254
      %v3635 = vpop.f32.mrf.mxu0
      %v3636 = vadd.f32 %v3607, %v3635
      %v3637 = vpop.f32.mrf.mxu0
      %v3638 = vadd.f32 %v3609, %v3637
      %3639 = vmatmul.bf16.gmra.mxu0 %v1272
      %v3640 = vpop.f32.mrf.mxu0
      %v3641 = vadd.f32 %v3612, %v3640
      %v3642 = vpop.f32.mrf.mxu0
      %v3643 = vadd.f32 %v3614, %v3642
      %3644 = vmatmul.bf16.gmra.mxu0 %v1290
      %v3645 = vpop.f32.mrf.mxu0
      %v3646 = vadd.f32 %v3617, %v3645
      %v3647 = vpop.f32.mrf.mxu0
      %v3648 = vadd.f32 %v3619, %v3647
      %3649 = vdwg.mxu0
      %3650 = vmatpush.bf16.msra.mxu0 %v2784
      %3651 = vmatpush.bf16.msra.mxu0 %v2783
      %3652 = vmatpush.bf16.msra.mxu0 %v2782
      %3653 = vmatpush.bf16.msra.mxu0 %v2781
      %3654 = vmatpush.bf16.msra.mxu0 %v2780
      %3655 = vmatpush.bf16.msra.mxu0 %v2779
      %3656 = vmatpush.bf16.msra.mxu0 %v2778
      %3657 = vmatpush.bf16.msra.mxu0 %v2777
      %3658 = vmatmul.bf16.gmra.mxu0 %v1249
      %v3659 = vpop.f32.mrf.mxu0
      %v3660 = vadd.f32 %v3631, %v3659
      %v3661 = vpop.f32.mrf.mxu0
      %v3662 = vadd.f32 %v3633, %v3661
      %3663 = vmatmul.bf16.gmra.mxu0 %v1267
      %v3664 = vpop.f32.mrf.mxu0
      %v3665 = vadd.f32 %v3636, %v3664
      %v3666 = vpop.f32.mrf.mxu0
      %v3667 = vadd.f32 %v3638, %v3666
      %3668 = vmatmul.bf16.gmra.mxu0 %v1285
      %v3669 = vpop.f32.mrf.mxu0
      %v3670 = vadd.f32 %v3641, %v3669
      %v3671 = vpop.f32.mrf.mxu0
      %v3672 = vadd.f32 %v3643, %v3671
      %3673 = vmatmul.bf16.gmra.mxu0 %v1303
      %v3674 = vpop.f32.mrf.mxu0
      %v3675 = vadd.f32 %v3646, %v3674
      %v3676 = vpop.f32.mrf.mxu0
      %v3677 = vadd.f32 %v3648, %v3676
      %3678 = vdwg.mxu0
      %3679 = vmatpush.bf16.msra.mxu0 %v2792
      %3680 = vmatpush.bf16.msra.mxu0 %v2791
      %3681 = vmatpush.bf16.msra.mxu0 %v2790
      %3682 = vmatpush.bf16.msra.mxu0 %v2789
      %3683 = vmatpush.bf16.msra.mxu0 %v2788
      %3684 = vmatpush.bf16.msra.mxu0 %v2787
      %3685 = vmatpush.bf16.msra.mxu0 %v2786
      %3686 = vmatpush.bf16.msra.mxu0 %v2785
      %3687 = vmatmul.bf16.gmra.mxu0 %v1250
      %v3688 = vpop.f32.mrf.mxu0
      %v3689 = vadd.f32 %v3660, %v3688
      %v3690 = vpop.f32.mrf.mxu0
      %v3691 = vadd.f32 %v3662, %v3690
      %3692 = vmatmul.bf16.gmra.mxu0 %v1268
      %v3693 = vpop.f32.mrf.mxu0
      %v3694 = vadd.f32 %v3665, %v3693
      %v3695 = vpop.f32.mrf.mxu0
      %v3696 = vadd.f32 %v3667, %v3695
      %3697 = vmatmul.bf16.gmra.mxu0 %v1286
      %v3698 = vpop.f32.mrf.mxu0
      %v3699 = vadd.f32 %v3670, %v3698
      %v3700 = vpop.f32.mrf.mxu0
      %v3701 = vadd.f32 %v3672, %v3700
      %3702 = vmatmul.bf16.gmra.mxu0 %v1304
      %v3703 = vpop.f32.mrf.mxu0
      %v3704 = vadd.f32 %v3675, %v3703
      %v3705 = vpop.f32.mrf.mxu0
      %v3706 = vadd.f32 %v3677, %v3705
      %3707 = vdwg.mxu0
      %3708 = vmatpush.bf16.msra.mxu0 %v2800
      %3709 = vmatpush.bf16.msra.mxu0 %v2799
      %3710 = vmatpush.bf16.msra.mxu0 %v2798
      %3711 = vmatpush.bf16.msra.mxu0 %v2797
      %3712 = vmatpush.bf16.msra.mxu0 %v2796
      %3713 = vmatpush.bf16.msra.mxu0 %v2795
      %3714 = vmatpush.bf16.msra.mxu0 %v2794
      %3715 = vmatpush.bf16.msra.mxu0 %v2793
      %3716 = vmatmul.bf16.gmra.mxu0 %v1251
      %v3717 = vpop.f32.mrf.mxu0
      %v3718 = vadd.f32 %v3689, %v3717
      %v3719 = vpop.f32.mrf.mxu0
      %v3720 = vadd.f32 %v3691, %v3719
      %3721 = vmatmul.bf16.gmra.mxu0 %v1269
      %v3722 = vpop.f32.mrf.mxu0
      %v3723 = vadd.f32 %v3694, %v3722
      %v3724 = vpop.f32.mrf.mxu0
      %v3725 = vadd.f32 %v3696, %v3724
      %3726 = vmatmul.bf16.gmra.mxu0 %v1287
      %v3727 = vpop.f32.mrf.mxu0
      %v3728 = vadd.f32 %v3699, %v3727
      %v3729 = vpop.f32.mrf.mxu0
      %v3730 = vadd.f32 %v3701, %v3729
      %3731 = vmatmul.bf16.gmra.mxu0 %v1305
      %v3732 = vpop.f32.mrf.mxu0
      %v3733 = vadd.f32 %v3704, %v3732
      %v3734 = vpop.f32.mrf.mxu0
      %v3735 = vadd.f32 %v3706, %v3734
      %3736 = vdwg.mxu0
      %3737 = vmatpush.bf16.msra.mxu0 %v2808
      %3738 = vmatpush.bf16.msra.mxu0 %v2807
      %3739 = vmatpush.bf16.msra.mxu0 %v2806
      %3740 = vmatpush.bf16.msra.mxu0 %v2805
      %3741 = vmatpush.bf16.msra.mxu0 %v2804
      %3742 = vmatpush.bf16.msra.mxu0 %v2803
      %3743 = vmatpush.bf16.msra.mxu0 %v2802
      %3744 = vmatpush.bf16.msra.mxu0 %v2801
      %3745 = vmatmul.bf16.gmra.mxu0 %v1252
      %v3746 = vpop.f32.mrf.mxu0
      %v3747 = vadd.f32 %v3718, %v3746
      %v3748 = vpop.f32.mrf.mxu0
      %v3749 = vadd.f32 %v3720, %v3748
      %3750 = vmatmul.bf16.gmra.mxu0 %v1270
      %v3751 = vpop.f32.mrf.mxu0
      %v3752 = vadd.f32 %v3723, %v3751
      %v3753 = vpop.f32.mrf.mxu0
      %v3754 = vadd.f32 %v3725, %v3753
      %3755 = vmatmul.bf16.gmra.mxu0 %v1288
      %v3756 = vpop.f32.mrf.mxu0
      %v3757 = vadd.f32 %v3728, %v3756
      %v3758 = vpop.f32.mrf.mxu0
      %v3759 = vadd.f32 %v3730, %v3758
      %3760 = vmatmul.bf16.gmra.mxu0 %v1306
      %v3761 = vpop.f32.mrf.mxu0
      %v3762 = vadd.f32 %v3733, %v3761
      %v3763 = vpop.f32.mrf.mxu0
      %v3764 = vadd.f32 %v3735, %v3763
      %3765 = vdwg.mxu0
      %3766 = vmatpush.bf16.msra.mxu0 %v2816
      %3767 = vmatpush.bf16.msra.mxu0 %v2815
      %3768 = vmatpush.bf16.msra.mxu0 %v2814
      %3769 = vmatpush.bf16.msra.mxu0 %v2813
      %3770 = vmatpush.bf16.msra.mxu0 %v2812
      %3771 = vmatpush.bf16.msra.mxu0 %v2811
      %3772 = vmatpush.bf16.msra.mxu0 %v2810
      %3773 = vmatpush.bf16.msra.mxu0 %v2809
      %3774 = vmatmul.bf16.gmra.mxu0 %v1253
      %v3775 = vpop.f32.mrf.mxu0
      %v3776 = vadd.f32 %v3747, %v3775
      %v3777 = vpop.f32.mrf.mxu0
      %v3778 = vadd.f32 %v3749, %v3777
      %3779 = vmatmul.bf16.gmra.mxu0 %v1271
      %v3780 = vpop.f32.mrf.mxu0
      %v3781 = vadd.f32 %v3752, %v3780
      %v3782 = vpop.f32.mrf.mxu0
      %v3783 = vadd.f32 %v3754, %v3782
      %3784 = vmatmul.bf16.gmra.mxu0 %v1289
      %v3785 = vpop.f32.mrf.mxu0
      %v3786 = vadd.f32 %v3757, %v3785
      %v3787 = vpop.f32.mrf.mxu0
      %v3788 = vadd.f32 %v3759, %v3787
      %3789 = vmatmul.bf16.gmra.mxu0 %v1307
      %v3790 = vpop.f32.mrf.mxu0
      %v3791 = vadd.f32 %v3762, %v3790
      %v3792 = vpop.f32.mrf.mxu0
      %v3793 = vadd.f32 %v3764, %v3792
      %3794 = vdwg.mxu0
      %3795 = vmatpush.bf16.msra.mxu0 %v2824
      %3796 = vmatpush.bf16.msra.mxu0 %v2823
      %3797 = vmatpush.bf16.msra.mxu0 %v2822
      %3798 = vmatpush.bf16.msra.mxu0 %v2821
      %3799 = vmatpush.bf16.msra.mxu0 %v2820
      %3800 = vmatpush.bf16.msra.mxu0 %v2819
      %3801 = vmatpush.bf16.msra.mxu0 %v2818
      %3802 = vmatpush.bf16.msra.mxu0 %v2817
      %3803 = vmatmul.bf16.gmra.mxu0 %v1254
      %v3804 = vpop.f32.mrf.mxu0
      %v3805 = vadd.f32 %v3776, %v3804
      %v3806 = vpop.f32.mrf.mxu0
      %v3807 = vadd.f32 %v3778, %v3806
      %3808 = vmatmul.bf16.gmra.mxu0 %v1272
      %v3809 = vpop.f32.mrf.mxu0
      %v3810 = vadd.f32 %v3781, %v3809
      %v3811 = vpop.f32.mrf.mxu0
      %v3812 = vadd.f32 %v3783, %v3811
      %3813 = vmatmul.bf16.gmra.mxu0 %v1290
      %v3814 = vpop.f32.mrf.mxu0
      %v3815 = vadd.f32 %v3786, %v3814
      %v3816 = vpop.f32.mrf.mxu0
      %v3817 = vadd.f32 %v3788, %v3816
      %3818 = vmatmul.bf16.gmra.mxu0 %v1308
      %v3819 = vpop.f32.mrf.mxu0
      %v3820 = vadd.f32 %v3791, %v3819
      %v3821 = vpop.f32.mrf.mxu0
      %v3822 = vadd.f32 %v3793, %v3821
      %3823 = vdwg.mxu0
      %3824 = vst [vmem:[%s500] sm:$0xff] %v3805
      %3825 = vst [vmem:[%s500 + $0x8] sm:$0xff] %v3807
      %3826 = vst [vmem:[%s500 + $0x10] sm:$0xff] %v3810
      %3827 = vst [vmem:[%s500 + $0x18] sm:$0xff] %v3812
      %3828 = vst [vmem:[%s500 + $0x20] sm:$0xff] %v3815
      %3829 = vst [vmem:[%s500 + $0x28] sm:$0xff] %v3817
      %3830 = vst [vmem:[%s500 + $0x30] sm:$0xff] %v3820
      %3831 = vst [vmem:[%s500 + $0x38] sm:$0xff] %v3822
      %v3832 = vadd.f32 %v3805, %v3807
      %v3833 = vadd.f32 %v3832, %v3810
      %v3834 = vadd.f32 %v3833, %v3812
      %v3835 = vadd.f32 %v3834, %v3815
      %v3836 = vadd.f32 %v3835, %v3817
      %v3837 = vadd.f32 %v3836, %v3820
      %v3838 = vadd.f32 %v3837, %v3822
      %v3839 = vrot.slane %v3838, 4
      %v3840 = vadd.f32 %v3838, %v3839
      %v3841 = vrot.slane %v3840, 2
      %v3842 = vadd.f32 %v3840, %v3841
      %v3843 = vrot.slane %v3842, 1
      %v3844 = vadd.f32 %v3842, %v3843
      %3845 = vst [vmem:[%s507] sm:$0x1] %v3844
      %v3846 = vmul.f32 %v3805, %v3805
      %v3847 = vmul.f32 %v3807, %v3807
      %v3848 = vmul.f32 %v3810, %v3810
      %v3849 = vmul.f32 %v3812, %v3812
      %v3850 = vmul.f32 %v3815, %v3815
      %v3851 = vmul.f32 %v3817, %v3817
      %v3852 = vmul.f32 %v3820, %v3820
      %v3853 = vmul.f32 %v3822, %v3822
      %v3854 = vadd.f32 %v3846, %v3847
      %v3855 = vadd.f32 %v3854, %v3848
      %v3856 = vadd.f32 %v3855, %v3849
      %v3857 = vadd.f32 %v3856, %v3850
      %v3858 = vadd.f32 %v3857, %v3851
      %v3859 = vadd.f32 %v3858, %v3852
      %v3860 = vadd.f32 %v3859, %v3853
      %v3861 = vrot.slane %v3860, 4
      %v3862 = vadd.f32 %v3860, %v3861
      %v3863 = vrot.slane %v3862, 2
      %v3864 = vadd.f32 %v3862, %v3863
      %v3865 = vrot.slane %v3864, 1
      %v3866 = vadd.f32 %v3864, %v3865
      %3867 = vst [vmem:[%s514] sm:$0x1] %v3866
      %p3868 = scmp.lt.s32.totalorder %s26, 1
      %s3869 = scalar_select %p3868, %s26, 1
      %p3870 = scmp.lt.s32.totalorder %s27, 7
      %s3871 = scalar_select %p3870, %s27, 7
      %s3872 = smul.addr %s3871, 8
      %s3873 = smul.addr %s3869, 64
      %s3874 = sadd.s32 %s3872, %s3873
      %s3875 = smul.addr %s3874, 8
      %s3876 = scalar_lea.vmem %s8, %s3875
      %p3877 = scmp.lt.s32.totalorder %s26, 1
      %s3878 = scalar_select %p3877, %s26, 1
      %p3879 = scmp.lt.s32.totalorder %s27, 7
      %s3880 = scalar_select %p3879, %s27, 7
      %s3881 = smul.addr %s3878, 8
      %s3882 = sadd.s32 %s3880, %s3881
      %s3883 = scalar_lea.vmem %s9, %s3882
      %p3884 = scmp.lt.s32.totalorder %s26, 1
      %s3885 = scalar_select %p3884, %s26, 1
      %p3886 = scmp.lt.s32.totalorder %s27, 7
      %s3887 = scalar_select %p3886, %s27, 7
      %s3888 = smul.addr %s3885, 8
      %s3889 = sadd.s32 %s3887, %s3888
      %s3890 = scalar_lea.vmem %s10, %s3889
      // Predicated region
      $region53: #{double_conv_forward.4} parent=51 // pred_check
        %p3891 = pneg %p247
      $region54: #{double_conv_forward.4} parent=51 // pred_check_branch
        %3893 = sbr.rel (%p3891) target = $region56
      $region55: #{double_conv_forward.4} parent=51 // pred_region
        _
      $region56: #{double_conv_forward.4} parent=51 // pred_fallthru
        _
      // Predicated region
      $region57: #{double_conv_forward.4} parent=51 // pred_check
        %p3894 = pneg %p275
      $region58: #{double_conv_forward.4} parent=51 // pred_check_branch
        %3896 = sbr.rel (%p3894) target = $region60
      $region59: #{double_conv_forward.4} parent=51 // pred_region
        _
      $region60: #{double_conv_forward.4} parent=51 // pred_fallthru
        _
      // Predicated region
      $region61: #{double_conv_forward.4} parent=51 // pred_check
        %p3897 = pneg %p303
      $region62: #{double_conv_forward.4} parent=51 // pred_check_branch
        %3899 = sbr.rel (%p3897) target = $region64
      $region63: #{double_conv_forward.4} parent=51 // pred_region
        _
      $region64: #{double_conv_forward.4} parent=51 // pred_fallthru
        _
    $region52: #{double_conv_forward.4} parent=5 // pred_fallthru
      _
    %p3900 = scmp.le.s32.totalorder 2, %s17
    // Predicated region
    $region65: #{double_conv_forward.4} parent=5 // pred_check
      %p3901 = pneg %p3900
    $region66: #{double_conv_forward.4} parent=5 // pred_check_branch
      %3903 = sbr.rel (%p3901) target = $region68
    $region67: #{double_conv_forward.4} parent=5 // pred_region
      %s3904 = ssub.s32 %s17, 2
      // Predicated region
      $region69: #{double_conv_forward.4} parent=67 // pred_check
        %p3905 = pneg %p253
      $region70: #{double_conv_forward.4} parent=67 // pred_check_branch
        %3907 = sbr.rel (%p3905) target = $region72
      $region71: #{double_conv_forward.4} parent=67 // pred_region
        %p3908 = scmp.lt.s32.totalorder %s28, 1
        %s3909 = scalar_select %p3908, %s28, 1
        %p3910 = scmp.lt.s32.totalorder %s29, 7
        %s3911 = scalar_select %p3910, %s29, 7
        %s3912 = smul.addr %s3911, 8
        %s3913 = smul.addr %s3909, 64
        %s3914 = sadd.s32 %s3912, %s3913
        %s3915 = smul.addr %s3914, 8
        %s3916 = scalar_lea.vmem %s8, %s3915
      $region72: #{double_conv_forward.4} parent=67 // pred_fallthru
        _
      // Predicated region
      $region73: #{double_conv_forward.4} parent=67 // pred_check
        %p3917 = pneg %p281
      $region74: #{double_conv_forward.4} parent=67 // pred_check_branch
        %3919 = sbr.rel (%p3917) target = $region76
      $region75: #{double_conv_forward.4} parent=67 // pred_region
        %p3920 = scmp.lt.s32.totalorder %s28, 1
        %s3921 = scalar_select %p3920, %s28, 1
        %p3922 = scmp.lt.s32.totalorder %s29, 7
        %s3923 = scalar_select %p3922, %s29, 7
        %s3924 = smul.addr %s3921, 8
        %s3925 = sadd.s32 %s3923, %s3924
        %s3926 = scalar_lea.vmem %s9, %s3925
      $region76: #{double_conv_forward.4} parent=67 // pred_fallthru
        _
      // Predicated region
      $region77: #{double_conv_forward.4} parent=67 // pred_check
        %p3927 = pneg %p309
      $region78: #{double_conv_forward.4} parent=67 // pred_check_branch
        %3929 = sbr.rel (%p3927) target = $region80
      $region79: #{double_conv_forward.4} parent=67 // pred_region
        %p3930 = scmp.lt.s32.totalorder %s28, 1
        %s3931 = scalar_select %p3930, %s28, 1
        %p3932 = scmp.lt.s32.totalorder %s29, 7
        %s3933 = scalar_select %p3932, %s29, 7
        %s3934 = smul.addr %s3931, 8
        %s3935 = sadd.s32 %s3933, %s3934
        %s3936 = scalar_lea.vmem %s10, %s3935
      $region80: #{double_conv_forward.4} parent=67 // pred_fallthru
        _
    $region68: #{double_conv_forward.4} parent=5 // pred_fallthru
      _
  $region6: #{double_conv_forward.4} parent=0 // loop_footer
    %s21 = sadd.s32 1, %s17
  $region7: #{double_conv_forward.4} parent=0 // loop_footer_branch
    %16 = sbr.rel target = $region3
  $region8: #{double_conv_forward.4} parent=0 // loop_exit
    _

</llo_original>
